<compile_context>
chip_gen: v7x
topology: tpu7x:2x2x1
jax: 0.10.0
libtpu: 0.0.40
codegen_flags: <defaults>
</compile_context>

<pallas_src>
import functools

import jax
import jax.numpy as jnp
import numpy as np
from jax.experimental import pallas as pl
from jax.experimental.pallas import tpu as pltpu

BT = 8                 # batch elements per conv grid step
N_HIDDEN = 512         # FC hidden width
GR = 4 * N_HIDDEN      # FC weight rows per grid step (= fc2..fc5 tail size)


# ----------------------------------------------------------------------------
# Kernel 1: fused conv1 + BN + ReLU + conv2 + BN + ReLU (stride 2, k=7, p=3).
# conv1's input arrives as a wrapper-built 7-tap im2col laid out so conv1's
# output is produced directly as the padded even/odd streams conv2 consumes;
# conv2 is one wide-K (448) matmul over the lane-concatenated tap views with
# all BT batch elements row-stacked into a single tall-M MXU matmul.
# ----------------------------------------------------------------------------
def _conv12_kernel(xe_ref, xo_ref, w1_ref, s1_ref, w2_ref, s2_ref, o_ref,
                   *, l2, j_len):
    bt = o_ref.shape[0]
    w1 = w1_ref[...]                       # (7, 64) f32, BN scale folded
    s1 = s1_ref[...]                       # (1, 64) f32 folded shift
    jrow = jax.lax.broadcasted_iota(jnp.int32, (j_len, w1.shape[-1]), 0)
    mask_e = (jrow >= 2) & (jrow <= j_len - 2)   # conv2's zero-pad rows -> 0
    mask_o = (jrow >= 1) & (jrow <= j_len - 3)

    lhs_rows = []
    for b in range(bt):                    # static unroll over the batch block
        he = jnp.dot(xe_ref[b], w1, preferred_element_type=jnp.float32)
        ho = jnp.dot(xo_ref[b], w1, preferred_element_type=jnp.float32)
        he = jnp.where(mask_e, jnp.maximum(he + s1, 0.0), 0.0).astype(jnp.bfloat16)
        ho = jnp.where(mask_o, jnp.maximum(ho + s1, 0.0), 0.0).astype(jnp.bfloat16)
        # 7 tap views (kernel positions 0,2,4,6 from the even stream; 1,3,5
        # from the odd stream) concatenated along K -> one (l2, 448) LHS row
        # block per element.
        lhs_rows.append(jnp.concatenate(
            [he[a:a + l2] for a in range(4)] + [ho[a:a + l2] for a in range(3)],
            axis=-1))
    lhs = jnp.concatenate(lhs_rows, axis=0)                 # (bt*l2, 448) bf16
    y = jnp.dot(lhs, w2_ref[...], preferred_element_type=jnp.float32)
    y = jnp.maximum(y + s2_ref[...], 0.0).astype(o_ref.dtype)
    for b in range(bt):
        o_ref[b] = y[b * l2:(b + 1) * l2]


def conv12_bn_relu(xe, xo, w1, s1, w2, s2, *, l2):
    bp, j_len, _ = xe.shape
    c2 = w2.shape[-1]
    kern = functools.partial(_conv12_kernel, l2=l2, j_len=j_len)
    return pl.pallas_call(
        kern,
        out_shape=jax.ShapeDtypeStruct((bp, l2, c2), jnp.bfloat16),
        grid=(bp // BT,),
        in_specs=[
            pl.BlockSpec((BT, j_len, 7), lambda b: (b, 0, 0)),
            pl.BlockSpec((BT, j_len, 7), lambda b: (b, 0, 0)),
            pl.BlockSpec((7, 64), lambda b: (0, 0)),
            pl.BlockSpec((1, 64), lambda b: (0, 0)),
            pl.BlockSpec((7 * 64, c2), lambda b: (0, 0)),
            pl.BlockSpec((1, c2), lambda b: (0, 0)),
        ],
        out_specs=pl.BlockSpec((BT, l2, c2), lambda b: (b, 0, 0)),
        compiler_params=pltpu.CompilerParams(dimension_semantics=("parallel",)),
    )(xe, xo, w1, s1, w2, s2)


# ----------------------------------------------------------------------------
# Kernel 2: conv3 + BN + ReLU.  Input is the padded even/odd split of conv2's
# output (wrapper side, tiny); the 7 tap views are lane-concatenated into one
# wide-K (896) matmul with all BT batch elements row-stacked.
# ----------------------------------------------------------------------------
def _conv3_kernel(xe_ref, xo_ref, w_ref, s_ref, o_ref, *, l_out):
    bt = o_ref.shape[0]
    lhs_rows = []
    for b in range(bt):
        he = xe_ref[b]
        ho = xo_ref[b]
        lhs_rows.append(jnp.concatenate(
            [he[a:a + l_out] for a in range(4)]
            + [ho[a:a + l_out] for a in range(3)], axis=-1))
    lhs = jnp.concatenate(lhs_rows, axis=0)                  # (bt*l_out, 7*c_in)
    y = jnp.dot(lhs, w_ref[...], preferred_element_type=jnp.float32)
    y = jnp.maximum(y + s_ref[...], 0.0).astype(o_ref.dtype)
    for b in range(bt):
        o_ref[b] = y[b * l_out:(b + 1) * l_out]


def conv3_bn_relu(x_nlc, w_packed, shift):
    bp, l_in, c_in = x_nlc.shape
    c_out = w_packed.shape[-1]
    l_out = l_in // 2
    p = l_out + 3
    xp = jnp.pad(x_nlc, ((0, 0), (3, 3), (0, 0)))
    xe = xp[:, 0::2, :]
    xo = xp[:, 1::2, :]
    kern = functools.partial(_conv3_kernel, l_out=l_out)
    return pl.pallas_call(
        kern,
        out_shape=jax.ShapeDtypeStruct((bp, l_out, c_out), jnp.bfloat16),
        grid=(bp // BT,),
        in_specs=[
            pl.BlockSpec((BT, p, c_in), lambda b: (b, 0, 0)),
            pl.BlockSpec((BT, p, c_in), lambda b: (b, 0, 0)),
            pl.BlockSpec((7 * c_in, c_out), lambda b: (0, 0)),
            pl.BlockSpec((1, c_out), lambda b: (0, 0)),
        ],
        out_specs=pl.BlockSpec((BT, l_out, c_out), lambda b: (b, 0, 0)),
        compiler_params=pltpu.CompilerParams(dimension_semantics=("parallel",)),
    )(xe, xo, w_packed, shift)


# ----------------------------------------------------------------------------
# Kernel 3: the whole FC stack (fc1..fc5, folded BN, ReLU) in one pallas_call.
# The packed weight slab is streamed GR=2048 rows per grid step; fc1's K is
# accumulated into an f32 VMEM scratch, and the final grid step's 2048-row
# block holds fc2..fc5 so the whole tail + epilogue runs exactly once.
# ----------------------------------------------------------------------------
def _fc_chain_kernel(ids_ref, x_ref, w_ref, shift_ref, o_ref, acc_ref, *, k1_groups):
    del ids_ref                            # only used by the x index_map
    s = pl.program_id(0)
    nh = o_ref.shape[-1]

    @pl.when(s == 0)
    def _():
        acc_ref[...] = jnp.zeros_like(acc_ref)

    @pl.when(s < k1_groups)                # fc1: streamed K accumulation
    def _():
        acc_ref[...] += jnp.dot(x_ref[...], w_ref[...],
                                preferred_element_type=jnp.float32)

    @pl.when(s == k1_groups)               # fc1 epilogue + fc2..fc5 tail
    def _():
        h = jnp.maximum(acc_ref[...] + shift_ref[0], 0.0).astype(jnp.bfloat16)
        for i in range(1, 4):              # fc2, fc3, fc4 (+ folded BN + ReLU)
            w_i = w_ref[(i - 1) * nh:i * nh, :]
            h = jnp.maximum(
                jnp.dot(h, w_i, preferred_element_type=jnp.float32) + shift_ref[i],
                0.0).astype(jnp.bfloat16)
        w5 = w_ref[3 * nh:4 * nh, :]       # fc5 (no BN / ReLU)
        o_ref[...] = jnp.dot(h, w5, preferred_element_type=jnp.float32) + shift_ref[4]


def fc_chain(x_flat, w_packed, shift_stack, ids, *, k1_groups):
    m = x_flat.shape[0]
    n = w_packed.shape[-1]
    kern = functools.partial(_fc_chain_kernel, k1_groups=k1_groups)
    return pl.pallas_call(
        kern,
        out_shape=jax.ShapeDtypeStruct((m, n), jnp.float32),
        grid_spec=pltpu.PrefetchScalarGridSpec(
            num_scalar_prefetch=1,
            grid=(k1_groups + 1,),
            in_specs=[
                pl.BlockSpec((m, GR), lambda s, ids: (0, ids[s])),
                pl.BlockSpec((GR, n), lambda s, ids: (s, 0)),
                pl.BlockSpec((5, 1, n), lambda s, ids: (0, 0, 0)),
            ],
            out_specs=pl.BlockSpec((m, n), lambda s, ids: (0, 0)),
            scratch_shapes=[pltpu.VMEM((m, n), jnp.float32)],   # fc1 accumulator
        ),
        compiler_params=pltpu.CompilerParams(
            dimension_semantics=("arbitrary",),
            # ~5 MiB double-buffered footprint; stay well inside v7x's scoped VMEM.
            vmem_limit_bytes=32 * 1024 * 1024),
    )(ids, x_flat, w_packed, shift_stack)


# ----------------------------------------------------------------------------
# One-time parameter packing: fold BN, pre-scale / transpose / stack weights.
# ----------------------------------------------------------------------------
def pack_params(params, input_dim, output_dim=256):
    eps = 1e-5
    assert input_dim % 8 == 0 and input_dim >= 8
    assert 0 < output_dim <= N_HIDDEN
    packed = {}

    def fold(conv_name, bn_name):
        w, b = params[conv_name]                       # (C_out, C_in, 7), (C_out,)
        g, be, mu, var = params[bn_name]
        scale = g / jnp.sqrt(var + eps)
        shift = be + scale * (b - mu)
        wk = jnp.transpose(w, (2, 1, 0)) * scale[None, None, :]   # (7, C_in, C_out)
        return wk, shift

    def pack_taps(wk):                                 # rows in order 0,2,4,6,1,3,5
        c_in, c_out = wk.shape[1], wk.shape[2]
        return jnp.concatenate([wk[0::2].reshape(4 * c_in, c_out),
                                wk[1::2].reshape(3 * c_in, c_out)], axis=0)

    wk1, s1 = fold("conv1", "bn1")
    wk2, s2 = fold("conv2", "bn2")
    wk3, s3 = fold("conv3", "bn3")
    packed["conv12"] = (
        wk1[:, 0, :].astype(jnp.float32),              # (7, 64) conv1 im2col weight
        s1[None, :].astype(jnp.float32),
        pack_taps(wk2).astype(jnp.bfloat16),           # (448, 128)
        s2[None, :].astype(jnp.float32),
    )
    packed["conv3"] = (
        pack_taps(wk3).astype(jnp.bfloat16),           # (896, 256)
        s3[None, :].astype(jnp.float32),
    )

    # --- FC stack: one packed bf16 slab, GR rows per grid step.  fc1 rows are
    # zero-padded to a multiple of GR; the final GR-row block is fc2..fc5.
    l3 = input_dim // 8
    flatten = 256 * l3
    k1_rows = -(-flatten // GR) * GR
    k1_groups = k1_rows // GR

    w_blocks, shifts = [], []
    for i in range(1, 5):
        w, b = params[f"fc{i}"]                        # (512, K)
        g, be, mu, var = params[f"bn_fc{i}"]
        scale = g / jnp.sqrt(var + eps)
        shift = be + scale * (b - mu)
        wt = w.T * scale[None, :]                      # (K, 512), BN scale folded
        if i == 1:
            # PyTorch flattens NCL channel-major; our conv output is NLC.  Permute
            # fc1's rows once so the kernel consumes the NLC flatten directly.
            wt = jnp.transpose(wt.reshape(256, l3, N_HIDDEN), (1, 0, 2))
            wt = wt.reshape(flatten, N_HIDDEN)
            wt = jnp.pad(wt, ((0, k1_rows - flatten), (0, 0)))
        w_blocks.append(wt)
        shifts.append(shift)
    w5, b5 = params["fc5"]                             # (output_dim, 512)
    w_blocks.append(jnp.pad(w5.T, ((0, 0), (0, N_HIDDEN - output_dim))))
    shifts.append(jnp.pad(b5, (0, N_HIDDEN - output_dim)))

    packed["fc_w"] = jnp.concatenate(w_blocks, axis=0).astype(jnp.bfloat16)
    packed["fc_shift"] = jnp.stack(shifts)[:, None, :].astype(jnp.float32)
    packed["fc_ids"] = jnp.array(
        [min(s, k1_groups - 1) for s in range(k1_groups + 1)], dtype=jnp.int32)
    packed["fc_cfg"] = dict(k1_groups=k1_groups, output_dim=output_dim)
    return packed


# ----------------------------------------------------------------------------
# Forward pass.
# ----------------------------------------------------------------------------
def spectrum_encoder_forward(x, packed):
    if x.ndim == 3:                                    # (B, 1, L) PyTorch NCL
        x = x[:, 0, :]
    B, L0 = x.shape
    b_pad = max(BT, -(-B // BT) * BT)
    x = jnp.pad(x.astype(jnp.float32), ((0, b_pad - B), (0, 0)))

    # conv1 im2col: 7-tap windows arranged so conv1's output comes out as the
    # padded even/odd streams conv2 needs (p1 = pad(x,3); even stream rows read
    # p1[4j-6+k], odd stream rows read p1[4j-4+k]).
    j_len = L0 // 4 + 3
    xq = jnp.pad(x, ((0, 0), (11, 9)))
    xe1 = jnp.stack([xq[:, (k + 2)::4][:, :j_len] for k in range(7)], axis=-1)
    xo1 = jnp.stack([xq[:, (k + 4)::4][:, :j_len] for k in range(7)], axis=-1)

    w1, s1, w2, s2 = packed["conv12"]
    h2 = conv12_bn_relu(xe1, xo1, w1, s1, w2, s2, l2=L0 // 4)   # (b_pad, L0/4, 128)

    w3, s3 = packed["conv3"]
    h3 = conv3_bn_relu(h2, w3, s3)                              # (b_pad, L0/8, 256)

    cfg = packed["fc_cfg"]
    x_flat = h3.reshape(b_pad, -1)                              # NLC flatten (bf16)
    k1_rows = cfg["k1_groups"] * GR
    x_flat = jnp.pad(x_flat, ((0, 0), (0, k1_rows - x_flat.shape[1])))
    out = fc_chain(x_flat, packed["fc_w"], packed["fc_shift"], packed["fc_ids"],
                   k1_groups=cfg["k1_groups"])
    return out[:B, :cfg["output_dim"]]


# ----------------------------------------------------------------------------
# Parameter init + pure-JAX f32 reference (correctness check only).
# ----------------------------------------------------------------------------
def init_params(key, input_dim, output_dim=256):
    flatten_size = 256 * (input_dim // 8)
    shapes = {
        "conv1": (64, 1, 7), "conv2": (128, 64, 7), "conv3": (256, 128, 7),
        "fc1": (512, flatten_size), "fc2": (512, 512), "fc3": (512, 512),
        "fc4": (512, 512), "fc5": (output_dim, 512),
    }
    bn_dims = {"bn1": 64, "bn2": 128, "bn3": 256,
               "bn_fc1": 512, "bn_fc2": 512, "bn_fc3": 512, "bn_fc4": 512}
    params = {}
    keys = jax.random.split(key, 2 * len(shapes) + 4 * len(bn_dims))
    ki = 0
    for name, shp in shapes.items():
        fan_in = int(np.prod(shp[1:]))
        w = jax.random.normal(keys[ki], shp, jnp.float32) * (1.0 / np.sqrt(fan_in))
        b = jax.random.normal(keys[ki + 1], (shp[0],), jnp.float32) * 0.05
        params[name] = (w, b)
        ki += 2
    for name, d in bn_dims.items():
        gamma = 1.0 + 0.1 * jax.random.normal(keys[ki], (d,), jnp.float32)
        beta = 0.1 * jax.random.normal(keys[ki + 1], (d,), jnp.float32)
        mean = 0.1 * jax.random.normal(keys[ki + 2], (d,), jnp.float32)
        var = 0.5 + jax.random.uniform(keys[ki + 3], (d,), jnp.float32)
        params[name] = (gamma, beta, mean, var)
        ki += 4
    return params


def ref_forward(x, params):
    if x.ndim == 2:
        x = x[:, None, :]

    def conv_bn_relu_ref(x, w, b, g, be, mu, var):
        y = jax.lax.conv_general_dilated(
            x, w, window_strides=(2,), padding=[(3, 3)],
            dimension_numbers=("NCH", "OIH", "NCH"))
        y = y + b[None, :, None]
        y = g[None, :, None] * (y - mu[None, :, None]) / jnp.sqrt(
            var[None, :, None] + 1e-5) + be[None, :, None]
        return jnp.maximum(y, 0.0)

    for i in range(1, 4):
        x = conv_bn_relu_ref(x, *params[f"conv{i}"], *params[f"bn{i}"])
    x = x.reshape(x.shape[0], -1)
    for i in range(1, 5):
        w, b = params[f"fc{i}"]
        g, be, mu, var = params[f"bn_fc{i}"]
        y = x @ w.T + b
        y = g * (y - mu) / jnp.sqrt(var + 1e-5) + be
        x = jnp.maximum(y, 0.0)
    w, b = params["fc5"]
    return x @ w.T + b


if __name__ == "__main__":
    input_dim = 16
    batch = 2
    output_dim = 256

    params = init_params(jax.random.PRNGKey(0), input_dim, output_dim)
    x = jax.random.normal(jax.random.PRNGKey(0), (batch, input_dim), jnp.float32)

    packed = pack_params(params, input_dim, output_dim)
    fwd = jax.jit(functools.partial(spectrum_encoder_forward, packed=packed))

    out = jax.block_until_ready(fwd(x))
    assert out.shape == (batch, output_dim)

    ref = jax.block_until_ready(ref_forward(x, params))
    np.testing.assert_allclose(np.asarray(out, dtype=np.float32), np.asarray(ref),
                               rtol=2e-2, atol=2e-2)

    print("KERNEL_OK")
</pallas_src>

<mosaic_0001>
module attributes {stable_mosaic.version = 11 : i64} {
  func.func @_conv12_kernel(%arg0: i32, %arg1: memref<8x7x7xf32, #tpu.memory_space<vmem>>, %arg2: memref<8x7x7xf32, #tpu.memory_space<vmem>>, %arg3: memref<7x64xf32, #tpu.memory_space<vmem>>, %arg4: memref<1x64xf32, #tpu.memory_space<vmem>>, %arg5: memref<448x128xbf16, #tpu.memory_space<vmem>>, %arg6: memref<1x128xf32, #tpu.memory_space<vmem>>, %arg7: memref<8x4x128xbf16, #tpu.memory_space<vmem>>) attributes {dimension_semantics = [#tpu.dimension_semantics<parallel>], iteration_bounds = array<i64: 1>, scalar_prefetch = 0 : i64, scratch_operands = 0 : i64, tpu.core_type = #tpu.core_type<tc>, window_params = [{transform_indices = @transform_0, window_bounds = array<i64: 8, 7, 7>}, {transform_indices = @transform_1, window_bounds = array<i64: 8, 7, 7>}, {pipeline_mode = #tpu.pipeline_mode<synchronous>, transform_indices = @transform_2, window_bounds = array<i64: 7, 64>}, {pipeline_mode = #tpu.pipeline_mode<synchronous>, transform_indices = @transform_3, window_bounds = array<i64: 1, 64>}, {pipeline_mode = #tpu.pipeline_mode<synchronous>, transform_indices = @transform_4, window_bounds = array<i64: 448, 128>}, {pipeline_mode = #tpu.pipeline_mode<synchronous>, transform_indices = @transform_5, window_bounds = array<i64: 1, 128>}, {transform_indices = @transform_6, window_bounds = array<i64: 8, 4, 128>}]} {
    %c0 = arith.constant 0 : index
    %c0_0 = arith.constant 0 : index
    %0 = vector.load %arg3[%c0, %c0_0] : memref<7x64xf32, #tpu.memory_space<vmem>>, vector<7x64xf32>
    %c0_1 = arith.constant 0 : index
    %c0_2 = arith.constant 0 : index
    %1 = vector.load %arg4[%c0_1, %c0_2] : memref<1x64xf32, #tpu.memory_space<vmem>>, vector<1x64xf32>
    %2 = tpu.iota {dimensions = array<i32: 0>} : vector<7x64xi32>
    %c2_i32 = arith.constant 2 : i32
    %3 = vector.broadcast %c2_i32 : i32 to vector<7x64xi32>
    %4 = arith.cmpi sge, %2, %3 : vector<7x64xi32>
    %c5_i32 = arith.constant 5 : i32
    %5 = vector.broadcast %c5_i32 : i32 to vector<7x64xi32>
    %6 = arith.cmpi sle, %2, %5 : vector<7x64xi32>
    %7 = arith.andi %4, %6 : vector<7x64xi1>
    %c1_i32 = arith.constant 1 : i32
    %8 = vector.broadcast %c1_i32 : i32 to vector<7x64xi32>
    %9 = arith.cmpi sge, %2, %8 : vector<7x64xi32>
    %c4_i32 = arith.constant 4 : i32
    %10 = vector.broadcast %c4_i32 : i32 to vector<7x64xi32>
    %11 = arith.cmpi sle, %2, %10 : vector<7x64xi32>
    %12 = arith.andi %9, %11 : vector<7x64xi1>
    %c0_3 = arith.constant 0 : index
    %c0_4 = arith.constant 0 : index
    %c0_5 = arith.constant 0 : index
    %13 = vector.load %arg1[%c0_3, %c0_4, %c0_5] : memref<8x7x7xf32, #tpu.memory_space<vmem>>, vector<1x7x7xf32>
    %14 = vector.shape_cast %13 : vector<1x7x7xf32> to vector<7x7xf32>
    %cst = arith.constant dense<0.000000e+00> : vector<7x64xf32>
    %15 = tpu.matmul %14, %0, %cst {dimension_numbers = #tpu.dot_dimension_numbers<[1], [0], [0], [1], [0, 0, 1, 1], [], []>} : vector<7x7xf32>, vector<7x64xf32>, vector<7x64xf32> -> vector<7x64xf32>
    %c0_6 = arith.constant 0 : index
    %c0_7 = arith.constant 0 : index
    %c0_8 = arith.constant 0 : index
    %16 = vector.load %arg2[%c0_6, %c0_7, %c0_8] : memref<8x7x7xf32, #tpu.memory_space<vmem>>, vector<1x7x7xf32>
    %17 = vector.shape_cast %16 : vector<1x7x7xf32> to vector<7x7xf32>
    %cst_9 = arith.constant dense<0.000000e+00> : vector<7x64xf32>
    %18 = tpu.matmul %17, %0, %cst_9 {dimension_numbers = #tpu.dot_dimension_numbers<[1], [0], [0], [1], [0, 0, 1, 1], [], []>} : vector<7x7xf32>, vector<7x64xf32>, vector<7x64xf32> -> vector<7x64xf32>
    %19 = vector.broadcast %1 : vector<1x64xf32> to vector<7x64xf32>
    %20 = arith.addf %15, %19 : vector<7x64xf32>
    %cst_10 = arith.constant 0.000000e+00 : f32
    %21 = vector.broadcast %cst_10 : f32 to vector<7x64xf32>
    %22 = arith.maximumf %20, %21 : vector<7x64xf32>
    %cst_11 = arith.constant 0.000000e+00 : f32
    %23 = vector.broadcast %cst_11 : f32 to vector<7x64xf32>
    %24 = arith.select %7, %22, %23 : vector<7x64xi1>, vector<7x64xf32>
    %25 = arith.truncf %24 : vector<7x64xf32> to vector<7x64xbf16>
    %26 = vector.broadcast %1 : vector<1x64xf32> to vector<7x64xf32>
    %27 = arith.addf %18, %26 : vector<7x64xf32>
    %cst_12 = arith.constant 0.000000e+00 : f32
    %28 = vector.broadcast %cst_12 : f32 to vector<7x64xf32>
    %29 = arith.maximumf %27, %28 : vector<7x64xf32>
    %cst_13 = arith.constant 0.000000e+00 : f32
    %30 = vector.broadcast %cst_13 : f32 to vector<7x64xf32>
    %31 = arith.select %12, %29, %30 : vector<7x64xi1>, vector<7x64xf32>
    %32 = arith.truncf %31 : vector<7x64xf32> to vector<7x64xbf16>
    %33 = vector.extract_strided_slice %25 {offsets = [0, 0], sizes = [4, 64], strides = [1, 1]} : vector<7x64xbf16> to vector<4x64xbf16>
    %34 = vector.extract_strided_slice %25 {offsets = [1, 0], sizes = [4, 64], strides = [1, 1]} : vector<7x64xbf16> to vector<4x64xbf16>
    %35 = vector.extract_strided_slice %25 {offsets = [2, 0], sizes = [4, 64], strides = [1, 1]} : vector<7x64xbf16> to vector<4x64xbf16>
    %36 = vector.extract_strided_slice %25 {offsets = [3, 0], sizes = [4, 64], strides = [1, 1]} : vector<7x64xbf16> to vector<4x64xbf16>
    %37 = vector.extract_strided_slice %32 {offsets = [0, 0], sizes = [4, 64], strides = [1, 1]} : vector<7x64xbf16> to vector<4x64xbf16>
    %38 = vector.extract_strided_slice %32 {offsets = [1, 0], sizes = [4, 64], strides = [1, 1]} : vector<7x64xbf16> to vector<4x64xbf16>
    %39 = vector.extract_strided_slice %32 {offsets = [2, 0], sizes = [4, 64], strides = [1, 1]} : vector<7x64xbf16> to vector<4x64xbf16>
    %40 = tpu.concatenate %33, %34, %35, %36, %37, %38, %39 in 1 : vector<4x64xbf16>, vector<4x64xbf16>, vector<4x64xbf16>, vector<4x64xbf16>, vector<4x64xbf16>, vector<4x64xbf16>, vector<4x64xbf16> -> vector<4x448xbf16>
    %c1 = arith.constant 1 : index
    %c0_14 = arith.constant 0 : index
    %c0_15 = arith.constant 0 : index
    %41 = vector.load %arg1[%c1, %c0_14, %c0_15] : memref<8x7x7xf32, #tpu.memory_space<vmem>>, vector<1x7x7xf32>
    %42 = vector.shape_cast %41 : vector<1x7x7xf32> to vector<7x7xf32>
    %cst_16 = arith.constant dense<0.000000e+00> : vector<7x64xf32>
    %43 = tpu.matmul %42, %0, %cst_16 {dimension_numbers = #tpu.dot_dimension_numbers<[1], [0], [0], [1], [0, 0, 1, 1], [], []>} : vector<7x7xf32>, vector<7x64xf32>, vector<7x64xf32> -> vector<7x64xf32>
    %c1_17 = arith.constant 1 : index
    %c0_18 = arith.constant 0 : index
    %c0_19 = arith.constant 0 : index
    %44 = vector.load %arg2[%c1_17, %c0_18, %c0_19] : memref<8x7x7xf32, #tpu.memory_space<vmem>>, vector<1x7x7xf32>
    %45 = vector.shape_cast %44 : vector<1x7x7xf32> to vector<7x7xf32>
    %cst_20 = arith.constant dense<0.000000e+00> : vector<7x64xf32>
    %46 = tpu.matmul %45, %0, %cst_20 {dimension_numbers = #tpu.dot_dimension_numbers<[1], [0], [0], [1], [0, 0, 1, 1], [], []>} : vector<7x7xf32>, vector<7x64xf32>, vector<7x64xf32> -> vector<7x64xf32>
    %47 = vector.broadcast %1 : vector<1x64xf32> to vector<7x64xf32>
    %48 = arith.addf %43, %47 : vector<7x64xf32>
    %cst_21 = arith.constant 0.000000e+00 : f32
    %49 = vector.broadcast %cst_21 : f32 to vector<7x64xf32>
    %50 = arith.maximumf %48, %49 : vector<7x64xf32>
    %cst_22 = arith.constant 0.000000e+00 : f32
    %51 = vector.broadcast %cst_22 : f32 to vector<7x64xf32>
    %52 = arith.select %7, %50, %51 : vector<7x64xi1>, vector<7x64xf32>
    %53 = arith.truncf %52 : vector<7x64xf32> to vector<7x64xbf16>
    %54 = vector.broadcast %1 : vector<1x64xf32> to vector<7x64xf32>
    %55 = arith.addf %46, %54 : vector<7x64xf32>
    %cst_23 = arith.constant 0.000000e+00 : f32
    %56 = vector.broadcast %cst_23 : f32 to vector<7x64xf32>
    %57 = arith.maximumf %55, %56 : vector<7x64xf32>
    %cst_24 = arith.constant 0.000000e+00 : f32
    %58 = vector.broadcast %cst_24 : f32 to vector<7x64xf32>
    %59 = arith.select %12, %57, %58 : vector<7x64xi1>, vector<7x64xf32>
    %60 = arith.truncf %59 : vector<7x64xf32> to vector<7x64xbf16>
    %61 = vector.extract_strided_slice %53 {offsets = [0, 0], sizes = [4, 64], strides = [1, 1]} : vector<7x64xbf16> to vector<4x64xbf16>
    %62 = vector.extract_strided_slice %53 {offsets = [1, 0], sizes = [4, 64], strides = [1, 1]} : vector<7x64xbf16> to vector<4x64xbf16>
    %63 = vector.extract_strided_slice %53 {offsets = [2, 0], sizes = [4, 64], strides = [1, 1]} : vector<7x64xbf16> to vector<4x64xbf16>
    %64 = vector.extract_strided_slice %53 {offsets = [3, 0], sizes = [4, 64], strides = [1, 1]} : vector<7x64xbf16> to vector<4x64xbf16>
    %65 = vector.extract_strided_slice %60 {offsets = [0, 0], sizes = [4, 64], strides = [1, 1]} : vector<7x64xbf16> to vector<4x64xbf16>
    %66 = vector.extract_strided_slice %60 {offsets = [1, 0], sizes = [4, 64], strides = [1, 1]} : vector<7x64xbf16> to vector<4x64xbf16>
    %67 = vector.extract_strided_slice %60 {offsets = [2, 0], sizes = [4, 64], strides = [1, 1]} : vector<7x64xbf16> to vector<4x64xbf16>
    %68 = tpu.concatenate %61, %62, %63, %64, %65, %66, %67 in 1 : vector<4x64xbf16>, vector<4x64xbf16>, vector<4x64xbf16>, vector<4x64xbf16>, vector<4x64xbf16>, vector<4x64xbf16>, vector<4x64xbf16> -> vector<4x448xbf16>
    %c2 = arith.constant 2 : index
    %c0_25 = arith.constant 0 : index
    %c0_26 = arith.constant 0 : index
    %69 = vector.load %arg1[%c2, %c0_25, %c0_26] : memref<8x7x7xf32, #tpu.memory_space<vmem>>, vector<1x7x7xf32>
    %70 = vector.shape_cast %69 : vector<1x7x7xf32> to vector<7x7xf32>
    %cst_27 = arith.constant dense<0.000000e+00> : vector<7x64xf32>
    %71 = tpu.matmul %70, %0, %cst_27 {dimension_numbers = #tpu.dot_dimension_numbers<[1], [0], [0], [1], [0, 0, 1, 1], [], []>} : vector<7x7xf32>, vector<7x64xf32>, vector<7x64xf32> -> vector<7x64xf32>
    %c2_28 = arith.constant 2 : index
    %c0_29 = arith.constant 0 : index
    %c0_30 = arith.constant 0 : index
    %72 = vector.load %arg2[%c2_28, %c0_29, %c0_30] : memref<8x7x7xf32, #tpu.memory_space<vmem>>, vector<1x7x7xf32>
    %73 = vector.shape_cast %72 : vector<1x7x7xf32> to vector<7x7xf32>
    %cst_31 = arith.constant dense<0.000000e+00> : vector<7x64xf32>
    %74 = tpu.matmul %73, %0, %cst_31 {dimension_numbers = #tpu.dot_dimension_numbers<[1], [0], [0], [1], [0, 0, 1, 1], [], []>} : vector<7x7xf32>, vector<7x64xf32>, vector<7x64xf32> -> vector<7x64xf32>
    %75 = vector.broadcast %1 : vector<1x64xf32> to vector<7x64xf32>
    %76 = arith.addf %71, %75 : vector<7x64xf32>
    %cst_32 = arith.constant 0.000000e+00 : f32
    %77 = vector.broadcast %cst_32 : f32 to vector<7x64xf32>
    %78 = arith.maximumf %76, %77 : vector<7x64xf32>
    %cst_33 = arith.constant 0.000000e+00 : f32
    %79 = vector.broadcast %cst_33 : f32 to vector<7x64xf32>
    %80 = arith.select %7, %78, %79 : vector<7x64xi1>, vector<7x64xf32>
    %81 = arith.truncf %80 : vector<7x64xf32> to vector<7x64xbf16>
    %82 = vector.broadcast %1 : vector<1x64xf32> to vector<7x64xf32>
    %83 = arith.addf %74, %82 : vector<7x64xf32>
    %cst_34 = arith.constant 0.000000e+00 : f32
    %84 = vector.broadcast %cst_34 : f32 to vector<7x64xf32>
    %85 = arith.maximumf %83, %84 : vector<7x64xf32>
    %cst_35 = arith.constant 0.000000e+00 : f32
    %86 = vector.broadcast %cst_35 : f32 to vector<7x64xf32>
    %87 = arith.select %12, %85, %86 : vector<7x64xi1>, vector<7x64xf32>
    %88 = arith.truncf %87 : vector<7x64xf32> to vector<7x64xbf16>
    %89 = vector.extract_strided_slice %81 {offsets = [0, 0], sizes = [4, 64], strides = [1, 1]} : vector<7x64xbf16> to vector<4x64xbf16>
    %90 = vector.extract_strided_slice %81 {offsets = [1, 0], sizes = [4, 64], strides = [1, 1]} : vector<7x64xbf16> to vector<4x64xbf16>
    %91 = vector.extract_strided_slice %81 {offsets = [2, 0], sizes = [4, 64], strides = [1, 1]} : vector<7x64xbf16> to vector<4x64xbf16>
    %92 = vector.extract_strided_slice %81 {offsets = [3, 0], sizes = [4, 64], strides = [1, 1]} : vector<7x64xbf16> to vector<4x64xbf16>
    %93 = vector.extract_strided_slice %88 {offsets = [0, 0], sizes = [4, 64], strides = [1, 1]} : vector<7x64xbf16> to vector<4x64xbf16>
    %94 = vector.extract_strided_slice %88 {offsets = [1, 0], sizes = [4, 64], strides = [1, 1]} : vector<7x64xbf16> to vector<4x64xbf16>
    %95 = vector.extract_strided_slice %88 {offsets = [2, 0], sizes = [4, 64], strides = [1, 1]} : vector<7x64xbf16> to vector<4x64xbf16>
    %96 = tpu.concatenate %89, %90, %91, %92, %93, %94, %95 in 1 : vector<4x64xbf16>, vector<4x64xbf16>, vector<4x64xbf16>, vector<4x64xbf16>, vector<4x64xbf16>, vector<4x64xbf16>, vector<4x64xbf16> -> vector<4x448xbf16>
    %c3 = arith.constant 3 : index
    %c0_36 = arith.constant 0 : index
    %c0_37 = arith.constant 0 : index
    %97 = vector.load %arg1[%c3, %c0_36, %c0_37] : memref<8x7x7xf32, #tpu.memory_space<vmem>>, vector<1x7x7xf32>
    %98 = vector.shape_cast %97 : vector<1x7x7xf32> to vector<7x7xf32>
    %cst_38 = arith.constant dense<0.000000e+00> : vector<7x64xf32>
    %99 = tpu.matmul %98, %0, %cst_38 {dimension_numbers = #tpu.dot_dimension_numbers<[1], [0], [0], [1], [0, 0, 1, 1], [], []>} : vector<7x7xf32>, vector<7x64xf32>, vector<7x64xf32> -> vector<7x64xf32>
    %c3_39 = arith.constant 3 : index
    %c0_40 = arith.constant 0 : index
    %c0_41 = arith.constant 0 : index
    %100 = vector.load %arg2[%c3_39, %c0_40, %c0_41] : memref<8x7x7xf32, #tpu.memory_space<vmem>>, vector<1x7x7xf32>
    %101 = vector.shape_cast %100 : vector<1x7x7xf32> to vector<7x7xf32>
    %cst_42 = arith.constant dense<0.000000e+00> : vector<7x64xf32>
    %102 = tpu.matmul %101, %0, %cst_42 {dimension_numbers = #tpu.dot_dimension_numbers<[1], [0], [0], [1], [0, 0, 1, 1], [], []>} : vector<7x7xf32>, vector<7x64xf32>, vector<7x64xf32> -> vector<7x64xf32>
    %103 = vector.broadcast %1 : vector<1x64xf32> to vector<7x64xf32>
    %104 = arith.addf %99, %103 : vector<7x64xf32>
    %cst_43 = arith.constant 0.000000e+00 : f32
    %105 = vector.broadcast %cst_43 : f32 to vector<7x64xf32>
    %106 = arith.maximumf %104, %105 : vector<7x64xf32>
    %cst_44 = arith.constant 0.000000e+00 : f32
    %107 = vector.broadcast %cst_44 : f32 to vector<7x64xf32>
    %108 = arith.select %7, %106, %107 : vector<7x64xi1>, vector<7x64xf32>
    %109 = arith.truncf %108 : vector<7x64xf32> to vector<7x64xbf16>
    %110 = vector.broadcast %1 : vector<1x64xf32> to vector<7x64xf32>
    %111 = arith.addf %102, %110 : vector<7x64xf32>
    %cst_45 = arith.constant 0.000000e+00 : f32
    %112 = vector.broadcast %cst_45 : f32 to vector<7x64xf32>
    %113 = arith.maximumf %111, %112 : vector<7x64xf32>
    %cst_46 = arith.constant 0.000000e+00 : f32
    %114 = vector.broadcast %cst_46 : f32 to vector<7x64xf32>
    %115 = arith.select %12, %113, %114 : vector<7x64xi1>, vector<7x64xf32>
    %116 = arith.truncf %115 : vector<7x64xf32> to vector<7x64xbf16>
    %117 = vector.extract_strided_slice %109 {offsets = [0, 0], sizes = [4, 64], strides = [1, 1]} : vector<7x64xbf16> to vector<4x64xbf16>
    %118 = vector.extract_strided_slice %109 {offsets = [1, 0], sizes = [4, 64], strides = [1, 1]} : vector<7x64xbf16> to vector<4x64xbf16>
    %119 = vector.extract_strided_slice %109 {offsets = [2, 0], sizes = [4, 64], strides = [1, 1]} : vector<7x64xbf16> to vector<4x64xbf16>
    %120 = vector.extract_strided_slice %109 {offsets = [3, 0], sizes = [4, 64], strides = [1, 1]} : vector<7x64xbf16> to vector<4x64xbf16>
    %121 = vector.extract_strided_slice %116 {offsets = [0, 0], sizes = [4, 64], strides = [1, 1]} : vector<7x64xbf16> to vector<4x64xbf16>
    %122 = vector.extract_strided_slice %116 {offsets = [1, 0], sizes = [4, 64], strides = [1, 1]} : vector<7x64xbf16> to vector<4x64xbf16>
    %123 = vector.extract_strided_slice %116 {offsets = [2, 0], sizes = [4, 64], strides = [1, 1]} : vector<7x64xbf16> to vector<4x64xbf16>
    %124 = tpu.concatenate %117, %118, %119, %120, %121, %122, %123 in 1 : vector<4x64xbf16>, vector<4x64xbf16>, vector<4x64xbf16>, vector<4x64xbf16>, vector<4x64xbf16>, vector<4x64xbf16>, vector<4x64xbf16> -> vector<4x448xbf16>
    %c4 = arith.constant 4 : index
    %c0_47 = arith.constant 0 : index
    %c0_48 = arith.constant 0 : index
    %125 = vector.load %arg1[%c4, %c0_47, %c0_48] : memref<8x7x7xf32, #tpu.memory_space<vmem>>, vector<1x7x7xf32>
    %126 = vector.shape_cast %125 : vector<1x7x7xf32> to vector<7x7xf32>
    %cst_49 = arith.constant dense<0.000000e+00> : vector<7x64xf32>
    %127 = tpu.matmul %126, %0, %cst_49 {dimension_numbers = #tpu.dot_dimension_numbers<[1], [0], [0], [1], [0, 0, 1, 1], [], []>} : vector<7x7xf32>, vector<7x64xf32>, vector<7x64xf32> -> vector<7x64xf32>
    %c4_50 = arith.constant 4 : index
    %c0_51 = arith.constant 0 : index
    %c0_52 = arith.constant 0 : index
    %128 = vector.load %arg2[%c4_50, %c0_51, %c0_52] : memref<8x7x7xf32, #tpu.memory_space<vmem>>, vector<1x7x7xf32>
    %129 = vector.shape_cast %128 : vector<1x7x7xf32> to vector<7x7xf32>
    %cst_53 = arith.constant dense<0.000000e+00> : vector<7x64xf32>
    %130 = tpu.matmul %129, %0, %cst_53 {dimension_numbers = #tpu.dot_dimension_numbers<[1], [0], [0], [1], [0, 0, 1, 1], [], []>} : vector<7x7xf32>, vector<7x64xf32>, vector<7x64xf32> -> vector<7x64xf32>
    %131 = vector.broadcast %1 : vector<1x64xf32> to vector<7x64xf32>
    %132 = arith.addf %127, %131 : vector<7x64xf32>
    %cst_54 = arith.constant 0.000000e+00 : f32
    %133 = vector.broadcast %cst_54 : f32 to vector<7x64xf32>
    %134 = arith.maximumf %132, %133 : vector<7x64xf32>
    %cst_55 = arith.constant 0.000000e+00 : f32
    %135 = vector.broadcast %cst_55 : f32 to vector<7x64xf32>
    %136 = arith.select %7, %134, %135 : vector<7x64xi1>, vector<7x64xf32>
    %137 = arith.truncf %136 : vector<7x64xf32> to vector<7x64xbf16>
    %138 = vector.broadcast %1 : vector<1x64xf32> to vector<7x64xf32>
    %139 = arith.addf %130, %138 : vector<7x64xf32>
    %cst_56 = arith.constant 0.000000e+00 : f32
    %140 = vector.broadcast %cst_56 : f32 to vector<7x64xf32>
    %141 = arith.maximumf %139, %140 : vector<7x64xf32>
    %cst_57 = arith.constant 0.000000e+00 : f32
    %142 = vector.broadcast %cst_57 : f32 to vector<7x64xf32>
    %143 = arith.select %12, %141, %142 : vector<7x64xi1>, vector<7x64xf32>
    %144 = arith.truncf %143 : vector<7x64xf32> to vector<7x64xbf16>
    %145 = vector.extract_strided_slice %137 {offsets = [0, 0], sizes = [4, 64], strides = [1, 1]} : vector<7x64xbf16> to vector<4x64xbf16>
    %146 = vector.extract_strided_slice %137 {offsets = [1, 0], sizes = [4, 64], strides = [1, 1]} : vector<7x64xbf16> to vector<4x64xbf16>
    %147 = vector.extract_strided_slice %137 {offsets = [2, 0], sizes = [4, 64], strides = [1, 1]} : vector<7x64xbf16> to vector<4x64xbf16>
    %148 = vector.extract_strided_slice %137 {offsets = [3, 0], sizes = [4, 64], strides = [1, 1]} : vector<7x64xbf16> to vector<4x64xbf16>
    %149 = vector.extract_strided_slice %144 {offsets = [0, 0], sizes = [4, 64], strides = [1, 1]} : vector<7x64xbf16> to vector<4x64xbf16>
    %150 = vector.extract_strided_slice %144 {offsets = [1, 0], sizes = [4, 64], strides = [1, 1]} : vector<7x64xbf16> to vector<4x64xbf16>
    %151 = vector.extract_strided_slice %144 {offsets = [2, 0], sizes = [4, 64], strides = [1, 1]} : vector<7x64xbf16> to vector<4x64xbf16>
    %152 = tpu.concatenate %145, %146, %147, %148, %149, %150, %151 in 1 : vector<4x64xbf16>, vector<4x64xbf16>, vector<4x64xbf16>, vector<4x64xbf16>, vector<4x64xbf16>, vector<4x64xbf16>, vector<4x64xbf16> -> vector<4x448xbf16>
    %c5 = arith.constant 5 : index
    %c0_58 = arith.constant 0 : index
    %c0_59 = arith.constant 0 : index
    %153 = vector.load %arg1[%c5, %c0_58, %c0_59] : memref<8x7x7xf32, #tpu.memory_space<vmem>>, vector<1x7x7xf32>
    %154 = vector.shape_cast %153 : vector<1x7x7xf32> to vector<7x7xf32>
    %cst_60 = arith.constant dense<0.000000e+00> : vector<7x64xf32>
    %155 = tpu.matmul %154, %0, %cst_60 {dimension_numbers = #tpu.dot_dimension_numbers<[1], [0], [0], [1], [0, 0, 1, 1], [], []>} : vector<7x7xf32>, vector<7x64xf32>, vector<7x64xf32> -> vector<7x64xf32>
    %c5_61 = arith.constant 5 : index
    %c0_62 = arith.constant 0 : index
    %c0_63 = arith.constant 0 : index
    %156 = vector.load %arg2[%c5_61, %c0_62, %c0_63] : memref<8x7x7xf32, #tpu.memory_space<vmem>>, vector<1x7x7xf32>
    %157 = vector.shape_cast %156 : vector<1x7x7xf32> to vector<7x7xf32>
    %cst_64 = arith.constant dense<0.000000e+00> : vector<7x64xf32>
    %158 = tpu.matmul %157, %0, %cst_64 {dimension_numbers = #tpu.dot_dimension_numbers<[1], [0], [0], [1], [0, 0, 1, 1], [], []>} : vector<7x7xf32>, vector<7x64xf32>, vector<7x64xf32> -> vector<7x64xf32>
    %159 = vector.broadcast %1 : vector<1x64xf32> to vector<7x64xf32>
    %160 = arith.addf %155, %159 : vector<7x64xf32>
    %cst_65 = arith.constant 0.000000e+00 : f32
    %161 = vector.broadcast %cst_65 : f32 to vector<7x64xf32>
    %162 = arith.maximumf %160, %161 : vector<7x64xf32>
    %cst_66 = arith.constant 0.000000e+00 : f32
    %163 = vector.broadcast %cst_66 : f32 to vector<7x64xf32>
    %164 = arith.select %7, %162, %163 : vector<7x64xi1>, vector<7x64xf32>
    %165 = arith.truncf %164 : vector<7x64xf32> to vector<7x64xbf16>
    %166 = vector.broadcast %1 : vector<1x64xf32> to vector<7x64xf32>
    %167 = arith.addf %158, %166 : vector<7x64xf32>
    %cst_67 = arith.constant 0.000000e+00 : f32
    %168 = vector.broadcast %cst_67 : f32 to vector<7x64xf32>
    %169 = arith.maximumf %167, %168 : vector<7x64xf32>
    %cst_68 = arith.constant 0.000000e+00 : f32
    %170 = vector.broadcast %cst_68 : f32 to vector<7x64xf32>
    %171 = arith.select %12, %169, %170 : vector<7x64xi1>, vector<7x64xf32>
    %172 = arith.truncf %171 : vector<7x64xf32> to vector<7x64xbf16>
    %173 = vector.extract_strided_slice %165 {offsets = [0, 0], sizes = [4, 64], strides = [1, 1]} : vector<7x64xbf16> to vector<4x64xbf16>
    %174 = vector.extract_strided_slice %165 {offsets = [1, 0], sizes = [4, 64], strides = [1, 1]} : vector<7x64xbf16> to vector<4x64xbf16>
    %175 = vector.extract_strided_slice %165 {offsets = [2, 0], sizes = [4, 64], strides = [1, 1]} : vector<7x64xbf16> to vector<4x64xbf16>
    %176 = vector.extract_strided_slice %165 {offsets = [3, 0], sizes = [4, 64], strides = [1, 1]} : vector<7x64xbf16> to vector<4x64xbf16>
    %177 = vector.extract_strided_slice %172 {offsets = [0, 0], sizes = [4, 64], strides = [1, 1]} : vector<7x64xbf16> to vector<4x64xbf16>
    %178 = vector.extract_strided_slice %172 {offsets = [1, 0], sizes = [4, 64], strides = [1, 1]} : vector<7x64xbf16> to vector<4x64xbf16>
    %179 = vector.extract_strided_slice %172 {offsets = [2, 0], sizes = [4, 64], strides = [1, 1]} : vector<7x64xbf16> to vector<4x64xbf16>
    %180 = tpu.concatenate %173, %174, %175, %176, %177, %178, %179 in 1 : vector<4x64xbf16>, vector<4x64xbf16>, vector<4x64xbf16>, vector<4x64xbf16>, vector<4x64xbf16>, vector<4x64xbf16>, vector<4x64xbf16> -> vector<4x448xbf16>
    %c6 = arith.constant 6 : index
    %c0_69 = arith.constant 0 : index
    %c0_70 = arith.constant 0 : index
    %181 = vector.load %arg1[%c6, %c0_69, %c0_70] : memref<8x7x7xf32, #tpu.memory_space<vmem>>, vector<1x7x7xf32>
    %182 = vector.shape_cast %181 : vector<1x7x7xf32> to vector<7x7xf32>
    %cst_71 = arith.constant dense<0.000000e+00> : vector<7x64xf32>
    %183 = tpu.matmul %182, %0, %cst_71 {dimension_numbers = #tpu.dot_dimension_numbers<[1], [0], [0], [1], [0, 0, 1, 1], [], []>} : vector<7x7xf32>, vector<7x64xf32>, vector<7x64xf32> -> vector<7x64xf32>
    %c6_72 = arith.constant 6 : index
    %c0_73 = arith.constant 0 : index
    %c0_74 = arith.constant 0 : index
    %184 = vector.load %arg2[%c6_72, %c0_73, %c0_74] : memref<8x7x7xf32, #tpu.memory_space<vmem>>, vector<1x7x7xf32>
    %185 = vector.shape_cast %184 : vector<1x7x7xf32> to vector<7x7xf32>
    %cst_75 = arith.constant dense<0.000000e+00> : vector<7x64xf32>
    %186 = tpu.matmul %185, %0, %cst_75 {dimension_numbers = #tpu.dot_dimension_numbers<[1], [0], [0], [1], [0, 0, 1, 1], [], []>} : vector<7x7xf32>, vector<7x64xf32>, vector<7x64xf32> -> vector<7x64xf32>
    %187 = vector.broadcast %1 : vector<1x64xf32> to vector<7x64xf32>
    %188 = arith.addf %183, %187 : vector<7x64xf32>
    %cst_76 = arith.constant 0.000000e+00 : f32
    %189 = vector.broadcast %cst_76 : f32 to vector<7x64xf32>
    %190 = arith.maximumf %188, %189 : vector<7x64xf32>
    %cst_77 = arith.constant 0.000000e+00 : f32
    %191 = vector.broadcast %cst_77 : f32 to vector<7x64xf32>
    %192 = arith.select %7, %190, %191 : vector<7x64xi1>, vector<7x64xf32>
    %193 = arith.truncf %192 : vector<7x64xf32> to vector<7x64xbf16>
    %194 = vector.broadcast %1 : vector<1x64xf32> to vector<7x64xf32>
    %195 = arith.addf %186, %194 : vector<7x64xf32>
    %cst_78 = arith.constant 0.000000e+00 : f32
    %196 = vector.broadcast %cst_78 : f32 to vector<7x64xf32>
    %197 = arith.maximumf %195, %196 : vector<7x64xf32>
    %cst_79 = arith.constant 0.000000e+00 : f32
    %198 = vector.broadcast %cst_79 : f32 to vector<7x64xf32>
    %199 = arith.select %12, %197, %198 : vector<7x64xi1>, vector<7x64xf32>
    %200 = arith.truncf %199 : vector<7x64xf32> to vector<7x64xbf16>
    %201 = vector.extract_strided_slice %193 {offsets = [0, 0], sizes = [4, 64], strides = [1, 1]} : vector<7x64xbf16> to vector<4x64xbf16>
    %202 = vector.extract_strided_slice %193 {offsets = [1, 0], sizes = [4, 64], strides = [1, 1]} : vector<7x64xbf16> to vector<4x64xbf16>
    %203 = vector.extract_strided_slice %193 {offsets = [2, 0], sizes = [4, 64], strides = [1, 1]} : vector<7x64xbf16> to vector<4x64xbf16>
    %204 = vector.extract_strided_slice %193 {offsets = [3, 0], sizes = [4, 64], strides = [1, 1]} : vector<7x64xbf16> to vector<4x64xbf16>
    %205 = vector.extract_strided_slice %200 {offsets = [0, 0], sizes = [4, 64], strides = [1, 1]} : vector<7x64xbf16> to vector<4x64xbf16>
    %206 = vector.extract_strided_slice %200 {offsets = [1, 0], sizes = [4, 64], strides = [1, 1]} : vector<7x64xbf16> to vector<4x64xbf16>
    %207 = vector.extract_strided_slice %200 {offsets = [2, 0], sizes = [4, 64], strides = [1, 1]} : vector<7x64xbf16> to vector<4x64xbf16>
    %208 = tpu.concatenate %201, %202, %203, %204, %205, %206, %207 in 1 : vector<4x64xbf16>, vector<4x64xbf16>, vector<4x64xbf16>, vector<4x64xbf16>, vector<4x64xbf16>, vector<4x64xbf16>, vector<4x64xbf16> -> vector<4x448xbf16>
    %c7 = arith.constant 7 : index
    %c0_80 = arith.constant 0 : index
    %c0_81 = arith.constant 0 : index
    %209 = vector.load %arg1[%c7, %c0_80, %c0_81] : memref<8x7x7xf32, #tpu.memory_space<vmem>>, vector<1x7x7xf32>
    %210 = vector.shape_cast %209 : vector<1x7x7xf32> to vector<7x7xf32>
    %cst_82 = arith.constant dense<0.000000e+00> : vector<7x64xf32>
    %211 = tpu.matmul %210, %0, %cst_82 {dimension_numbers = #tpu.dot_dimension_numbers<[1], [0], [0], [1], [0, 0, 1, 1], [], []>} : vector<7x7xf32>, vector<7x64xf32>, vector<7x64xf32> -> vector<7x64xf32>
    %c7_83 = arith.constant 7 : index
    %c0_84 = arith.constant 0 : index
    %c0_85 = arith.constant 0 : index
    %212 = vector.load %arg2[%c7_83, %c0_84, %c0_85] : memref<8x7x7xf32, #tpu.memory_space<vmem>>, vector<1x7x7xf32>
    %213 = vector.shape_cast %212 : vector<1x7x7xf32> to vector<7x7xf32>
    %cst_86 = arith.constant dense<0.000000e+00> : vector<7x64xf32>
    %214 = tpu.matmul %213, %0, %cst_86 {dimension_numbers = #tpu.dot_dimension_numbers<[1], [0], [0], [1], [0, 0, 1, 1], [], []>} : vector<7x7xf32>, vector<7x64xf32>, vector<7x64xf32> -> vector<7x64xf32>
    %215 = vector.broadcast %1 : vector<1x64xf32> to vector<7x64xf32>
    %216 = arith.addf %211, %215 : vector<7x64xf32>
    %cst_87 = arith.constant 0.000000e+00 : f32
    %217 = vector.broadcast %cst_87 : f32 to vector<7x64xf32>
    %218 = arith.maximumf %216, %217 : vector<7x64xf32>
    %cst_88 = arith.constant 0.000000e+00 : f32
    %219 = vector.broadcast %cst_88 : f32 to vector<7x64xf32>
    %220 = arith.select %7, %218, %219 : vector<7x64xi1>, vector<7x64xf32>
    %221 = arith.truncf %220 : vector<7x64xf32> to vector<7x64xbf16>
    %222 = vector.broadcast %1 : vector<1x64xf32> to vector<7x64xf32>
    %223 = arith.addf %214, %222 : vector<7x64xf32>
    %cst_89 = arith.constant 0.000000e+00 : f32
    %224 = vector.broadcast %cst_89 : f32 to vector<7x64xf32>
    %225 = arith.maximumf %223, %224 : vector<7x64xf32>
    %cst_90 = arith.constant 0.000000e+00 : f32
    %226 = vector.broadcast %cst_90 : f32 to vector<7x64xf32>
    %227 = arith.select %12, %225, %226 : vector<7x64xi1>, vector<7x64xf32>
    %228 = arith.truncf %227 : vector<7x64xf32> to vector<7x64xbf16>
    %229 = vector.extract_strided_slice %221 {offsets = [0, 0], sizes = [4, 64], strides = [1, 1]} : vector<7x64xbf16> to vector<4x64xbf16>
    %230 = vector.extract_strided_slice %221 {offsets = [1, 0], sizes = [4, 64], strides = [1, 1]} : vector<7x64xbf16> to vector<4x64xbf16>
    %231 = vector.extract_strided_slice %221 {offsets = [2, 0], sizes = [4, 64], strides = [1, 1]} : vector<7x64xbf16> to vector<4x64xbf16>
    %232 = vector.extract_strided_slice %221 {offsets = [3, 0], sizes = [4, 64], strides = [1, 1]} : vector<7x64xbf16> to vector<4x64xbf16>
    %233 = vector.extract_strided_slice %228 {offsets = [0, 0], sizes = [4, 64], strides = [1, 1]} : vector<7x64xbf16> to vector<4x64xbf16>
    %234 = vector.extract_strided_slice %228 {offsets = [1, 0], sizes = [4, 64], strides = [1, 1]} : vector<7x64xbf16> to vector<4x64xbf16>
    %235 = vector.extract_strided_slice %228 {offsets = [2, 0], sizes = [4, 64], strides = [1, 1]} : vector<7x64xbf16> to vector<4x64xbf16>
    %236 = tpu.concatenate %229, %230, %231, %232, %233, %234, %235 in 1 : vector<4x64xbf16>, vector<4x64xbf16>, vector<4x64xbf16>, vector<4x64xbf16>, vector<4x64xbf16>, vector<4x64xbf16>, vector<4x64xbf16> -> vector<4x448xbf16>
    %237 = tpu.concatenate %40, %68, %96, %124, %152, %180, %208, %236 in 0 : vector<4x448xbf16>, vector<4x448xbf16>, vector<4x448xbf16>, vector<4x448xbf16>, vector<4x448xbf16>, vector<4x448xbf16>, vector<4x448xbf16>, vector<4x448xbf16> -> vector<32x448xbf16>
    %c0_91 = arith.constant 0 : index
    %c0_92 = arith.constant 0 : index
    %238 = vector.load %arg5[%c0_91, %c0_92] : memref<448x128xbf16, #tpu.memory_space<vmem>>, vector<448x128xbf16>
    %cst_93 = arith.constant dense<0.000000e+00> : vector<32x128xf32>
    %239 = tpu.matmul %237, %238, %cst_93 {dimension_numbers = #tpu.dot_dimension_numbers<[1], [0], [0], [1], [0, 0, 1, 1], [], []>} : vector<32x448xbf16>, vector<448x128xbf16>, vector<32x128xf32> -> vector<32x128xf32>
    %c0_94 = arith.constant 0 : index
    %c0_95 = arith.constant 0 : index
    %240 = vector.load %arg6[%c0_94, %c0_95] : memref<1x128xf32, #tpu.memory_space<vmem>>, vector<1x128xf32>
    %241 = vector.broadcast %240 : vector<1x128xf32> to vector<32x128xf32>
    %242 = arith.addf %239, %241 : vector<32x128xf32>
    %cst_96 = arith.constant 0.000000e+00 : f32
    %243 = vector.broadcast %cst_96 : f32 to vector<32x128xf32>
    %244 = arith.maximumf %242, %243 : vector<32x128xf32>
    %245 = arith.truncf %244 : vector<32x128xf32> to vector<32x128xbf16>
    %246 = vector.extract_strided_slice %245 {offsets = [0, 0], sizes = [4, 128], strides = [1, 1]} : vector<32x128xbf16> to vector<4x128xbf16>
    %c0_97 = arith.constant 0 : index
    %c0_98 = arith.constant 0 : index
    %c0_99 = arith.constant 0 : index
    %247 = vector.load %arg7[%c0_97, %c0_98, %c0_99] : memref<8x4x128xbf16, #tpu.memory_space<vmem>>, vector<1x4x128xbf16>
    %248 = vector.shape_cast %247 : vector<1x4x128xbf16> to vector<4x128xbf16>
    %249 = vector.shape_cast %246 : vector<4x128xbf16> to vector<1x4x128xbf16>
    tpu.vector_store %arg7[%c0_97, %c0_98, %c0_99], %249 {strides = array<i32>} : memref<8x4x128xbf16, #tpu.memory_space<vmem>>, vector<1x4x128xbf16>,
    %250 = vector.extract_strided_slice %245 {offsets = [4, 0], sizes = [4, 128], strides = [1, 1]} : vector<32x128xbf16> to vector<4x128xbf16>
    %c1_100 = arith.constant 1 : index
    %c0_101 = arith.constant 0 : index
    %c0_102 = arith.constant 0 : index
    %251 = vector.load %arg7[%c1_100, %c0_101, %c0_102] : memref<8x4x128xbf16, #tpu.memory_space<vmem>>, vector<1x4x128xbf16>
    %252 = vector.shape_cast %251 : vector<1x4x128xbf16> to vector<4x128xbf16>
    %253 = vector.shape_cast %250 : vector<4x128xbf16> to vector<1x4x128xbf16>
    tpu.vector_store %arg7[%c1_100, %c0_101, %c0_102], %253 {strides = array<i32>} : memref<8x4x128xbf16, #tpu.memory_space<vmem>>, vector<1x4x128xbf16>,
    %254 = vector.extract_strided_slice %245 {offsets = [8, 0], sizes = [4, 128], strides = [1, 1]} : vector<32x128xbf16> to vector<4x128xbf16>
    %c2_103 = arith.constant 2 : index
    %c0_104 = arith.constant 0 : index
    %c0_105 = arith.constant 0 : index
    %255 = vector.load %arg7[%c2_103, %c0_104, %c0_105] : memref<8x4x128xbf16, #tpu.memory_space<vmem>>, vector<1x4x128xbf16>
    %256 = vector.shape_cast %255 : vector<1x4x128xbf16> to vector<4x128xbf16>
    %257 = vector.shape_cast %254 : vector<4x128xbf16> to vector<1x4x128xbf16>
    tpu.vector_store %arg7[%c2_103, %c0_104, %c0_105], %257 {strides = array<i32>} : memref<8x4x128xbf16, #tpu.memory_space<vmem>>, vector<1x4x128xbf16>,
    %258 = vector.extract_strided_slice %245 {offsets = [12, 0], sizes = [4, 128], strides = [1, 1]} : vector<32x128xbf16> to vector<4x128xbf16>
    %c3_106 = arith.constant 3 : index
    %c0_107 = arith.constant 0 : index
    %c0_108 = arith.constant 0 : index
    %259 = vector.load %arg7[%c3_106, %c0_107, %c0_108] : memref<8x4x128xbf16, #tpu.memory_space<vmem>>, vector<1x4x128xbf16>
    %260 = vector.shape_cast %259 : vector<1x4x128xbf16> to vector<4x128xbf16>
    %261 = vector.shape_cast %258 : vector<4x128xbf16> to vector<1x4x128xbf16>
    tpu.vector_store %arg7[%c3_106, %c0_107, %c0_108], %261 {strides = array<i32>} : memref<8x4x128xbf16, #tpu.memory_space<vmem>>, vector<1x4x128xbf16>,
    %262 = vector.extract_strided_slice %245 {offsets = [16, 0], sizes = [4, 128], strides = [1, 1]} : vector<32x128xbf16> to vector<4x128xbf16>
    %c4_109 = arith.constant 4 : index
    %c0_110 = arith.constant 0 : index
    %c0_111 = arith.constant 0 : index
    %263 = vector.load %arg7[%c4_109, %c0_110, %c0_111] : memref<8x4x128xbf16, #tpu.memory_space<vmem>>, vector<1x4x128xbf16>
    %264 = vector.shape_cast %263 : vector<1x4x128xbf16> to vector<4x128xbf16>
    %265 = vector.shape_cast %262 : vector<4x128xbf16> to vector<1x4x128xbf16>
    tpu.vector_store %arg7[%c4_109, %c0_110, %c0_111], %265 {strides = array<i32>} : memref<8x4x128xbf16, #tpu.memory_space<vmem>>, vector<1x4x128xbf16>,
    %266 = vector.extract_strided_slice %245 {offsets = [20, 0], sizes = [4, 128], strides = [1, 1]} : vector<32x128xbf16> to vector<4x128xbf16>
    %c5_112 = arith.constant 5 : index
    %c0_113 = arith.constant 0 : index
    %c0_114 = arith.constant 0 : index
    %267 = vector.load %arg7[%c5_112, %c0_113, %c0_114] : memref<8x4x128xbf16, #tpu.memory_space<vmem>>, vector<1x4x128xbf16>
    %268 = vector.shape_cast %267 : vector<1x4x128xbf16> to vector<4x128xbf16>
    %269 = vector.shape_cast %266 : vector<4x128xbf16> to vector<1x4x128xbf16>
    tpu.vector_store %arg7[%c5_112, %c0_113, %c0_114], %269 {strides = array<i32>} : memref<8x4x128xbf16, #tpu.memory_space<vmem>>, vector<1x4x128xbf16>,
    %270 = vector.extract_strided_slice %245 {offsets = [24, 0], sizes = [4, 128], strides = [1, 1]} : vector<32x128xbf16> to vector<4x128xbf16>
    %c6_115 = arith.constant 6 : index
    %c0_116 = arith.constant 0 : index
    %c0_117 = arith.constant 0 : index
    %271 = vector.load %arg7[%c6_115, %c0_116, %c0_117] : memref<8x4x128xbf16, #tpu.memory_space<vmem>>, vector<1x4x128xbf16>
    %272 = vector.shape_cast %271 : vector<1x4x128xbf16> to vector<4x128xbf16>
    %273 = vector.shape_cast %270 : vector<4x128xbf16> to vector<1x4x128xbf16>
    tpu.vector_store %arg7[%c6_115, %c0_116, %c0_117], %273 {strides = array<i32>} : memref<8x4x128xbf16, #tpu.memory_space<vmem>>, vector<1x4x128xbf16>,
    %274 = vector.extract_strided_slice %245 {offsets = [28, 0], sizes = [4, 128], strides = [1, 1]} : vector<32x128xbf16> to vector<4x128xbf16>
    %c7_118 = arith.constant 7 : index
    %c0_119 = arith.constant 0 : index
    %c0_120 = arith.constant 0 : index
    %275 = vector.load %arg7[%c7_118, %c0_119, %c0_120] : memref<8x4x128xbf16, #tpu.memory_space<vmem>>, vector<1x4x128xbf16>
    %276 = vector.shape_cast %275 : vector<1x4x128xbf16> to vector<4x128xbf16>
    %277 = vector.shape_cast %274 : vector<4x128xbf16> to vector<1x4x128xbf16>
    tpu.vector_store %arg7[%c7_118, %c0_119, %c0_120], %277 {strides = array<i32>} : memref<8x4x128xbf16, #tpu.memory_space<vmem>>, vector<1x4x128xbf16>,
    return
  }
  func.func @transform_0(%arg0: i32) -> (i32, i32, i32) {
    %c0_i32 = arith.constant 0 : i32
    %c0_i32_0 = arith.constant 0 : i32
    %c0_i32_1 = arith.constant 0 : i32
    return %arg0, %c0_i32, %c0_i32_0 : i32, i32, i32
  }
  func.func @transform_1(%arg0: i32) -> (i32, i32, i32) {
    %c0_i32 = arith.constant 0 : i32
    %c0_i32_0 = arith.constant 0 : i32
    %c0_i32_1 = arith.constant 0 : i32
    return %arg0, %c0_i32, %c0_i32_0 : i32, i32, i32
  }
  func.func @transform_2(%arg0: i32) -> (i32, i32) {
    %c0_i32 = arith.constant 0 : i32
    %c0_i32_0 = arith.constant 0 : i32
    %c0_i32_1 = arith.constant 0 : i32
    return %c0_i32, %c0_i32_0 : i32, i32
  }
  func.func @transform_3(%arg0: i32) -> (i32, i32) {
    %c0_i32 = arith.constant 0 : i32
    %c0_i32_0 = arith.constant 0 : i32
    %c0_i32_1 = arith.constant 0 : i32
    return %c0_i32, %c0_i32_0 : i32, i32
  }
  func.func @transform_4(%arg0: i32) -> (i32, i32) {
    %c0_i32 = arith.constant 0 : i32
    %c0_i32_0 = arith.constant 0 : i32
    %c0_i32_1 = arith.constant 0 : i32
    return %c0_i32, %c0_i32_0 : i32, i32
  }
  func.func @transform_5(%arg0: i32) -> (i32, i32) {
    %c0_i32 = arith.constant 0 : i32
    %c0_i32_0 = arith.constant 0 : i32
    %c0_i32_1 = arith.constant 0 : i32
    return %c0_i32, %c0_i32_0 : i32, i32
  }
  func.func @transform_6(%arg0: i32) -> (i32, i32, i32) {
    %c0_i32 = arith.constant 0 : i32
    %c0_i32_0 = arith.constant 0 : i32
    %c0_i32_1 = arith.constant 0 : i32
    return %arg0, %c0_i32, %c0_i32_0 : i32, i32, i32
  }
}

module attributes {stable_mosaic.version = 11 : i64} {
  func.func @_conv3_kernel(%arg0: i32, %arg1: memref<8x5x128xbf16, #tpu.memory_space<vmem>>, %arg2: memref<8x5x128xbf16, #tpu.memory_space<vmem>>, %arg3: memref<896x256xbf16, #tpu.memory_space<vmem>>, %arg4: memref<1x256xf32, #tpu.memory_space<vmem>>, %arg5: memref<8x2x256xbf16, #tpu.memory_space<vmem>>) attributes {dimension_semantics = [#tpu.dimension_semantics<parallel>], iteration_bounds = array<i64: 1>, scalar_prefetch = 0 : i64, scratch_operands = 0 : i64, tpu.core_type = #tpu.core_type<tc>, window_params = [{transform_indices = @transform_0, window_bounds = array<i64: 8, 5, 128>}, {transform_indices = @transform_1, window_bounds = array<i64: 8, 5, 128>}, {pipeline_mode = #tpu.pipeline_mode<synchronous>, transform_indices = @transform_2, window_bounds = array<i64: 896, 256>}, {pipeline_mode = #tpu.pipeline_mode<synchronous>, transform_indices = @transform_3, window_bounds = array<i64: 1, 256>}, {transform_indices = @transform_4, window_bounds = array<i64: 8, 2, 256>}]} {
    %c0 = arith.constant 0 : index
    %c0_0 = arith.constant 0 : index
    %c0_1 = arith.constant 0 : index
    %0 = vector.load %arg1[%c0, %c0_0, %c0_1] : memref<8x5x128xbf16, #tpu.memory_space<vmem>>, vector<1x5x128xbf16>
    %1 = vector.shape_cast %0 : vector<1x5x128xbf16> to vector<5x128xbf16>
    %c0_2 = arith.constant 0 : index
    %c0_3 = arith.constant 0 : index
    %c0_4 = arith.constant 0 : index
    %2 = vector.load %arg2[%c0_2, %c0_3, %c0_4] : memref<8x5x128xbf16, #tpu.memory_space<vmem>>, vector<1x5x128xbf16>
    %3 = vector.shape_cast %2 : vector<1x5x128xbf16> to vector<5x128xbf16>
    %4 = vector.extract_strided_slice %1 {offsets = [0, 0], sizes = [2, 128], strides = [1, 1]} : vector<5x128xbf16> to vector<2x128xbf16>
    %5 = vector.extract_strided_slice %1 {offsets = [1, 0], sizes = [2, 128], strides = [1, 1]} : vector<5x128xbf16> to vector<2x128xbf16>
    %6 = vector.extract_strided_slice %1 {offsets = [2, 0], sizes = [2, 128], strides = [1, 1]} : vector<5x128xbf16> to vector<2x128xbf16>
    %7 = vector.extract_strided_slice %1 {offsets = [3, 0], sizes = [2, 128], strides = [1, 1]} : vector<5x128xbf16> to vector<2x128xbf16>
    %8 = vector.extract_strided_slice %3 {offsets = [0, 0], sizes = [2, 128], strides = [1, 1]} : vector<5x128xbf16> to vector<2x128xbf16>
    %9 = vector.extract_strided_slice %3 {offsets = [1, 0], sizes = [2, 128], strides = [1, 1]} : vector<5x128xbf16> to vector<2x128xbf16>
    %10 = vector.extract_strided_slice %3 {offsets = [2, 0], sizes = [2, 128], strides = [1, 1]} : vector<5x128xbf16> to vector<2x128xbf16>
    %11 = tpu.concatenate %4, %5, %6, %7, %8, %9, %10 in 1 : vector<2x128xbf16>, vector<2x128xbf16>, vector<2x128xbf16>, vector<2x128xbf16>, vector<2x128xbf16>, vector<2x128xbf16>, vector<2x128xbf16> -> vector<2x896xbf16>
    %c1 = arith.constant 1 : index
    %c0_5 = arith.constant 0 : index
    %c0_6 = arith.constant 0 : index
    %12 = vector.load %arg1[%c1, %c0_5, %c0_6] : memref<8x5x128xbf16, #tpu.memory_space<vmem>>, vector<1x5x128xbf16>
    %13 = vector.shape_cast %12 : vector<1x5x128xbf16> to vector<5x128xbf16>
    %c1_7 = arith.constant 1 : index
    %c0_8 = arith.constant 0 : index
    %c0_9 = arith.constant 0 : index
    %14 = vector.load %arg2[%c1_7, %c0_8, %c0_9] : memref<8x5x128xbf16, #tpu.memory_space<vmem>>, vector<1x5x128xbf16>
    %15 = vector.shape_cast %14 : vector<1x5x128xbf16> to vector<5x128xbf16>
    %16 = vector.extract_strided_slice %13 {offsets = [0, 0], sizes = [2, 128], strides = [1, 1]} : vector<5x128xbf16> to vector<2x128xbf16>
    %17 = vector.extract_strided_slice %13 {offsets = [1, 0], sizes = [2, 128], strides = [1, 1]} : vector<5x128xbf16> to vector<2x128xbf16>
    %18 = vector.extract_strided_slice %13 {offsets = [2, 0], sizes = [2, 128], strides = [1, 1]} : vector<5x128xbf16> to vector<2x128xbf16>
    %19 = vector.extract_strided_slice %13 {offsets = [3, 0], sizes = [2, 128], strides = [1, 1]} : vector<5x128xbf16> to vector<2x128xbf16>
    %20 = vector.extract_strided_slice %15 {offsets = [0, 0], sizes = [2, 128], strides = [1, 1]} : vector<5x128xbf16> to vector<2x128xbf16>
    %21 = vector.extract_strided_slice %15 {offsets = [1, 0], sizes = [2, 128], strides = [1, 1]} : vector<5x128xbf16> to vector<2x128xbf16>
    %22 = vector.extract_strided_slice %15 {offsets = [2, 0], sizes = [2, 128], strides = [1, 1]} : vector<5x128xbf16> to vector<2x128xbf16>
    %23 = tpu.concatenate %16, %17, %18, %19, %20, %21, %22 in 1 : vector<2x128xbf16>, vector<2x128xbf16>, vector<2x128xbf16>, vector<2x128xbf16>, vector<2x128xbf16>, vector<2x128xbf16>, vector<2x128xbf16> -> vector<2x896xbf16>
    %c2 = arith.constant 2 : index
    %c0_10 = arith.constant 0 : index
    %c0_11 = arith.constant 0 : index
    %24 = vector.load %arg1[%c2, %c0_10, %c0_11] : memref<8x5x128xbf16, #tpu.memory_space<vmem>>, vector<1x5x128xbf16>
    %25 = vector.shape_cast %24 : vector<1x5x128xbf16> to vector<5x128xbf16>
    %c2_12 = arith.constant 2 : index
    %c0_13 = arith.constant 0 : index
    %c0_14 = arith.constant 0 : index
    %26 = vector.load %arg2[%c2_12, %c0_13, %c0_14] : memref<8x5x128xbf16, #tpu.memory_space<vmem>>, vector<1x5x128xbf16>
    %27 = vector.shape_cast %26 : vector<1x5x128xbf16> to vector<5x128xbf16>
    %28 = vector.extract_strided_slice %25 {offsets = [0, 0], sizes = [2, 128], strides = [1, 1]} : vector<5x128xbf16> to vector<2x128xbf16>
    %29 = vector.extract_strided_slice %25 {offsets = [1, 0], sizes = [2, 128], strides = [1, 1]} : vector<5x128xbf16> to vector<2x128xbf16>
    %30 = vector.extract_strided_slice %25 {offsets = [2, 0], sizes = [2, 128], strides = [1, 1]} : vector<5x128xbf16> to vector<2x128xbf16>
    %31 = vector.extract_strided_slice %25 {offsets = [3, 0], sizes = [2, 128], strides = [1, 1]} : vector<5x128xbf16> to vector<2x128xbf16>
    %32 = vector.extract_strided_slice %27 {offsets = [0, 0], sizes = [2, 128], strides = [1, 1]} : vector<5x128xbf16> to vector<2x128xbf16>
    %33 = vector.extract_strided_slice %27 {offsets = [1, 0], sizes = [2, 128], strides = [1, 1]} : vector<5x128xbf16> to vector<2x128xbf16>
    %34 = vector.extract_strided_slice %27 {offsets = [2, 0], sizes = [2, 128], strides = [1, 1]} : vector<5x128xbf16> to vector<2x128xbf16>
    %35 = tpu.concatenate %28, %29, %30, %31, %32, %33, %34 in 1 : vector<2x128xbf16>, vector<2x128xbf16>, vector<2x128xbf16>, vector<2x128xbf16>, vector<2x128xbf16>, vector<2x128xbf16>, vector<2x128xbf16> -> vector<2x896xbf16>
    %c3 = arith.constant 3 : index
    %c0_15 = arith.constant 0 : index
    %c0_16 = arith.constant 0 : index
    %36 = vector.load %arg1[%c3, %c0_15, %c0_16] : memref<8x5x128xbf16, #tpu.memory_space<vmem>>, vector<1x5x128xbf16>
    %37 = vector.shape_cast %36 : vector<1x5x128xbf16> to vector<5x128xbf16>
    %c3_17 = arith.constant 3 : index
    %c0_18 = arith.constant 0 : index
    %c0_19 = arith.constant 0 : index
    %38 = vector.load %arg2[%c3_17, %c0_18, %c0_19] : memref<8x5x128xbf16, #tpu.memory_space<vmem>>, vector<1x5x128xbf16>
    %39 = vector.shape_cast %38 : vector<1x5x128xbf16> to vector<5x128xbf16>
    %40 = vector.extract_strided_slice %37 {offsets = [0, 0], sizes = [2, 128], strides = [1, 1]} : vector<5x128xbf16> to vector<2x128xbf16>
    %41 = vector.extract_strided_slice %37 {offsets = [1, 0], sizes = [2, 128], strides = [1, 1]} : vector<5x128xbf16> to vector<2x128xbf16>
    %42 = vector.extract_strided_slice %37 {offsets = [2, 0], sizes = [2, 128], strides = [1, 1]} : vector<5x128xbf16> to vector<2x128xbf16>
    %43 = vector.extract_strided_slice %37 {offsets = [3, 0], sizes = [2, 128], strides = [1, 1]} : vector<5x128xbf16> to vector<2x128xbf16>
    %44 = vector.extract_strided_slice %39 {offsets = [0, 0], sizes = [2, 128], strides = [1, 1]} : vector<5x128xbf16> to vector<2x128xbf16>
    %45 = vector.extract_strided_slice %39 {offsets = [1, 0], sizes = [2, 128], strides = [1, 1]} : vector<5x128xbf16> to vector<2x128xbf16>
    %46 = vector.extract_strided_slice %39 {offsets = [2, 0], sizes = [2, 128], strides = [1, 1]} : vector<5x128xbf16> to vector<2x128xbf16>
    %47 = tpu.concatenate %40, %41, %42, %43, %44, %45, %46 in 1 : vector<2x128xbf16>, vector<2x128xbf16>, vector<2x128xbf16>, vector<2x128xbf16>, vector<2x128xbf16>, vector<2x128xbf16>, vector<2x128xbf16> -> vector<2x896xbf16>
    %c4 = arith.constant 4 : index
    %c0_20 = arith.constant 0 : index
    %c0_21 = arith.constant 0 : index
    %48 = vector.load %arg1[%c4, %c0_20, %c0_21] : memref<8x5x128xbf16, #tpu.memory_space<vmem>>, vector<1x5x128xbf16>
    %49 = vector.shape_cast %48 : vector<1x5x128xbf16> to vector<5x128xbf16>
    %c4_22 = arith.constant 4 : index
    %c0_23 = arith.constant 0 : index
    %c0_24 = arith.constant 0 : index
    %50 = vector.load %arg2[%c4_22, %c0_23, %c0_24] : memref<8x5x128xbf16, #tpu.memory_space<vmem>>, vector<1x5x128xbf16>
    %51 = vector.shape_cast %50 : vector<1x5x128xbf16> to vector<5x128xbf16>
    %52 = vector.extract_strided_slice %49 {offsets = [0, 0], sizes = [2, 128], strides = [1, 1]} : vector<5x128xbf16> to vector<2x128xbf16>
    %53 = vector.extract_strided_slice %49 {offsets = [1, 0], sizes = [2, 128], strides = [1, 1]} : vector<5x128xbf16> to vector<2x128xbf16>
    %54 = vector.extract_strided_slice %49 {offsets = [2, 0], sizes = [2, 128], strides = [1, 1]} : vector<5x128xbf16> to vector<2x128xbf16>
    %55 = vector.extract_strided_slice %49 {offsets = [3, 0], sizes = [2, 128], strides = [1, 1]} : vector<5x128xbf16> to vector<2x128xbf16>
    %56 = vector.extract_strided_slice %51 {offsets = [0, 0], sizes = [2, 128], strides = [1, 1]} : vector<5x128xbf16> to vector<2x128xbf16>
    %57 = vector.extract_strided_slice %51 {offsets = [1, 0], sizes = [2, 128], strides = [1, 1]} : vector<5x128xbf16> to vector<2x128xbf16>
    %58 = vector.extract_strided_slice %51 {offsets = [2, 0], sizes = [2, 128], strides = [1, 1]} : vector<5x128xbf16> to vector<2x128xbf16>
    %59 = tpu.concatenate %52, %53, %54, %55, %56, %57, %58 in 1 : vector<2x128xbf16>, vector<2x128xbf16>, vector<2x128xbf16>, vector<2x128xbf16>, vector<2x128xbf16>, vector<2x128xbf16>, vector<2x128xbf16> -> vector<2x896xbf16>
    %c5 = arith.constant 5 : index
    %c0_25 = arith.constant 0 : index
    %c0_26 = arith.constant 0 : index
    %60 = vector.load %arg1[%c5, %c0_25, %c0_26] : memref<8x5x128xbf16, #tpu.memory_space<vmem>>, vector<1x5x128xbf16>
    %61 = vector.shape_cast %60 : vector<1x5x128xbf16> to vector<5x128xbf16>
    %c5_27 = arith.constant 5 : index
    %c0_28 = arith.constant 0 : index
    %c0_29 = arith.constant 0 : index
    %62 = vector.load %arg2[%c5_27, %c0_28, %c0_29] : memref<8x5x128xbf16, #tpu.memory_space<vmem>>, vector<1x5x128xbf16>
    %63 = vector.shape_cast %62 : vector<1x5x128xbf16> to vector<5x128xbf16>
    %64 = vector.extract_strided_slice %61 {offsets = [0, 0], sizes = [2, 128], strides = [1, 1]} : vector<5x128xbf16> to vector<2x128xbf16>
    %65 = vector.extract_strided_slice %61 {offsets = [1, 0], sizes = [2, 128], strides = [1, 1]} : vector<5x128xbf16> to vector<2x128xbf16>
    %66 = vector.extract_strided_slice %61 {offsets = [2, 0], sizes = [2, 128], strides = [1, 1]} : vector<5x128xbf16> to vector<2x128xbf16>
    %67 = vector.extract_strided_slice %61 {offsets = [3, 0], sizes = [2, 128], strides = [1, 1]} : vector<5x128xbf16> to vector<2x128xbf16>
    %68 = vector.extract_strided_slice %63 {offsets = [0, 0], sizes = [2, 128], strides = [1, 1]} : vector<5x128xbf16> to vector<2x128xbf16>
    %69 = vector.extract_strided_slice %63 {offsets = [1, 0], sizes = [2, 128], strides = [1, 1]} : vector<5x128xbf16> to vector<2x128xbf16>
    %70 = vector.extract_strided_slice %63 {offsets = [2, 0], sizes = [2, 128], strides = [1, 1]} : vector<5x128xbf16> to vector<2x128xbf16>
    %71 = tpu.concatenate %64, %65, %66, %67, %68, %69, %70 in 1 : vector<2x128xbf16>, vector<2x128xbf16>, vector<2x128xbf16>, vector<2x128xbf16>, vector<2x128xbf16>, vector<2x128xbf16>, vector<2x128xbf16> -> vector<2x896xbf16>
    %c6 = arith.constant 6 : index
    %c0_30 = arith.constant 0 : index
    %c0_31 = arith.constant 0 : index
    %72 = vector.load %arg1[%c6, %c0_30, %c0_31] : memref<8x5x128xbf16, #tpu.memory_space<vmem>>, vector<1x5x128xbf16>
    %73 = vector.shape_cast %72 : vector<1x5x128xbf16> to vector<5x128xbf16>
    %c6_32 = arith.constant 6 : index
    %c0_33 = arith.constant 0 : index
    %c0_34 = arith.constant 0 : index
    %74 = vector.load %arg2[%c6_32, %c0_33, %c0_34] : memref<8x5x128xbf16, #tpu.memory_space<vmem>>, vector<1x5x128xbf16>
    %75 = vector.shape_cast %74 : vector<1x5x128xbf16> to vector<5x128xbf16>
    %76 = vector.extract_strided_slice %73 {offsets = [0, 0], sizes = [2, 128], strides = [1, 1]} : vector<5x128xbf16> to vector<2x128xbf16>
    %77 = vector.extract_strided_slice %73 {offsets = [1, 0], sizes = [2, 128], strides = [1, 1]} : vector<5x128xbf16> to vector<2x128xbf16>
    %78 = vector.extract_strided_slice %73 {offsets = [2, 0], sizes = [2, 128], strides = [1, 1]} : vector<5x128xbf16> to vector<2x128xbf16>
    %79 = vector.extract_strided_slice %73 {offsets = [3, 0], sizes = [2, 128], strides = [1, 1]} : vector<5x128xbf16> to vector<2x128xbf16>
    %80 = vector.extract_strided_slice %75 {offsets = [0, 0], sizes = [2, 128], strides = [1, 1]} : vector<5x128xbf16> to vector<2x128xbf16>
    %81 = vector.extract_strided_slice %75 {offsets = [1, 0], sizes = [2, 128], strides = [1, 1]} : vector<5x128xbf16> to vector<2x128xbf16>
    %82 = vector.extract_strided_slice %75 {offsets = [2, 0], sizes = [2, 128], strides = [1, 1]} : vector<5x128xbf16> to vector<2x128xbf16>
    %83 = tpu.concatenate %76, %77, %78, %79, %80, %81, %82 in 1 : vector<2x128xbf16>, vector<2x128xbf16>, vector<2x128xbf16>, vector<2x128xbf16>, vector<2x128xbf16>, vector<2x128xbf16>, vector<2x128xbf16> -> vector<2x896xbf16>
    %c7 = arith.constant 7 : index
    %c0_35 = arith.constant 0 : index
    %c0_36 = arith.constant 0 : index
    %84 = vector.load %arg1[%c7, %c0_35, %c0_36] : memref<8x5x128xbf16, #tpu.memory_space<vmem>>, vector<1x5x128xbf16>
    %85 = vector.shape_cast %84 : vector<1x5x128xbf16> to vector<5x128xbf16>
    %c7_37 = arith.constant 7 : index
    %c0_38 = arith.constant 0 : index
    %c0_39 = arith.constant 0 : index
    %86 = vector.load %arg2[%c7_37, %c0_38, %c0_39] : memref<8x5x128xbf16, #tpu.memory_space<vmem>>, vector<1x5x128xbf16>
    %87 = vector.shape_cast %86 : vector<1x5x128xbf16> to vector<5x128xbf16>
    %88 = vector.extract_strided_slice %85 {offsets = [0, 0], sizes = [2, 128], strides = [1, 1]} : vector<5x128xbf16> to vector<2x128xbf16>
    %89 = vector.extract_strided_slice %85 {offsets = [1, 0], sizes = [2, 128], strides = [1, 1]} : vector<5x128xbf16> to vector<2x128xbf16>
    %90 = vector.extract_strided_slice %85 {offsets = [2, 0], sizes = [2, 128], strides = [1, 1]} : vector<5x128xbf16> to vector<2x128xbf16>
    %91 = vector.extract_strided_slice %85 {offsets = [3, 0], sizes = [2, 128], strides = [1, 1]} : vector<5x128xbf16> to vector<2x128xbf16>
    %92 = vector.extract_strided_slice %87 {offsets = [0, 0], sizes = [2, 128], strides = [1, 1]} : vector<5x128xbf16> to vector<2x128xbf16>
    %93 = vector.extract_strided_slice %87 {offsets = [1, 0], sizes = [2, 128], strides = [1, 1]} : vector<5x128xbf16> to vector<2x128xbf16>
    %94 = vector.extract_strided_slice %87 {offsets = [2, 0], sizes = [2, 128], strides = [1, 1]} : vector<5x128xbf16> to vector<2x128xbf16>
    %95 = tpu.concatenate %88, %89, %90, %91, %92, %93, %94 in 1 : vector<2x128xbf16>, vector<2x128xbf16>, vector<2x128xbf16>, vector<2x128xbf16>, vector<2x128xbf16>, vector<2x128xbf16>, vector<2x128xbf16> -> vector<2x896xbf16>
    %96 = tpu.concatenate %11, %23, %35, %47, %59, %71, %83, %95 in 0 : vector<2x896xbf16>, vector<2x896xbf16>, vector<2x896xbf16>, vector<2x896xbf16>, vector<2x896xbf16>, vector<2x896xbf16>, vector<2x896xbf16>, vector<2x896xbf16> -> vector<16x896xbf16>
    %c0_40 = arith.constant 0 : index
    %c0_41 = arith.constant 0 : index
    %97 = vector.load %arg3[%c0_40, %c0_41] : memref<896x256xbf16, #tpu.memory_space<vmem>>, vector<896x256xbf16>
    %cst = arith.constant dense<0.000000e+00> : vector<16x256xf32>
    %98 = tpu.matmul %96, %97, %cst {dimension_numbers = #tpu.dot_dimension_numbers<[1], [0], [0], [1], [0, 0, 1, 1], [], []>} : vector<16x896xbf16>, vector<896x256xbf16>, vector<16x256xf32> -> vector<16x256xf32>
    %c0_42 = arith.constant 0 : index
    %c0_43 = arith.constant 0 : index
    %99 = vector.load %arg4[%c0_42, %c0_43] : memref<1x256xf32, #tpu.memory_space<vmem>>, vector<1x256xf32>
    %100 = vector.broadcast %99 : vector<1x256xf32> to vector<16x256xf32>
    %101 = arith.addf %98, %100 : vector<16x256xf32>
    %cst_44 = arith.constant 0.000000e+00 : f32
    %102 = vector.broadcast %cst_44 : f32 to vector<16x256xf32>
    %103 = arith.maximumf %101, %102 : vector<16x256xf32>
    %104 = arith.truncf %103 : vector<16x256xf32> to vector<16x256xbf16>
    %105 = vector.extract_strided_slice %104 {offsets = [0, 0], sizes = [2, 256], strides = [1, 1]} : vector<16x256xbf16> to vector<2x256xbf16>
    %c0_45 = arith.constant 0 : index
    %c0_46 = arith.constant 0 : index
    %c0_47 = arith.constant 0 : index
    %106 = vector.load %arg5[%c0_45, %c0_46, %c0_47] : memref<8x2x256xbf16, #tpu.memory_space<vmem>>, vector<1x2x256xbf16>
    %107 = vector.shape_cast %106 : vector<1x2x256xbf16> to vector<2x256xbf16>
    %108 = vector.shape_cast %105 : vector<2x256xbf16> to vector<1x2x256xbf16>
    tpu.vector_store %arg5[%c0_45, %c0_46, %c0_47], %108 {strides = array<i32>} : memref<8x2x256xbf16, #tpu.memory_space<vmem>>, vector<1x2x256xbf16>,
    %109 = vector.extract_strided_slice %104 {offsets = [2, 0], sizes = [2, 256], strides = [1, 1]} : vector<16x256xbf16> to vector<2x256xbf16>
    %c1_48 = arith.constant 1 : index
    %c0_49 = arith.constant 0 : index
    %c0_50 = arith.constant 0 : index
    %110 = vector.load %arg5[%c1_48, %c0_49, %c0_50] : memref<8x2x256xbf16, #tpu.memory_space<vmem>>, vector<1x2x256xbf16>
    %111 = vector.shape_cast %110 : vector<1x2x256xbf16> to vector<2x256xbf16>
    %112 = vector.shape_cast %109 : vector<2x256xbf16> to vector<1x2x256xbf16>
    tpu.vector_store %arg5[%c1_48, %c0_49, %c0_50], %112 {strides = array<i32>} : memref<8x2x256xbf16, #tpu.memory_space<vmem>>, vector<1x2x256xbf16>,
    %113 = vector.extract_strided_slice %104 {offsets = [4, 0], sizes = [2, 256], strides = [1, 1]} : vector<16x256xbf16> to vector<2x256xbf16>
    %c2_51 = arith.constant 2 : index
    %c0_52 = arith.constant 0 : index
    %c0_53 = arith.constant 0 : index
    %114 = vector.load %arg5[%c2_51, %c0_52, %c0_53] : memref<8x2x256xbf16, #tpu.memory_space<vmem>>, vector<1x2x256xbf16>
    %115 = vector.shape_cast %114 : vector<1x2x256xbf16> to vector<2x256xbf16>
    %116 = vector.shape_cast %113 : vector<2x256xbf16> to vector<1x2x256xbf16>
    tpu.vector_store %arg5[%c2_51, %c0_52, %c0_53], %116 {strides = array<i32>} : memref<8x2x256xbf16, #tpu.memory_space<vmem>>, vector<1x2x256xbf16>,
    %117 = vector.extract_strided_slice %104 {offsets = [6, 0], sizes = [2, 256], strides = [1, 1]} : vector<16x256xbf16> to vector<2x256xbf16>
    %c3_54 = arith.constant 3 : index
    %c0_55 = arith.constant 0 : index
    %c0_56 = arith.constant 0 : index
    %118 = vector.load %arg5[%c3_54, %c0_55, %c0_56] : memref<8x2x256xbf16, #tpu.memory_space<vmem>>, vector<1x2x256xbf16>
    %119 = vector.shape_cast %118 : vector<1x2x256xbf16> to vector<2x256xbf16>
    %120 = vector.shape_cast %117 : vector<2x256xbf16> to vector<1x2x256xbf16>
    tpu.vector_store %arg5[%c3_54, %c0_55, %c0_56], %120 {strides = array<i32>} : memref<8x2x256xbf16, #tpu.memory_space<vmem>>, vector<1x2x256xbf16>,
    %121 = vector.extract_strided_slice %104 {offsets = [8, 0], sizes = [2, 256], strides = [1, 1]} : vector<16x256xbf16> to vector<2x256xbf16>
    %c4_57 = arith.constant 4 : index
    %c0_58 = arith.constant 0 : index
    %c0_59 = arith.constant 0 : index
    %122 = vector.load %arg5[%c4_57, %c0_58, %c0_59] : memref<8x2x256xbf16, #tpu.memory_space<vmem>>, vector<1x2x256xbf16>
    %123 = vector.shape_cast %122 : vector<1x2x256xbf16> to vector<2x256xbf16>
    %124 = vector.shape_cast %121 : vector<2x256xbf16> to vector<1x2x256xbf16>
    tpu.vector_store %arg5[%c4_57, %c0_58, %c0_59], %124 {strides = array<i32>} : memref<8x2x256xbf16, #tpu.memory_space<vmem>>, vector<1x2x256xbf16>,
    %125 = vector.extract_strided_slice %104 {offsets = [10, 0], sizes = [2, 256], strides = [1, 1]} : vector<16x256xbf16> to vector<2x256xbf16>
    %c5_60 = arith.constant 5 : index
    %c0_61 = arith.constant 0 : index
    %c0_62 = arith.constant 0 : index
    %126 = vector.load %arg5[%c5_60, %c0_61, %c0_62] : memref<8x2x256xbf16, #tpu.memory_space<vmem>>, vector<1x2x256xbf16>
    %127 = vector.shape_cast %126 : vector<1x2x256xbf16> to vector<2x256xbf16>
    %128 = vector.shape_cast %125 : vector<2x256xbf16> to vector<1x2x256xbf16>
    tpu.vector_store %arg5[%c5_60, %c0_61, %c0_62], %128 {strides = array<i32>} : memref<8x2x256xbf16, #tpu.memory_space<vmem>>, vector<1x2x256xbf16>,
    %129 = vector.extract_strided_slice %104 {offsets = [12, 0], sizes = [2, 256], strides = [1, 1]} : vector<16x256xbf16> to vector<2x256xbf16>
    %c6_63 = arith.constant 6 : index
    %c0_64 = arith.constant 0 : index
    %c0_65 = arith.constant 0 : index
    %130 = vector.load %arg5[%c6_63, %c0_64, %c0_65] : memref<8x2x256xbf16, #tpu.memory_space<vmem>>, vector<1x2x256xbf16>
    %131 = vector.shape_cast %130 : vector<1x2x256xbf16> to vector<2x256xbf16>
    %132 = vector.shape_cast %129 : vector<2x256xbf16> to vector<1x2x256xbf16>
    tpu.vector_store %arg5[%c6_63, %c0_64, %c0_65], %132 {strides = array<i32>} : memref<8x2x256xbf16, #tpu.memory_space<vmem>>, vector<1x2x256xbf16>,
    %133 = vector.extract_strided_slice %104 {offsets = [14, 0], sizes = [2, 256], strides = [1, 1]} : vector<16x256xbf16> to vector<2x256xbf16>
    %c7_66 = arith.constant 7 : index
    %c0_67 = arith.constant 0 : index
    %c0_68 = arith.constant 0 : index
    %134 = vector.load %arg5[%c7_66, %c0_67, %c0_68] : memref<8x2x256xbf16, #tpu.memory_space<vmem>>, vector<1x2x256xbf16>
    %135 = vector.shape_cast %134 : vector<1x2x256xbf16> to vector<2x256xbf16>
    %136 = vector.shape_cast %133 : vector<2x256xbf16> to vector<1x2x256xbf16>
    tpu.vector_store %arg5[%c7_66, %c0_67, %c0_68], %136 {strides = array<i32>} : memref<8x2x256xbf16, #tpu.memory_space<vmem>>, vector<1x2x256xbf16>,
    return
  }
  func.func @transform_0(%arg0: i32) -> (i32, i32, i32) {
    %c0_i32 = arith.constant 0 : i32
    %c0_i32_0 = arith.constant 0 : i32
    %c0_i32_1 = arith.constant 0 : i32
    return %arg0, %c0_i32, %c0_i32_0 : i32, i32, i32
  }
  func.func @transform_1(%arg0: i32) -> (i32, i32, i32) {
    %c0_i32 = arith.constant 0 : i32
    %c0_i32_0 = arith.constant 0 : i32
    %c0_i32_1 = arith.constant 0 : i32
    return %arg0, %c0_i32, %c0_i32_0 : i32, i32, i32
  }
  func.func @transform_2(%arg0: i32) -> (i32, i32) {
    %c0_i32 = arith.constant 0 : i32
    %c0_i32_0 = arith.constant 0 : i32
    %c0_i32_1 = arith.constant 0 : i32
    return %c0_i32, %c0_i32_0 : i32, i32
  }
  func.func @transform_3(%arg0: i32) -> (i32, i32) {
    %c0_i32 = arith.constant 0 : i32
    %c0_i32_0 = arith.constant 0 : i32
    %c0_i32_1 = arith.constant 0 : i32
    return %c0_i32, %c0_i32_0 : i32, i32
  }
  func.func @transform_4(%arg0: i32) -> (i32, i32, i32) {
    %c0_i32 = arith.constant 0 : i32
    %c0_i32_0 = arith.constant 0 : i32
    %c0_i32_1 = arith.constant 0 : i32
    return %arg0, %c0_i32, %c0_i32_0 : i32, i32, i32
  }
}

module attributes {stable_mosaic.version = 11 : i64} {
  func.func @_fc_chain_kernel(%arg0: i32, %arg1: memref<2xi32, #tpu.memory_space<smem>>, %arg2: memref<8x2048xbf16, #tpu.memory_space<vmem>>, %arg3: memref<2048x512xbf16, #tpu.memory_space<vmem>>, %arg4: memref<5x1x512xf32, #tpu.memory_space<vmem>>, %arg5: memref<8x512xf32, #tpu.memory_space<vmem>>, %arg6: memref<8x512xf32, #tpu.memory_space<vmem>>) attributes {dimension_semantics = [#tpu.dimension_semantics<arbitrary>], iteration_bounds = array<i64: 2>, scalar_prefetch = 1 : i64, scratch_operands = 1 : i64, tpu.core_type = #tpu.core_type<tc>, window_params = [{transform_indices = @transform_0, window_bounds = array<i64: 8, 2048>}, {transform_indices = @transform_1, window_bounds = array<i64: 2048, 512>}, {pipeline_mode = #tpu.pipeline_mode<synchronous>, transform_indices = @transform_2, window_bounds = array<i64: 5, 1, 512>}, {pipeline_mode = #tpu.pipeline_mode<synchronous>, transform_indices = @transform_3, window_bounds = array<i64: 8, 512>}]} {
    %c0_i32 = arith.constant 0 : i32
    %0 = arith.cmpi eq, %arg0, %c0_i32 : i32
    %1 = arith.extui %0 : i1 to i32
    %c0_i32_0 = arith.constant 0 : i32
    %2 = arith.cmpi ne, %1, %c0_i32_0 : i32
    scf.if %2 {
      %cst = arith.constant 0.000000e+00 : f32
      %9 = vector.broadcast %cst : f32 to vector<8x512xf32>
      %c0 = arith.constant 0 : index
      %c0_4 = arith.constant 0 : index
      %10 = vector.load %arg6[%c0, %c0_4] : memref<8x512xf32, #tpu.memory_space<vmem>>, vector<8x512xf32>
      tpu.vector_store %arg6[%c0, %c0_4], %9 {strides = array<i32>} : memref<8x512xf32, #tpu.memory_space<vmem>>, vector<8x512xf32>,
    } else {
    }
    %c1_i32 = arith.constant 1 : i32
    %3 = arith.cmpi slt, %arg0, %c1_i32 : i32
    %4 = arith.extui %3 : i1 to i32
    %c0_i32_1 = arith.constant 0 : i32
    %5 = arith.cmpi ne, %4, %c0_i32_1 : i32
    scf.if %5 {
      %c0 = arith.constant 0 : index
      %c0_4 = arith.constant 0 : index
      %9 = vector.load %arg6[%c0, %c0_4] : memref<8x512xf32, #tpu.memory_space<vmem>>, vector<8x512xf32>
      %c0_5 = arith.constant 0 : index
      %c0_6 = arith.constant 0 : index
      %10 = vector.load %arg2[%c0_5, %c0_6] : memref<8x2048xbf16, #tpu.memory_space<vmem>>, vector<8x2048xbf16>
      %c0_7 = arith.constant 0 : index
      %c0_8 = arith.constant 0 : index
      %11 = vector.load %arg3[%c0_7, %c0_8] : memref<2048x512xbf16, #tpu.memory_space<vmem>>, vector<2048x512xbf16>
      %cst = arith.constant dense<0.000000e+00> : vector<8x512xf32>
      %12 = tpu.matmul %10, %11, %cst {dimension_numbers = #tpu.dot_dimension_numbers<[1], [0], [0], [1], [0, 0, 1, 1], [], []>} : vector<8x2048xbf16>, vector<2048x512xbf16>, vector<8x512xf32> -> vector<8x512xf32>
      %13 = arith.addf %9, %12 : vector<8x512xf32>
      %c0_9 = arith.constant 0 : index
      %c0_10 = arith.constant 0 : index
      %14 = vector.load %arg6[%c0_9, %c0_10] : memref<8x512xf32, #tpu.memory_space<vmem>>, vector<8x512xf32>
      tpu.vector_store %arg6[%c0_9, %c0_10], %13 {strides = array<i32>} : memref<8x512xf32, #tpu.memory_space<vmem>>, vector<8x512xf32>,
    } else {
    }
    %c1_i32_2 = arith.constant 1 : i32
    %6 = arith.cmpi eq, %arg0, %c1_i32_2 : i32
    %7 = arith.extui %6 : i1 to i32
    %c0_i32_3 = arith.constant 0 : i32
    %8 = arith.cmpi ne, %7, %c0_i32_3 : i32
    scf.if %8 {
      %c0 = arith.constant 0 : index
      %c0_4 = arith.constant 0 : index
      %9 = vector.load %arg6[%c0, %c0_4] : memref<8x512xf32, #tpu.memory_space<vmem>>, vector<8x512xf32>
      %c0_5 = arith.constant 0 : index
      %c0_6 = arith.constant 0 : index
      %c0_7 = arith.constant 0 : index
      %10 = vector.load %arg4[%c0_5, %c0_6, %c0_7] : memref<5x1x512xf32, #tpu.memory_space<vmem>>, vector<1x1x512xf32>
      %11 = vector.shape_cast %10 : vector<1x1x512xf32> to vector<1x512xf32>
      %12 = vector.broadcast %11 : vector<1x512xf32> to vector<8x512xf32>
      %13 = arith.addf %9, %12 : vector<8x512xf32>
      %cst = arith.constant 0.000000e+00 : f32
      %14 = vector.broadcast %cst : f32 to vector<8x512xf32>
      %15 = arith.maximumf %13, %14 : vector<8x512xf32>
      %16 = arith.truncf %15 : vector<8x512xf32> to vector<8x512xbf16>
      %c0_8 = arith.constant 0 : index
      %c0_9 = arith.constant 0 : index
      %17 = vector.load %arg3[%c0_8, %c0_9] : memref<2048x512xbf16, #tpu.memory_space<vmem>>, vector<512x512xbf16>
      %cst_10 = arith.constant dense<0.000000e+00> : vector<8x512xf32>
      %18 = tpu.matmul %16, %17, %cst_10 {dimension_numbers = #tpu.dot_dimension_numbers<[1], [0], [0], [1], [0, 0, 1, 1], [], []>} : vector<8x512xbf16>, vector<512x512xbf16>, vector<8x512xf32> -> vector<8x512xf32>
      %c1 = arith.constant 1 : index
      %c0_11 = arith.constant 0 : index
      %c0_12 = arith.constant 0 : index
      %19 = vector.load %arg4[%c1, %c0_11, %c0_12] : memref<5x1x512xf32, #tpu.memory_space<vmem>>, vector<1x1x512xf32>
      %20 = vector.shape_cast %19 : vector<1x1x512xf32> to vector<1x512xf32>
      %21 = vector.broadcast %20 : vector<1x512xf32> to vector<8x512xf32>
      %22 = arith.addf %18, %21 : vector<8x512xf32>
      %cst_13 = arith.constant 0.000000e+00 : f32
      %23 = vector.broadcast %cst_13 : f32 to vector<8x512xf32>
      %24 = arith.maximumf %22, %23 : vector<8x512xf32>
      %25 = arith.truncf %24 : vector<8x512xf32> to vector<8x512xbf16>
      %c512 = arith.constant 512 : index
      %c0_14 = arith.constant 0 : index
      %26 = vector.load %arg3[%c512, %c0_14] : memref<2048x512xbf16, #tpu.memory_space<vmem>>, vector<512x512xbf16>
      %cst_15 = arith.constant dense<0.000000e+00> : vector<8x512xf32>
      %27 = tpu.matmul %25, %26, %cst_15 {dimension_numbers = #tpu.dot_dimension_numbers<[1], [0], [0], [1], [0, 0, 1, 1], [], []>} : vector<8x512xbf16>, vector<512x512xbf16>, vector<8x512xf32> -> vector<8x512xf32>
      %c2 = arith.constant 2 : index
      %c0_16 = arith.constant 0 : index
      %c0_17 = arith.constant 0 : index
      %28 = vector.load %arg4[%c2, %c0_16, %c0_17] : memref<5x1x512xf32, #tpu.memory_space<vmem>>, vector<1x1x512xf32>
      %29 = vector.shape_cast %28 : vector<1x1x512xf32> to vector<1x512xf32>
      %30 = vector.broadcast %29 : vector<1x512xf32> to vector<8x512xf32>
      %31 = arith.addf %27, %30 : vector<8x512xf32>
      %cst_18 = arith.constant 0.000000e+00 : f32
      %32 = vector.broadcast %cst_18 : f32 to vector<8x512xf32>
      %33 = arith.maximumf %31, %32 : vector<8x512xf32>
      %34 = arith.truncf %33 : vector<8x512xf32> to vector<8x512xbf16>
      %c1024 = arith.constant 1024 : index
      %c0_19 = arith.constant 0 : index
      %35 = vector.load %arg3[%c1024, %c0_19] : memref<2048x512xbf16, #tpu.memory_space<vmem>>, vector<512x512xbf16>
      %cst_20 = arith.constant dense<0.000000e+00> : vector<8x512xf32>
      %36 = tpu.matmul %34, %35, %cst_20 {dimension_numbers = #tpu.dot_dimension_numbers<[1], [0], [0], [1], [0, 0, 1, 1], [], []>} : vector<8x512xbf16>, vector<512x512xbf16>, vector<8x512xf32> -> vector<8x512xf32>
      %c3 = arith.constant 3 : index
      %c0_21 = arith.constant 0 : index
      %c0_22 = arith.constant 0 : index
      %37 = vector.load %arg4[%c3, %c0_21, %c0_22] : memref<5x1x512xf32, #tpu.memory_space<vmem>>, vector<1x1x512xf32>
      %38 = vector.shape_cast %37 : vector<1x1x512xf32> to vector<1x512xf32>
      %39 = vector.broadcast %38 : vector<1x512xf32> to vector<8x512xf32>
      %40 = arith.addf %36, %39 : vector<8x512xf32>
      %cst_23 = arith.constant 0.000000e+00 : f32
      %41 = vector.broadcast %cst_23 : f32 to vector<8x512xf32>
      %42 = arith.maximumf %40, %41 : vector<8x512xf32>
      %43 = arith.truncf %42 : vector<8x512xf32> to vector<8x512xbf16>
      %c1536 = arith.constant 1536 : index
      %c0_24 = arith.constant 0 : index
      %44 = vector.load %arg3[%c1536, %c0_24] : memref<2048x512xbf16, #tpu.memory_space<vmem>>, vector<512x512xbf16>
      %cst_25 = arith.constant dense<0.000000e+00> : vector<8x512xf32>
      %45 = tpu.matmul %43, %44, %cst_25 {dimension_numbers = #tpu.dot_dimension_numbers<[1], [0], [0], [1], [0, 0, 1, 1], [], []>} : vector<8x512xbf16>, vector<512x512xbf16>, vector<8x512xf32> -> vector<8x512xf32>
      %c4 = arith.constant 4 : index
      %c0_26 = arith.constant 0 : index
      %c0_27 = arith.constant 0 : index
      %46 = vector.load %arg4[%c4, %c0_26, %c0_27] : memref<5x1x512xf32, #tpu.memory_space<vmem>>, vector<1x1x512xf32>
      %47 = vector.shape_cast %46 : vector<1x1x512xf32> to vector<1x512xf32>
      %48 = vector.broadcast %47 : vector<1x512xf32> to vector<8x512xf32>
      %49 = arith.addf %45, %48 : vector<8x512xf32>
      %c0_28 = arith.constant 0 : index
      %c0_29 = arith.constant 0 : index
      %50 = vector.load %arg5[%c0_28, %c0_29] : memref<8x512xf32, #tpu.memory_space<vmem>>, vector<8x512xf32>
      tpu.vector_store %arg5[%c0_28, %c0_29], %49 {strides = array<i32>} : memref<8x512xf32, #tpu.memory_space<vmem>>, vector<8x512xf32>,
    } else {
    }
    return
  }
  func.func @transform_0(%arg0: i32, %arg1: memref<2xi32, #tpu.memory_space<smem>>) -> (i32, i32) {
    %0 = arith.index_cast %arg0 : i32 to index
    %1 = memref.load %arg1[%0] : memref<2xi32, #tpu.memory_space<smem>>
    %c0_i32 = arith.constant 0 : i32
    %c0_i32_0 = arith.constant 0 : i32
    return %c0_i32, %1 : i32, i32
  }
  func.func @transform_1(%arg0: i32, %arg1: memref<2xi32, #tpu.memory_space<smem>>) -> (i32, i32) {
    %c0_i32 = arith.constant 0 : i32
    %c0_i32_0 = arith.constant 0 : i32
    return %arg0, %c0_i32 : i32, i32
  }
  func.func @transform_2(%arg0: i32, %arg1: memref<2xi32, #tpu.memory_space<smem>>) -> (i32, i32, i32) {
    %c0_i32 = arith.constant 0 : i32
    %c0_i32_0 = arith.constant 0 : i32
    %c0_i32_1 = arith.constant 0 : i32
    %c0_i32_2 = arith.constant 0 : i32
    return %c0_i32, %c0_i32_0, %c0_i32_1 : i32, i32, i32
  }
  func.func @transform_3(%arg0: i32, %arg1: memref<2xi32, #tpu.memory_space<smem>>) -> (i32, i32) {
    %c0_i32 = arith.constant 0 : i32
    %c0_i32_0 = arith.constant 0 : i32
    %c0_i32_1 = arith.constant 0 : i32
    return %c0_i32, %c0_i32_0 : i32, i32
  }
}

</mosaic_0001>

<llo_original>
// kernel: spectrum_encoder_forward.4
$region0: #{spectrum_encoder_forward.4}
  #allocation0 [shape = 'u32[]', space=smem, size = 0x4, offset = 0x4, fixed_abs, tag = 'smem constant byte address 0x4 - core index']
  #allocation1 [shape = 'u32[144,128]{1,0:T(1,128)}', space=vmem, size = 0x12000, scoped, tag = 'internal scratch']
  %s0 = inlined_call_operand.vmem [shape: bf16[8,5,128], index: 0, kind: input, shape index: {}]
  %s1 = inlined_call_operand.vmem [shape: bf16[8,5,128], index: 1, kind: input, shape index: {}]
  %s2 = inlined_call_operand.vmem [shape: bf16[896,256], index: 2, kind: input, shape index: {}]
  %s3 = inlined_call_operand.hbm [shape: f32[1,256], index: 3, kind: input, shape index: {}]
  %s4 = inlined_call_operand.vmem [shape: bf16[8,2,256], index: 4, kind: output, shape index: {}]
  %s5 = sld [smem:[#allocation0]]
  $region30: #{spectrum_encoder_forward.4} parent=0
    _
  %s7 = ssub.s32 1, %s5
  %s8 = scalar_select 0, %s7, %s5
  $region1: #{spectrum_encoder_forward.4} parent=0
    #allocation2 [shape = 'u8[1024]{0}', space=vmem, size = 0x400, scoped, tag = 'input window, operand 3, single buffered']
    #allocation3 [shape = 's32[1]{0}', space=sflag, size = 0x4, scoped, tag = 'scoped memory for spectrum_encoder_forward.4']
    %9 = vsyncpa [#allocation3], 0
    // Predicated region
    $region2: #{spectrum_encoder_forward.4} parent=1 // pred_check
      _
    $region3: #{spectrum_encoder_forward.4} parent=1 // pred_check_branch
      %11 = sbr.rel (0) target = $region5
    $region4: #{spectrum_encoder_forward.4} parent=1 // pred_region
      _
    $region5: #{spectrum_encoder_forward.4} parent=1 // pred_fallthru
      _
    // Predicated region
    $region6: #{spectrum_encoder_forward.4} parent=1 // pred_check
      _
    $region7: #{spectrum_encoder_forward.4} parent=1 // pred_check_branch
      %13 = sbr.rel (0) target = $region9
    $region8: #{spectrum_encoder_forward.4} parent=1 // pred_region
      _
    $region9: #{spectrum_encoder_forward.4} parent=1 // pred_fallthru
      _
    // Predicated region
    $region10: #{spectrum_encoder_forward.4} parent=1 // pred_check
      _
    $region11: #{spectrum_encoder_forward.4} parent=1 // pred_check_branch
      %15 = sbr.rel (0) target = $region13
    $region12: #{spectrum_encoder_forward.4} parent=1 // pred_region
      _
    $region13: #{spectrum_encoder_forward.4} parent=1 // pred_fallthru
      _
    // Predicated region
    $region14: #{spectrum_encoder_forward.4} parent=1 // pred_check
      _
    $region15: #{spectrum_encoder_forward.4} parent=1 // pred_check_branch
      %17 = sbr.rel (0) target = $region17
    $region16: #{spectrum_encoder_forward.4} parent=1 // pred_region
      %s19 = ssub.s32 32, 32
      %20 = vsyncadd [#allocation3], %s19
      %s22 = sshll.u32 [#allocation2], 4
      %s23 = int_to_ptr.vmem [resolvable:$true] %s22
      %25 = dma.hbm_to_vmem [thread:$0]  %s3, 32, %s23, [#allocation3]
    $region17: #{spectrum_encoder_forward.4} parent=1 // pred_fallthru
      _
    // Predicated region
    $region18: #{spectrum_encoder_forward.4} parent=1 // pred_check
      _
    $region19: #{spectrum_encoder_forward.4} parent=1 // pred_check_branch
      %27 = sbr.rel (0) target = $region21
    $region20: #{spectrum_encoder_forward.4} parent=1 // pred_region
      %28 = dma.done [#allocation3], 32
    $region21: #{spectrum_encoder_forward.4} parent=1 // pred_fallthru
      _
    %v30 = vld [vmem:[%s0] sm:$0x7]
    %v31 = vld [vmem:[%s1] sm:$0x7]
    %v33 = vunpack.c.l.b16 %v30
    %v34 = vpack.c.b16 %v33, %v33
    %v36 = vshrl.u32 %v34, 16
    %v38 = vshll.u32 %v34, 16
    %v40 = vrot.slane %v38, 1
    %v41 = vor.u32 %v36, %v40
    %v42 = vrot.slane %v34, 1
    %v43 = vrot.slane %v36, 1
    %v44 = vrot.slane %v38, 2
    %v45 = vor.u32 %v43, %v44
    %v47 = vunpack.c.l.b16 %v31
    %v48 = vpack.c.b16 %v47, %v47
    %v50 = vshrl.u32 %v48, 16
    %v52 = vshll.u32 %v48, 16
    %v54 = vrot.slane %v52, 1
    %v55 = vor.u32 %v50, %v54
    %v56 = vrot.slane %v48, 1
    %s57 = scalar_lea.vmem %s0, 4
    %v58 = vld [vmem:[%s57] sm:$0x7]
    %s59 = scalar_lea.vmem %s1, 4
    %v60 = vld [vmem:[%s59] sm:$0x7]
    %v62 = vunpack.c.l.b16 %v58
    %v63 = vpack.c.b16 %v62, %v62
    %v65 = vshrl.u32 %v63, 16
    %v67 = vshll.u32 %v63, 16
    %v69 = vrot.slane %v67, 1
    %v70 = vor.u32 %v65, %v69
    %v71 = vrot.slane %v63, 1
    %v72 = vrot.slane %v65, 1
    %v73 = vrot.slane %v67, 2
    %v74 = vor.u32 %v72, %v73
    %v76 = vunpack.c.l.b16 %v60
    %v77 = vpack.c.b16 %v76, %v76
    %v79 = vshrl.u32 %v77, 16
    %v81 = vshll.u32 %v77, 16
    %v83 = vrot.slane %v81, 1
    %v84 = vor.u32 %v79, %v83
    %v85 = vrot.slane %v77, 1
    %s86 = scalar_lea.vmem %s0, 8
    %v87 = vld [vmem:[%s86] sm:$0x7]
    %s88 = scalar_lea.vmem %s1, 8
    %v89 = vld [vmem:[%s88] sm:$0x7]
    %v91 = vunpack.c.l.b16 %v87
    %v92 = vpack.c.b16 %v91, %v91
    %v94 = vshrl.u32 %v92, 16
    %v96 = vshll.u32 %v92, 16
    %v98 = vrot.slane %v96, 1
    %v99 = vor.u32 %v94, %v98
    %v100 = vrot.slane %v92, 1
    %v101 = vrot.slane %v94, 1
    %v102 = vrot.slane %v96, 2
    %v103 = vor.u32 %v101, %v102
    %v105 = vunpack.c.l.b16 %v89
    %v106 = vpack.c.b16 %v105, %v105
    %v108 = vshrl.u32 %v106, 16
    %v110 = vshll.u32 %v106, 16
    %v112 = vrot.slane %v110, 1
    %v113 = vor.u32 %v108, %v112
    %v114 = vrot.slane %v106, 1
    %s115 = scalar_lea.vmem %s0, 12
    %v116 = vld [vmem:[%s115] sm:$0x7]
    %s117 = scalar_lea.vmem %s1, 12
    %v118 = vld [vmem:[%s117] sm:$0x7]
    %v120 = vunpack.c.l.b16 %v116
    %v121 = vpack.c.b16 %v120, %v120
    %v123 = vshrl.u32 %v121, 16
    %v125 = vshll.u32 %v121, 16
    %v127 = vrot.slane %v125, 1
    %v128 = vor.u32 %v123, %v127
    %v129 = vrot.slane %v121, 1
    %v130 = vrot.slane %v123, 1
    %v131 = vrot.slane %v125, 2
    %v132 = vor.u32 %v130, %v131
    %v134 = vunpack.c.l.b16 %v118
    %v135 = vpack.c.b16 %v134, %v134
    %v137 = vshrl.u32 %v135, 16
    %v139 = vshll.u32 %v135, 16
    %v141 = vrot.slane %v139, 1
    %v142 = vor.u32 %v137, %v141
    %v143 = vrot.slane %v135, 1
    %s144 = scalar_lea.vmem %s0, 16
    %v145 = vld [vmem:[%s144] sm:$0x7]
    %s146 = scalar_lea.vmem %s1, 16
    %v147 = vld [vmem:[%s146] sm:$0x7]
    %v149 = vunpack.c.l.b16 %v145
    %v150 = vpack.c.b16 %v149, %v149
    %v152 = vshrl.u32 %v150, 16
    %v154 = vshll.u32 %v150, 16
    %v156 = vrot.slane %v154, 1
    %v157 = vor.u32 %v152, %v156
    %v158 = vrot.slane %v150, 1
    %v159 = vrot.slane %v152, 1
    %v160 = vrot.slane %v154, 2
    %v161 = vor.u32 %v159, %v160
    %v163 = vunpack.c.l.b16 %v147
    %v164 = vpack.c.b16 %v163, %v163
    %v166 = vshrl.u32 %v164, 16
    %v168 = vshll.u32 %v164, 16
    %v170 = vrot.slane %v168, 1
    %v171 = vor.u32 %v166, %v170
    %v172 = vrot.slane %v164, 1
    %s173 = scalar_lea.vmem %s0, 20
    %v174 = vld [vmem:[%s173] sm:$0x7]
    %s175 = scalar_lea.vmem %s1, 20
    %v176 = vld [vmem:[%s175] sm:$0x7]
    %v178 = vunpack.c.l.b16 %v174
    %v179 = vpack.c.b16 %v178, %v178
    %v181 = vshrl.u32 %v179, 16
    %v183 = vshll.u32 %v179, 16
    %v185 = vrot.slane %v183, 1
    %v186 = vor.u32 %v181, %v185
    %v187 = vrot.slane %v179, 1
    %v188 = vrot.slane %v181, 1
    %v189 = vrot.slane %v183, 2
    %v190 = vor.u32 %v188, %v189
    %v192 = vunpack.c.l.b16 %v176
    %v193 = vpack.c.b16 %v192, %v192
    %v195 = vshrl.u32 %v193, 16
    %v197 = vshll.u32 %v193, 16
    %v199 = vrot.slane %v197, 1
    %v200 = vor.u32 %v195, %v199
    %v201 = vrot.slane %v193, 1
    %s202 = scalar_lea.vmem %s0, 24
    %v203 = vld [vmem:[%s202] sm:$0x7]
    %s204 = scalar_lea.vmem %s1, 24
    %v205 = vld [vmem:[%s204] sm:$0x7]
    %v207 = vunpack.c.l.b16 %v203
    %v208 = vpack.c.b16 %v207, %v207
    %v210 = vshrl.u32 %v208, 16
    %v212 = vshll.u32 %v208, 16
    %v214 = vrot.slane %v212, 1
    %v215 = vor.u32 %v210, %v214
    %v216 = vrot.slane %v208, 1
    %v217 = vrot.slane %v210, 1
    %v218 = vrot.slane %v212, 2
    %v219 = vor.u32 %v217, %v218
    %v221 = vunpack.c.l.b16 %v205
    %v222 = vpack.c.b16 %v221, %v221
    %v224 = vshrl.u32 %v222, 16
    %v226 = vshll.u32 %v222, 16
    %v228 = vrot.slane %v226, 1
    %v229 = vor.u32 %v224, %v228
    %v230 = vrot.slane %v222, 1
    %s231 = scalar_lea.vmem %s0, 28
    %v232 = vld [vmem:[%s231] sm:$0x7]
    %s233 = scalar_lea.vmem %s1, 28
    %v234 = vld [vmem:[%s233] sm:$0x7]
    %v236 = vunpack.c.l.b16 %v232
    %v237 = vpack.c.b16 %v236, %v236
    %v239 = vshrl.u32 %v237, 16
    %v241 = vshll.u32 %v237, 16
    %v243 = vrot.slane %v241, 1
    %v244 = vor.u32 %v239, %v243
    %v245 = vrot.slane %v237, 1
    %v246 = vrot.slane %v239, 1
    %v247 = vrot.slane %v241, 2
    %v248 = vor.u32 %v246, %v247
    %v250 = vunpack.c.l.b16 %v234
    %v251 = vpack.c.b16 %v250, %v250
    %v253 = vshrl.u32 %v251, 16
    %v255 = vshll.u32 %v251, 16
    %v257 = vrot.slane %v255, 1
    %v258 = vor.u32 %v253, %v257
    %v259 = vrot.slane %v251, 1
    %v260 = vrot.slane %v58, 7
    %v261 = vrot.slane %v70, 7
    %v262 = vrot.slane %v71, 7
    %v263 = vrot.slane %v74, 7
    %v264 = vrot.slane %v60, 7
    %v265 = vrot.slane %v84, 7
    %v266 = vrot.slane %v85, 7
    %v267 = vrot.slane %v87, 6
    %v268 = vrot.slane %v99, 6
    %v269 = vrot.slane %v100, 6
    %v270 = vrot.slane %v103, 6
    %v271 = vrot.slane %v89, 6
    %v272 = vrot.slane %v113, 6
    %v273 = vrot.slane %v114, 6
    %v274 = vrot.slane %v116, 5
    %v275 = vrot.slane %v128, 5
    %v276 = vrot.slane %v129, 5
    %v277 = vrot.slane %v132, 5
    %v278 = vrot.slane %v118, 5
    %v279 = vrot.slane %v142, 5
    %v280 = vrot.slane %v143, 5
    %v281 = vrot.slane %v145, 4
    %v282 = vrot.slane %v157, 4
    %v283 = vrot.slane %v158, 4
    %v284 = vrot.slane %v161, 4
    %v285 = vrot.slane %v147, 4
    %v286 = vrot.slane %v171, 4
    %v287 = vrot.slane %v172, 4
    %v288 = vrot.slane %v174, 3
    %v289 = vrot.slane %v186, 3
    %v290 = vrot.slane %v187, 3
    %v291 = vrot.slane %v190, 3
    %v292 = vrot.slane %v176, 3
    %v293 = vrot.slane %v200, 3
    %v294 = vrot.slane %v201, 3
    %v295 = vrot.slane %v203, 2
    %v296 = vrot.slane %v215, 2
    %v297 = vrot.slane %v216, 2
    %v298 = vrot.slane %v219, 2
    %v299 = vrot.slane %v205, 2
    %v300 = vrot.slane %v229, 2
    %v301 = vrot.slane %v230, 2
    %v302 = vrot.slane %v232, 1
    %v303 = vrot.slane %v244, 1
    %v304 = vrot.slane %v245, 1
    %v305 = vrot.slane %v248, 1
    %v306 = vrot.slane %v234, 1
    %v307 = vrot.slane %v258, 1
    %v308 = vrot.slane %v259, 1
    %vm309 = vcmask 1040384
    %v312 = vsel %vm309, %v30, %v260
    %v315 = vsel %vm309, %v41, %v261
    %v318 = vsel %vm309, %v42, %v262
    %v321 = vsel %vm309, %v45, %v263
    %v324 = vsel %vm309, %v31, %v264
    %v327 = vsel %vm309, %v55, %v265
    %v330 = vsel %vm309, %v56, %v266
    %vm331 = vcmask 1041408
    %v333 = vsel %vm331, %v312, %v267
    %v335 = vsel %vm331, %v315, %v268
    %v337 = vsel %vm331, %v318, %v269
    %v339 = vsel %vm331, %v321, %v270
    %v341 = vsel %vm331, %v324, %v271
    %v343 = vsel %vm331, %v327, %v272
    %v345 = vsel %vm331, %v330, %v273
    %vm346 = vcmask 1042432
    %v348 = vsel %vm346, %v333, %v274
    %v350 = vsel %vm346, %v335, %v275
    %v352 = vsel %vm346, %v337, %v276
    %v354 = vsel %vm346, %v339, %v277
    %v356 = vsel %vm346, %v341, %v278
    %v358 = vsel %vm346, %v343, %v279
    %v360 = vsel %vm346, %v345, %v280
    %vm361 = vcmask 1043456
    %v363 = vsel %vm361, %v348, %v281
    %v365 = vsel %vm361, %v350, %v282
    %v367 = vsel %vm361, %v352, %v283
    %v369 = vsel %vm361, %v354, %v284
    %v371 = vsel %vm361, %v356, %v285
    %v373 = vsel %vm361, %v358, %v286
    %v375 = vsel %vm361, %v360, %v287
    %vm376 = vcmask 1044480
    %v378 = vsel %vm376, %v363, %v288
    %v380 = vsel %vm376, %v365, %v289
    %v382 = vsel %vm376, %v367, %v290
    %v384 = vsel %vm376, %v369, %v291
    %v386 = vsel %vm376, %v371, %v292
    %v388 = vsel %vm376, %v373, %v293
    %v390 = vsel %vm376, %v375, %v294
    %vm391 = vcmask 1045504
    %v393 = vsel %vm391, %v378, %v295
    %v395 = vsel %vm391, %v380, %v296
    %v397 = vsel %vm391, %v382, %v297
    %v399 = vsel %vm391, %v384, %v298
    %v401 = vsel %vm391, %v386, %v299
    %v403 = vsel %vm391, %v388, %v300
    %v405 = vsel %vm391, %v390, %v301
    %vm406 = vcmask 1046528
    %v408 = vsel %vm406, %v393, %v302
    %v411 = vsel %vm406, %v395, %v303
    %v414 = vsel %vm406, %v397, %v304
    %v417 = vsel %vm406, %v399, %v305
    %v420 = vsel %vm406, %v401, %v306
    %v423 = vsel %vm406, %v403, %v307
    %v426 = vsel %vm406, %v405, %v308
    %v428 = vld [vmem:[%s2] sm:$0xff]
    %v429 = vld [vmem:[%s2 + $0x8] sm:$0xff]
    %v430 = vld [vmem:[%s2 + $0x10] sm:$0xff]
    %v431 = vld [vmem:[%s2 + $0x18] sm:$0xff]
    %v432 = vld [vmem:[%s2 + $0x20] sm:$0xff]
    %v433 = vld [vmem:[%s2 + $0x28] sm:$0xff]
    %v434 = vld [vmem:[%s2 + $0x30] sm:$0xff]
    %v435 = vld [vmem:[%s2 + $0x38] sm:$0xff]
    %v436 = vld [vmem:[%s2 + $0x40] sm:$0xff]
    %v437 = vld [vmem:[%s2 + $0x48] sm:$0xff]
    %v438 = vld [vmem:[%s2 + $0x50] sm:$0xff]
    %v439 = vld [vmem:[%s2 + $0x58] sm:$0xff]
    %v440 = vld [vmem:[%s2 + $0x60] sm:$0xff]
    %v441 = vld [vmem:[%s2 + $0x68] sm:$0xff]
    %v442 = vld [vmem:[%s2 + $0x70] sm:$0xff]
    %v443 = vld [vmem:[%s2 + $0x78] sm:$0xff]
    %v444 = vld [vmem:[%s2 + $0x80] sm:$0xff]
    %v445 = vld [vmem:[%s2 + $0x88] sm:$0xff]
    %v446 = vld [vmem:[%s2 + $0x90] sm:$0xff]
    %v447 = vld [vmem:[%s2 + $0x98] sm:$0xff]
    %v448 = vld [vmem:[%s2 + $0xa0] sm:$0xff]
    %v449 = vld [vmem:[%s2 + $0xa8] sm:$0xff]
    %v450 = vld [vmem:[%s2 + $0xb0] sm:$0xff]
    %v451 = vld [vmem:[%s2 + $0xb8] sm:$0xff]
    %v452 = vld [vmem:[%s2 + $0xc0] sm:$0xff]
    %v453 = vld [vmem:[%s2 + $0xc8] sm:$0xff]
    %v454 = vld [vmem:[%s2 + $0xd0] sm:$0xff]
    %v455 = vld [vmem:[%s2 + $0xd8] sm:$0xff]
    %v456 = vld [vmem:[%s2 + $0xe0] sm:$0xff]
    %v457 = vld [vmem:[%s2 + $0xe8] sm:$0xff]
    %v458 = vld [vmem:[%s2 + $0xf0] sm:$0xff]
    %v459 = vld [vmem:[%s2 + $0xf8] sm:$0xff]
    %v460 = vld [vmem:[%s2 + $0x100] sm:$0xff]
    %v461 = vld [vmem:[%s2 + $0x108] sm:$0xff]
    %v462 = vld [vmem:[%s2 + $0x110] sm:$0xff]
    %v463 = vld [vmem:[%s2 + $0x118] sm:$0xff]
    %v464 = vld [vmem:[%s2 + $0x120] sm:$0xff]
    %v465 = vld [vmem:[%s2 + $0x128] sm:$0xff]
    %v466 = vld [vmem:[%s2 + $0x130] sm:$0xff]
    %v467 = vld [vmem:[%s2 + $0x138] sm:$0xff]
    %v468 = vld [vmem:[%s2 + $0x140] sm:$0xff]
    %v469 = vld [vmem:[%s2 + $0x148] sm:$0xff]
    %v470 = vld [vmem:[%s2 + $0x150] sm:$0xff]
    %v471 = vld [vmem:[%s2 + $0x158] sm:$0xff]
    %v472 = vld [vmem:[%s2 + $0x160] sm:$0xff]
    %v473 = vld [vmem:[%s2 + $0x168] sm:$0xff]
    %v474 = vld [vmem:[%s2 + $0x170] sm:$0xff]
    %v475 = vld [vmem:[%s2 + $0x178] sm:$0xff]
    %v476 = vld [vmem:[%s2 + $0x180] sm:$0xff]
    %v477 = vld [vmem:[%s2 + $0x188] sm:$0xff]
    %v478 = vld [vmem:[%s2 + $0x190] sm:$0xff]
    %v479 = vld [vmem:[%s2 + $0x198] sm:$0xff]
    %v480 = vld [vmem:[%s2 + $0x1a0] sm:$0xff]
    %v481 = vld [vmem:[%s2 + $0x1a8] sm:$0xff]
    %v482 = vld [vmem:[%s2 + $0x1b0] sm:$0xff]
    %v483 = vld [vmem:[%s2 + $0x1b8] sm:$0xff]
    %v484 = vld [vmem:[%s2 + $0x1c0] sm:$0xff]
    %v485 = vld [vmem:[%s2 + $0x1c8] sm:$0xff]
    %v486 = vld [vmem:[%s2 + $0x1d0] sm:$0xff]
    %v487 = vld [vmem:[%s2 + $0x1d8] sm:$0xff]
    %v488 = vld [vmem:[%s2 + $0x1e0] sm:$0xff]
    %v489 = vld [vmem:[%s2 + $0x1e8] sm:$0xff]
    %v490 = vld [vmem:[%s2 + $0x1f0] sm:$0xff]
    %v491 = vld [vmem:[%s2 + $0x1f8] sm:$0xff]
    %v492 = vld [vmem:[%s2 + $0x200] sm:$0xff]
    %v493 = vld [vmem:[%s2 + $0x208] sm:$0xff]
    %v494 = vld [vmem:[%s2 + $0x210] sm:$0xff]
    %v495 = vld [vmem:[%s2 + $0x218] sm:$0xff]
    %v496 = vld [vmem:[%s2 + $0x220] sm:$0xff]
    %v497 = vld [vmem:[%s2 + $0x228] sm:$0xff]
    %v498 = vld [vmem:[%s2 + $0x230] sm:$0xff]
    %v499 = vld [vmem:[%s2 + $0x238] sm:$0xff]
    %v500 = vld [vmem:[%s2 + $0x240] sm:$0xff]
    %v501 = vld [vmem:[%s2 + $0x248] sm:$0xff]
    %v502 = vld [vmem:[%s2 + $0x250] sm:$0xff]
    %v503 = vld [vmem:[%s2 + $0x258] sm:$0xff]
    %v504 = vld [vmem:[%s2 + $0x260] sm:$0xff]
    %v505 = vld [vmem:[%s2 + $0x268] sm:$0xff]
    %v506 = vld [vmem:[%s2 + $0x270] sm:$0xff]
    %v507 = vld [vmem:[%s2 + $0x278] sm:$0xff]
    %v508 = vld [vmem:[%s2 + $0x280] sm:$0xff]
    %v509 = vld [vmem:[%s2 + $0x288] sm:$0xff]
    %v510 = vld [vmem:[%s2 + $0x290] sm:$0xff]
    %v511 = vld [vmem:[%s2 + $0x298] sm:$0xff]
    %v512 = vld [vmem:[%s2 + $0x2a0] sm:$0xff]
    %v513 = vld [vmem:[%s2 + $0x2a8] sm:$0xff]
    %v514 = vld [vmem:[%s2 + $0x2b0] sm:$0xff]
    %v515 = vld [vmem:[%s2 + $0x2b8] sm:$0xff]
    %v516 = vld [vmem:[%s2 + $0x2c0] sm:$0xff]
    %v517 = vld [vmem:[%s2 + $0x2c8] sm:$0xff]
    %v518 = vld [vmem:[%s2 + $0x2d0] sm:$0xff]
    %v519 = vld [vmem:[%s2 + $0x2d8] sm:$0xff]
    %v520 = vld [vmem:[%s2 + $0x2e0] sm:$0xff]
    %v521 = vld [vmem:[%s2 + $0x2e8] sm:$0xff]
    %v522 = vld [vmem:[%s2 + $0x2f0] sm:$0xff]
    %v523 = vld [vmem:[%s2 + $0x2f8] sm:$0xff]
    %v524 = vld [vmem:[%s2 + $0x300] sm:$0xff]
    %v525 = vld [vmem:[%s2 + $0x308] sm:$0xff]
    %v526 = vld [vmem:[%s2 + $0x310] sm:$0xff]
    %v527 = vld [vmem:[%s2 + $0x318] sm:$0xff]
    %v528 = vld [vmem:[%s2 + $0x320] sm:$0xff]
    %v529 = vld [vmem:[%s2 + $0x328] sm:$0xff]
    %v530 = vld [vmem:[%s2 + $0x330] sm:$0xff]
    %v531 = vld [vmem:[%s2 + $0x338] sm:$0xff]
    %v532 = vld [vmem:[%s2 + $0x340] sm:$0xff]
    %v533 = vld [vmem:[%s2 + $0x348] sm:$0xff]
    %v534 = vld [vmem:[%s2 + $0x350] sm:$0xff]
    %v535 = vld [vmem:[%s2 + $0x358] sm:$0xff]
    %v536 = vld [vmem:[%s2 + $0x360] sm:$0xff]
    %v537 = vld [vmem:[%s2 + $0x368] sm:$0xff]
    %v538 = vld [vmem:[%s2 + $0x370] sm:$0xff]
    %v539 = vld [vmem:[%s2 + $0x378] sm:$0xff]
    %v540 = vld [vmem:[#allocation2] sm:$0x3]
    %v542 = vlaneseq
    %v543 = vshrl.u32 %v542, 7
    %v544 = vsub.s32 0, %v543
    %v545 = vrot.slane %v540, %v544
    %v546 = vlaneseq
    %v547 = vshrl.u32 %v546, 7
    %v548 = vsub.s32 1, %v547
    %v549 = vrot.slane %v540, %v548
    %v664 = vunpack.c.l.b16 %v428
    %v665 = vunpack.c.h.b16 %v428
    %v666 = vunpack.c.l.b16 %v429
    %v667 = vunpack.c.h.b16 %v429
    %v668 = vunpack.c.l.b16 %v430
    %v669 = vunpack.c.h.b16 %v430
    %v670 = vunpack.c.l.b16 %v431
    %v671 = vunpack.c.h.b16 %v431
    %v672 = vunpack.c.l.b16 %v432
    %v673 = vunpack.c.h.b16 %v432
    %v674 = vunpack.c.l.b16 %v433
    %v675 = vunpack.c.h.b16 %v433
    %v676 = vunpack.c.l.b16 %v434
    %v677 = vunpack.c.h.b16 %v434
    %v678 = vunpack.c.l.b16 %v435
    %v679 = vunpack.c.h.b16 %v435
    %v680 = vunpack.c.l.b16 %v436
    %v681 = vunpack.c.h.b16 %v436
    %v682 = vunpack.c.l.b16 %v437
    %v683 = vunpack.c.h.b16 %v437
    %v684 = vunpack.c.l.b16 %v438
    %v685 = vunpack.c.h.b16 %v438
    %v686 = vunpack.c.l.b16 %v439
    %v687 = vunpack.c.h.b16 %v439
    %v688 = vunpack.c.l.b16 %v440
    %v689 = vunpack.c.h.b16 %v440
    %v690 = vunpack.c.l.b16 %v441
    %v691 = vunpack.c.h.b16 %v441
    %v692 = vunpack.c.l.b16 %v442
    %v693 = vunpack.c.h.b16 %v442
    %v694 = vunpack.c.l.b16 %v443
    %v695 = vunpack.c.h.b16 %v443
    %v696 = vunpack.c.l.b16 %v444
    %v697 = vunpack.c.h.b16 %v444
    %v698 = vunpack.c.l.b16 %v445
    %v699 = vunpack.c.h.b16 %v445
    %v700 = vunpack.c.l.b16 %v446
    %v701 = vunpack.c.h.b16 %v446
    %v702 = vunpack.c.l.b16 %v447
    %v703 = vunpack.c.h.b16 %v447
    %v704 = vunpack.c.l.b16 %v448
    %v705 = vunpack.c.h.b16 %v448
    %v706 = vunpack.c.l.b16 %v449
    %v707 = vunpack.c.h.b16 %v449
    %v708 = vunpack.c.l.b16 %v450
    %v709 = vunpack.c.h.b16 %v450
    %v710 = vunpack.c.l.b16 %v451
    %v711 = vunpack.c.h.b16 %v451
    %v712 = vunpack.c.l.b16 %v452
    %v713 = vunpack.c.h.b16 %v452
    %v714 = vunpack.c.l.b16 %v453
    %v715 = vunpack.c.h.b16 %v453
    %v716 = vunpack.c.l.b16 %v454
    %v717 = vunpack.c.h.b16 %v454
    %v718 = vunpack.c.l.b16 %v455
    %v719 = vunpack.c.h.b16 %v455
    %v720 = vunpack.c.l.b16 %v456
    %v721 = vunpack.c.h.b16 %v456
    %v722 = vunpack.c.l.b16 %v457
    %v723 = vunpack.c.h.b16 %v457
    %v724 = vunpack.c.l.b16 %v458
    %v725 = vunpack.c.h.b16 %v458
    %v726 = vunpack.c.l.b16 %v459
    %v727 = vunpack.c.h.b16 %v459
    %v728 = vunpack.c.l.b16 %v460
    %v729 = vunpack.c.h.b16 %v460
    %v730 = vunpack.c.l.b16 %v461
    %v731 = vunpack.c.h.b16 %v461
    %v732 = vunpack.c.l.b16 %v462
    %v733 = vunpack.c.h.b16 %v462
    %v734 = vunpack.c.l.b16 %v463
    %v735 = vunpack.c.h.b16 %v463
    %v736 = vunpack.c.l.b16 %v464
    %v737 = vunpack.c.h.b16 %v464
    %v738 = vunpack.c.l.b16 %v465
    %v739 = vunpack.c.h.b16 %v465
    %v740 = vunpack.c.l.b16 %v466
    %v741 = vunpack.c.h.b16 %v466
    %v742 = vunpack.c.l.b16 %v467
    %v743 = vunpack.c.h.b16 %v467
    %v744 = vunpack.c.l.b16 %v468
    %v745 = vunpack.c.h.b16 %v468
    %v746 = vunpack.c.l.b16 %v469
    %v747 = vunpack.c.h.b16 %v469
    %v748 = vunpack.c.l.b16 %v470
    %v749 = vunpack.c.h.b16 %v470
    %v750 = vunpack.c.l.b16 %v471
    %v751 = vunpack.c.h.b16 %v471
    %v752 = vunpack.c.l.b16 %v472
    %v753 = vunpack.c.h.b16 %v472
    %v754 = vunpack.c.l.b16 %v473
    %v755 = vunpack.c.h.b16 %v473
    %v756 = vunpack.c.l.b16 %v474
    %v757 = vunpack.c.h.b16 %v474
    %v758 = vunpack.c.l.b16 %v475
    %v759 = vunpack.c.h.b16 %v475
    %v760 = vunpack.c.l.b16 %v476
    %v761 = vunpack.c.h.b16 %v476
    %v762 = vunpack.c.l.b16 %v477
    %v763 = vunpack.c.h.b16 %v477
    %v764 = vunpack.c.l.b16 %v478
    %v765 = vunpack.c.h.b16 %v478
    %v766 = vunpack.c.l.b16 %v479
    %v767 = vunpack.c.h.b16 %v479
    %v768 = vunpack.c.l.b16 %v480
    %v769 = vunpack.c.h.b16 %v480
    %v770 = vunpack.c.l.b16 %v481
    %v771 = vunpack.c.h.b16 %v481
    %v772 = vunpack.c.l.b16 %v482
    %v773 = vunpack.c.h.b16 %v482
    %v774 = vunpack.c.l.b16 %v483
    %v775 = vunpack.c.h.b16 %v483
    %v776 = vunpack.c.l.b16 %v484
    %v777 = vunpack.c.h.b16 %v484
    %v778 = vunpack.c.l.b16 %v485
    %v779 = vunpack.c.h.b16 %v485
    %v780 = vunpack.c.l.b16 %v486
    %v781 = vunpack.c.h.b16 %v486
    %v782 = vunpack.c.l.b16 %v487
    %v783 = vunpack.c.h.b16 %v487
    %v784 = vunpack.c.l.b16 %v488
    %v785 = vunpack.c.h.b16 %v488
    %v786 = vunpack.c.l.b16 %v489
    %v787 = vunpack.c.h.b16 %v489
    %v788 = vunpack.c.l.b16 %v490
    %v789 = vunpack.c.h.b16 %v490
    %v790 = vunpack.c.l.b16 %v491
    %v791 = vunpack.c.h.b16 %v491
    %v792 = vunpack.c.l.b16 %v492
    %v793 = vunpack.c.h.b16 %v492
    %v794 = vunpack.c.l.b16 %v493
    %v795 = vunpack.c.h.b16 %v493
    %v796 = vunpack.c.l.b16 %v494
    %v797 = vunpack.c.h.b16 %v494
    %v798 = vunpack.c.l.b16 %v495
    %v799 = vunpack.c.h.b16 %v495
    %v800 = vunpack.c.l.b16 %v496
    %v801 = vunpack.c.h.b16 %v496
    %v802 = vunpack.c.l.b16 %v497
    %v803 = vunpack.c.h.b16 %v497
    %v804 = vunpack.c.l.b16 %v498
    %v805 = vunpack.c.h.b16 %v498
    %v806 = vunpack.c.l.b16 %v499
    %v807 = vunpack.c.h.b16 %v499
    %v808 = vunpack.c.l.b16 %v500
    %v809 = vunpack.c.h.b16 %v500
    %v810 = vunpack.c.l.b16 %v501
    %v811 = vunpack.c.h.b16 %v501
    %v812 = vunpack.c.l.b16 %v502
    %v813 = vunpack.c.h.b16 %v502
    %v814 = vunpack.c.l.b16 %v503
    %v815 = vunpack.c.h.b16 %v503
    %v816 = vunpack.c.l.b16 %v504
    %v817 = vunpack.c.h.b16 %v504
    %v818 = vunpack.c.l.b16 %v505
    %v819 = vunpack.c.h.b16 %v505
    %v820 = vunpack.c.l.b16 %v506
    %v821 = vunpack.c.h.b16 %v506
    %v822 = vunpack.c.l.b16 %v507
    %v823 = vunpack.c.h.b16 %v507
    %v824 = vunpack.c.l.b16 %v508
    %v825 = vunpack.c.h.b16 %v508
    %v826 = vunpack.c.l.b16 %v509
    %v827 = vunpack.c.h.b16 %v509
    %v828 = vunpack.c.l.b16 %v510
    %v829 = vunpack.c.h.b16 %v510
    %v830 = vunpack.c.l.b16 %v511
    %v831 = vunpack.c.h.b16 %v511
    %v832 = vunpack.c.l.b16 %v512
    %v833 = vunpack.c.h.b16 %v512
    %v834 = vunpack.c.l.b16 %v513
    %v835 = vunpack.c.h.b16 %v513
    %v836 = vunpack.c.l.b16 %v514
    %v837 = vunpack.c.h.b16 %v514
    %v838 = vunpack.c.l.b16 %v515
    %v839 = vunpack.c.h.b16 %v515
    %v840 = vunpack.c.l.b16 %v516
    %v841 = vunpack.c.h.b16 %v516
    %v842 = vunpack.c.l.b16 %v517
    %v843 = vunpack.c.h.b16 %v517
    %v844 = vunpack.c.l.b16 %v518
    %v845 = vunpack.c.h.b16 %v518
    %v846 = vunpack.c.l.b16 %v519
    %v847 = vunpack.c.h.b16 %v519
    %v848 = vunpack.c.l.b16 %v520
    %v849 = vunpack.c.h.b16 %v520
    %v850 = vunpack.c.l.b16 %v521
    %v851 = vunpack.c.h.b16 %v521
    %v852 = vunpack.c.l.b16 %v522
    %v853 = vunpack.c.h.b16 %v522
    %v854 = vunpack.c.l.b16 %v523
    %v855 = vunpack.c.h.b16 %v523
    %v856 = vunpack.c.l.b16 %v524
    %v857 = vunpack.c.h.b16 %v524
    %v858 = vunpack.c.l.b16 %v525
    %v859 = vunpack.c.h.b16 %v525
    %v860 = vunpack.c.l.b16 %v526
    %v861 = vunpack.c.h.b16 %v526
    %v862 = vunpack.c.l.b16 %v527
    %v863 = vunpack.c.h.b16 %v527
    %v864 = vunpack.c.l.b16 %v528
    %v865 = vunpack.c.h.b16 %v528
    %v866 = vunpack.c.l.b16 %v529
    %v867 = vunpack.c.h.b16 %v529
    %v868 = vunpack.c.l.b16 %v530
    %v869 = vunpack.c.h.b16 %v530
    %v870 = vunpack.c.l.b16 %v531
    %v871 = vunpack.c.h.b16 %v531
    %v872 = vunpack.c.l.b16 %v532
    %v873 = vunpack.c.h.b16 %v532
    %v874 = vunpack.c.l.b16 %v533
    %v875 = vunpack.c.h.b16 %v533
    %v876 = vunpack.c.l.b16 %v534
    %v877 = vunpack.c.h.b16 %v534
    %v878 = vunpack.c.l.b16 %v535
    %v879 = vunpack.c.h.b16 %v535
    %v880 = vunpack.c.l.b16 %v536
    %v881 = vunpack.c.h.b16 %v536
    %v882 = vunpack.c.l.b16 %v537
    %v883 = vunpack.c.h.b16 %v537
    %v884 = vunpack.c.l.b16 %v538
    %v885 = vunpack.c.h.b16 %v538
    %v886 = vunpack.c.l.b16 %v539
    %v887 = vunpack.c.h.b16 %v539
    %v888 = vpack.c.b16 %v666, %v664
    %v889 = vpack.c.b16 %v667, %v665
    %v890 = vpack.c.b16 %v670, %v668
    %v891 = vpack.c.b16 %v671, %v669
    %v892 = vpack.c.b16 %v674, %v672
    %v893 = vpack.c.b16 %v675, %v673
    %v894 = vpack.c.b16 %v678, %v676
    %v895 = vpack.c.b16 %v679, %v677
    %v896 = vpack.c.b16 %v682, %v680
    %v897 = vpack.c.b16 %v683, %v681
    %v898 = vpack.c.b16 %v686, %v684
    %v899 = vpack.c.b16 %v687, %v685
    %v900 = vpack.c.b16 %v690, %v688
    %v901 = vpack.c.b16 %v691, %v689
    %v902 = vpack.c.b16 %v694, %v692
    %v903 = vpack.c.b16 %v695, %v693
    %v904 = vpack.c.b16 %v698, %v696
    %v905 = vpack.c.b16 %v699, %v697
    %v906 = vpack.c.b16 %v702, %v700
    %v907 = vpack.c.b16 %v703, %v701
    %v908 = vpack.c.b16 %v706, %v704
    %v909 = vpack.c.b16 %v707, %v705
    %v910 = vpack.c.b16 %v710, %v708
    %v911 = vpack.c.b16 %v711, %v709
    %v912 = vpack.c.b16 %v714, %v712
    %v913 = vpack.c.b16 %v715, %v713
    %v914 = vpack.c.b16 %v718, %v716
    %v915 = vpack.c.b16 %v719, %v717
    %v916 = vpack.c.b16 %v722, %v720
    %v917 = vpack.c.b16 %v723, %v721
    %v918 = vpack.c.b16 %v726, %v724
    %v919 = vpack.c.b16 %v727, %v725
    %v920 = vpack.c.b16 %v730, %v728
    %v921 = vpack.c.b16 %v731, %v729
    %v922 = vpack.c.b16 %v734, %v732
    %v923 = vpack.c.b16 %v735, %v733
    %v924 = vpack.c.b16 %v738, %v736
    %v925 = vpack.c.b16 %v739, %v737
    %v926 = vpack.c.b16 %v742, %v740
    %v927 = vpack.c.b16 %v743, %v741
    %v928 = vpack.c.b16 %v746, %v744
    %v929 = vpack.c.b16 %v747, %v745
    %v930 = vpack.c.b16 %v750, %v748
    %v931 = vpack.c.b16 %v751, %v749
    %v932 = vpack.c.b16 %v754, %v752
    %v933 = vpack.c.b16 %v755, %v753
    %v934 = vpack.c.b16 %v758, %v756
    %v935 = vpack.c.b16 %v759, %v757
    %v936 = vpack.c.b16 %v762, %v760
    %v937 = vpack.c.b16 %v763, %v761
    %v938 = vpack.c.b16 %v766, %v764
    %v939 = vpack.c.b16 %v767, %v765
    %v940 = vpack.c.b16 %v770, %v768
    %v941 = vpack.c.b16 %v771, %v769
    %v942 = vpack.c.b16 %v774, %v772
    %v943 = vpack.c.b16 %v775, %v773
    %v944 = vpack.c.b16 %v778, %v776
    %v945 = vpack.c.b16 %v779, %v777
    %v946 = vpack.c.b16 %v782, %v780
    %v947 = vpack.c.b16 %v783, %v781
    %v948 = vpack.c.b16 %v786, %v784
    %v949 = vpack.c.b16 %v787, %v785
    %v950 = vpack.c.b16 %v790, %v788
    %v951 = vpack.c.b16 %v791, %v789
    %v952 = vpack.c.b16 %v794, %v792
    %v953 = vpack.c.b16 %v795, %v793
    %v954 = vpack.c.b16 %v798, %v796
    %v955 = vpack.c.b16 %v799, %v797
    %v956 = vpack.c.b16 %v802, %v800
    %v957 = vpack.c.b16 %v803, %v801
    %v958 = vpack.c.b16 %v806, %v804
    %v959 = vpack.c.b16 %v807, %v805
    %v960 = vpack.c.b16 %v810, %v808
    %v961 = vpack.c.b16 %v811, %v809
    %v962 = vpack.c.b16 %v814, %v812
    %v963 = vpack.c.b16 %v815, %v813
    %v964 = vpack.c.b16 %v818, %v816
    %v965 = vpack.c.b16 %v819, %v817
    %v966 = vpack.c.b16 %v822, %v820
    %v967 = vpack.c.b16 %v823, %v821
    %v968 = vpack.c.b16 %v826, %v824
    %v969 = vpack.c.b16 %v827, %v825
    %v970 = vpack.c.b16 %v830, %v828
    %v971 = vpack.c.b16 %v831, %v829
    %v972 = vpack.c.b16 %v834, %v832
    %v973 = vpack.c.b16 %v835, %v833
    %v974 = vpack.c.b16 %v838, %v836
    %v975 = vpack.c.b16 %v839, %v837
    %v976 = vpack.c.b16 %v842, %v840
    %v977 = vpack.c.b16 %v843, %v841
    %v978 = vpack.c.b16 %v846, %v844
    %v979 = vpack.c.b16 %v847, %v845
    %v980 = vpack.c.b16 %v850, %v848
    %v981 = vpack.c.b16 %v851, %v849
    %v982 = vpack.c.b16 %v854, %v852
    %v983 = vpack.c.b16 %v855, %v853
    %v984 = vpack.c.b16 %v858, %v856
    %v985 = vpack.c.b16 %v859, %v857
    %v986 = vpack.c.b16 %v862, %v860
    %v987 = vpack.c.b16 %v863, %v861
    %v988 = vpack.c.b16 %v866, %v864
    %v989 = vpack.c.b16 %v867, %v865
    %v990 = vpack.c.b16 %v870, %v868
    %v991 = vpack.c.b16 %v871, %v869
    %v992 = vpack.c.b16 %v874, %v872
    %v993 = vpack.c.b16 %v875, %v873
    %v994 = vpack.c.b16 %v878, %v876
    %v995 = vpack.c.b16 %v879, %v877
    %v996 = vpack.c.b16 %v882, %v880
    %v997 = vpack.c.b16 %v883, %v881
    %v998 = vpack.c.b16 %v886, %v884
    %v999 = vpack.c.b16 %v887, %v885
    %1112 = vmatprep.subr.bf16.mxu0 %v889
    %1113 = vmatpush1.bf16.msra.mxu0 %v888
    %1114 = vmatprep.subr.bf16.mxu0 %v891
    %1115 = vmatpush1.bf16.msra.mxu0 %v890
    %1116 = vmatprep.subr.bf16.mxu0 %v893
    %1117 = vmatpush1.bf16.msra.mxu0 %v892
    %1118 = vmatprep.subr.bf16.mxu0 %v895
    %1119 = vmatpush1.bf16.msra.mxu0 %v894
    %1120 = vmatprep.subr.bf16.mxu0 %v897
    %1121 = vmatpush1.bf16.msra.mxu0 %v896
    %1122 = vmatprep.subr.bf16.mxu0 %v899
    %1123 = vmatpush1.bf16.msra.mxu0 %v898
    %1124 = vmatprep.subr.bf16.mxu0 %v901
    %1125 = vmatpush1.bf16.msra.mxu0 %v900
    %1126 = vmatprep.subr.bf16.mxu0 %v903
    %1127 = vmatpush1.bf16.msra.mxu0 %v902
    %1128 = vmatprep.subr.bf16.mxu0 %v905
    %1129 = vmatpush1.bf16.msra.mxu0 %v904
    %1130 = vmatprep.subr.bf16.mxu0 %v907
    %1131 = vmatpush1.bf16.msra.mxu0 %v906
    %1132 = vmatprep.subr.bf16.mxu0 %v909
    %1133 = vmatpush1.bf16.msra.mxu0 %v908
    %1134 = vmatprep.subr.bf16.mxu0 %v911
    %1135 = vmatpush1.bf16.msra.mxu0 %v910
    %1136 = vmatprep.subr.bf16.mxu0 %v913
    %1137 = vmatpush1.bf16.msra.mxu0 %v912
    %1138 = vmatprep.subr.bf16.mxu0 %v915
    %1139 = vmatpush1.bf16.msra.mxu0 %v914
    %1140 = vmatprep.subr.bf16.mxu0 %v917
    %1141 = vmatpush1.bf16.msra.mxu0 %v916
    %1142 = vmatprep.subr.bf16.mxu0 %v919
    %1143 = vmatpush1.bf16.msra.mxu0 %v918
    %1144 = vmatprep.mubr.bf16.mxu0 %v411
    %1145 = vmatmul.mubr.bf16.gmra.mrb[0].mxu0 %v408
    %v1146 = vpop.f32.mrb[0].mxu0
    %v1147 = vadd.f32 %v545, %v1146
    %v1148 = vpop.f32.mrb[0].mxu0
    %v1149 = vadd.f32 %v549, %v1148
    %v1150 = vpop.f32.mrb[0].mxu0
    %v1151 = vadd.f32 %v545, %v1150
    %v1152 = vpop.f32.mrb[0].mxu0
    %v1153 = vadd.f32 %v549, %v1152
    %1154 = vdwg.mxu0
    %1155 = vmatprep.subr.bf16.mxu0 %v921
    %1156 = vmatpush1.bf16.msra.mxu0 %v920
    %1157 = vmatprep.subr.bf16.mxu0 %v923
    %1158 = vmatpush1.bf16.msra.mxu0 %v922
    %1159 = vmatprep.subr.bf16.mxu0 %v925
    %1160 = vmatpush1.bf16.msra.mxu0 %v924
    %1161 = vmatprep.subr.bf16.mxu0 %v927
    %1162 = vmatpush1.bf16.msra.mxu0 %v926
    %1163 = vmatprep.subr.bf16.mxu0 %v929
    %1164 = vmatpush1.bf16.msra.mxu0 %v928
    %1165 = vmatprep.subr.bf16.mxu0 %v931
    %1166 = vmatpush1.bf16.msra.mxu0 %v930
    %1167 = vmatprep.subr.bf16.mxu0 %v933
    %1168 = vmatpush1.bf16.msra.mxu0 %v932
    %1169 = vmatprep.subr.bf16.mxu0 %v935
    %1170 = vmatpush1.bf16.msra.mxu0 %v934
    %1171 = vmatprep.subr.bf16.mxu0 %v937
    %1172 = vmatpush1.bf16.msra.mxu0 %v936
    %1173 = vmatprep.subr.bf16.mxu0 %v939
    %1174 = vmatpush1.bf16.msra.mxu0 %v938
    %1175 = vmatprep.subr.bf16.mxu0 %v941
    %1176 = vmatpush1.bf16.msra.mxu0 %v940
    %1177 = vmatprep.subr.bf16.mxu0 %v943
    %1178 = vmatpush1.bf16.msra.mxu0 %v942
    %1179 = vmatprep.subr.bf16.mxu0 %v945
    %1180 = vmatpush1.bf16.msra.mxu0 %v944
    %1181 = vmatprep.subr.bf16.mxu0 %v947
    %1182 = vmatpush1.bf16.msra.mxu0 %v946
    %1183 = vmatprep.subr.bf16.mxu0 %v949
    %1184 = vmatpush1.bf16.msra.mxu0 %v948
    %1185 = vmatprep.subr.bf16.mxu0 %v951
    %1186 = vmatpush1.bf16.msra.mxu0 %v950
    %1187 = vmatprep.mubr.bf16.mxu0 %v417
    %1188 = vmatmul.mubr.bf16.gmra.mrb[0].mxu0 %v414
    %v1189 = vpop.f32.mrb[0].mxu0
    %v1190 = vadd.f32 %v1147, %v1189
    %v1191 = vpop.f32.mrb[0].mxu0
    %v1192 = vadd.f32 %v1149, %v1191
    %v1193 = vpop.f32.mrb[0].mxu0
    %v1194 = vadd.f32 %v1151, %v1193
    %v1195 = vpop.f32.mrb[0].mxu0
    %v1196 = vadd.f32 %v1153, %v1195
    %1197 = vdwg.mxu0
    %1198 = vmatprep.subr.bf16.mxu0 %v953
    %1199 = vmatpush1.bf16.msra.mxu0 %v952
    %1200 = vmatprep.subr.bf16.mxu0 %v955
    %1201 = vmatpush1.bf16.msra.mxu0 %v954
    %1202 = vmatprep.subr.bf16.mxu0 %v957
    %1203 = vmatpush1.bf16.msra.mxu0 %v956
    %1204 = vmatprep.subr.bf16.mxu0 %v959
    %1205 = vmatpush1.bf16.msra.mxu0 %v958
    %1206 = vmatprep.subr.bf16.mxu0 %v961
    %1207 = vmatpush1.bf16.msra.mxu0 %v960
    %1208 = vmatprep.subr.bf16.mxu0 %v963
    %1209 = vmatpush1.bf16.msra.mxu0 %v962
    %1210 = vmatprep.subr.bf16.mxu0 %v965
    %1211 = vmatpush1.bf16.msra.mxu0 %v964
    %1212 = vmatprep.subr.bf16.mxu0 %v967
    %1213 = vmatpush1.bf16.msra.mxu0 %v966
    %1214 = vmatprep.subr.bf16.mxu0 %v969
    %1215 = vmatpush1.bf16.msra.mxu0 %v968
    %1216 = vmatprep.subr.bf16.mxu0 %v971
    %1217 = vmatpush1.bf16.msra.mxu0 %v970
    %1218 = vmatprep.subr.bf16.mxu0 %v973
    %1219 = vmatpush1.bf16.msra.mxu0 %v972
    %1220 = vmatprep.subr.bf16.mxu0 %v975
    %1221 = vmatpush1.bf16.msra.mxu0 %v974
    %1222 = vmatprep.subr.bf16.mxu0 %v977
    %1223 = vmatpush1.bf16.msra.mxu0 %v976
    %1224 = vmatprep.subr.bf16.mxu0 %v979
    %1225 = vmatpush1.bf16.msra.mxu0 %v978
    %1226 = vmatprep.subr.bf16.mxu0 %v981
    %1227 = vmatpush1.bf16.msra.mxu0 %v980
    %1228 = vmatprep.subr.bf16.mxu0 %v983
    %1229 = vmatpush1.bf16.msra.mxu0 %v982
    %1230 = vmatprep.mubr.bf16.mxu0 %v423
    %1231 = vmatmul.mubr.bf16.gmra.mrb[0].mxu0 %v420
    %v1232 = vpop.f32.mrb[0].mxu0
    %v1233 = vadd.f32 %v1190, %v1232
    %v1234 = vpop.f32.mrb[0].mxu0
    %v1235 = vadd.f32 %v1192, %v1234
    %v1236 = vpop.f32.mrb[0].mxu0
    %v1237 = vadd.f32 %v1194, %v1236
    %v1238 = vpop.f32.mrb[0].mxu0
    %v1239 = vadd.f32 %v1196, %v1238
    %1240 = vdwg.mxu0
    %1241 = vmatprep.subr.bf16.mxu0 %v985
    %1242 = vmatpush1.bf16.msra.mxu0 %v984
    %1243 = vmatprep.subr.bf16.mxu0 %v987
    %1244 = vmatpush1.bf16.msra.mxu0 %v986
    %1245 = vmatprep.subr.bf16.mxu0 %v989
    %1246 = vmatpush1.bf16.msra.mxu0 %v988
    %1247 = vmatprep.subr.bf16.mxu0 %v991
    %1248 = vmatpush1.bf16.msra.mxu0 %v990
    %1249 = vmatprep.subr.bf16.mxu0 %v993
    %1250 = vmatpush1.bf16.msra.mxu0 %v992
    %1251 = vmatprep.subr.bf16.mxu0 %v995
    %1252 = vmatpush1.bf16.msra.mxu0 %v994
    %1253 = vmatprep.subr.bf16.mxu0 %v997
    %1254 = vmatpush1.bf16.msra.mxu0 %v996
    %1255 = vmatprep.subr.bf16.mxu0 %v999
    %1256 = vmatpush1.bf16.msra.mxu0 %v998
    %1257 = vmatprep.subr.bf16.mxu0 0
    %1258 = vmatpush1.bf16.msra.mxu0 0
    %1259 = vmatprep.subr.bf16.mxu0 0
    %1260 = vmatpush1.bf16.msra.mxu0 0
    %1261 = vmatprep.subr.bf16.mxu0 0
    %1262 = vmatpush1.bf16.msra.mxu0 0
    %1263 = vmatprep.subr.bf16.mxu0 0
    %1264 = vmatpush1.bf16.msra.mxu0 0
    %1265 = vmatprep.subr.bf16.mxu0 0
    %1266 = vmatpush1.bf16.msra.mxu0 0
    %1267 = vmatprep.subr.bf16.mxu0 0
    %1268 = vmatpush1.bf16.msra.mxu0 0
    %1269 = vmatprep.subr.bf16.mxu0 0
    %1270 = vmatpush1.bf16.msra.mxu0 0
    %1271 = vmatprep.subr.bf16.mxu0 0
    %1272 = vmatpush1.bf16.msra.mxu0 0
    %1273 = vmatprep.mubr.bf16.mxu0 0
    %1274 = vmatmul.mubr.bf16.gmra.mrb[0].mxu0 %v426
    %v1275 = vpop.f32.mrb[0].mxu0
    %v1276 = vadd.f32 %v1233, %v1275
    %v1277 = vpop.f32.mrb[0].mxu0
    %v1278 = vadd.f32 %v1235, %v1277
    %v1279 = vpop.f32.mrb[0].mxu0
    %v1280 = vadd.f32 %v1237, %v1279
    %v1281 = vpop.f32.mrb[0].mxu0
    %v1282 = vadd.f32 %v1239, %v1281
    %1283 = vdwg.mxu0
    %v1284 = vmax.f32 %v1276, 0.0
    %v1285 = vmax.f32 %v1278, 0.0
    %v1286 = vmax.f32 %v1280, 0.0
    %v1287 = vmax.f32 %v1282, 0.0
    %v1288 = vpack.c.bf16 %v1286, %v1284
    %v1289 = vpack.c.bf16 %v1287, %v1285
    %v1292 = vcombine.low %v1288, %v1289
    %v1294 = vunpack.c.l.s4 1966171168
    %v1295 = vunpack.c.0.s8 %v1294
    %v1296 = vlaneseq
    %v1297 = vshrl.u32 %v1296, 7
    %v1298 = vsub.s32 %v1295, %v1297
    %v1299 = vrot.slane %v1292, %v1298
    %v1301 = vunpack.c.l.s4 1966171168
    %v1302 = vunpack.c.0.s8 %v1301
    %v1303 = vlaneseq
    %v1304 = vshrl.u32 %v1303, 7
    %v1305 = vsub.s32 %v1302, %v1304
    %v1306 = vrot.slane %v1299, %v1305
    %1308 = vst [vmem:[%s4] sm:$0x3] %v1306
    %v1309 = vcombine.high %v1299, %v1299
    %v1311 = vunpack.c.l.s4 1966171168
    %v1312 = vunpack.c.0.s8 %v1311
    %v1313 = vlaneseq
    %v1314 = vshrl.u32 %v1313, 7
    %v1315 = vsub.s32 %v1312, %v1314
    %v1316 = vrot.slane %v1309, %v1315
    %s1318 = scalar_lea.vmem %s4, 2
    %1319 = vst [vmem:[%s1318] sm:$0x3] %v1316
    %v1320 = vcombine.high %v1306, %v1306
    %s1322 = scalar_lea.vmem %s4, 4
    %1323 = vst [vmem:[%s1322] sm:$0x3] %v1320
    %v1324 = vcombine.high %v1316, %v1316
    %s1326 = scalar_lea.vmem %s4, 6
    %1327 = vst [vmem:[%s1326] sm:$0x3] %v1324
    %v1328 = vcombine.high %v1288, %v1289
    %v1330 = vunpack.c.l.s4 1966171168
    %v1331 = vunpack.c.0.s8 %v1330
    %v1332 = vlaneseq
    %v1333 = vshrl.u32 %v1332, 7
    %v1334 = vsub.s32 %v1331, %v1333
    %v1335 = vrot.slane %v1328, %v1334
    %v1337 = vunpack.c.l.s4 1966171168
    %v1338 = vunpack.c.0.s8 %v1337
    %v1339 = vlaneseq
    %v1340 = vshrl.u32 %v1339, 7
    %v1341 = vsub.s32 %v1338, %v1340
    %v1342 = vrot.slane %v1335, %v1341
    %s1344 = scalar_lea.vmem %s4, 8
    %1345 = vst [vmem:[%s1344] sm:$0x3] %v1342
    %v1346 = vcombine.high %v1335, %v1335
    %v1348 = vunpack.c.l.s4 1966171168
    %v1349 = vunpack.c.0.s8 %v1348
    %v1350 = vlaneseq
    %v1351 = vshrl.u32 %v1350, 7
    %v1352 = vsub.s32 %v1349, %v1351
    %v1353 = vrot.slane %v1346, %v1352
    %s1355 = scalar_lea.vmem %s4, 10
    %1356 = vst [vmem:[%s1355] sm:$0x3] %v1353
    %v1357 = vcombine.high %v1342, %v1342
    %s1359 = scalar_lea.vmem %s4, 12
    %1360 = vst [vmem:[%s1359] sm:$0x3] %v1357
    %v1361 = vcombine.high %v1353, %v1353
    %s1363 = scalar_lea.vmem %s4, 14
    %1364 = vst [vmem:[%s1363] sm:$0x3] %v1361
    // Predicated region
    $region22: #{spectrum_encoder_forward.4} parent=1 // pred_check
      _
    $region23: #{spectrum_encoder_forward.4} parent=1 // pred_check_branch
      %1366 = sbr.rel (0) target = $region25
    $region24: #{spectrum_encoder_forward.4} parent=1 // pred_region
      _
    $region25: #{spectrum_encoder_forward.4} parent=1 // pred_fallthru
      _
    // Predicated region
    $region26: #{spectrum_encoder_forward.4} parent=1 // pred_check
      _
    $region27: #{spectrum_encoder_forward.4} parent=1 // pred_check_branch
      %1368 = sbr.rel (0) target = $region29
    $region28: #{spectrum_encoder_forward.4} parent=1 // pred_region
      _
    $region29: #{spectrum_encoder_forward.4} parent=1 // pred_fallthru
      _
    %1369 = vsyncpa [#allocation3], 1

// kernel: spectrum_encoder_forward.3
$region0: #{spectrum_encoder_forward.3}
  #allocation0 [shape = 'u32[]', space=smem, size = 0x4, offset = 0x4, fixed_abs, tag = 'smem constant byte address 0x4 - core index']
  #allocation1 [shape = 'u32[144,128]{1,0:T(1,128)}', space=vmem, size = 0x12000, scoped, tag = 'internal scratch']
  %s0 = inlined_call_operand.vmem [shape: f32[8,7,7], index: 0, kind: input, shape index: {}]
  %s1 = inlined_call_operand.vmem [shape: f32[8,7,7], index: 1, kind: input, shape index: {}]
  %s2 = inlined_call_operand.hbm [shape: f32[7,64], index: 2, kind: input, shape index: {}]
  %s3 = inlined_call_operand.hbm [shape: f32[1,64], index: 3, kind: input, shape index: {}]
  %s4 = inlined_call_operand.hbm [shape: bf16[448,128], index: 4, kind: input, shape index: {}]
  %s5 = inlined_call_operand.hbm [shape: f32[1,128], index: 5, kind: input, shape index: {}]
  %s6 = inlined_call_operand.vmem [shape: bf16[8,4,128], index: 6, kind: output, shape index: {}]
  %s7 = sld [smem:[#allocation0]]
  $region50: #{spectrum_encoder_forward.3} parent=0
    _
  %s9 = ssub.s32 1, %s7
  %s10 = scalar_select 0, %s9, %s7
  $region1: #{spectrum_encoder_forward.3} parent=0
    #allocation2 [shape = 'u8[4096]{0}', space=vmem, size = 0x1000, scoped, tag = 'input window, operand 2, single buffered']
    #allocation3 [shape = 's32[1]{0}', space=sflag, size = 0x4, scoped, tag = 'scoped memory for spectrum_encoder_forward.3']
    #allocation4 [shape = 'u8[512]{0}', space=vmem, size = 0x400, scoped, tag = 'input window, operand 3, single buffered']
    #allocation5 [shape = 's32[1]{0}', space=sflag, size = 0x4, scoped, tag = 'scoped memory for spectrum_encoder_forward.3']
    #allocation6 [shape = 'u8[114688]{0}', space=vmem, size = 0x1c000, scoped, tag = 'input window, operand 4, single buffered']
    #allocation7 [shape = 'u8[512]{0}', space=vmem, size = 0x400, scoped, tag = 'input window, operand 5, single buffered']
    #allocation8 [shape = 's32[1]{0}', space=sflag, size = 0x4, scoped, tag = 'scoped memory for spectrum_encoder_forward.3']
    %11 = vsyncpa [#allocation3], 0
    %12 = vsyncpa [#allocation5], 0
    %13 = vsyncpa [#allocation8], 0
    // Predicated region
    $region2: #{spectrum_encoder_forward.3} parent=1 // pred_check
      _
    $region3: #{spectrum_encoder_forward.3} parent=1 // pred_check_branch
      %15 = sbr.rel (0) target = $region5
    $region4: #{spectrum_encoder_forward.3} parent=1 // pred_region
      _
    $region5: #{spectrum_encoder_forward.3} parent=1 // pred_fallthru
      _
    // Predicated region
    $region6: #{spectrum_encoder_forward.3} parent=1 // pred_check
      _
    $region7: #{spectrum_encoder_forward.3} parent=1 // pred_check_branch
      %17 = sbr.rel (0) target = $region9
    $region8: #{spectrum_encoder_forward.3} parent=1 // pred_region
      _
    $region9: #{spectrum_encoder_forward.3} parent=1 // pred_fallthru
      _
    // Predicated region
    $region10: #{spectrum_encoder_forward.3} parent=1 // pred_check
      _
    $region11: #{spectrum_encoder_forward.3} parent=1 // pred_check_branch
      %19 = sbr.rel (0) target = $region13
    $region12: #{spectrum_encoder_forward.3} parent=1 // pred_region
      %s21 = ssub.s32 128, 128
      %22 = vsyncadd [#allocation3], %s21
      %s24 = sshll.u32 [#allocation2], 4
      %s25 = int_to_ptr.vmem [resolvable:$true] %s24
      %27 = dma.hbm_to_vmem [thread:$0]  %s2, 128, %s25, [#allocation3]
    $region13: #{spectrum_encoder_forward.3} parent=1 // pred_fallthru
      _
    // Predicated region
    $region14: #{spectrum_encoder_forward.3} parent=1 // pred_check
      _
    $region15: #{spectrum_encoder_forward.3} parent=1 // pred_check_branch
      %29 = sbr.rel (0) target = $region17
    $region16: #{spectrum_encoder_forward.3} parent=1 // pred_region
      %s31 = ssub.s32 16, 16
      %32 = vsyncadd [#allocation5], %s31
      %s34 = sshll.u32 [#allocation4], 4
      %s35 = int_to_ptr.vmem [resolvable:$true] %s34
      %37 = dma.hbm_to_vmem [thread:$0]  %s3, 16, %s35, [#allocation5]
    $region17: #{spectrum_encoder_forward.3} parent=1 // pred_fallthru
      _
    // Predicated region
    $region18: #{spectrum_encoder_forward.3} parent=1 // pred_check
      _
    $region19: #{spectrum_encoder_forward.3} parent=1 // pred_check_branch
      %39 = sbr.rel (0) target = $region21
    $region20: #{spectrum_encoder_forward.3} parent=1 // pred_region
      %s41 = ssub.s32 3584, 3584
      %42 = vsyncadd [#allocation5], %s41
      %s43 = sshll.u32 [#allocation6], 4
      %s44 = int_to_ptr.vmem [resolvable:$true] %s43
      %49 = dma.hbm_to_vmem [thread:$0]  %s4, 3584, %s44, [#allocation5], 64, 64, 4
    $region21: #{spectrum_encoder_forward.3} parent=1 // pred_fallthru
      _
    // Predicated region
    $region22: #{spectrum_encoder_forward.3} parent=1 // pred_check
      _
    $region23: #{spectrum_encoder_forward.3} parent=1 // pred_check_branch
      %51 = sbr.rel (0) target = $region25
    $region24: #{spectrum_encoder_forward.3} parent=1 // pred_region
      %s53 = ssub.s32 16, 16
      %54 = vsyncadd [#allocation8], %s53
      %s56 = sshll.u32 [#allocation7], 4
      %s57 = int_to_ptr.vmem [resolvable:$true] %s56
      %59 = dma.hbm_to_vmem [thread:$0]  %s5, 16, %s57, [#allocation8]
    $region25: #{spectrum_encoder_forward.3} parent=1 // pred_fallthru
      _
    // Predicated region
    $region26: #{spectrum_encoder_forward.3} parent=1 // pred_check
      _
    $region27: #{spectrum_encoder_forward.3} parent=1 // pred_check_branch
      %61 = sbr.rel (0) target = $region29
    $region28: #{spectrum_encoder_forward.3} parent=1 // pred_region
      %62 = dma.done [#allocation3], 128
    $region29: #{spectrum_encoder_forward.3} parent=1 // pred_fallthru
      _
    // Predicated region
    $region30: #{spectrum_encoder_forward.3} parent=1 // pred_check
      _
    $region31: #{spectrum_encoder_forward.3} parent=1 // pred_check_branch
      %64 = sbr.rel (0) target = $region33
    $region32: #{spectrum_encoder_forward.3} parent=1 // pred_region
      %65 = dma.done [#allocation5], 16
    $region33: #{spectrum_encoder_forward.3} parent=1 // pred_fallthru
      _
    // Predicated region
    $region34: #{spectrum_encoder_forward.3} parent=1 // pred_check
      _
    $region35: #{spectrum_encoder_forward.3} parent=1 // pred_check_branch
      %67 = sbr.rel (0) target = $region37
    $region36: #{spectrum_encoder_forward.3} parent=1 // pred_region
      %68 = dma.done [#allocation5], 3584
    $region37: #{spectrum_encoder_forward.3} parent=1 // pred_fallthru
      _
    // Predicated region
    $region38: #{spectrum_encoder_forward.3} parent=1 // pred_check
      _
    $region39: #{spectrum_encoder_forward.3} parent=1 // pred_check_branch
      %70 = sbr.rel (0) target = $region41
    $region40: #{spectrum_encoder_forward.3} parent=1 // pred_region
      %71 = dma.done [#allocation8], 16
    $region41: #{spectrum_encoder_forward.3} parent=1 // pred_fallthru
      _
    %v73 = vld [vmem:[#allocation2] sm:$0x7f]
    %v74 = vld [vmem:[#allocation4] sm:$0x1]
    %v75 = vlaneseq
    %v76 = vshrl.u32 %v75, 7
    %vm77 = vcmp.ge.s32.totalorder %v76, 2
    %vm78 = vcmp.le.s32.totalorder %v76, 5
    %vm79 = vmand %vm77, %vm78
    %vm80 = vcmp.ge.s32.totalorder %v76, 1
    %vm81 = vcmp.le.s32.totalorder %v76, 4
    %vm82 = vmand %vm80, %vm81
    %v83 = vld [vmem:[%s0] sm:$0x7f]
    %v84 = vld [vmem:[%s1] sm:$0x7f]
    %v86 = vlaneseq
    %v87 = vshrl.u32 %v86, 7
    %v88 = vsub.s32 0, %v87
    %v89 = vrot.slane %v74, %v88
    %vm91 = vcmask 56320
    %v93 = vsel %vm91, %v83, 0
    %vm95 = vcmask 1046528
    %v97 = vsel %vm95, %v73, 0
    %99 = vmatprep.subr.mxu0 0.0
    %100 = vmatpush1.msra.mxu0 %v97
    %101 = vmatprep.subr.mxu0 0.0
    %102 = vmatpush1.msra.mxu0 0.0
    %103 = vmatprep.subr.mxu0 0.0
    %104 = vmatpush1.msra.mxu0 0.0
    %105 = vmatprep.subr.mxu0 0.0
    %106 = vmatpush1.msra.mxu0 0.0
    %107 = vmatprep.subr.mxu0 0.0
    %108 = vmatpush1.msra.mxu0 0.0
    %109 = vmatprep.subr.mxu0 0.0
    %110 = vmatpush1.msra.mxu0 0.0
    %111 = vmatprep.subr.mxu0 0.0
    %112 = vmatpush1.msra.mxu0 0.0
    %113 = vmatprep.subr.mxu0 0.0
    %114 = vmatpush1.msra.mxu0 0.0
    %115 = vmatprep.subr.mxu0 0.0
    %116 = vmatpush1.msra.mxu0 0.0
    %117 = vmatprep.subr.mxu0 0.0
    %118 = vmatpush1.msra.mxu0 0.0
    %119 = vmatprep.subr.mxu0 0.0
    %120 = vmatpush1.msra.mxu0 0.0
    %121 = vmatprep.subr.mxu0 0.0
    %122 = vmatpush1.msra.mxu0 0.0
    %123 = vmatprep.subr.mxu0 0.0
    %124 = vmatpush1.msra.mxu0 0.0
    %125 = vmatprep.subr.mxu0 0.0
    %126 = vmatpush1.msra.mxu0 0.0
    %127 = vmatprep.subr.mxu0 0.0
    %128 = vmatpush1.msra.mxu0 0.0
    %129 = vmatprep.subr.mxu0 0.0
    %130 = vmatpush1.msra.mxu0 0.0
    %131 = vmatprep.subr.mxu0 0.0
    %132 = vmatpush1.msra.mxu0 0.0
    %133 = vmatprep.subr.mxu0 0.0
    %134 = vmatpush1.msra.mxu0 0.0
    %135 = vmatprep.subr.mxu0 0.0
    %136 = vmatpush1.msra.mxu0 0.0
    %137 = vmatprep.subr.mxu0 0.0
    %138 = vmatpush1.msra.mxu0 0.0
    %139 = vmatprep.subr.mxu0 0.0
    %140 = vmatpush1.msra.mxu0 0.0
    %141 = vmatprep.subr.mxu0 0.0
    %142 = vmatpush1.msra.mxu0 0.0
    %143 = vmatprep.subr.mxu0 0.0
    %144 = vmatpush1.msra.mxu0 0.0
    %145 = vmatprep.subr.mxu0 0.0
    %146 = vmatpush1.msra.mxu0 0.0
    %147 = vmatprep.subr.mxu0 0.0
    %148 = vmatpush1.msra.mxu0 0.0
    %149 = vmatprep.subr.mxu0 0.0
    %150 = vmatpush1.msra.mxu0 0.0
    %151 = vmatprep.subr.mxu0 0.0
    %152 = vmatpush1.msra.mxu0 0.0
    %153 = vmatprep.subr.mxu0 0.0
    %154 = vmatpush1.msra.mxu0 0.0
    %155 = vmatprep.subr.mxu0 0.0
    %156 = vmatpush1.msra.mxu0 0.0
    %157 = vmatprep.subr.mxu0 0.0
    %158 = vmatpush1.msra.mxu0 0.0
    %159 = vmatprep.subr.mxu0 0.0
    %160 = vmatpush1.msra.mxu0 0.0
    %161 = vmatprep.subr.mxu0 0.0
    %162 = vmatpush1.msra.mxu0 0.0
    %163 = vmatprep.mubr.f32.mxu0 0.0
    %164 = vmatmul.mubr.f32.gmra.mrb[0].mxu0 %v93
    %v165 = vpop.f32.mrb[0].mxu0
    %v166 = vadd.f32 %v89, %v165
    %v167 = vpop.f32.mrb[0].mxu0
    %168 = vdwg.mxu0
    %v169 = vmax.f32 %v166, 0.0
    %v170 = vsel %vm79, %v169, 0.0
    %v171 = vpack.c.bf16 %v170, %v170
    %v173 = vsel %vm91, %v84, 0
    %175 = vmatprep.subr.mxu0 0.0
    %176 = vmatpush1.msra.mxu0 %v97
    %177 = vmatprep.subr.mxu0 0.0
    %178 = vmatpush1.msra.mxu0 0.0
    %179 = vmatprep.subr.mxu0 0.0
    %180 = vmatpush1.msra.mxu0 0.0
    %181 = vmatprep.subr.mxu0 0.0
    %182 = vmatpush1.msra.mxu0 0.0
    %183 = vmatprep.subr.mxu0 0.0
    %184 = vmatpush1.msra.mxu0 0.0
    %185 = vmatprep.subr.mxu0 0.0
    %186 = vmatpush1.msra.mxu0 0.0
    %187 = vmatprep.subr.mxu0 0.0
    %188 = vmatpush1.msra.mxu0 0.0
    %189 = vmatprep.subr.mxu0 0.0
    %190 = vmatpush1.msra.mxu0 0.0
    %191 = vmatprep.subr.mxu0 0.0
    %192 = vmatpush1.msra.mxu0 0.0
    %193 = vmatprep.subr.mxu0 0.0
    %194 = vmatpush1.msra.mxu0 0.0
    %195 = vmatprep.subr.mxu0 0.0
    %196 = vmatpush1.msra.mxu0 0.0
    %197 = vmatprep.subr.mxu0 0.0
    %198 = vmatpush1.msra.mxu0 0.0
    %199 = vmatprep.subr.mxu0 0.0
    %200 = vmatpush1.msra.mxu0 0.0
    %201 = vmatprep.subr.mxu0 0.0
    %202 = vmatpush1.msra.mxu0 0.0
    %203 = vmatprep.subr.mxu0 0.0
    %204 = vmatpush1.msra.mxu0 0.0
    %205 = vmatprep.subr.mxu0 0.0
    %206 = vmatpush1.msra.mxu0 0.0
    %207 = vmatprep.subr.mxu0 0.0
    %208 = vmatpush1.msra.mxu0 0.0
    %209 = vmatprep.subr.mxu0 0.0
    %210 = vmatpush1.msra.mxu0 0.0
    %211 = vmatprep.subr.mxu0 0.0
    %212 = vmatpush1.msra.mxu0 0.0
    %213 = vmatprep.subr.mxu0 0.0
    %214 = vmatpush1.msra.mxu0 0.0
    %215 = vmatprep.subr.mxu0 0.0
    %216 = vmatpush1.msra.mxu0 0.0
    %217 = vmatprep.subr.mxu0 0.0
    %218 = vmatpush1.msra.mxu0 0.0
    %219 = vmatprep.subr.mxu0 0.0
    %220 = vmatpush1.msra.mxu0 0.0
    %221 = vmatprep.subr.mxu0 0.0
    %222 = vmatpush1.msra.mxu0 0.0
    %223 = vmatprep.subr.mxu0 0.0
    %224 = vmatpush1.msra.mxu0 0.0
    %225 = vmatprep.subr.mxu0 0.0
    %226 = vmatpush1.msra.mxu0 0.0
    %227 = vmatprep.subr.mxu0 0.0
    %228 = vmatpush1.msra.mxu0 0.0
    %229 = vmatprep.subr.mxu0 0.0
    %230 = vmatpush1.msra.mxu0 0.0
    %231 = vmatprep.subr.mxu0 0.0
    %232 = vmatpush1.msra.mxu0 0.0
    %233 = vmatprep.subr.mxu0 0.0
    %234 = vmatpush1.msra.mxu0 0.0
    %235 = vmatprep.subr.mxu0 0.0
    %236 = vmatpush1.msra.mxu0 0.0
    %237 = vmatprep.subr.mxu0 0.0
    %238 = vmatpush1.msra.mxu0 0.0
    %239 = vmatprep.mubr.f32.mxu0 0.0
    %240 = vmatmul.mubr.f32.gmra.mrb[0].mxu0 %v173
    %v241 = vpop.f32.mrb[0].mxu0
    %v242 = vadd.f32 %v89, %v241
    %v243 = vpop.f32.mrb[0].mxu0
    %244 = vdwg.mxu0
    %v245 = vmax.f32 %v242, 0.0
    %v246 = vsel %vm82, %v245, 0.0
    %v247 = vpack.c.bf16 %v246, %v246
    %v249 = vshrl.u32 %v171, 16
    %v251 = vshll.u32 %v171, 16
    %v253 = vrot.slane %v251, 1
    %v254 = vor.u32 %v249, %v253
    %255 = vrot.lane.b32.xlu0 %v254, 64
    %v256 = vpop.permute.xlu0 %255
    %v258 = vrot.slane %v171, 1
    %v259 = vrot.slane %v249, 1
    %v260 = vrot.slane %v251, 2
    %v261 = vor.u32 %v259, %v260
    %262 = vrot.lane.b32.xlu0 %v261, 64
    %v263 = vpop.permute.xlu0 %262
    %v265 = vshrl.u32 %v247, 16
    %v267 = vshll.u32 %v247, 16
    %v269 = vrot.slane %v267, 1
    %v270 = vor.u32 %v265, %v269
    %271 = vrot.lane.b32.xlu0 %v270, 64
    %v272 = vpop.permute.xlu0 %271
    %v274 = vrot.slane %v247, 1
    %vm275 = vcmask 523264
    %v277 = vsel %vm275, %v171, %v256
    %v280 = vsel %vm275, %v258, %v263
    %v282 = vsel %vm275, %v247, %v272
    %s283 = scalar_lea.vmem %s0, 8
    %v284 = vld [vmem:[%s283] sm:$0x7f]
    %s285 = scalar_lea.vmem %s1, 8
    %v286 = vld [vmem:[%s285] sm:$0x7f]
    %v288 = vsel %vm91, %v284, 0
    %290 = vmatprep.subr.mxu0 0.0
    %291 = vmatpush1.msra.mxu0 %v97
    %292 = vmatprep.subr.mxu0 0.0
    %293 = vmatpush1.msra.mxu0 0.0
    %294 = vmatprep.subr.mxu0 0.0
    %295 = vmatpush1.msra.mxu0 0.0
    %296 = vmatprep.subr.mxu0 0.0
    %297 = vmatpush1.msra.mxu0 0.0
    %298 = vmatprep.subr.mxu0 0.0
    %299 = vmatpush1.msra.mxu0 0.0
    %300 = vmatprep.subr.mxu0 0.0
    %301 = vmatpush1.msra.mxu0 0.0
    %302 = vmatprep.subr.mxu0 0.0
    %303 = vmatpush1.msra.mxu0 0.0
    %304 = vmatprep.subr.mxu0 0.0
    %305 = vmatpush1.msra.mxu0 0.0
    %306 = vmatprep.subr.mxu0 0.0
    %307 = vmatpush1.msra.mxu0 0.0
    %308 = vmatprep.subr.mxu0 0.0
    %309 = vmatpush1.msra.mxu0 0.0
    %310 = vmatprep.subr.mxu0 0.0
    %311 = vmatpush1.msra.mxu0 0.0
    %312 = vmatprep.subr.mxu0 0.0
    %313 = vmatpush1.msra.mxu0 0.0
    %314 = vmatprep.subr.mxu0 0.0
    %315 = vmatpush1.msra.mxu0 0.0
    %316 = vmatprep.subr.mxu0 0.0
    %317 = vmatpush1.msra.mxu0 0.0
    %318 = vmatprep.subr.mxu0 0.0
    %319 = vmatpush1.msra.mxu0 0.0
    %320 = vmatprep.subr.mxu0 0.0
    %321 = vmatpush1.msra.mxu0 0.0
    %322 = vmatprep.subr.mxu0 0.0
    %323 = vmatpush1.msra.mxu0 0.0
    %324 = vmatprep.subr.mxu0 0.0
    %325 = vmatpush1.msra.mxu0 0.0
    %326 = vmatprep.subr.mxu0 0.0
    %327 = vmatpush1.msra.mxu0 0.0
    %328 = vmatprep.subr.mxu0 0.0
    %329 = vmatpush1.msra.mxu0 0.0
    %330 = vmatprep.subr.mxu0 0.0
    %331 = vmatpush1.msra.mxu0 0.0
    %332 = vmatprep.subr.mxu0 0.0
    %333 = vmatpush1.msra.mxu0 0.0
    %334 = vmatprep.subr.mxu0 0.0
    %335 = vmatpush1.msra.mxu0 0.0
    %336 = vmatprep.subr.mxu0 0.0
    %337 = vmatpush1.msra.mxu0 0.0
    %338 = vmatprep.subr.mxu0 0.0
    %339 = vmatpush1.msra.mxu0 0.0
    %340 = vmatprep.subr.mxu0 0.0
    %341 = vmatpush1.msra.mxu0 0.0
    %342 = vmatprep.subr.mxu0 0.0
    %343 = vmatpush1.msra.mxu0 0.0
    %344 = vmatprep.subr.mxu0 0.0
    %345 = vmatpush1.msra.mxu0 0.0
    %346 = vmatprep.subr.mxu0 0.0
    %347 = vmatpush1.msra.mxu0 0.0
    %348 = vmatprep.subr.mxu0 0.0
    %349 = vmatpush1.msra.mxu0 0.0
    %350 = vmatprep.subr.mxu0 0.0
    %351 = vmatpush1.msra.mxu0 0.0
    %352 = vmatprep.subr.mxu0 0.0
    %353 = vmatpush1.msra.mxu0 0.0
    %354 = vmatprep.mubr.f32.mxu0 0.0
    %355 = vmatmul.mubr.f32.gmra.mrb[0].mxu0 %v288
    %v356 = vpop.f32.mrb[0].mxu0
    %v357 = vadd.f32 %v89, %v356
    %v358 = vpop.f32.mrb[0].mxu0
    %359 = vdwg.mxu0
    %v360 = vmax.f32 %v357, 0.0
    %v361 = vsel %vm79, %v360, 0.0
    %v362 = vpack.c.bf16 %v361, %v361
    %v364 = vsel %vm91, %v286, 0
    %366 = vmatprep.subr.mxu0 0.0
    %367 = vmatpush1.msra.mxu0 %v97
    %368 = vmatprep.subr.mxu0 0.0
    %369 = vmatpush1.msra.mxu0 0.0
    %370 = vmatprep.subr.mxu0 0.0
    %371 = vmatpush1.msra.mxu0 0.0
    %372 = vmatprep.subr.mxu0 0.0
    %373 = vmatpush1.msra.mxu0 0.0
    %374 = vmatprep.subr.mxu0 0.0
    %375 = vmatpush1.msra.mxu0 0.0
    %376 = vmatprep.subr.mxu0 0.0
    %377 = vmatpush1.msra.mxu0 0.0
    %378 = vmatprep.subr.mxu0 0.0
    %379 = vmatpush1.msra.mxu0 0.0
    %380 = vmatprep.subr.mxu0 0.0
    %381 = vmatpush1.msra.mxu0 0.0
    %382 = vmatprep.subr.mxu0 0.0
    %383 = vmatpush1.msra.mxu0 0.0
    %384 = vmatprep.subr.mxu0 0.0
    %385 = vmatpush1.msra.mxu0 0.0
    %386 = vmatprep.subr.mxu0 0.0
    %387 = vmatpush1.msra.mxu0 0.0
    %388 = vmatprep.subr.mxu0 0.0
    %389 = vmatpush1.msra.mxu0 0.0
    %390 = vmatprep.subr.mxu0 0.0
    %391 = vmatpush1.msra.mxu0 0.0
    %392 = vmatprep.subr.mxu0 0.0
    %393 = vmatpush1.msra.mxu0 0.0
    %394 = vmatprep.subr.mxu0 0.0
    %395 = vmatpush1.msra.mxu0 0.0
    %396 = vmatprep.subr.mxu0 0.0
    %397 = vmatpush1.msra.mxu0 0.0
    %398 = vmatprep.subr.mxu0 0.0
    %399 = vmatpush1.msra.mxu0 0.0
    %400 = vmatprep.subr.mxu0 0.0
    %401 = vmatpush1.msra.mxu0 0.0
    %402 = vmatprep.subr.mxu0 0.0
    %403 = vmatpush1.msra.mxu0 0.0
    %404 = vmatprep.subr.mxu0 0.0
    %405 = vmatpush1.msra.mxu0 0.0
    %406 = vmatprep.subr.mxu0 0.0
    %407 = vmatpush1.msra.mxu0 0.0
    %408 = vmatprep.subr.mxu0 0.0
    %409 = vmatpush1.msra.mxu0 0.0
    %410 = vmatprep.subr.mxu0 0.0
    %411 = vmatpush1.msra.mxu0 0.0
    %412 = vmatprep.subr.mxu0 0.0
    %413 = vmatpush1.msra.mxu0 0.0
    %414 = vmatprep.subr.mxu0 0.0
    %415 = vmatpush1.msra.mxu0 0.0
    %416 = vmatprep.subr.mxu0 0.0
    %417 = vmatpush1.msra.mxu0 0.0
    %418 = vmatprep.subr.mxu0 0.0
    %419 = vmatpush1.msra.mxu0 0.0
    %420 = vmatprep.subr.mxu0 0.0
    %421 = vmatpush1.msra.mxu0 0.0
    %422 = vmatprep.subr.mxu0 0.0
    %423 = vmatpush1.msra.mxu0 0.0
    %424 = vmatprep.subr.mxu0 0.0
    %425 = vmatpush1.msra.mxu0 0.0
    %426 = vmatprep.subr.mxu0 0.0
    %427 = vmatpush1.msra.mxu0 0.0
    %428 = vmatprep.subr.mxu0 0.0
    %429 = vmatpush1.msra.mxu0 0.0
    %430 = vmatprep.mubr.f32.mxu0 0.0
    %431 = vmatmul.mubr.f32.gmra.mrb[0].mxu0 %v364
    %v432 = vpop.f32.mrb[0].mxu0
    %v433 = vadd.f32 %v89, %v432
    %v434 = vpop.f32.mrb[0].mxu0
    %435 = vdwg.mxu0
    %v436 = vmax.f32 %v433, 0.0
    %v437 = vsel %vm82, %v436, 0.0
    %v438 = vpack.c.bf16 %v437, %v437
    %v440 = vshrl.u32 %v362, 16
    %v442 = vshll.u32 %v362, 16
    %v444 = vrot.slane %v442, 1
    %v445 = vor.u32 %v440, %v444
    %446 = vrot.lane.b32.xlu0 %v445, 64
    %v447 = vpop.permute.xlu0 %446
    %v449 = vrot.slane %v362, 1
    %v450 = vrot.slane %v440, 1
    %v451 = vrot.slane %v442, 2
    %v452 = vor.u32 %v450, %v451
    %453 = vrot.lane.b32.xlu0 %v452, 64
    %v454 = vpop.permute.xlu0 %453
    %v456 = vshrl.u32 %v438, 16
    %v458 = vshll.u32 %v438, 16
    %v460 = vrot.slane %v458, 1
    %v461 = vor.u32 %v456, %v460
    %462 = vrot.lane.b32.xlu0 %v461, 64
    %v463 = vpop.permute.xlu0 %462
    %v465 = vrot.slane %v438, 1
    %v467 = vsel %vm275, %v362, %v447
    %v470 = vsel %vm275, %v449, %v454
    %v472 = vsel %vm275, %v438, %v463
    %s473 = scalar_lea.vmem %s0, 16
    %v474 = vld [vmem:[%s473] sm:$0x7f]
    %s475 = scalar_lea.vmem %s1, 16
    %v476 = vld [vmem:[%s475] sm:$0x7f]
    %v478 = vsel %vm91, %v474, 0
    %480 = vmatprep.subr.mxu0 0.0
    %481 = vmatpush1.msra.mxu0 %v97
    %482 = vmatprep.subr.mxu0 0.0
    %483 = vmatpush1.msra.mxu0 0.0
    %484 = vmatprep.subr.mxu0 0.0
    %485 = vmatpush1.msra.mxu0 0.0
    %486 = vmatprep.subr.mxu0 0.0
    %487 = vmatpush1.msra.mxu0 0.0
    %488 = vmatprep.subr.mxu0 0.0
    %489 = vmatpush1.msra.mxu0 0.0
    %490 = vmatprep.subr.mxu0 0.0
    %491 = vmatpush1.msra.mxu0 0.0
    %492 = vmatprep.subr.mxu0 0.0
    %493 = vmatpush1.msra.mxu0 0.0
    %494 = vmatprep.subr.mxu0 0.0
    %495 = vmatpush1.msra.mxu0 0.0
    %496 = vmatprep.subr.mxu0 0.0
    %497 = vmatpush1.msra.mxu0 0.0
    %498 = vmatprep.subr.mxu0 0.0
    %499 = vmatpush1.msra.mxu0 0.0
    %500 = vmatprep.subr.mxu0 0.0
    %501 = vmatpush1.msra.mxu0 0.0
    %502 = vmatprep.subr.mxu0 0.0
    %503 = vmatpush1.msra.mxu0 0.0
    %504 = vmatprep.subr.mxu0 0.0
    %505 = vmatpush1.msra.mxu0 0.0
    %506 = vmatprep.subr.mxu0 0.0
    %507 = vmatpush1.msra.mxu0 0.0
    %508 = vmatprep.subr.mxu0 0.0
    %509 = vmatpush1.msra.mxu0 0.0
    %510 = vmatprep.subr.mxu0 0.0
    %511 = vmatpush1.msra.mxu0 0.0
    %512 = vmatprep.subr.mxu0 0.0
    %513 = vmatpush1.msra.mxu0 0.0
    %514 = vmatprep.subr.mxu0 0.0
    %515 = vmatpush1.msra.mxu0 0.0
    %516 = vmatprep.subr.mxu0 0.0
    %517 = vmatpush1.msra.mxu0 0.0
    %518 = vmatprep.subr.mxu0 0.0
    %519 = vmatpush1.msra.mxu0 0.0
    %520 = vmatprep.subr.mxu0 0.0
    %521 = vmatpush1.msra.mxu0 0.0
    %522 = vmatprep.subr.mxu0 0.0
    %523 = vmatpush1.msra.mxu0 0.0
    %524 = vmatprep.subr.mxu0 0.0
    %525 = vmatpush1.msra.mxu0 0.0
    %526 = vmatprep.subr.mxu0 0.0
    %527 = vmatpush1.msra.mxu0 0.0
    %528 = vmatprep.subr.mxu0 0.0
    %529 = vmatpush1.msra.mxu0 0.0
    %530 = vmatprep.subr.mxu0 0.0
    %531 = vmatpush1.msra.mxu0 0.0
    %532 = vmatprep.subr.mxu0 0.0
    %533 = vmatpush1.msra.mxu0 0.0
    %534 = vmatprep.subr.mxu0 0.0
    %535 = vmatpush1.msra.mxu0 0.0
    %536 = vmatprep.subr.mxu0 0.0
    %537 = vmatpush1.msra.mxu0 0.0
    %538 = vmatprep.subr.mxu0 0.0
    %539 = vmatpush1.msra.mxu0 0.0
    %540 = vmatprep.subr.mxu0 0.0
    %541 = vmatpush1.msra.mxu0 0.0
    %542 = vmatprep.subr.mxu0 0.0
    %543 = vmatpush1.msra.mxu0 0.0
    %544 = vmatprep.mubr.f32.mxu0 0.0
    %545 = vmatmul.mubr.f32.gmra.mrb[0].mxu0 %v478
    %v546 = vpop.f32.mrb[0].mxu0
    %v547 = vadd.f32 %v89, %v546
    %v548 = vpop.f32.mrb[0].mxu0
    %549 = vdwg.mxu0
    %v550 = vmax.f32 %v547, 0.0
    %v551 = vsel %vm79, %v550, 0.0
    %v552 = vpack.c.bf16 %v551, %v551
    %v554 = vsel %vm91, %v476, 0
    %556 = vmatprep.subr.mxu0 0.0
    %557 = vmatpush1.msra.mxu0 %v97
    %558 = vmatprep.subr.mxu0 0.0
    %559 = vmatpush1.msra.mxu0 0.0
    %560 = vmatprep.subr.mxu0 0.0
    %561 = vmatpush1.msra.mxu0 0.0
    %562 = vmatprep.subr.mxu0 0.0
    %563 = vmatpush1.msra.mxu0 0.0
    %564 = vmatprep.subr.mxu0 0.0
    %565 = vmatpush1.msra.mxu0 0.0
    %566 = vmatprep.subr.mxu0 0.0
    %567 = vmatpush1.msra.mxu0 0.0
    %568 = vmatprep.subr.mxu0 0.0
    %569 = vmatpush1.msra.mxu0 0.0
    %570 = vmatprep.subr.mxu0 0.0
    %571 = vmatpush1.msra.mxu0 0.0
    %572 = vmatprep.subr.mxu0 0.0
    %573 = vmatpush1.msra.mxu0 0.0
    %574 = vmatprep.subr.mxu0 0.0
    %575 = vmatpush1.msra.mxu0 0.0
    %576 = vmatprep.subr.mxu0 0.0
    %577 = vmatpush1.msra.mxu0 0.0
    %578 = vmatprep.subr.mxu0 0.0
    %579 = vmatpush1.msra.mxu0 0.0
    %580 = vmatprep.subr.mxu0 0.0
    %581 = vmatpush1.msra.mxu0 0.0
    %582 = vmatprep.subr.mxu0 0.0
    %583 = vmatpush1.msra.mxu0 0.0
    %584 = vmatprep.subr.mxu0 0.0
    %585 = vmatpush1.msra.mxu0 0.0
    %586 = vmatprep.subr.mxu0 0.0
    %587 = vmatpush1.msra.mxu0 0.0
    %588 = vmatprep.subr.mxu0 0.0
    %589 = vmatpush1.msra.mxu0 0.0
    %590 = vmatprep.subr.mxu0 0.0
    %591 = vmatpush1.msra.mxu0 0.0
    %592 = vmatprep.subr.mxu0 0.0
    %593 = vmatpush1.msra.mxu0 0.0
    %594 = vmatprep.subr.mxu0 0.0
    %595 = vmatpush1.msra.mxu0 0.0
    %596 = vmatprep.subr.mxu0 0.0
    %597 = vmatpush1.msra.mxu0 0.0
    %598 = vmatprep.subr.mxu0 0.0
    %599 = vmatpush1.msra.mxu0 0.0
    %600 = vmatprep.subr.mxu0 0.0
    %601 = vmatpush1.msra.mxu0 0.0
    %602 = vmatprep.subr.mxu0 0.0
    %603 = vmatpush1.msra.mxu0 0.0
    %604 = vmatprep.subr.mxu0 0.0
    %605 = vmatpush1.msra.mxu0 0.0
    %606 = vmatprep.subr.mxu0 0.0
    %607 = vmatpush1.msra.mxu0 0.0
    %608 = vmatprep.subr.mxu0 0.0
    %609 = vmatpush1.msra.mxu0 0.0
    %610 = vmatprep.subr.mxu0 0.0
    %611 = vmatpush1.msra.mxu0 0.0
    %612 = vmatprep.subr.mxu0 0.0
    %613 = vmatpush1.msra.mxu0 0.0
    %614 = vmatprep.subr.mxu0 0.0
    %615 = vmatpush1.msra.mxu0 0.0
    %616 = vmatprep.subr.mxu0 0.0
    %617 = vmatpush1.msra.mxu0 0.0
    %618 = vmatprep.subr.mxu0 0.0
    %619 = vmatpush1.msra.mxu0 0.0
    %620 = vmatprep.mubr.f32.mxu0 0.0
    %621 = vmatmul.mubr.f32.gmra.mrb[0].mxu0 %v554
    %v622 = vpop.f32.mrb[0].mxu0
    %v623 = vadd.f32 %v89, %v622
    %v624 = vpop.f32.mrb[0].mxu0
    %625 = vdwg.mxu0
    %v626 = vmax.f32 %v623, 0.0
    %v627 = vsel %vm82, %v626, 0.0
    %v628 = vpack.c.bf16 %v627, %v627
    %v630 = vshrl.u32 %v552, 16
    %v632 = vshll.u32 %v552, 16
    %v634 = vrot.slane %v632, 1
    %v635 = vor.u32 %v630, %v634
    %636 = vrot.lane.b32.xlu0 %v635, 64
    %v637 = vpop.permute.xlu0 %636
    %v639 = vrot.slane %v552, 1
    %v640 = vrot.slane %v630, 1
    %v641 = vrot.slane %v632, 2
    %v642 = vor.u32 %v640, %v641
    %643 = vrot.lane.b32.xlu0 %v642, 64
    %v644 = vpop.permute.xlu0 %643
    %v646 = vshrl.u32 %v628, 16
    %v648 = vshll.u32 %v628, 16
    %v650 = vrot.slane %v648, 1
    %v651 = vor.u32 %v646, %v650
    %652 = vrot.lane.b32.xlu0 %v651, 64
    %v653 = vpop.permute.xlu0 %652
    %v655 = vrot.slane %v628, 1
    %v657 = vsel %vm275, %v552, %v637
    %v660 = vsel %vm275, %v639, %v644
    %v662 = vsel %vm275, %v628, %v653
    %s663 = scalar_lea.vmem %s0, 24
    %v664 = vld [vmem:[%s663] sm:$0x7f]
    %s665 = scalar_lea.vmem %s1, 24
    %v666 = vld [vmem:[%s665] sm:$0x7f]
    %v668 = vsel %vm91, %v664, 0
    %670 = vmatprep.subr.mxu0 0.0
    %671 = vmatpush1.msra.mxu0 %v97
    %672 = vmatprep.subr.mxu0 0.0
    %673 = vmatpush1.msra.mxu0 0.0
    %674 = vmatprep.subr.mxu0 0.0
    %675 = vmatpush1.msra.mxu0 0.0
    %676 = vmatprep.subr.mxu0 0.0
    %677 = vmatpush1.msra.mxu0 0.0
    %678 = vmatprep.subr.mxu0 0.0
    %679 = vmatpush1.msra.mxu0 0.0
    %680 = vmatprep.subr.mxu0 0.0
    %681 = vmatpush1.msra.mxu0 0.0
    %682 = vmatprep.subr.mxu0 0.0
    %683 = vmatpush1.msra.mxu0 0.0
    %684 = vmatprep.subr.mxu0 0.0
    %685 = vmatpush1.msra.mxu0 0.0
    %686 = vmatprep.subr.mxu0 0.0
    %687 = vmatpush1.msra.mxu0 0.0
    %688 = vmatprep.subr.mxu0 0.0
    %689 = vmatpush1.msra.mxu0 0.0
    %690 = vmatprep.subr.mxu0 0.0
    %691 = vmatpush1.msra.mxu0 0.0
    %692 = vmatprep.subr.mxu0 0.0
    %693 = vmatpush1.msra.mxu0 0.0
    %694 = vmatprep.subr.mxu0 0.0
    %695 = vmatpush1.msra.mxu0 0.0
    %696 = vmatprep.subr.mxu0 0.0
    %697 = vmatpush1.msra.mxu0 0.0
    %698 = vmatprep.subr.mxu0 0.0
    %699 = vmatpush1.msra.mxu0 0.0
    %700 = vmatprep.subr.mxu0 0.0
    %701 = vmatpush1.msra.mxu0 0.0
    %702 = vmatprep.subr.mxu0 0.0
    %703 = vmatpush1.msra.mxu0 0.0
    %704 = vmatprep.subr.mxu0 0.0
    %705 = vmatpush1.msra.mxu0 0.0
    %706 = vmatprep.subr.mxu0 0.0
    %707 = vmatpush1.msra.mxu0 0.0
    %708 = vmatprep.subr.mxu0 0.0
    %709 = vmatpush1.msra.mxu0 0.0
    %710 = vmatprep.subr.mxu0 0.0
    %711 = vmatpush1.msra.mxu0 0.0
    %712 = vmatprep.subr.mxu0 0.0
    %713 = vmatpush1.msra.mxu0 0.0
    %714 = vmatprep.subr.mxu0 0.0
    %715 = vmatpush1.msra.mxu0 0.0
    %716 = vmatprep.subr.mxu0 0.0
    %717 = vmatpush1.msra.mxu0 0.0
    %718 = vmatprep.subr.mxu0 0.0
    %719 = vmatpush1.msra.mxu0 0.0
    %720 = vmatprep.subr.mxu0 0.0
    %721 = vmatpush1.msra.mxu0 0.0
    %722 = vmatprep.subr.mxu0 0.0
    %723 = vmatpush1.msra.mxu0 0.0
    %724 = vmatprep.subr.mxu0 0.0
    %725 = vmatpush1.msra.mxu0 0.0
    %726 = vmatprep.subr.mxu0 0.0
    %727 = vmatpush1.msra.mxu0 0.0
    %728 = vmatprep.subr.mxu0 0.0
    %729 = vmatpush1.msra.mxu0 0.0
    %730 = vmatprep.subr.mxu0 0.0
    %731 = vmatpush1.msra.mxu0 0.0
    %732 = vmatprep.subr.mxu0 0.0
    %733 = vmatpush1.msra.mxu0 0.0
    %734 = vmatprep.mubr.f32.mxu0 0.0
    %735 = vmatmul.mubr.f32.gmra.mrb[0].mxu0 %v668
    %v736 = vpop.f32.mrb[0].mxu0
    %v737 = vadd.f32 %v89, %v736
    %v738 = vpop.f32.mrb[0].mxu0
    %739 = vdwg.mxu0
    %v740 = vmax.f32 %v737, 0.0
    %v741 = vsel %vm79, %v740, 0.0
    %v742 = vpack.c.bf16 %v741, %v741
    %v744 = vsel %vm91, %v666, 0
    %746 = vmatprep.subr.mxu0 0.0
    %747 = vmatpush1.msra.mxu0 %v97
    %748 = vmatprep.subr.mxu0 0.0
    %749 = vmatpush1.msra.mxu0 0.0
    %750 = vmatprep.subr.mxu0 0.0
    %751 = vmatpush1.msra.mxu0 0.0
    %752 = vmatprep.subr.mxu0 0.0
    %753 = vmatpush1.msra.mxu0 0.0
    %754 = vmatprep.subr.mxu0 0.0
    %755 = vmatpush1.msra.mxu0 0.0
    %756 = vmatprep.subr.mxu0 0.0
    %757 = vmatpush1.msra.mxu0 0.0
    %758 = vmatprep.subr.mxu0 0.0
    %759 = vmatpush1.msra.mxu0 0.0
    %760 = vmatprep.subr.mxu0 0.0
    %761 = vmatpush1.msra.mxu0 0.0
    %762 = vmatprep.subr.mxu0 0.0
    %763 = vmatpush1.msra.mxu0 0.0
    %764 = vmatprep.subr.mxu0 0.0
    %765 = vmatpush1.msra.mxu0 0.0
    %766 = vmatprep.subr.mxu0 0.0
    %767 = vmatpush1.msra.mxu0 0.0
    %768 = vmatprep.subr.mxu0 0.0
    %769 = vmatpush1.msra.mxu0 0.0
    %770 = vmatprep.subr.mxu0 0.0
    %771 = vmatpush1.msra.mxu0 0.0
    %772 = vmatprep.subr.mxu0 0.0
    %773 = vmatpush1.msra.mxu0 0.0
    %774 = vmatprep.subr.mxu0 0.0
    %775 = vmatpush1.msra.mxu0 0.0
    %776 = vmatprep.subr.mxu0 0.0
    %777 = vmatpush1.msra.mxu0 0.0
    %778 = vmatprep.subr.mxu0 0.0
    %779 = vmatpush1.msra.mxu0 0.0
    %780 = vmatprep.subr.mxu0 0.0
    %781 = vmatpush1.msra.mxu0 0.0
    %782 = vmatprep.subr.mxu0 0.0
    %783 = vmatpush1.msra.mxu0 0.0
    %784 = vmatprep.subr.mxu0 0.0
    %785 = vmatpush1.msra.mxu0 0.0
    %786 = vmatprep.subr.mxu0 0.0
    %787 = vmatpush1.msra.mxu0 0.0
    %788 = vmatprep.subr.mxu0 0.0
    %789 = vmatpush1.msra.mxu0 0.0
    %790 = vmatprep.subr.mxu0 0.0
    %791 = vmatpush1.msra.mxu0 0.0
    %792 = vmatprep.subr.mxu0 0.0
    %793 = vmatpush1.msra.mxu0 0.0
    %794 = vmatprep.subr.mxu0 0.0
    %795 = vmatpush1.msra.mxu0 0.0
    %796 = vmatprep.subr.mxu0 0.0
    %797 = vmatpush1.msra.mxu0 0.0
    %798 = vmatprep.subr.mxu0 0.0
    %799 = vmatpush1.msra.mxu0 0.0
    %800 = vmatprep.subr.mxu0 0.0
    %801 = vmatpush1.msra.mxu0 0.0
    %802 = vmatprep.subr.mxu0 0.0
    %803 = vmatpush1.msra.mxu0 0.0
    %804 = vmatprep.subr.mxu0 0.0
    %805 = vmatpush1.msra.mxu0 0.0
    %806 = vmatprep.subr.mxu0 0.0
    %807 = vmatpush1.msra.mxu0 0.0
    %808 = vmatprep.subr.mxu0 0.0
    %809 = vmatpush1.msra.mxu0 0.0
    %810 = vmatprep.mubr.f32.mxu0 0.0
    %811 = vmatmul.mubr.f32.gmra.mrb[0].mxu0 %v744
    %v812 = vpop.f32.mrb[0].mxu0
    %v813 = vadd.f32 %v89, %v812
    %v814 = vpop.f32.mrb[0].mxu0
    %815 = vdwg.mxu0
    %v816 = vmax.f32 %v813, 0.0
    %v817 = vsel %vm82, %v816, 0.0
    %v818 = vpack.c.bf16 %v817, %v817
    %v820 = vshrl.u32 %v742, 16
    %v822 = vshll.u32 %v742, 16
    %v824 = vrot.slane %v822, 1
    %v825 = vor.u32 %v820, %v824
    %826 = vrot.lane.b32.xlu0 %v825, 64
    %v827 = vpop.permute.xlu0 %826
    %v829 = vrot.slane %v742, 1
    %v830 = vrot.slane %v820, 1
    %v831 = vrot.slane %v822, 2
    %v832 = vor.u32 %v830, %v831
    %833 = vrot.lane.b32.xlu0 %v832, 64
    %v834 = vpop.permute.xlu0 %833
    %v836 = vshrl.u32 %v818, 16
    %v838 = vshll.u32 %v818, 16
    %v840 = vrot.slane %v838, 1
    %v841 = vor.u32 %v836, %v840
    %842 = vrot.lane.b32.xlu0 %v841, 64
    %v843 = vpop.permute.xlu0 %842
    %v845 = vrot.slane %v818, 1
    %v847 = vsel %vm275, %v742, %v827
    %v850 = vsel %vm275, %v829, %v834
    %v852 = vsel %vm275, %v818, %v843
    %s853 = scalar_lea.vmem %s0, 32
    %v854 = vld [vmem:[%s853] sm:$0x7f]
    %s855 = scalar_lea.vmem %s1, 32
    %v856 = vld [vmem:[%s855] sm:$0x7f]
    %v858 = vsel %vm91, %v854, 0
    %860 = vmatprep.subr.mxu0 0.0
    %861 = vmatpush1.msra.mxu0 %v97
    %862 = vmatprep.subr.mxu0 0.0
    %863 = vmatpush1.msra.mxu0 0.0
    %864 = vmatprep.subr.mxu0 0.0
    %865 = vmatpush1.msra.mxu0 0.0
    %866 = vmatprep.subr.mxu0 0.0
    %867 = vmatpush1.msra.mxu0 0.0
    %868 = vmatprep.subr.mxu0 0.0
    %869 = vmatpush1.msra.mxu0 0.0
    %870 = vmatprep.subr.mxu0 0.0
    %871 = vmatpush1.msra.mxu0 0.0
    %872 = vmatprep.subr.mxu0 0.0
    %873 = vmatpush1.msra.mxu0 0.0
    %874 = vmatprep.subr.mxu0 0.0
    %875 = vmatpush1.msra.mxu0 0.0
    %876 = vmatprep.subr.mxu0 0.0
    %877 = vmatpush1.msra.mxu0 0.0
    %878 = vmatprep.subr.mxu0 0.0
    %879 = vmatpush1.msra.mxu0 0.0
    %880 = vmatprep.subr.mxu0 0.0
    %881 = vmatpush1.msra.mxu0 0.0
    %882 = vmatprep.subr.mxu0 0.0
    %883 = vmatpush1.msra.mxu0 0.0
    %884 = vmatprep.subr.mxu0 0.0
    %885 = vmatpush1.msra.mxu0 0.0
    %886 = vmatprep.subr.mxu0 0.0
    %887 = vmatpush1.msra.mxu0 0.0
    %888 = vmatprep.subr.mxu0 0.0
    %889 = vmatpush1.msra.mxu0 0.0
    %890 = vmatprep.subr.mxu0 0.0
    %891 = vmatpush1.msra.mxu0 0.0
    %892 = vmatprep.subr.mxu0 0.0
    %893 = vmatpush1.msra.mxu0 0.0
    %894 = vmatprep.subr.mxu0 0.0
    %895 = vmatpush1.msra.mxu0 0.0
    %896 = vmatprep.subr.mxu0 0.0
    %897 = vmatpush1.msra.mxu0 0.0
    %898 = vmatprep.subr.mxu0 0.0
    %899 = vmatpush1.msra.mxu0 0.0
    %900 = vmatprep.subr.mxu0 0.0
    %901 = vmatpush1.msra.mxu0 0.0
    %902 = vmatprep.subr.mxu0 0.0
    %903 = vmatpush1.msra.mxu0 0.0
    %904 = vmatprep.subr.mxu0 0.0
    %905 = vmatpush1.msra.mxu0 0.0
    %906 = vmatprep.subr.mxu0 0.0
    %907 = vmatpush1.msra.mxu0 0.0
    %908 = vmatprep.subr.mxu0 0.0
    %909 = vmatpush1.msra.mxu0 0.0
    %910 = vmatprep.subr.mxu0 0.0
    %911 = vmatpush1.msra.mxu0 0.0
    %912 = vmatprep.subr.mxu0 0.0
    %913 = vmatpush1.msra.mxu0 0.0
    %914 = vmatprep.subr.mxu0 0.0
    %915 = vmatpush1.msra.mxu0 0.0
    %916 = vmatprep.subr.mxu0 0.0
    %917 = vmatpush1.msra.mxu0 0.0
    %918 = vmatprep.subr.mxu0 0.0
    %919 = vmatpush1.msra.mxu0 0.0
    %920 = vmatprep.subr.mxu0 0.0
    %921 = vmatpush1.msra.mxu0 0.0
    %922 = vmatprep.subr.mxu0 0.0
    %923 = vmatpush1.msra.mxu0 0.0
    %924 = vmatprep.mubr.f32.mxu0 0.0
    %925 = vmatmul.mubr.f32.gmra.mrb[0].mxu0 %v858
    %v926 = vpop.f32.mrb[0].mxu0
    %v927 = vadd.f32 %v89, %v926
    %v928 = vpop.f32.mrb[0].mxu0
    %929 = vdwg.mxu0
    %v930 = vmax.f32 %v927, 0.0
    %v931 = vsel %vm79, %v930, 0.0
    %v932 = vpack.c.bf16 %v931, %v931
    %v934 = vsel %vm91, %v856, 0
    %936 = vmatprep.subr.mxu0 0.0
    %937 = vmatpush1.msra.mxu0 %v97
    %938 = vmatprep.subr.mxu0 0.0
    %939 = vmatpush1.msra.mxu0 0.0
    %940 = vmatprep.subr.mxu0 0.0
    %941 = vmatpush1.msra.mxu0 0.0
    %942 = vmatprep.subr.mxu0 0.0
    %943 = vmatpush1.msra.mxu0 0.0
    %944 = vmatprep.subr.mxu0 0.0
    %945 = vmatpush1.msra.mxu0 0.0
    %946 = vmatprep.subr.mxu0 0.0
    %947 = vmatpush1.msra.mxu0 0.0
    %948 = vmatprep.subr.mxu0 0.0
    %949 = vmatpush1.msra.mxu0 0.0
    %950 = vmatprep.subr.mxu0 0.0
    %951 = vmatpush1.msra.mxu0 0.0
    %952 = vmatprep.subr.mxu0 0.0
    %953 = vmatpush1.msra.mxu0 0.0
    %954 = vmatprep.subr.mxu0 0.0
    %955 = vmatpush1.msra.mxu0 0.0
    %956 = vmatprep.subr.mxu0 0.0
    %957 = vmatpush1.msra.mxu0 0.0
    %958 = vmatprep.subr.mxu0 0.0
    %959 = vmatpush1.msra.mxu0 0.0
    %960 = vmatprep.subr.mxu0 0.0
    %961 = vmatpush1.msra.mxu0 0.0
    %962 = vmatprep.subr.mxu0 0.0
    %963 = vmatpush1.msra.mxu0 0.0
    %964 = vmatprep.subr.mxu0 0.0
    %965 = vmatpush1.msra.mxu0 0.0
    %966 = vmatprep.subr.mxu0 0.0
    %967 = vmatpush1.msra.mxu0 0.0
    %968 = vmatprep.subr.mxu0 0.0
    %969 = vmatpush1.msra.mxu0 0.0
    %970 = vmatprep.subr.mxu0 0.0
    %971 = vmatpush1.msra.mxu0 0.0
    %972 = vmatprep.subr.mxu0 0.0
    %973 = vmatpush1.msra.mxu0 0.0
    %974 = vmatprep.subr.mxu0 0.0
    %975 = vmatpush1.msra.mxu0 0.0
    %976 = vmatprep.subr.mxu0 0.0
    %977 = vmatpush1.msra.mxu0 0.0
    %978 = vmatprep.subr.mxu0 0.0
    %979 = vmatpush1.msra.mxu0 0.0
    %980 = vmatprep.subr.mxu0 0.0
    %981 = vmatpush1.msra.mxu0 0.0
    %982 = vmatprep.subr.mxu0 0.0
    %983 = vmatpush1.msra.mxu0 0.0
    %984 = vmatprep.subr.mxu0 0.0
    %985 = vmatpush1.msra.mxu0 0.0
    %986 = vmatprep.subr.mxu0 0.0
    %987 = vmatpush1.msra.mxu0 0.0
    %988 = vmatprep.subr.mxu0 0.0
    %989 = vmatpush1.msra.mxu0 0.0
    %990 = vmatprep.subr.mxu0 0.0
    %991 = vmatpush1.msra.mxu0 0.0
    %992 = vmatprep.subr.mxu0 0.0
    %993 = vmatpush1.msra.mxu0 0.0
    %994 = vmatprep.subr.mxu0 0.0
    %995 = vmatpush1.msra.mxu0 0.0
    %996 = vmatprep.subr.mxu0 0.0
    %997 = vmatpush1.msra.mxu0 0.0
    %998 = vmatprep.subr.mxu0 0.0
    %999 = vmatpush1.msra.mxu0 0.0
    %1000 = vmatprep.mubr.f32.mxu0 0.0
    %1001 = vmatmul.mubr.f32.gmra.mrb[0].mxu0 %v934
    %v1002 = vpop.f32.mrb[0].mxu0
    %v1003 = vadd.f32 %v89, %v1002
    %v1004 = vpop.f32.mrb[0].mxu0
    %1005 = vdwg.mxu0
    %v1006 = vmax.f32 %v1003, 0.0
    %v1007 = vsel %vm82, %v1006, 0.0
    %v1008 = vpack.c.bf16 %v1007, %v1007
    %v1010 = vshrl.u32 %v932, 16
    %v1012 = vshll.u32 %v932, 16
    %v1014 = vrot.slane %v1012, 1
    %v1015 = vor.u32 %v1010, %v1014
    %1016 = vrot.lane.b32.xlu0 %v1015, 64
    %v1017 = vpop.permute.xlu0 %1016
    %v1019 = vrot.slane %v932, 1
    %v1020 = vrot.slane %v1010, 1
    %v1021 = vrot.slane %v1012, 2
    %v1022 = vor.u32 %v1020, %v1021
    %1023 = vrot.lane.b32.xlu0 %v1022, 64
    %v1024 = vpop.permute.xlu0 %1023
    %v1026 = vshrl.u32 %v1008, 16
    %v1028 = vshll.u32 %v1008, 16
    %v1030 = vrot.slane %v1028, 1
    %v1031 = vor.u32 %v1026, %v1030
    %1032 = vrot.lane.b32.xlu0 %v1031, 64
    %v1033 = vpop.permute.xlu0 %1032
    %v1035 = vrot.slane %v1008, 1
    %v1037 = vsel %vm275, %v932, %v1017
    %v1040 = vsel %vm275, %v1019, %v1024
    %v1042 = vsel %vm275, %v1008, %v1033
    %s1043 = scalar_lea.vmem %s0, 40
    %v1044 = vld [vmem:[%s1043] sm:$0x7f]
    %s1045 = scalar_lea.vmem %s1, 40
    %v1046 = vld [vmem:[%s1045] sm:$0x7f]
    %v1048 = vsel %vm91, %v1044, 0
    %1050 = vmatprep.subr.mxu0 0.0
    %1051 = vmatpush1.msra.mxu0 %v97
    %1052 = vmatprep.subr.mxu0 0.0
    %1053 = vmatpush1.msra.mxu0 0.0
    %1054 = vmatprep.subr.mxu0 0.0
    %1055 = vmatpush1.msra.mxu0 0.0
    %1056 = vmatprep.subr.mxu0 0.0
    %1057 = vmatpush1.msra.mxu0 0.0
    %1058 = vmatprep.subr.mxu0 0.0
    %1059 = vmatpush1.msra.mxu0 0.0
    %1060 = vmatprep.subr.mxu0 0.0
    %1061 = vmatpush1.msra.mxu0 0.0
    %1062 = vmatprep.subr.mxu0 0.0
    %1063 = vmatpush1.msra.mxu0 0.0
    %1064 = vmatprep.subr.mxu0 0.0
    %1065 = vmatpush1.msra.mxu0 0.0
    %1066 = vmatprep.subr.mxu0 0.0
    %1067 = vmatpush1.msra.mxu0 0.0
    %1068 = vmatprep.subr.mxu0 0.0
    %1069 = vmatpush1.msra.mxu0 0.0
    %1070 = vmatprep.subr.mxu0 0.0
    %1071 = vmatpush1.msra.mxu0 0.0
    %1072 = vmatprep.subr.mxu0 0.0
    %1073 = vmatpush1.msra.mxu0 0.0
    %1074 = vmatprep.subr.mxu0 0.0
    %1075 = vmatpush1.msra.mxu0 0.0
    %1076 = vmatprep.subr.mxu0 0.0
    %1077 = vmatpush1.msra.mxu0 0.0
    %1078 = vmatprep.subr.mxu0 0.0
    %1079 = vmatpush1.msra.mxu0 0.0
    %1080 = vmatprep.subr.mxu0 0.0
    %1081 = vmatpush1.msra.mxu0 0.0
    %1082 = vmatprep.subr.mxu0 0.0
    %1083 = vmatpush1.msra.mxu0 0.0
    %1084 = vmatprep.subr.mxu0 0.0
    %1085 = vmatpush1.msra.mxu0 0.0
    %1086 = vmatprep.subr.mxu0 0.0
    %1087 = vmatpush1.msra.mxu0 0.0
    %1088 = vmatprep.subr.mxu0 0.0
    %1089 = vmatpush1.msra.mxu0 0.0
    %1090 = vmatprep.subr.mxu0 0.0
    %1091 = vmatpush1.msra.mxu0 0.0
    %1092 = vmatprep.subr.mxu0 0.0
    %1093 = vmatpush1.msra.mxu0 0.0
    %1094 = vmatprep.subr.mxu0 0.0
    %1095 = vmatpush1.msra.mxu0 0.0
    %1096 = vmatprep.subr.mxu0 0.0
    %1097 = vmatpush1.msra.mxu0 0.0
    %1098 = vmatprep.subr.mxu0 0.0
    %1099 = vmatpush1.msra.mxu0 0.0
    %1100 = vmatprep.subr.mxu0 0.0
    %1101 = vmatpush1.msra.mxu0 0.0
    %1102 = vmatprep.subr.mxu0 0.0
    %1103 = vmatpush1.msra.mxu0 0.0
    %1104 = vmatprep.subr.mxu0 0.0
    %1105 = vmatpush1.msra.mxu0 0.0
    %1106 = vmatprep.subr.mxu0 0.0
    %1107 = vmatpush1.msra.mxu0 0.0
    %1108 = vmatprep.subr.mxu0 0.0
    %1109 = vmatpush1.msra.mxu0 0.0
    %1110 = vmatprep.subr.mxu0 0.0
    %1111 = vmatpush1.msra.mxu0 0.0
    %1112 = vmatprep.subr.mxu0 0.0
    %1113 = vmatpush1.msra.mxu0 0.0
    %1114 = vmatprep.mubr.f32.mxu0 0.0
    %1115 = vmatmul.mubr.f32.gmra.mrb[0].mxu0 %v1048
    %v1116 = vpop.f32.mrb[0].mxu0
    %v1117 = vadd.f32 %v89, %v1116
    %v1118 = vpop.f32.mrb[0].mxu0
    %1119 = vdwg.mxu0
    %v1120 = vmax.f32 %v1117, 0.0
    %v1121 = vsel %vm79, %v1120, 0.0
    %v1122 = vpack.c.bf16 %v1121, %v1121
    %v1124 = vsel %vm91, %v1046, 0
    %1126 = vmatprep.subr.mxu0 0.0
    %1127 = vmatpush1.msra.mxu0 %v97
    %1128 = vmatprep.subr.mxu0 0.0
    %1129 = vmatpush1.msra.mxu0 0.0
    %1130 = vmatprep.subr.mxu0 0.0
    %1131 = vmatpush1.msra.mxu0 0.0
    %1132 = vmatprep.subr.mxu0 0.0
    %1133 = vmatpush1.msra.mxu0 0.0
    %1134 = vmatprep.subr.mxu0 0.0
    %1135 = vmatpush1.msra.mxu0 0.0
    %1136 = vmatprep.subr.mxu0 0.0
    %1137 = vmatpush1.msra.mxu0 0.0
    %1138 = vmatprep.subr.mxu0 0.0
    %1139 = vmatpush1.msra.mxu0 0.0
    %1140 = vmatprep.subr.mxu0 0.0
    %1141 = vmatpush1.msra.mxu0 0.0
    %1142 = vmatprep.subr.mxu0 0.0
    %1143 = vmatpush1.msra.mxu0 0.0
    %1144 = vmatprep.subr.mxu0 0.0
    %1145 = vmatpush1.msra.mxu0 0.0
    %1146 = vmatprep.subr.mxu0 0.0
    %1147 = vmatpush1.msra.mxu0 0.0
    %1148 = vmatprep.subr.mxu0 0.0
    %1149 = vmatpush1.msra.mxu0 0.0
    %1150 = vmatprep.subr.mxu0 0.0
    %1151 = vmatpush1.msra.mxu0 0.0
    %1152 = vmatprep.subr.mxu0 0.0
    %1153 = vmatpush1.msra.mxu0 0.0
    %1154 = vmatprep.subr.mxu0 0.0
    %1155 = vmatpush1.msra.mxu0 0.0
    %1156 = vmatprep.subr.mxu0 0.0
    %1157 = vmatpush1.msra.mxu0 0.0
    %1158 = vmatprep.subr.mxu0 0.0
    %1159 = vmatpush1.msra.mxu0 0.0
    %1160 = vmatprep.subr.mxu0 0.0
    %1161 = vmatpush1.msra.mxu0 0.0
    %1162 = vmatprep.subr.mxu0 0.0
    %1163 = vmatpush1.msra.mxu0 0.0
    %1164 = vmatprep.subr.mxu0 0.0
    %1165 = vmatpush1.msra.mxu0 0.0
    %1166 = vmatprep.subr.mxu0 0.0
    %1167 = vmatpush1.msra.mxu0 0.0
    %1168 = vmatprep.subr.mxu0 0.0
    %1169 = vmatpush1.msra.mxu0 0.0
    %1170 = vmatprep.subr.mxu0 0.0
    %1171 = vmatpush1.msra.mxu0 0.0
    %1172 = vmatprep.subr.mxu0 0.0
    %1173 = vmatpush1.msra.mxu0 0.0
    %1174 = vmatprep.subr.mxu0 0.0
    %1175 = vmatpush1.msra.mxu0 0.0
    %1176 = vmatprep.subr.mxu0 0.0
    %1177 = vmatpush1.msra.mxu0 0.0
    %1178 = vmatprep.subr.mxu0 0.0
    %1179 = vmatpush1.msra.mxu0 0.0
    %1180 = vmatprep.subr.mxu0 0.0
    %1181 = vmatpush1.msra.mxu0 0.0
    %1182 = vmatprep.subr.mxu0 0.0
    %1183 = vmatpush1.msra.mxu0 0.0
    %1184 = vmatprep.subr.mxu0 0.0
    %1185 = vmatpush1.msra.mxu0 0.0
    %1186 = vmatprep.subr.mxu0 0.0
    %1187 = vmatpush1.msra.mxu0 0.0
    %1188 = vmatprep.subr.mxu0 0.0
    %1189 = vmatpush1.msra.mxu0 0.0
    %1190 = vmatprep.mubr.f32.mxu0 0.0
    %1191 = vmatmul.mubr.f32.gmra.mrb[0].mxu0 %v1124
    %v1192 = vpop.f32.mrb[0].mxu0
    %v1193 = vadd.f32 %v89, %v1192
    %v1194 = vpop.f32.mrb[0].mxu0
    %1195 = vdwg.mxu0
    %v1196 = vmax.f32 %v1193, 0.0
    %v1197 = vsel %vm82, %v1196, 0.0
    %v1198 = vpack.c.bf16 %v1197, %v1197
    %v1200 = vshrl.u32 %v1122, 16
    %v1202 = vshll.u32 %v1122, 16
    %v1204 = vrot.slane %v1202, 1
    %v1205 = vor.u32 %v1200, %v1204
    %1206 = vrot.lane.b32.xlu0 %v1205, 64
    %v1207 = vpop.permute.xlu0 %1206
    %v1209 = vrot.slane %v1122, 1
    %v1210 = vrot.slane %v1200, 1
    %v1211 = vrot.slane %v1202, 2
    %v1212 = vor.u32 %v1210, %v1211
    %1213 = vrot.lane.b32.xlu0 %v1212, 64
    %v1214 = vpop.permute.xlu0 %1213
    %v1216 = vshrl.u32 %v1198, 16
    %v1218 = vshll.u32 %v1198, 16
    %v1220 = vrot.slane %v1218, 1
    %v1221 = vor.u32 %v1216, %v1220
    %1222 = vrot.lane.b32.xlu0 %v1221, 64
    %v1223 = vpop.permute.xlu0 %1222
    %v1225 = vrot.slane %v1198, 1
    %v1227 = vsel %vm275, %v1122, %v1207
    %v1230 = vsel %vm275, %v1209, %v1214
    %v1232 = vsel %vm275, %v1198, %v1223
    %s1233 = scalar_lea.vmem %s0, 48
    %v1234 = vld [vmem:[%s1233] sm:$0x7f]
    %s1235 = scalar_lea.vmem %s1, 48
    %v1236 = vld [vmem:[%s1235] sm:$0x7f]
    %v1238 = vsel %vm91, %v1234, 0
    %1240 = vmatprep.subr.mxu0 0.0
    %1241 = vmatpush1.msra.mxu0 %v97
    %1242 = vmatprep.subr.mxu0 0.0
    %1243 = vmatpush1.msra.mxu0 0.0
    %1244 = vmatprep.subr.mxu0 0.0
    %1245 = vmatpush1.msra.mxu0 0.0
    %1246 = vmatprep.subr.mxu0 0.0
    %1247 = vmatpush1.msra.mxu0 0.0
    %1248 = vmatprep.subr.mxu0 0.0
    %1249 = vmatpush1.msra.mxu0 0.0
    %1250 = vmatprep.subr.mxu0 0.0
    %1251 = vmatpush1.msra.mxu0 0.0
    %1252 = vmatprep.subr.mxu0 0.0
    %1253 = vmatpush1.msra.mxu0 0.0
    %1254 = vmatprep.subr.mxu0 0.0
    %1255 = vmatpush1.msra.mxu0 0.0
    %1256 = vmatprep.subr.mxu0 0.0
    %1257 = vmatpush1.msra.mxu0 0.0
    %1258 = vmatprep.subr.mxu0 0.0
    %1259 = vmatpush1.msra.mxu0 0.0
    %1260 = vmatprep.subr.mxu0 0.0
    %1261 = vmatpush1.msra.mxu0 0.0
    %1262 = vmatprep.subr.mxu0 0.0
    %1263 = vmatpush1.msra.mxu0 0.0
    %1264 = vmatprep.subr.mxu0 0.0
    %1265 = vmatpush1.msra.mxu0 0.0
    %1266 = vmatprep.subr.mxu0 0.0
    %1267 = vmatpush1.msra.mxu0 0.0
    %1268 = vmatprep.subr.mxu0 0.0
    %1269 = vmatpush1.msra.mxu0 0.0
    %1270 = vmatprep.subr.mxu0 0.0
    %1271 = vmatpush1.msra.mxu0 0.0
    %1272 = vmatprep.subr.mxu0 0.0
    %1273 = vmatpush1.msra.mxu0 0.0
    %1274 = vmatprep.subr.mxu0 0.0
    %1275 = vmatpush1.msra.mxu0 0.0
    %1276 = vmatprep.subr.mxu0 0.0
    %1277 = vmatpush1.msra.mxu0 0.0
    %1278 = vmatprep.subr.mxu0 0.0
    %1279 = vmatpush1.msra.mxu0 0.0
    %1280 = vmatprep.subr.mxu0 0.0
    %1281 = vmatpush1.msra.mxu0 0.0
    %1282 = vmatprep.subr.mxu0 0.0
    %1283 = vmatpush1.msra.mxu0 0.0
    %1284 = vmatprep.subr.mxu0 0.0
    %1285 = vmatpush1.msra.mxu0 0.0
    %1286 = vmatprep.subr.mxu0 0.0
    %1287 = vmatpush1.msra.mxu0 0.0
    %1288 = vmatprep.subr.mxu0 0.0
    %1289 = vmatpush1.msra.mxu0 0.0
    %1290 = vmatprep.subr.mxu0 0.0
    %1291 = vmatpush1.msra.mxu0 0.0
    %1292 = vmatprep.subr.mxu0 0.0
    %1293 = vmatpush1.msra.mxu0 0.0
    %1294 = vmatprep.subr.mxu0 0.0
    %1295 = vmatpush1.msra.mxu0 0.0
    %1296 = vmatprep.subr.mxu0 0.0
    %1297 = vmatpush1.msra.mxu0 0.0
    %1298 = vmatprep.subr.mxu0 0.0
    %1299 = vmatpush1.msra.mxu0 0.0
    %1300 = vmatprep.subr.mxu0 0.0
    %1301 = vmatpush1.msra.mxu0 0.0
    %1302 = vmatprep.subr.mxu0 0.0
    %1303 = vmatpush1.msra.mxu0 0.0
    %1304 = vmatprep.mubr.f32.mxu0 0.0
    %1305 = vmatmul.mubr.f32.gmra.mrb[0].mxu0 %v1238
    %v1306 = vpop.f32.mrb[0].mxu0
    %v1307 = vadd.f32 %v89, %v1306
    %v1308 = vpop.f32.mrb[0].mxu0
    %1309 = vdwg.mxu0
    %v1310 = vmax.f32 %v1307, 0.0
    %v1311 = vsel %vm79, %v1310, 0.0
    %v1312 = vpack.c.bf16 %v1311, %v1311
    %v1314 = vsel %vm91, %v1236, 0
    %1316 = vmatprep.subr.mxu0 0.0
    %1317 = vmatpush1.msra.mxu0 %v97
    %1318 = vmatprep.subr.mxu0 0.0
    %1319 = vmatpush1.msra.mxu0 0.0
    %1320 = vmatprep.subr.mxu0 0.0
    %1321 = vmatpush1.msra.mxu0 0.0
    %1322 = vmatprep.subr.mxu0 0.0
    %1323 = vmatpush1.msra.mxu0 0.0
    %1324 = vmatprep.subr.mxu0 0.0
    %1325 = vmatpush1.msra.mxu0 0.0
    %1326 = vmatprep.subr.mxu0 0.0
    %1327 = vmatpush1.msra.mxu0 0.0
    %1328 = vmatprep.subr.mxu0 0.0
    %1329 = vmatpush1.msra.mxu0 0.0
    %1330 = vmatprep.subr.mxu0 0.0
    %1331 = vmatpush1.msra.mxu0 0.0
    %1332 = vmatprep.subr.mxu0 0.0
    %1333 = vmatpush1.msra.mxu0 0.0
    %1334 = vmatprep.subr.mxu0 0.0
    %1335 = vmatpush1.msra.mxu0 0.0
    %1336 = vmatprep.subr.mxu0 0.0
    %1337 = vmatpush1.msra.mxu0 0.0
    %1338 = vmatprep.subr.mxu0 0.0
    %1339 = vmatpush1.msra.mxu0 0.0
    %1340 = vmatprep.subr.mxu0 0.0
    %1341 = vmatpush1.msra.mxu0 0.0
    %1342 = vmatprep.subr.mxu0 0.0
    %1343 = vmatpush1.msra.mxu0 0.0
    %1344 = vmatprep.subr.mxu0 0.0
    %1345 = vmatpush1.msra.mxu0 0.0
    %1346 = vmatprep.subr.mxu0 0.0
    %1347 = vmatpush1.msra.mxu0 0.0
    %1348 = vmatprep.subr.mxu0 0.0
    %1349 = vmatpush1.msra.mxu0 0.0
    %1350 = vmatprep.subr.mxu0 0.0
    %1351 = vmatpush1.msra.mxu0 0.0
    %1352 = vmatprep.subr.mxu0 0.0
    %1353 = vmatpush1.msra.mxu0 0.0
    %1354 = vmatprep.subr.mxu0 0.0
    %1355 = vmatpush1.msra.mxu0 0.0
    %1356 = vmatprep.subr.mxu0 0.0
    %1357 = vmatpush1.msra.mxu0 0.0
    %1358 = vmatprep.subr.mxu0 0.0
    %1359 = vmatpush1.msra.mxu0 0.0
    %1360 = vmatprep.subr.mxu0 0.0
    %1361 = vmatpush1.msra.mxu0 0.0
    %1362 = vmatprep.subr.mxu0 0.0
    %1363 = vmatpush1.msra.mxu0 0.0
    %1364 = vmatprep.subr.mxu0 0.0
    %1365 = vmatpush1.msra.mxu0 0.0
    %1366 = vmatprep.subr.mxu0 0.0
    %1367 = vmatpush1.msra.mxu0 0.0
    %1368 = vmatprep.subr.mxu0 0.0
    %1369 = vmatpush1.msra.mxu0 0.0
    %1370 = vmatprep.subr.mxu0 0.0
    %1371 = vmatpush1.msra.mxu0 0.0
    %1372 = vmatprep.subr.mxu0 0.0
    %1373 = vmatpush1.msra.mxu0 0.0
    %1374 = vmatprep.subr.mxu0 0.0
    %1375 = vmatpush1.msra.mxu0 0.0
    %1376 = vmatprep.subr.mxu0 0.0
    %1377 = vmatpush1.msra.mxu0 0.0
    %1378 = vmatprep.subr.mxu0 0.0
    %1379 = vmatpush1.msra.mxu0 0.0
    %1380 = vmatprep.mubr.f32.mxu0 0.0
    %1381 = vmatmul.mubr.f32.gmra.mrb[0].mxu0 %v1314
    %v1382 = vpop.f32.mrb[0].mxu0
    %v1383 = vadd.f32 %v89, %v1382
    %v1384 = vpop.f32.mrb[0].mxu0
    %1385 = vdwg.mxu0
    %v1386 = vmax.f32 %v1383, 0.0
    %v1387 = vsel %vm82, %v1386, 0.0
    %v1388 = vpack.c.bf16 %v1387, %v1387
    %v1390 = vshrl.u32 %v1312, 16
    %v1392 = vshll.u32 %v1312, 16
    %v1394 = vrot.slane %v1392, 1
    %v1395 = vor.u32 %v1390, %v1394
    %1396 = vrot.lane.b32.xlu0 %v1395, 64
    %v1397 = vpop.permute.xlu0 %1396
    %v1399 = vrot.slane %v1312, 1
    %v1400 = vrot.slane %v1390, 1
    %v1401 = vrot.slane %v1392, 2
    %v1402 = vor.u32 %v1400, %v1401
    %1403 = vrot.lane.b32.xlu0 %v1402, 64
    %v1404 = vpop.permute.xlu0 %1403
    %v1406 = vshrl.u32 %v1388, 16
    %v1408 = vshll.u32 %v1388, 16
    %v1410 = vrot.slane %v1408, 1
    %v1411 = vor.u32 %v1406, %v1410
    %1412 = vrot.lane.b32.xlu0 %v1411, 64
    %v1413 = vpop.permute.xlu0 %1412
    %v1415 = vrot.slane %v1388, 1
    %v1417 = vsel %vm275, %v1312, %v1397
    %v1420 = vsel %vm275, %v1399, %v1404
    %v1422 = vsel %vm275, %v1388, %v1413
    %s1423 = scalar_lea.vmem %s0, 56
    %v1424 = vld [vmem:[%s1423] sm:$0x7f]
    %s1425 = scalar_lea.vmem %s1, 56
    %v1426 = vld [vmem:[%s1425] sm:$0x7f]
    %v1428 = vsel %vm91, %v1424, 0
    %1430 = vmatprep.subr.mxu0 0.0
    %1431 = vmatpush1.msra.mxu0 %v97
    %1432 = vmatprep.subr.mxu0 0.0
    %1433 = vmatpush1.msra.mxu0 0.0
    %1434 = vmatprep.subr.mxu0 0.0
    %1435 = vmatpush1.msra.mxu0 0.0
    %1436 = vmatprep.subr.mxu0 0.0
    %1437 = vmatpush1.msra.mxu0 0.0
    %1438 = vmatprep.subr.mxu0 0.0
    %1439 = vmatpush1.msra.mxu0 0.0
    %1440 = vmatprep.subr.mxu0 0.0
    %1441 = vmatpush1.msra.mxu0 0.0
    %1442 = vmatprep.subr.mxu0 0.0
    %1443 = vmatpush1.msra.mxu0 0.0
    %1444 = vmatprep.subr.mxu0 0.0
    %1445 = vmatpush1.msra.mxu0 0.0
    %1446 = vmatprep.subr.mxu0 0.0
    %1447 = vmatpush1.msra.mxu0 0.0
    %1448 = vmatprep.subr.mxu0 0.0
    %1449 = vmatpush1.msra.mxu0 0.0
    %1450 = vmatprep.subr.mxu0 0.0
    %1451 = vmatpush1.msra.mxu0 0.0
    %1452 = vmatprep.subr.mxu0 0.0
    %1453 = vmatpush1.msra.mxu0 0.0
    %1454 = vmatprep.subr.mxu0 0.0
    %1455 = vmatpush1.msra.mxu0 0.0
    %1456 = vmatprep.subr.mxu0 0.0
    %1457 = vmatpush1.msra.mxu0 0.0
    %1458 = vmatprep.subr.mxu0 0.0
    %1459 = vmatpush1.msra.mxu0 0.0
    %1460 = vmatprep.subr.mxu0 0.0
    %1461 = vmatpush1.msra.mxu0 0.0
    %1462 = vmatprep.subr.mxu0 0.0
    %1463 = vmatpush1.msra.mxu0 0.0
    %1464 = vmatprep.subr.mxu0 0.0
    %1465 = vmatpush1.msra.mxu0 0.0
    %1466 = vmatprep.subr.mxu0 0.0
    %1467 = vmatpush1.msra.mxu0 0.0
    %1468 = vmatprep.subr.mxu0 0.0
    %1469 = vmatpush1.msra.mxu0 0.0
    %1470 = vmatprep.subr.mxu0 0.0
    %1471 = vmatpush1.msra.mxu0 0.0
    %1472 = vmatprep.subr.mxu0 0.0
    %1473 = vmatpush1.msra.mxu0 0.0
    %1474 = vmatprep.subr.mxu0 0.0
    %1475 = vmatpush1.msra.mxu0 0.0
    %1476 = vmatprep.subr.mxu0 0.0
    %1477 = vmatpush1.msra.mxu0 0.0
    %1478 = vmatprep.subr.mxu0 0.0
    %1479 = vmatpush1.msra.mxu0 0.0
    %1480 = vmatprep.subr.mxu0 0.0
    %1481 = vmatpush1.msra.mxu0 0.0
    %1482 = vmatprep.subr.mxu0 0.0
    %1483 = vmatpush1.msra.mxu0 0.0
    %1484 = vmatprep.subr.mxu0 0.0
    %1485 = vmatpush1.msra.mxu0 0.0
    %1486 = vmatprep.subr.mxu0 0.0
    %1487 = vmatpush1.msra.mxu0 0.0
    %1488 = vmatprep.subr.mxu0 0.0
    %1489 = vmatpush1.msra.mxu0 0.0
    %1490 = vmatprep.subr.mxu0 0.0
    %1491 = vmatpush1.msra.mxu0 0.0
    %1492 = vmatprep.subr.mxu0 0.0
    %1493 = vmatpush1.msra.mxu0 0.0
    %1494 = vmatprep.mubr.f32.mxu0 0.0
    %1495 = vmatmul.mubr.f32.gmra.mrb[0].mxu0 %v1428
    %v1496 = vpop.f32.mrb[0].mxu0
    %v1497 = vadd.f32 %v89, %v1496
    %v1498 = vpop.f32.mrb[0].mxu0
    %1499 = vdwg.mxu0
    %v1500 = vmax.f32 %v1497, 0.0
    %v1501 = vsel %vm79, %v1500, 0.0
    %v1502 = vpack.c.bf16 %v1501, %v1501
    %v1504 = vsel %vm91, %v1426, 0
    %1506 = vmatprep.subr.mxu0 0.0
    %1507 = vmatpush1.msra.mxu0 %v97
    %1508 = vmatprep.subr.mxu0 0.0
    %1509 = vmatpush1.msra.mxu0 0.0
    %1510 = vmatprep.subr.mxu0 0.0
    %1511 = vmatpush1.msra.mxu0 0.0
    %1512 = vmatprep.subr.mxu0 0.0
    %1513 = vmatpush1.msra.mxu0 0.0
    %1514 = vmatprep.subr.mxu0 0.0
    %1515 = vmatpush1.msra.mxu0 0.0
    %1516 = vmatprep.subr.mxu0 0.0
    %1517 = vmatpush1.msra.mxu0 0.0
    %1518 = vmatprep.subr.mxu0 0.0
    %1519 = vmatpush1.msra.mxu0 0.0
    %1520 = vmatprep.subr.mxu0 0.0
    %1521 = vmatpush1.msra.mxu0 0.0
    %1522 = vmatprep.subr.mxu0 0.0
    %1523 = vmatpush1.msra.mxu0 0.0
    %1524 = vmatprep.subr.mxu0 0.0
    %1525 = vmatpush1.msra.mxu0 0.0
    %1526 = vmatprep.subr.mxu0 0.0
    %1527 = vmatpush1.msra.mxu0 0.0
    %1528 = vmatprep.subr.mxu0 0.0
    %1529 = vmatpush1.msra.mxu0 0.0
    %1530 = vmatprep.subr.mxu0 0.0
    %1531 = vmatpush1.msra.mxu0 0.0
    %1532 = vmatprep.subr.mxu0 0.0
    %1533 = vmatpush1.msra.mxu0 0.0
    %1534 = vmatprep.subr.mxu0 0.0
    %1535 = vmatpush1.msra.mxu0 0.0
    %1536 = vmatprep.subr.mxu0 0.0
    %1537 = vmatpush1.msra.mxu0 0.0
    %1538 = vmatprep.subr.mxu0 0.0
    %1539 = vmatpush1.msra.mxu0 0.0
    %1540 = vmatprep.subr.mxu0 0.0
    %1541 = vmatpush1.msra.mxu0 0.0
    %1542 = vmatprep.subr.mxu0 0.0
    %1543 = vmatpush1.msra.mxu0 0.0
    %1544 = vmatprep.subr.mxu0 0.0
    %1545 = vmatpush1.msra.mxu0 0.0
    %1546 = vmatprep.subr.mxu0 0.0
    %1547 = vmatpush1.msra.mxu0 0.0
    %1548 = vmatprep.subr.mxu0 0.0
    %1549 = vmatpush1.msra.mxu0 0.0
    %1550 = vmatprep.subr.mxu0 0.0
    %1551 = vmatpush1.msra.mxu0 0.0
    %1552 = vmatprep.subr.mxu0 0.0
    %1553 = vmatpush1.msra.mxu0 0.0
    %1554 = vmatprep.subr.mxu0 0.0
    %1555 = vmatpush1.msra.mxu0 0.0
    %1556 = vmatprep.subr.mxu0 0.0
    %1557 = vmatpush1.msra.mxu0 0.0
    %1558 = vmatprep.subr.mxu0 0.0
    %1559 = vmatpush1.msra.mxu0 0.0
    %1560 = vmatprep.subr.mxu0 0.0
    %1561 = vmatpush1.msra.mxu0 0.0
    %1562 = vmatprep.subr.mxu0 0.0
    %1563 = vmatpush1.msra.mxu0 0.0
    %1564 = vmatprep.subr.mxu0 0.0
    %1565 = vmatpush1.msra.mxu0 0.0
    %1566 = vmatprep.subr.mxu0 0.0
    %1567 = vmatpush1.msra.mxu0 0.0
    %1568 = vmatprep.subr.mxu0 0.0
    %1569 = vmatpush1.msra.mxu0 0.0
    %1570 = vmatprep.mubr.f32.mxu0 0.0
    %1571 = vmatmul.mubr.f32.gmra.mrb[0].mxu0 %v1504
    %v1572 = vpop.f32.mrb[0].mxu0
    %v1573 = vadd.f32 %v89, %v1572
    %v1574 = vpop.f32.mrb[0].mxu0
    %1575 = vdwg.mxu0
    %v1576 = vmax.f32 %v1573, 0.0
    %v1577 = vsel %vm82, %v1576, 0.0
    %v1578 = vpack.c.bf16 %v1577, %v1577
    %v1580 = vshrl.u32 %v1502, 16
    %v1582 = vshll.u32 %v1502, 16
    %v1584 = vrot.slane %v1582, 1
    %v1585 = vor.u32 %v1580, %v1584
    %1586 = vrot.lane.b32.xlu0 %v1585, 64
    %v1587 = vpop.permute.xlu0 %1586
    %v1589 = vrot.slane %v1502, 1
    %v1590 = vrot.slane %v1580, 1
    %v1591 = vrot.slane %v1582, 2
    %v1592 = vor.u32 %v1590, %v1591
    %1593 = vrot.lane.b32.xlu0 %v1592, 64
    %v1594 = vpop.permute.xlu0 %1593
    %v1596 = vshrl.u32 %v1578, 16
    %v1598 = vshll.u32 %v1578, 16
    %v1600 = vrot.slane %v1598, 1
    %v1601 = vor.u32 %v1596, %v1600
    %1602 = vrot.lane.b32.xlu0 %v1601, 64
    %v1603 = vpop.permute.xlu0 %1602
    %v1605 = vrot.slane %v1578, 1
    %v1607 = vsel %vm275, %v1502, %v1587
    %v1610 = vsel %vm275, %v1589, %v1594
    %v1612 = vsel %vm275, %v1578, %v1603
    %v1616 = vrot.slane %v467, 6
    %v1617 = vrot.slane %v470, 6
    %v1618 = vrot.slane %v472, 6
    %v1619 = vrot.slane %v465, 6
    %v1623 = vrot.slane %v657, 4
    %v1624 = vrot.slane %v660, 4
    %v1625 = vrot.slane %v662, 4
    %v1626 = vrot.slane %v655, 4
    %v1630 = vrot.slane %v847, 2
    %v1631 = vrot.slane %v850, 2
    %v1632 = vrot.slane %v852, 2
    %v1633 = vrot.slane %v845, 2
    %v1637 = vrot.slane %v1227, 6
    %v1638 = vrot.slane %v1230, 6
    %v1639 = vrot.slane %v1232, 6
    %v1640 = vrot.slane %v1225, 6
    %v1644 = vrot.slane %v1417, 4
    %v1645 = vrot.slane %v1420, 4
    %v1646 = vrot.slane %v1422, 4
    %v1647 = vrot.slane %v1415, 4
    %v1651 = vrot.slane %v1607, 2
    %v1652 = vrot.slane %v1610, 2
    %v1653 = vrot.slane %v1612, 2
    %v1654 = vrot.slane %v1605, 2
    %vm1655 = vcmask 1041408
    %v1657 = vsel %vm1655, %v277, %v1616
    %v1659 = vsel %vm1655, %v280, %v1617
    %v1661 = vsel %vm1655, %v282, %v1618
    %v1664 = vsel %vm1655, %v274, %v1619
    %vm1665 = vcmask 1043456
    %v1667 = vsel %vm1665, %v1657, %v1623
    %v1669 = vsel %vm1665, %v1659, %v1624
    %v1671 = vsel %vm1665, %v1661, %v1625
    %v1673 = vsel %vm1665, %v1664, %v1626
    %vm1674 = vcmask 1045504
    %v1676 = vsel %vm1674, %v1667, %v1630
    %v1679 = vsel %vm1674, %v1669, %v1631
    %v1682 = vsel %vm1674, %v1671, %v1632
    %v1685 = vsel %vm1674, %v1673, %v1633
    %v1687 = vsel %vm1655, %v1037, %v1637
    %v1689 = vsel %vm1655, %v1040, %v1638
    %v1691 = vsel %vm1655, %v1042, %v1639
    %v1694 = vsel %vm1655, %v1035, %v1640
    %v1696 = vsel %vm1665, %v1687, %v1644
    %v1698 = vsel %vm1665, %v1689, %v1645
    %v1700 = vsel %vm1665, %v1691, %v1646
    %v1702 = vsel %vm1665, %v1694, %v1647
    %v1704 = vsel %vm1674, %v1696, %v1651
    %v1707 = vsel %vm1674, %v1698, %v1652
    %v1710 = vsel %vm1674, %v1700, %v1653
    %v1713 = vsel %vm1674, %v1702, %v1654
    %v1714 = vld [vmem:[#allocation6] sm:$0xf]
    %v1715 = vld [vmem:[#allocation6 + $0x4] sm:$0xf]
    %v1716 = vld [vmem:[#allocation6 + $0x8] sm:$0xf]
    %v1717 = vld [vmem:[#allocation6 + $0xc] sm:$0xf]
    %v1718 = vld [vmem:[#allocation6 + $0x10] sm:$0xf]
    %v1719 = vld [vmem:[#allocation6 + $0x14] sm:$0xf]
    %v1720 = vld [vmem:[#allocation6 + $0x18] sm:$0xf]
    %v1721 = vld [vmem:[#allocation6 + $0x1c] sm:$0xf]
    %v1722 = vld [vmem:[#allocation6 + $0x20] sm:$0xf]
    %v1723 = vld [vmem:[#allocation6 + $0x24] sm:$0xf]
    %v1724 = vld [vmem:[#allocation6 + $0x28] sm:$0xf]
    %v1725 = vld [vmem:[#allocation6 + $0x2c] sm:$0xf]
    %v1726 = vld [vmem:[#allocation6 + $0x30] sm:$0xf]
    %v1727 = vld [vmem:[#allocation6 + $0x34] sm:$0xf]
    %v1728 = vld [vmem:[#allocation6 + $0x38] sm:$0xf]
    %v1729 = vld [vmem:[#allocation6 + $0x3c] sm:$0xf]
    %v1730 = vld [vmem:[#allocation6 + $0x40] sm:$0xf]
    %v1731 = vld [vmem:[#allocation6 + $0x44] sm:$0xf]
    %v1732 = vld [vmem:[#allocation6 + $0x48] sm:$0xf]
    %v1733 = vld [vmem:[#allocation6 + $0x4c] sm:$0xf]
    %v1734 = vld [vmem:[#allocation6 + $0x50] sm:$0xf]
    %v1735 = vld [vmem:[#allocation6 + $0x54] sm:$0xf]
    %v1736 = vld [vmem:[#allocation6 + $0x58] sm:$0xf]
    %v1737 = vld [vmem:[#allocation6 + $0x5c] sm:$0xf]
    %v1738 = vld [vmem:[#allocation6 + $0x60] sm:$0xf]
    %v1739 = vld [vmem:[#allocation6 + $0x64] sm:$0xf]
    %v1740 = vld [vmem:[#allocation6 + $0x68] sm:$0xf]
    %v1741 = vld [vmem:[#allocation6 + $0x6c] sm:$0xf]
    %v1742 = vld [vmem:[#allocation6 + $0x70] sm:$0xf]
    %v1743 = vld [vmem:[#allocation6 + $0x74] sm:$0xf]
    %v1744 = vld [vmem:[#allocation6 + $0x78] sm:$0xf]
    %v1745 = vld [vmem:[#allocation6 + $0x7c] sm:$0xf]
    %v1746 = vld [vmem:[#allocation6 + $0x80] sm:$0xf]
    %v1747 = vld [vmem:[#allocation6 + $0x84] sm:$0xf]
    %v1748 = vld [vmem:[#allocation6 + $0x88] sm:$0xf]
    %v1749 = vld [vmem:[#allocation6 + $0x8c] sm:$0xf]
    %v1750 = vld [vmem:[#allocation6 + $0x90] sm:$0xf]
    %v1751 = vld [vmem:[#allocation6 + $0x94] sm:$0xf]
    %v1752 = vld [vmem:[#allocation6 + $0x98] sm:$0xf]
    %v1753 = vld [vmem:[#allocation6 + $0x9c] sm:$0xf]
    %v1754 = vld [vmem:[#allocation6 + $0xa0] sm:$0xf]
    %v1755 = vld [vmem:[#allocation6 + $0xa4] sm:$0xf]
    %v1756 = vld [vmem:[#allocation6 + $0xa8] sm:$0xf]
    %v1757 = vld [vmem:[#allocation6 + $0xac] sm:$0xf]
    %v1758 = vld [vmem:[#allocation6 + $0xb0] sm:$0xf]
    %v1759 = vld [vmem:[#allocation6 + $0xb4] sm:$0xf]
    %v1760 = vld [vmem:[#allocation6 + $0xb8] sm:$0xf]
    %v1761 = vld [vmem:[#allocation6 + $0xbc] sm:$0xf]
    %v1762 = vld [vmem:[#allocation6 + $0xc0] sm:$0xf]
    %v1763 = vld [vmem:[#allocation6 + $0xc4] sm:$0xf]
    %v1764 = vld [vmem:[#allocation6 + $0xc8] sm:$0xf]
    %v1765 = vld [vmem:[#allocation6 + $0xcc] sm:$0xf]
    %v1766 = vld [vmem:[#allocation6 + $0xd0] sm:$0xf]
    %v1767 = vld [vmem:[#allocation6 + $0xd4] sm:$0xf]
    %v1768 = vld [vmem:[#allocation6 + $0xd8] sm:$0xf]
    %v1769 = vld [vmem:[#allocation6 + $0xdc] sm:$0xf]
    %v1770 = vld [vmem:[#allocation7] sm:$0x1]
    %v1772 = vlaneseq
    %v1773 = vshrl.u32 %v1772, 7
    %v1774 = vsub.s32 0, %v1773
    %v1775 = vrot.slane %v1770, %v1774
    %v1833 = vunpack.c.l.b16 %v1714
    %v1834 = vunpack.c.l.b16 %v1715
    %v1835 = vunpack.c.l.b16 %v1716
    %v1836 = vunpack.c.l.b16 %v1717
    %v1837 = vunpack.c.l.b16 %v1718
    %v1838 = vunpack.c.l.b16 %v1719
    %v1839 = vunpack.c.l.b16 %v1720
    %v1840 = vunpack.c.l.b16 %v1721
    %v1841 = vunpack.c.l.b16 %v1722
    %v1842 = vunpack.c.l.b16 %v1723
    %v1843 = vunpack.c.l.b16 %v1724
    %v1844 = vunpack.c.l.b16 %v1725
    %v1845 = vunpack.c.l.b16 %v1726
    %v1846 = vunpack.c.l.b16 %v1727
    %v1847 = vunpack.c.l.b16 %v1728
    %v1848 = vunpack.c.l.b16 %v1729
    %v1849 = vunpack.c.l.b16 %v1730
    %v1850 = vunpack.c.l.b16 %v1731
    %v1851 = vunpack.c.l.b16 %v1732
    %v1852 = vunpack.c.l.b16 %v1733
    %v1853 = vunpack.c.l.b16 %v1734
    %v1854 = vunpack.c.l.b16 %v1735
    %v1855 = vunpack.c.l.b16 %v1736
    %v1856 = vunpack.c.l.b16 %v1737
    %v1857 = vunpack.c.l.b16 %v1738
    %v1858 = vunpack.c.l.b16 %v1739
    %v1859 = vunpack.c.l.b16 %v1740
    %v1860 = vunpack.c.l.b16 %v1741
    %v1861 = vunpack.c.l.b16 %v1742
    %v1862 = vunpack.c.l.b16 %v1743
    %v1863 = vunpack.c.l.b16 %v1744
    %v1864 = vunpack.c.l.b16 %v1745
    %v1865 = vunpack.c.l.b16 %v1746
    %v1866 = vunpack.c.l.b16 %v1747
    %v1867 = vunpack.c.l.b16 %v1748
    %v1868 = vunpack.c.l.b16 %v1749
    %v1869 = vunpack.c.l.b16 %v1750
    %v1870 = vunpack.c.l.b16 %v1751
    %v1871 = vunpack.c.l.b16 %v1752
    %v1872 = vunpack.c.l.b16 %v1753
    %v1873 = vunpack.c.l.b16 %v1754
    %v1874 = vunpack.c.l.b16 %v1755
    %v1875 = vunpack.c.l.b16 %v1756
    %v1876 = vunpack.c.l.b16 %v1757
    %v1877 = vunpack.c.l.b16 %v1758
    %v1878 = vunpack.c.l.b16 %v1759
    %v1879 = vunpack.c.l.b16 %v1760
    %v1880 = vunpack.c.l.b16 %v1761
    %v1881 = vunpack.c.l.b16 %v1762
    %v1882 = vunpack.c.l.b16 %v1763
    %v1883 = vunpack.c.l.b16 %v1764
    %v1884 = vunpack.c.l.b16 %v1765
    %v1885 = vunpack.c.l.b16 %v1766
    %v1886 = vunpack.c.l.b16 %v1767
    %v1887 = vunpack.c.l.b16 %v1768
    %v1888 = vunpack.c.l.b16 %v1769
    %v1889 = vpack.c.b16 %v1834, %v1833
    %v1890 = vpack.c.b16 %v1836, %v1835
    %v1891 = vpack.c.b16 %v1838, %v1837
    %v1892 = vpack.c.b16 %v1840, %v1839
    %v1893 = vpack.c.b16 %v1842, %v1841
    %v1894 = vpack.c.b16 %v1844, %v1843
    %v1895 = vpack.c.b16 %v1846, %v1845
    %v1896 = vpack.c.b16 %v1848, %v1847
    %v1897 = vpack.c.b16 %v1850, %v1849
    %v1898 = vpack.c.b16 %v1852, %v1851
    %v1899 = vpack.c.b16 %v1854, %v1853
    %v1900 = vpack.c.b16 %v1856, %v1855
    %v1901 = vpack.c.b16 %v1858, %v1857
    %v1902 = vpack.c.b16 %v1860, %v1859
    %v1903 = vpack.c.b16 %v1862, %v1861
    %v1904 = vpack.c.b16 %v1864, %v1863
    %v1905 = vpack.c.b16 %v1866, %v1865
    %v1906 = vpack.c.b16 %v1868, %v1867
    %v1907 = vpack.c.b16 %v1870, %v1869
    %v1908 = vpack.c.b16 %v1872, %v1871
    %v1909 = vpack.c.b16 %v1874, %v1873
    %v1910 = vpack.c.b16 %v1876, %v1875
    %v1911 = vpack.c.b16 %v1878, %v1877
    %v1912 = vpack.c.b16 %v1880, %v1879
    %v1913 = vpack.c.b16 %v1882, %v1881
    %v1914 = vpack.c.b16 %v1884, %v1883
    %v1915 = vpack.c.b16 %v1886, %v1885
    %v1916 = vpack.c.b16 %v1888, %v1887
    %v1945 = vsel %vm275, %v1685, 0
    %v1947 = vsel %vm275, %v1713, 0
    %1949 = vmatprep.subr.bf16.mxu0 0
    %1950 = vmatpush1.bf16.msra.mxu0 %v1889
    %1951 = vmatprep.subr.bf16.mxu0 0
    %1952 = vmatpush1.bf16.msra.mxu0 %v1890
    %1953 = vmatprep.subr.bf16.mxu0 0
    %1954 = vmatpush1.bf16.msra.mxu0 %v1891
    %1955 = vmatprep.subr.bf16.mxu0 0
    %1956 = vmatpush1.bf16.msra.mxu0 %v1892
    %1957 = vmatprep.subr.bf16.mxu0 0
    %1958 = vmatpush1.bf16.msra.mxu0 %v1893
    %1959 = vmatprep.subr.bf16.mxu0 0
    %1960 = vmatpush1.bf16.msra.mxu0 %v1894
    %1961 = vmatprep.subr.bf16.mxu0 0
    %1962 = vmatpush1.bf16.msra.mxu0 %v1895
    %1963 = vmatprep.subr.bf16.mxu0 0
    %1964 = vmatpush1.bf16.msra.mxu0 %v1896
    %1965 = vmatprep.subr.bf16.mxu0 0
    %1966 = vmatpush1.bf16.msra.mxu0 %v1897
    %1967 = vmatprep.subr.bf16.mxu0 0
    %1968 = vmatpush1.bf16.msra.mxu0 %v1898
    %1969 = vmatprep.subr.bf16.mxu0 0
    %1970 = vmatpush1.bf16.msra.mxu0 %v1899
    %1971 = vmatprep.subr.bf16.mxu0 0
    %1972 = vmatpush1.bf16.msra.mxu0 %v1900
    %1973 = vmatprep.subr.bf16.mxu0 0
    %1974 = vmatpush1.bf16.msra.mxu0 %v1901
    %1975 = vmatprep.subr.bf16.mxu0 0
    %1976 = vmatpush1.bf16.msra.mxu0 %v1902
    %1977 = vmatprep.subr.bf16.mxu0 0
    %1978 = vmatpush1.bf16.msra.mxu0 %v1903
    %1979 = vmatprep.subr.bf16.mxu0 0
    %1980 = vmatpush1.bf16.msra.mxu0 %v1904
    %1981 = vmatprep.mubr.bf16.mxu0 %v1679
    %1982 = vmatmul.mubr.bf16.gmra.mrb[0].mxu0 %v1676
    %v1983 = vpop.f32.mrb[0].mxu0
    %v1984 = vadd.f32 %v1775, %v1983
    %v1985 = vpop.f32.mrb[0].mxu0
    %v1986 = vpop.f32.mrb[0].mxu0
    %v1987 = vadd.f32 %v1775, %v1986
    %v1988 = vpop.f32.mrb[0].mxu0
    %1989 = vmatprep.mubr.bf16.mxu0 %v1707
    %1990 = vmatmul.mubr.bf16.gmra.mrb[0].mxu0 %v1704
    %v1991 = vpop.f32.mrb[0].mxu0
    %v1992 = vadd.f32 %v1775, %v1991
    %v1993 = vpop.f32.mrb[0].mxu0
    %v1994 = vpop.f32.mrb[0].mxu0
    %v1995 = vadd.f32 %v1775, %v1994
    %v1996 = vpop.f32.mrb[0].mxu0
    %1997 = vdwg.mxu0
    %1998 = vmatprep.subr.bf16.mxu0 0
    %1999 = vmatpush1.bf16.msra.mxu0 %v1905
    %2000 = vmatprep.subr.bf16.mxu0 0
    %2001 = vmatpush1.bf16.msra.mxu0 %v1906
    %2002 = vmatprep.subr.bf16.mxu0 0
    %2003 = vmatpush1.bf16.msra.mxu0 %v1907
    %2004 = vmatprep.subr.bf16.mxu0 0
    %2005 = vmatpush1.bf16.msra.mxu0 %v1908
    %2006 = vmatprep.subr.bf16.mxu0 0
    %2007 = vmatpush1.bf16.msra.mxu0 %v1909
    %2008 = vmatprep.subr.bf16.mxu0 0
    %2009 = vmatpush1.bf16.msra.mxu0 %v1910
    %2010 = vmatprep.subr.bf16.mxu0 0
    %2011 = vmatpush1.bf16.msra.mxu0 %v1911
    %2012 = vmatprep.subr.bf16.mxu0 0
    %2013 = vmatpush1.bf16.msra.mxu0 %v1912
    %2014 = vmatprep.subr.bf16.mxu0 0
    %2015 = vmatpush1.bf16.msra.mxu0 %v1913
    %2016 = vmatprep.subr.bf16.mxu0 0
    %2017 = vmatpush1.bf16.msra.mxu0 %v1914
    %2018 = vmatprep.subr.bf16.mxu0 0
    %2019 = vmatpush1.bf16.msra.mxu0 %v1915
    %2020 = vmatprep.subr.bf16.mxu0 0
    %2021 = vmatpush1.bf16.msra.mxu0 %v1916
    %2022 = vmatprep.subr.bf16.mxu0 0
    %2023 = vmatpush1.bf16.msra.mxu0 0
    %2024 = vmatprep.subr.bf16.mxu0 0
    %2025 = vmatpush1.bf16.msra.mxu0 0
    %2026 = vmatprep.subr.bf16.mxu0 0
    %2027 = vmatpush1.bf16.msra.mxu0 0
    %2028 = vmatprep.subr.bf16.mxu0 0
    %2029 = vmatpush1.bf16.msra.mxu0 0
    %2030 = vmatprep.mubr.bf16.mxu0 %v1945
    %2031 = vmatmul.mubr.bf16.gmra.mrb[0].mxu0 %v1682
    %v2032 = vpop.f32.mrb[0].mxu0
    %v2033 = vadd.f32 %v1984, %v2032
    %v2034 = vpop.f32.mrb[0].mxu0
    %v2035 = vpop.f32.mrb[0].mxu0
    %v2036 = vadd.f32 %v1987, %v2035
    %v2037 = vpop.f32.mrb[0].mxu0
    %2038 = vmatprep.mubr.bf16.mxu0 %v1947
    %2039 = vmatmul.mubr.bf16.gmra.mrb[0].mxu0 %v1710
    %v2040 = vpop.f32.mrb[0].mxu0
    %v2041 = vadd.f32 %v1992, %v2040
    %v2042 = vpop.f32.mrb[0].mxu0
    %v2043 = vpop.f32.mrb[0].mxu0
    %v2044 = vadd.f32 %v1995, %v2043
    %v2045 = vpop.f32.mrb[0].mxu0
    %2046 = vdwg.mxu0
    %v2047 = vmax.f32 %v2033, 0.0
    %v2048 = vmax.f32 %v2036, 0.0
    %v2049 = vmax.f32 %v2041, 0.0
    %v2050 = vmax.f32 %v2044, 0.0
    %v2051 = vpack.c.bf16 %v2048, %v2047
    %v2052 = vpack.c.bf16 %v2050, %v2049
    %2053 = vst [vmem:[%s6] sm:$0x3] %v2051
    %v2056 = vunpack.c.l.s4 1983009808
    %v2057 = vunpack.c.0.s8 %v2056
    %v2058 = vlaneseq
    %v2059 = vshrl.u32 %v2058, 7
    %v2060 = vsub.s32 %v2057, %v2059
    %v2061 = vrot.slane %v2051, %v2060
    %v2062 = vcombine.high %v2061, %v2061
    %s2064 = scalar_lea.vmem %s6, 2
    %2065 = vst [vmem:[%s2064] sm:$0x3] %v2062
    %v2066 = vcombine.high %v2051, %v2051
    %v2068 = vunpack.c.l.s4 1983009808
    %v2069 = vunpack.c.0.s8 %v2068
    %v2070 = vlaneseq
    %v2071 = vshrl.u32 %v2070, 7
    %v2072 = vsub.s32 %v2069, %v2071
    %v2073 = vrot.slane %v2066, %v2072
    %s2075 = scalar_lea.vmem %s6, 4
    %2076 = vst [vmem:[%s2075] sm:$0x3] %v2073
    %v2077 = vcombine.high %v2073, %v2073
    %s2079 = scalar_lea.vmem %s6, 6
    %2080 = vst [vmem:[%s2079] sm:$0x3] %v2077
    %s2081 = scalar_lea.vmem %s6, 8
    %2082 = vst [vmem:[%s2081] sm:$0x3] %v2052
    %v2085 = vunpack.c.l.s4 1983009808
    %v2086 = vunpack.c.0.s8 %v2085
    %v2087 = vlaneseq
    %v2088 = vshrl.u32 %v2087, 7
    %v2089 = vsub.s32 %v2086, %v2088
    %v2090 = vrot.slane %v2052, %v2089
    %v2091 = vcombine.high %v2090, %v2090
    %s2093 = scalar_lea.vmem %s6, 10
    %2094 = vst [vmem:[%s2093] sm:$0x3] %v2091
    %v2095 = vcombine.high %v2052, %v2052
    %v2097 = vunpack.c.l.s4 1983009808
    %v2098 = vunpack.c.0.s8 %v2097
    %v2099 = vlaneseq
    %v2100 = vshrl.u32 %v2099, 7
    %v2101 = vsub.s32 %v2098, %v2100
    %v2102 = vrot.slane %v2095, %v2101
    %s2104 = scalar_lea.vmem %s6, 12
    %2105 = vst [vmem:[%s2104] sm:$0x3] %v2102
    %v2106 = vcombine.high %v2102, %v2102
    %s2108 = scalar_lea.vmem %s6, 14
    %2109 = vst [vmem:[%s2108] sm:$0x3] %v2106
    // Predicated region
    $region42: #{spectrum_encoder_forward.3} parent=1 // pred_check
      _
    $region43: #{spectrum_encoder_forward.3} parent=1 // pred_check_branch
      %2111 = sbr.rel (0) target = $region45
    $region44: #{spectrum_encoder_forward.3} parent=1 // pred_region
      _
    $region45: #{spectrum_encoder_forward.3} parent=1 // pred_fallthru
      _
    // Predicated region
    $region46: #{spectrum_encoder_forward.3} parent=1 // pred_check
      _
    $region47: #{spectrum_encoder_forward.3} parent=1 // pred_check_branch
      %2113 = sbr.rel (0) target = $region49
    $region48: #{spectrum_encoder_forward.3} parent=1 // pred_region
      _
    $region49: #{spectrum_encoder_forward.3} parent=1 // pred_fallthru
      _
    %2114 = vsyncpa [#allocation3], 1
    %2115 = vsyncpa [#allocation5], 1
    %2116 = vsyncpa [#allocation8], 1

// kernel: spectrum_encoder_forward.5
$region0: #{spectrum_encoder_forward.5}
  #allocation0 [shape = 'u32[]', space=smem, size = 0x4, offset = 0x4, fixed_abs, tag = 'smem constant byte address 0x4 - core index']
  #allocation1 [shape = 'u32[144,128]{1,0:T(1,128)}', space=vmem, size = 0x12000, scoped, tag = 'internal scratch']
  #allocation2 [shape = 'f32[8,512]{1,0:T(8,128)}', space=vmem, size = 0x4000, scoped, tag = 'scratch operand']
  #allocation3 [shape = 's32[1]{0}', space=sflag, size = 0x4, scoped, tag = 'scoped memory for spectrum_encoder_forward.5']
  #allocation4 [shape = 'u8[512]{0}', space=smem, size = 0x200, scoped, tag = 'prefetched SMEM operand 0']
  %s0 = inlined_call_operand.vmem [shape: s32[2], index: 0, kind: input, shape index: {}]
  %s1 = inlined_call_operand.vmem [shape: bf16[8,2048], index: 1, kind: input, shape index: {}]
  %s2 = inlined_call_operand.vmem [shape: bf16[4096,512], index: 2, kind: input, shape index: {}]
  %s3 = inlined_call_operand.vmem [shape: f32[5,1,512], index: 3, kind: input, shape index: {}]
  %s4 = inlined_call_operand.vmem [shape: f32[8,512], index: 4, kind: output, shape index: {}]
  %s5 = sld [smem:[#allocation0]]
  $region57: #{spectrum_encoder_forward.5} parent=0
    _
  %s7 = ssub.s32 1, %s5
  %s8 = scalar_select 0, %s7, %s5
  %s9 = sshll.u32 %s0, 4
  %s10 = int_to_ptr.vmem [resolvable:$true] %s9
  %12 = dma.vmem_to_smem %s10, 16, [#allocation4], [#allocation3]
  %13 = dma.done [#allocation3], 16
  %14 = sfence
  loop: start=0, step=1, limit=4
  $region2: #{spectrum_encoder_forward.5} parent=0 // loop_pre_header
    _
  $region3: #{spectrum_encoder_forward.5} parent=0 // loop_header
    %s16 = sphi 0, %s20
    %p17 = scmp.ge.s32.totalorder %s16, 4
    %s28 = sphi 0, %s30
    %s31 = sphi 0, %s28
    %s32 = sphi 0, %s31
    %s48 = sphi 0, %s32
    %s54 = sphi 0, %s56
    %s57 = sphi 0, %s54
    %s58 = sphi 0, %s57
    %s74 = sphi 0, %s58
    %s78 = sphi 0, %s78
    %s80 = sphi 0, %s78
    %s81 = sphi 0, %s80
    %s95 = sphi 0, %s81
    %s99 = sphi 0, %s99
    %s101 = sphi 0, %s99
    %s102 = sphi 0, %s101
    %s116 = sphi 0, %s102
  $region4: #{spectrum_encoder_forward.5} parent=0 // loop_header_branch
    %19 = sbr.rel (%p17) target = $region8
  $region5: #{spectrum_encoder_forward.5} parent=0 // loop_body
    %s21 = ssub.s32 %s16, 1
    %s22 = ssub.s32 %s16, 2
    %s23 = sadd.s32 %s16, 1
    %s24 = sld [smem:[#allocation4 + %s16]]
    %s25 = sld [smem:[#allocation4 + %s23]]
    %s26 = ssub.s32 %s24, %s25
    %p27 = scmp.eq.s32.totalorder %s26, 0
    %s29 = sadd.s32 %s28, 1
    %s30 = scalar_select %p27, %s28, %s29
    %p33 = pneg %p27
    %p34 = scmp.eq.s32.totalorder %s16, 1
    %p35 = por %p33, %p34
    %p36 = scmp.ne.s32.totalorder %s28, %s31
    %p37 = scmp.eq.s32.totalorder %s16, 0
    %p38 = por %p36, %p37
    %p39 = scmp.ne.s32.totalorder %s28, %s31
    %p40 = scmp.eq.s32.totalorder %s21, 1
    %p41 = por %p39, %p40
    %p42 = scmp.ne.s32.totalorder %s31, %s32
    %p43 = scmp.eq.s32.totalorder %s21, 0
    %p44 = por %p42, %p43
    %p45 = scmp.ne.s32.totalorder %s31, %s32
    %p46 = scmp.eq.s32.totalorder %s22, 1
    %p47 = por %p45, %p46
    %p49 = scmp.ne.s32.totalorder %s32, %s48
    %p50 = scmp.eq.s32.totalorder %s22, 0
    %p51 = por %p49, %p50
    %s52 = ssub.s32 %s16, %s23
    %p53 = scmp.eq.s32.totalorder %s52, 0
    %s55 = sadd.s32 %s54, 1
    %s56 = scalar_select %p53, %s54, %s55
    %p59 = pneg %p53
    %p60 = scmp.eq.s32.totalorder %s16, 1
    %p61 = por %p59, %p60
    %p62 = scmp.ne.s32.totalorder %s54, %s57
    %p63 = scmp.eq.s32.totalorder %s16, 0
    %p64 = por %p62, %p63
    %p65 = scmp.ne.s32.totalorder %s54, %s57
    %p66 = scmp.eq.s32.totalorder %s21, 1
    %p67 = por %p65, %p66
    %p68 = scmp.ne.s32.totalorder %s57, %s58
    %p69 = scmp.eq.s32.totalorder %s21, 0
    %p70 = por %p68, %p69
    %p71 = scmp.ne.s32.totalorder %s57, %s58
    %p72 = scmp.eq.s32.totalorder %s22, 1
    %p73 = por %p71, %p72
    %p75 = scmp.ne.s32.totalorder %s58, %s74
    %p76 = scmp.eq.s32.totalorder %s22, 0
    %p77 = por %p75, %p76
    %s79 = sadd.s32 %s78, 1
    %p82 = scmp.eq.s32.totalorder %s16, 1
    %p83 = scmp.ne.s32.totalorder %s78, %s80
    %p84 = scmp.eq.s32.totalorder %s16, 0
    %p85 = por %p83, %p84
    %p86 = scmp.ne.s32.totalorder %s78, %s80
    %p87 = scmp.eq.s32.totalorder %s21, 1
    %p88 = por %p86, %p87
    %p89 = scmp.ne.s32.totalorder %s80, %s81
    %p90 = scmp.eq.s32.totalorder %s21, 0
    %p91 = por %p89, %p90
    %p92 = scmp.ne.s32.totalorder %s80, %s81
    %p93 = scmp.eq.s32.totalorder %s22, 1
    %p94 = por %p92, %p93
    %p96 = scmp.ne.s32.totalorder %s81, %s95
    %p97 = scmp.eq.s32.totalorder %s22, 0
    %p98 = por %p96, %p97
    %s100 = sadd.s32 %s99, 1
    %p103 = scmp.eq.s32.totalorder %s16, 1
    %p104 = scmp.ne.s32.totalorder %s99, %s101
    %p105 = scmp.eq.s32.totalorder %s16, 0
    %p106 = por %p104, %p105
    %p107 = scmp.ne.s32.totalorder %s99, %s101
    %p108 = scmp.eq.s32.totalorder %s21, 1
    %p109 = por %p107, %p108
    %p110 = scmp.ne.s32.totalorder %s101, %s102
    %p111 = scmp.eq.s32.totalorder %s21, 0
    %p112 = por %p110, %p111
    %p113 = scmp.ne.s32.totalorder %s101, %s102
    %p114 = scmp.eq.s32.totalorder %s22, 1
    %p115 = por %p113, %p114
    %p117 = scmp.ne.s32.totalorder %s102, %s116
    %p118 = scmp.eq.s32.totalorder %s22, 0
    %p119 = por %p117, %p118
    %p120 = scmp.le.s32.totalorder 1, %s16
    %p121 = scmp.lt.s32.totalorder %s16, 3
    %p122 = pnand %p120, %p121
    %p123 = pneg %p122
    // Predicated region
    $region9: #{spectrum_encoder_forward.5} parent=5 // pred_check
      _
    $region10: #{spectrum_encoder_forward.5} parent=5 // pred_check_branch
      %125 = sbr.rel (%p122) target = $region12
    $region11: #{spectrum_encoder_forward.5} parent=5 // pred_region
      %s126 = ssub.s32 %s16, 1
      // Predicated region
      $region13: #{spectrum_encoder_forward.5} parent=11 // pred_check
        %p127 = pneg %p91
      $region14: #{spectrum_encoder_forward.5} parent=11 // pred_check_branch
        %129 = sbr.rel (%p127) target = $region16
      $region15: #{spectrum_encoder_forward.5} parent=11 // pred_region
        _
      $region16: #{spectrum_encoder_forward.5} parent=11 // pred_fallthru
        _
    $region12: #{spectrum_encoder_forward.5} parent=5 // pred_fallthru
      _
    %p130 = scmp.lt.s32.totalorder %s16, 2
    // Predicated region
    $region17: #{spectrum_encoder_forward.5} parent=5 // pred_check
      %p131 = pneg %p130
    $region18: #{spectrum_encoder_forward.5} parent=5 // pred_check_branch
      %133 = sbr.rel (%p131) target = $region20
    $region19: #{spectrum_encoder_forward.5} parent=5 // pred_region
      // Predicated region
      $region21: #{spectrum_encoder_forward.5} parent=19 // pred_check
        %p134 = pneg %p38
      $region22: #{spectrum_encoder_forward.5} parent=19 // pred_check_branch
        %136 = sbr.rel (%p134) target = $region24
      $region23: #{spectrum_encoder_forward.5} parent=19 // pred_region
        %s137 = sld [smem:[#allocation4 + %s16]]
        %s138 = smul.u32 16, %s137
        %p139 = scmp.lt.s32.totalorder %s138, 15
        %s140 = scalar_select %p139, %s138, 15
        %s141 = smul.addr %s140, 4
        %s142 = scalar_lea.vmem %s1, %s141
        %s143 = sld [smem:[#allocation4 + %s16]]
        %s144 = smul.u32 16, %s143
      $region24: #{spectrum_encoder_forward.5} parent=19 // pred_fallthru
        _
      // Predicated region
      $region25: #{spectrum_encoder_forward.5} parent=19 // pred_check
        %p145 = pneg %p64
      $region26: #{spectrum_encoder_forward.5} parent=19 // pred_check_branch
        %147 = sbr.rel (%p145) target = $region28
      $region27: #{spectrum_encoder_forward.5} parent=19 // pred_region
        %s148 = smul.u32 256, %s16
        %p149 = scmp.lt.s32.totalorder %s148, 511
        %s150 = scalar_select %p149, %s148, 511
        %s151 = smul.addr %s150, 4
        %s152 = smul.addr %s151, 4
        %s153 = scalar_lea.vmem %s2, %s152
        %s154 = smul.u32 256, %s16
      $region28: #{spectrum_encoder_forward.5} parent=19 // pred_fallthru
        _
    $region20: #{spectrum_encoder_forward.5} parent=5 // pred_fallthru
      _
    %p155 = scmp.le.s32.totalorder 1, %s16
    %p156 = scmp.lt.s32.totalorder %s16, 3
    %p157 = pnand %p155, %p156
    %p158 = pneg %p157
    // Predicated region
    $region29: #{spectrum_encoder_forward.5} parent=5 // pred_check
      _
    $region30: #{spectrum_encoder_forward.5} parent=5 // pred_check_branch
      %160 = sbr.rel (%p157) target = $region32
    $region31: #{spectrum_encoder_forward.5} parent=5 // pred_region
      %s161 = ssub.s32 %s16, 1
      %s162 = sld [smem:[#allocation4 + %s21]]
      %s163 = smul.u32 16, %s162
      %p164 = scmp.lt.s32.totalorder %s163, 15
      %s165 = scalar_select %p164, %s163, 15
      %s166 = smul.addr %s165, 4
      %s167 = scalar_lea.vmem %s1, %s166
      %p168 = pneg %p44
      %p169 = pneg %p41
      %s170 = smul.u32 256, %s21
      %p171 = scmp.lt.s32.totalorder %s170, 511
      %s172 = scalar_select %p171, %s170, 511
      %s173 = smul.addr %s172, 4
      %s174 = smul.addr %s173, 4
      %s175 = scalar_lea.vmem %s2, %s174
      %p176 = pneg %p70
      %p177 = pneg %p67
      %p178 = pneg %p91
      %p179 = pneg %p88
      %p180 = pneg %p112
      %p181 = pneg %p109
      %s182 = sld [smem:[#allocation4 + %s21]]
      %s183 = smul.u32 16, %s182
      %p184 = scmp.lt.s32.totalorder %s183, 15
      %s185 = scalar_select %p184, %s183, 15
      %s186 = smul.addr %s185, 4
      %s187 = scalar_lea.vmem %s1, %s186
      %s188 = sld [smem:[#allocation4 + %s21]]
      %s189 = smul.u32 16, %s188
      %s190 = smul.u32 256, %s21
      %p191 = scmp.lt.s32.totalorder %s190, 511
      %s192 = scalar_select %p191, %s190, 511
      %s193 = smul.addr %s192, 4
      %s194 = smul.addr %s193, 4
      %s195 = scalar_lea.vmem %s2, %s194
      %s196 = smul.u32 256, %s21
      %p197 = scmp.eq.s32.totalorder %s21, 0
      // Predicated region
      $region33: #{spectrum_encoder_forward.5} parent=31 // pred_check
        %p198 = pneg %p197
      $region34: #{spectrum_encoder_forward.5} parent=31 // pred_check_branch
        %200 = sbr.rel (%p198) target = $region36
      $region35: #{spectrum_encoder_forward.5} parent=31 // pred_region
        %201 = vst [vmem:[#allocation2] sm:$0xff] 0.0
        %202 = vst [vmem:[#allocation2 + $0x8] sm:$0xff] 0.0
        %203 = vst [vmem:[#allocation2 + $0x10] sm:$0xff] 0.0
        %204 = vst [vmem:[#allocation2 + $0x18] sm:$0xff] 0.0
      $region36: #{spectrum_encoder_forward.5} parent=31 // pred_fallthru
        _
      %p205 = scmp.lt.s32.totalorder %s21, 1
      // Predicated region
      $region37: #{spectrum_encoder_forward.5} parent=31 // pred_check
        %p206 = pneg %p205
      $region38: #{spectrum_encoder_forward.5} parent=31 // pred_check_branch
        %208 = sbr.rel (%p206) target = $region40
      $region39: #{spectrum_encoder_forward.5} parent=31 // pred_region
        %v209 = vld [vmem:[#allocation2] sm:$0xff]
        %v210 = vld [vmem:[#allocation2 + $0x8] sm:$0xff]
        %v211 = vld [vmem:[#allocation2 + $0x10] sm:$0xff]
        %v212 = vld [vmem:[#allocation2 + $0x18] sm:$0xff]
        %v213 = vld [vmem:[%s187] sm:$0xff]
        %v214 = vld [vmem:[%s187 + $0x8] sm:$0xff]
        %v215 = vld [vmem:[%s187 + $0x10] sm:$0xff]
        %v216 = vld [vmem:[%s187 + $0x18] sm:$0xff]
        %v217 = vld [vmem:[%s187 + $0x20] sm:$0xff]
        %v218 = vld [vmem:[%s187 + $0x28] sm:$0xff]
        %v219 = vld [vmem:[%s187 + $0x30] sm:$0xff]
        %v220 = vld [vmem:[%s187 + $0x38] sm:$0xff]
        %v221 = vld [vmem:[%s195] sm:$0xff]
        %v222 = vld [vmem:[%s195 + $0x8] sm:$0xff]
        %v223 = vld [vmem:[%s195 + $0x10] sm:$0xff]
        %v224 = vld [vmem:[%s195 + $0x18] sm:$0xff]
        %v225 = vld [vmem:[%s195 + $0x20] sm:$0xff]
        %v226 = vld [vmem:[%s195 + $0x28] sm:$0xff]
        %v227 = vld [vmem:[%s195 + $0x30] sm:$0xff]
        %v228 = vld [vmem:[%s195 + $0x38] sm:$0xff]
        %v229 = vld [vmem:[%s195 + $0x40] sm:$0xff]
        %v230 = vld [vmem:[%s195 + $0x48] sm:$0xff]
        %v231 = vld [vmem:[%s195 + $0x50] sm:$0xff]
        %v232 = vld [vmem:[%s195 + $0x58] sm:$0xff]
        %v233 = vld [vmem:[%s195 + $0x60] sm:$0xff]
        %v234 = vld [vmem:[%s195 + $0x68] sm:$0xff]
        %v235 = vld [vmem:[%s195 + $0x70] sm:$0xff]
        %v236 = vld [vmem:[%s195 + $0x78] sm:$0xff]
        %v237 = vld [vmem:[%s195 + $0x80] sm:$0xff]
        %v238 = vld [vmem:[%s195 + $0x88] sm:$0xff]
        %v239 = vld [vmem:[%s195 + $0x90] sm:$0xff]
        %v240 = vld [vmem:[%s195 + $0x98] sm:$0xff]
        %v241 = vld [vmem:[%s195 + $0xa0] sm:$0xff]
        %v242 = vld [vmem:[%s195 + $0xa8] sm:$0xff]
        %v243 = vld [vmem:[%s195 + $0xb0] sm:$0xff]
        %v244 = vld [vmem:[%s195 + $0xb8] sm:$0xff]
        %v245 = vld [vmem:[%s195 + $0xc0] sm:$0xff]
        %v246 = vld [vmem:[%s195 + $0xc8] sm:$0xff]
        %v247 = vld [vmem:[%s195 + $0xd0] sm:$0xff]
        %v248 = vld [vmem:[%s195 + $0xd8] sm:$0xff]
        %v249 = vld [vmem:[%s195 + $0xe0] sm:$0xff]
        %v250 = vld [vmem:[%s195 + $0xe8] sm:$0xff]
        %v251 = vld [vmem:[%s195 + $0xf0] sm:$0xff]
        %v252 = vld [vmem:[%s195 + $0xf8] sm:$0xff]
        %v253 = vld [vmem:[%s195 + $0x100] sm:$0xff]
        %v254 = vld [vmem:[%s195 + $0x108] sm:$0xff]
        %v255 = vld [vmem:[%s195 + $0x110] sm:$0xff]
        %v256 = vld [vmem:[%s195 + $0x118] sm:$0xff]
        %v257 = vld [vmem:[%s195 + $0x120] sm:$0xff]
        %v258 = vld [vmem:[%s195 + $0x128] sm:$0xff]
        %v259 = vld [vmem:[%s195 + $0x130] sm:$0xff]
        %v260 = vld [vmem:[%s195 + $0x138] sm:$0xff]
        %v261 = vld [vmem:[%s195 + $0x140] sm:$0xff]
        %v262 = vld [vmem:[%s195 + $0x148] sm:$0xff]
        %v263 = vld [vmem:[%s195 + $0x150] sm:$0xff]
        %v264 = vld [vmem:[%s195 + $0x158] sm:$0xff]
        %v265 = vld [vmem:[%s195 + $0x160] sm:$0xff]
        %v266 = vld [vmem:[%s195 + $0x168] sm:$0xff]
        %v267 = vld [vmem:[%s195 + $0x170] sm:$0xff]
        %v268 = vld [vmem:[%s195 + $0x178] sm:$0xff]
        %v269 = vld [vmem:[%s195 + $0x180] sm:$0xff]
        %v270 = vld [vmem:[%s195 + $0x188] sm:$0xff]
        %v271 = vld [vmem:[%s195 + $0x190] sm:$0xff]
        %v272 = vld [vmem:[%s195 + $0x198] sm:$0xff]
        %v273 = vld [vmem:[%s195 + $0x1a0] sm:$0xff]
        %v274 = vld [vmem:[%s195 + $0x1a8] sm:$0xff]
        %v275 = vld [vmem:[%s195 + $0x1b0] sm:$0xff]
        %v276 = vld [vmem:[%s195 + $0x1b8] sm:$0xff]
        %v277 = vld [vmem:[%s195 + $0x1c0] sm:$0xff]
        %v278 = vld [vmem:[%s195 + $0x1c8] sm:$0xff]
        %v279 = vld [vmem:[%s195 + $0x1d0] sm:$0xff]
        %v280 = vld [vmem:[%s195 + $0x1d8] sm:$0xff]
        %v281 = vld [vmem:[%s195 + $0x1e0] sm:$0xff]
        %v282 = vld [vmem:[%s195 + $0x1e8] sm:$0xff]
        %v283 = vld [vmem:[%s195 + $0x1f0] sm:$0xff]
        %v284 = vld [vmem:[%s195 + $0x1f8] sm:$0xff]
        %v285 = vld [vmem:[%s195 + $0x200] sm:$0xff]
        %v286 = vld [vmem:[%s195 + $0x208] sm:$0xff]
        %v287 = vld [vmem:[%s195 + $0x210] sm:$0xff]
        %v288 = vld [vmem:[%s195 + $0x218] sm:$0xff]
        %v289 = vld [vmem:[%s195 + $0x220] sm:$0xff]
        %v290 = vld [vmem:[%s195 + $0x228] sm:$0xff]
        %v291 = vld [vmem:[%s195 + $0x230] sm:$0xff]
        %v292 = vld [vmem:[%s195 + $0x238] sm:$0xff]
        %v293 = vld [vmem:[%s195 + $0x240] sm:$0xff]
        %v294 = vld [vmem:[%s195 + $0x248] sm:$0xff]
        %v295 = vld [vmem:[%s195 + $0x250] sm:$0xff]
        %v296 = vld [vmem:[%s195 + $0x258] sm:$0xff]
        %v297 = vld [vmem:[%s195 + $0x260] sm:$0xff]
        %v298 = vld [vmem:[%s195 + $0x268] sm:$0xff]
        %v299 = vld [vmem:[%s195 + $0x270] sm:$0xff]
        %v300 = vld [vmem:[%s195 + $0x278] sm:$0xff]
        %v301 = vld [vmem:[%s195 + $0x280] sm:$0xff]
        %v302 = vld [vmem:[%s195 + $0x288] sm:$0xff]
        %v303 = vld [vmem:[%s195 + $0x290] sm:$0xff]
        %v304 = vld [vmem:[%s195 + $0x298] sm:$0xff]
        %v305 = vld [vmem:[%s195 + $0x2a0] sm:$0xff]
        %v306 = vld [vmem:[%s195 + $0x2a8] sm:$0xff]
        %v307 = vld [vmem:[%s195 + $0x2b0] sm:$0xff]
        %v308 = vld [vmem:[%s195 + $0x2b8] sm:$0xff]
        %v309 = vld [vmem:[%s195 + $0x2c0] sm:$0xff]
        %v310 = vld [vmem:[%s195 + $0x2c8] sm:$0xff]
        %v311 = vld [vmem:[%s195 + $0x2d0] sm:$0xff]
        %v312 = vld [vmem:[%s195 + $0x2d8] sm:$0xff]
        %v313 = vld [vmem:[%s195 + $0x2e0] sm:$0xff]
        %v314 = vld [vmem:[%s195 + $0x2e8] sm:$0xff]
        %v315 = vld [vmem:[%s195 + $0x2f0] sm:$0xff]
        %v316 = vld [vmem:[%s195 + $0x2f8] sm:$0xff]
        %v317 = vld [vmem:[%s195 + $0x300] sm:$0xff]
        %v318 = vld [vmem:[%s195 + $0x308] sm:$0xff]
        %v319 = vld [vmem:[%s195 + $0x310] sm:$0xff]
        %v320 = vld [vmem:[%s195 + $0x318] sm:$0xff]
        %v321 = vld [vmem:[%s195 + $0x320] sm:$0xff]
        %v322 = vld [vmem:[%s195 + $0x328] sm:$0xff]
        %v323 = vld [vmem:[%s195 + $0x330] sm:$0xff]
        %v324 = vld [vmem:[%s195 + $0x338] sm:$0xff]
        %v325 = vld [vmem:[%s195 + $0x340] sm:$0xff]
        %v326 = vld [vmem:[%s195 + $0x348] sm:$0xff]
        %v327 = vld [vmem:[%s195 + $0x350] sm:$0xff]
        %v328 = vld [vmem:[%s195 + $0x358] sm:$0xff]
        %v329 = vld [vmem:[%s195 + $0x360] sm:$0xff]
        %v330 = vld [vmem:[%s195 + $0x368] sm:$0xff]
        %v331 = vld [vmem:[%s195 + $0x370] sm:$0xff]
        %v332 = vld [vmem:[%s195 + $0x378] sm:$0xff]
        %v333 = vld [vmem:[%s195 + $0x380] sm:$0xff]
        %v334 = vld [vmem:[%s195 + $0x388] sm:$0xff]
        %v335 = vld [vmem:[%s195 + $0x390] sm:$0xff]
        %v336 = vld [vmem:[%s195 + $0x398] sm:$0xff]
        %v337 = vld [vmem:[%s195 + $0x3a0] sm:$0xff]
        %v338 = vld [vmem:[%s195 + $0x3a8] sm:$0xff]
        %v339 = vld [vmem:[%s195 + $0x3b0] sm:$0xff]
        %v340 = vld [vmem:[%s195 + $0x3b8] sm:$0xff]
        %v341 = vld [vmem:[%s195 + $0x3c0] sm:$0xff]
        %v342 = vld [vmem:[%s195 + $0x3c8] sm:$0xff]
        %v343 = vld [vmem:[%s195 + $0x3d0] sm:$0xff]
        %v344 = vld [vmem:[%s195 + $0x3d8] sm:$0xff]
        %v345 = vld [vmem:[%s195 + $0x3e0] sm:$0xff]
        %v346 = vld [vmem:[%s195 + $0x3e8] sm:$0xff]
        %v347 = vld [vmem:[%s195 + $0x3f0] sm:$0xff]
        %v348 = vld [vmem:[%s195 + $0x3f8] sm:$0xff]
        %v349 = vld [vmem:[%s195 + $0x400] sm:$0xff]
        %v350 = vld [vmem:[%s195 + $0x408] sm:$0xff]
        %v351 = vld [vmem:[%s195 + $0x410] sm:$0xff]
        %v352 = vld [vmem:[%s195 + $0x418] sm:$0xff]
        %v353 = vld [vmem:[%s195 + $0x420] sm:$0xff]
        %v354 = vld [vmem:[%s195 + $0x428] sm:$0xff]
        %v355 = vld [vmem:[%s195 + $0x430] sm:$0xff]
        %v356 = vld [vmem:[%s195 + $0x438] sm:$0xff]
        %v357 = vld [vmem:[%s195 + $0x440] sm:$0xff]
        %v358 = vld [vmem:[%s195 + $0x448] sm:$0xff]
        %v359 = vld [vmem:[%s195 + $0x450] sm:$0xff]
        %v360 = vld [vmem:[%s195 + $0x458] sm:$0xff]
        %v361 = vld [vmem:[%s195 + $0x460] sm:$0xff]
        %v362 = vld [vmem:[%s195 + $0x468] sm:$0xff]
        %v363 = vld [vmem:[%s195 + $0x470] sm:$0xff]
        %v364 = vld [vmem:[%s195 + $0x478] sm:$0xff]
        %v365 = vld [vmem:[%s195 + $0x480] sm:$0xff]
        %v366 = vld [vmem:[%s195 + $0x488] sm:$0xff]
        %v367 = vld [vmem:[%s195 + $0x490] sm:$0xff]
        %v368 = vld [vmem:[%s195 + $0x498] sm:$0xff]
        %v369 = vld [vmem:[%s195 + $0x4a0] sm:$0xff]
        %v370 = vld [vmem:[%s195 + $0x4a8] sm:$0xff]
        %v371 = vld [vmem:[%s195 + $0x4b0] sm:$0xff]
        %v372 = vld [vmem:[%s195 + $0x4b8] sm:$0xff]
        %v373 = vld [vmem:[%s195 + $0x4c0] sm:$0xff]
        %v374 = vld [vmem:[%s195 + $0x4c8] sm:$0xff]
        %v375 = vld [vmem:[%s195 + $0x4d0] sm:$0xff]
        %v376 = vld [vmem:[%s195 + $0x4d8] sm:$0xff]
        %v377 = vld [vmem:[%s195 + $0x4e0] sm:$0xff]
        %v378 = vld [vmem:[%s195 + $0x4e8] sm:$0xff]
        %v379 = vld [vmem:[%s195 + $0x4f0] sm:$0xff]
        %v380 = vld [vmem:[%s195 + $0x4f8] sm:$0xff]
        %v381 = vld [vmem:[%s195 + $0x500] sm:$0xff]
        %v382 = vld [vmem:[%s195 + $0x508] sm:$0xff]
        %v383 = vld [vmem:[%s195 + $0x510] sm:$0xff]
        %v384 = vld [vmem:[%s195 + $0x518] sm:$0xff]
        %v385 = vld [vmem:[%s195 + $0x520] sm:$0xff]
        %v386 = vld [vmem:[%s195 + $0x528] sm:$0xff]
        %v387 = vld [vmem:[%s195 + $0x530] sm:$0xff]
        %v388 = vld [vmem:[%s195 + $0x538] sm:$0xff]
        %v389 = vld [vmem:[%s195 + $0x540] sm:$0xff]
        %v390 = vld [vmem:[%s195 + $0x548] sm:$0xff]
        %v391 = vld [vmem:[%s195 + $0x550] sm:$0xff]
        %v392 = vld [vmem:[%s195 + $0x558] sm:$0xff]
        %v393 = vld [vmem:[%s195 + $0x560] sm:$0xff]
        %v394 = vld [vmem:[%s195 + $0x568] sm:$0xff]
        %v395 = vld [vmem:[%s195 + $0x570] sm:$0xff]
        %v396 = vld [vmem:[%s195 + $0x578] sm:$0xff]
        %v397 = vld [vmem:[%s195 + $0x580] sm:$0xff]
        %v398 = vld [vmem:[%s195 + $0x588] sm:$0xff]
        %v399 = vld [vmem:[%s195 + $0x590] sm:$0xff]
        %v400 = vld [vmem:[%s195 + $0x598] sm:$0xff]
        %v401 = vld [vmem:[%s195 + $0x5a0] sm:$0xff]
        %v402 = vld [vmem:[%s195 + $0x5a8] sm:$0xff]
        %v403 = vld [vmem:[%s195 + $0x5b0] sm:$0xff]
        %v404 = vld [vmem:[%s195 + $0x5b8] sm:$0xff]
        %v405 = vld [vmem:[%s195 + $0x5c0] sm:$0xff]
        %v406 = vld [vmem:[%s195 + $0x5c8] sm:$0xff]
        %v407 = vld [vmem:[%s195 + $0x5d0] sm:$0xff]
        %v408 = vld [vmem:[%s195 + $0x5d8] sm:$0xff]
        %v409 = vld [vmem:[%s195 + $0x5e0] sm:$0xff]
        %v410 = vld [vmem:[%s195 + $0x5e8] sm:$0xff]
        %v411 = vld [vmem:[%s195 + $0x5f0] sm:$0xff]
        %v412 = vld [vmem:[%s195 + $0x5f8] sm:$0xff]
        %v413 = vld [vmem:[%s195 + $0x600] sm:$0xff]
        %v414 = vld [vmem:[%s195 + $0x608] sm:$0xff]
        %v415 = vld [vmem:[%s195 + $0x610] sm:$0xff]
        %v416 = vld [vmem:[%s195 + $0x618] sm:$0xff]
        %v417 = vld [vmem:[%s195 + $0x620] sm:$0xff]
        %v418 = vld [vmem:[%s195 + $0x628] sm:$0xff]
        %v419 = vld [vmem:[%s195 + $0x630] sm:$0xff]
        %v420 = vld [vmem:[%s195 + $0x638] sm:$0xff]
        %v421 = vld [vmem:[%s195 + $0x640] sm:$0xff]
        %v422 = vld [vmem:[%s195 + $0x648] sm:$0xff]
        %v423 = vld [vmem:[%s195 + $0x650] sm:$0xff]
        %v424 = vld [vmem:[%s195 + $0x658] sm:$0xff]
        %v425 = vld [vmem:[%s195 + $0x660] sm:$0xff]
        %v426 = vld [vmem:[%s195 + $0x668] sm:$0xff]
        %v427 = vld [vmem:[%s195 + $0x670] sm:$0xff]
        %v428 = vld [vmem:[%s195 + $0x678] sm:$0xff]
        %v429 = vld [vmem:[%s195 + $0x680] sm:$0xff]
        %v430 = vld [vmem:[%s195 + $0x688] sm:$0xff]
        %v431 = vld [vmem:[%s195 + $0x690] sm:$0xff]
        %v432 = vld [vmem:[%s195 + $0x698] sm:$0xff]
        %v433 = vld [vmem:[%s195 + $0x6a0] sm:$0xff]
        %v434 = vld [vmem:[%s195 + $0x6a8] sm:$0xff]
        %v435 = vld [vmem:[%s195 + $0x6b0] sm:$0xff]
        %v436 = vld [vmem:[%s195 + $0x6b8] sm:$0xff]
        %v437 = vld [vmem:[%s195 + $0x6c0] sm:$0xff]
        %v438 = vld [vmem:[%s195 + $0x6c8] sm:$0xff]
        %v439 = vld [vmem:[%s195 + $0x6d0] sm:$0xff]
        %v440 = vld [vmem:[%s195 + $0x6d8] sm:$0xff]
        %v441 = vld [vmem:[%s195 + $0x6e0] sm:$0xff]
        %v442 = vld [vmem:[%s195 + $0x6e8] sm:$0xff]
        %v443 = vld [vmem:[%s195 + $0x6f0] sm:$0xff]
        %v444 = vld [vmem:[%s195 + $0x6f8] sm:$0xff]
        %v445 = vld [vmem:[%s195 + $0x700] sm:$0xff]
        %v446 = vld [vmem:[%s195 + $0x708] sm:$0xff]
        %v447 = vld [vmem:[%s195 + $0x710] sm:$0xff]
        %v448 = vld [vmem:[%s195 + $0x718] sm:$0xff]
        %v449 = vld [vmem:[%s195 + $0x720] sm:$0xff]
        %v450 = vld [vmem:[%s195 + $0x728] sm:$0xff]
        %v451 = vld [vmem:[%s195 + $0x730] sm:$0xff]
        %v452 = vld [vmem:[%s195 + $0x738] sm:$0xff]
        %v453 = vld [vmem:[%s195 + $0x740] sm:$0xff]
        %v454 = vld [vmem:[%s195 + $0x748] sm:$0xff]
        %v455 = vld [vmem:[%s195 + $0x750] sm:$0xff]
        %v456 = vld [vmem:[%s195 + $0x758] sm:$0xff]
        %v457 = vld [vmem:[%s195 + $0x760] sm:$0xff]
        %v458 = vld [vmem:[%s195 + $0x768] sm:$0xff]
        %v459 = vld [vmem:[%s195 + $0x770] sm:$0xff]
        %v460 = vld [vmem:[%s195 + $0x778] sm:$0xff]
        %v461 = vld [vmem:[%s195 + $0x780] sm:$0xff]
        %v462 = vld [vmem:[%s195 + $0x788] sm:$0xff]
        %v463 = vld [vmem:[%s195 + $0x790] sm:$0xff]
        %v464 = vld [vmem:[%s195 + $0x798] sm:$0xff]
        %v465 = vld [vmem:[%s195 + $0x7a0] sm:$0xff]
        %v466 = vld [vmem:[%s195 + $0x7a8] sm:$0xff]
        %v467 = vld [vmem:[%s195 + $0x7b0] sm:$0xff]
        %v468 = vld [vmem:[%s195 + $0x7b8] sm:$0xff]
        %v469 = vld [vmem:[%s195 + $0x7c0] sm:$0xff]
        %v470 = vld [vmem:[%s195 + $0x7c8] sm:$0xff]
        %v471 = vld [vmem:[%s195 + $0x7d0] sm:$0xff]
        %v472 = vld [vmem:[%s195 + $0x7d8] sm:$0xff]
        %v473 = vld [vmem:[%s195 + $0x7e0] sm:$0xff]
        %v474 = vld [vmem:[%s195 + $0x7e8] sm:$0xff]
        %v475 = vld [vmem:[%s195 + $0x7f0] sm:$0xff]
        %v476 = vld [vmem:[%s195 + $0x7f8] sm:$0xff]
        %v477 = vld [vmem:[%s195 + $0x800] sm:$0xff]
        %v478 = vld [vmem:[%s195 + $0x808] sm:$0xff]
        %v479 = vld [vmem:[%s195 + $0x810] sm:$0xff]
        %v480 = vld [vmem:[%s195 + $0x818] sm:$0xff]
        %v481 = vld [vmem:[%s195 + $0x820] sm:$0xff]
        %v482 = vld [vmem:[%s195 + $0x828] sm:$0xff]
        %v483 = vld [vmem:[%s195 + $0x830] sm:$0xff]
        %v484 = vld [vmem:[%s195 + $0x838] sm:$0xff]
        %v485 = vld [vmem:[%s195 + $0x840] sm:$0xff]
        %v486 = vld [vmem:[%s195 + $0x848] sm:$0xff]
        %v487 = vld [vmem:[%s195 + $0x850] sm:$0xff]
        %v488 = vld [vmem:[%s195 + $0x858] sm:$0xff]
        %v489 = vld [vmem:[%s195 + $0x860] sm:$0xff]
        %v490 = vld [vmem:[%s195 + $0x868] sm:$0xff]
        %v491 = vld [vmem:[%s195 + $0x870] sm:$0xff]
        %v492 = vld [vmem:[%s195 + $0x878] sm:$0xff]
        %v493 = vld [vmem:[%s195 + $0x880] sm:$0xff]
        %v494 = vld [vmem:[%s195 + $0x888] sm:$0xff]
        %v495 = vld [vmem:[%s195 + $0x890] sm:$0xff]
        %v496 = vld [vmem:[%s195 + $0x898] sm:$0xff]
        %v497 = vld [vmem:[%s195 + $0x8a0] sm:$0xff]
        %v498 = vld [vmem:[%s195 + $0x8a8] sm:$0xff]
        %v499 = vld [vmem:[%s195 + $0x8b0] sm:$0xff]
        %v500 = vld [vmem:[%s195 + $0x8b8] sm:$0xff]
        %v501 = vld [vmem:[%s195 + $0x8c0] sm:$0xff]
        %v502 = vld [vmem:[%s195 + $0x8c8] sm:$0xff]
        %v503 = vld [vmem:[%s195 + $0x8d0] sm:$0xff]
        %v504 = vld [vmem:[%s195 + $0x8d8] sm:$0xff]
        %v505 = vld [vmem:[%s195 + $0x8e0] sm:$0xff]
        %v506 = vld [vmem:[%s195 + $0x8e8] sm:$0xff]
        %v507 = vld [vmem:[%s195 + $0x8f0] sm:$0xff]
        %v508 = vld [vmem:[%s195 + $0x8f8] sm:$0xff]
        %v509 = vld [vmem:[%s195 + $0x900] sm:$0xff]
        %v510 = vld [vmem:[%s195 + $0x908] sm:$0xff]
        %v511 = vld [vmem:[%s195 + $0x910] sm:$0xff]
        %v512 = vld [vmem:[%s195 + $0x918] sm:$0xff]
        %v513 = vld [vmem:[%s195 + $0x920] sm:$0xff]
        %v514 = vld [vmem:[%s195 + $0x928] sm:$0xff]
        %v515 = vld [vmem:[%s195 + $0x930] sm:$0xff]
        %v516 = vld [vmem:[%s195 + $0x938] sm:$0xff]
        %v517 = vld [vmem:[%s195 + $0x940] sm:$0xff]
        %v518 = vld [vmem:[%s195 + $0x948] sm:$0xff]
        %v519 = vld [vmem:[%s195 + $0x950] sm:$0xff]
        %v520 = vld [vmem:[%s195 + $0x958] sm:$0xff]
        %v521 = vld [vmem:[%s195 + $0x960] sm:$0xff]
        %v522 = vld [vmem:[%s195 + $0x968] sm:$0xff]
        %v523 = vld [vmem:[%s195 + $0x970] sm:$0xff]
        %v524 = vld [vmem:[%s195 + $0x978] sm:$0xff]
        %v525 = vld [vmem:[%s195 + $0x980] sm:$0xff]
        %v526 = vld [vmem:[%s195 + $0x988] sm:$0xff]
        %v527 = vld [vmem:[%s195 + $0x990] sm:$0xff]
        %v528 = vld [vmem:[%s195 + $0x998] sm:$0xff]
        %v529 = vld [vmem:[%s195 + $0x9a0] sm:$0xff]
        %v530 = vld [vmem:[%s195 + $0x9a8] sm:$0xff]
        %v531 = vld [vmem:[%s195 + $0x9b0] sm:$0xff]
        %v532 = vld [vmem:[%s195 + $0x9b8] sm:$0xff]
        %v533 = vld [vmem:[%s195 + $0x9c0] sm:$0xff]
        %v534 = vld [vmem:[%s195 + $0x9c8] sm:$0xff]
        %v535 = vld [vmem:[%s195 + $0x9d0] sm:$0xff]
        %v536 = vld [vmem:[%s195 + $0x9d8] sm:$0xff]
        %v537 = vld [vmem:[%s195 + $0x9e0] sm:$0xff]
        %v538 = vld [vmem:[%s195 + $0x9e8] sm:$0xff]
        %v539 = vld [vmem:[%s195 + $0x9f0] sm:$0xff]
        %v540 = vld [vmem:[%s195 + $0x9f8] sm:$0xff]
        %v541 = vld [vmem:[%s195 + $0xa00] sm:$0xff]
        %v542 = vld [vmem:[%s195 + $0xa08] sm:$0xff]
        %v543 = vld [vmem:[%s195 + $0xa10] sm:$0xff]
        %v544 = vld [vmem:[%s195 + $0xa18] sm:$0xff]
        %v545 = vld [vmem:[%s195 + $0xa20] sm:$0xff]
        %v546 = vld [vmem:[%s195 + $0xa28] sm:$0xff]
        %v547 = vld [vmem:[%s195 + $0xa30] sm:$0xff]
        %v548 = vld [vmem:[%s195 + $0xa38] sm:$0xff]
        %v549 = vld [vmem:[%s195 + $0xa40] sm:$0xff]
        %v550 = vld [vmem:[%s195 + $0xa48] sm:$0xff]
        %v551 = vld [vmem:[%s195 + $0xa50] sm:$0xff]
        %v552 = vld [vmem:[%s195 + $0xa58] sm:$0xff]
        %v553 = vld [vmem:[%s195 + $0xa60] sm:$0xff]
        %v554 = vld [vmem:[%s195 + $0xa68] sm:$0xff]
        %v555 = vld [vmem:[%s195 + $0xa70] sm:$0xff]
        %v556 = vld [vmem:[%s195 + $0xa78] sm:$0xff]
        %v557 = vld [vmem:[%s195 + $0xa80] sm:$0xff]
        %v558 = vld [vmem:[%s195 + $0xa88] sm:$0xff]
        %v559 = vld [vmem:[%s195 + $0xa90] sm:$0xff]
        %v560 = vld [vmem:[%s195 + $0xa98] sm:$0xff]
        %v561 = vld [vmem:[%s195 + $0xaa0] sm:$0xff]
        %v562 = vld [vmem:[%s195 + $0xaa8] sm:$0xff]
        %v563 = vld [vmem:[%s195 + $0xab0] sm:$0xff]
        %v564 = vld [vmem:[%s195 + $0xab8] sm:$0xff]
        %v565 = vld [vmem:[%s195 + $0xac0] sm:$0xff]
        %v566 = vld [vmem:[%s195 + $0xac8] sm:$0xff]
        %v567 = vld [vmem:[%s195 + $0xad0] sm:$0xff]
        %v568 = vld [vmem:[%s195 + $0xad8] sm:$0xff]
        %v569 = vld [vmem:[%s195 + $0xae0] sm:$0xff]
        %v570 = vld [vmem:[%s195 + $0xae8] sm:$0xff]
        %v571 = vld [vmem:[%s195 + $0xaf0] sm:$0xff]
        %v572 = vld [vmem:[%s195 + $0xaf8] sm:$0xff]
        %v573 = vld [vmem:[%s195 + $0xb00] sm:$0xff]
        %v574 = vld [vmem:[%s195 + $0xb08] sm:$0xff]
        %v575 = vld [vmem:[%s195 + $0xb10] sm:$0xff]
        %v576 = vld [vmem:[%s195 + $0xb18] sm:$0xff]
        %v577 = vld [vmem:[%s195 + $0xb20] sm:$0xff]
        %v578 = vld [vmem:[%s195 + $0xb28] sm:$0xff]
        %v579 = vld [vmem:[%s195 + $0xb30] sm:$0xff]
        %v580 = vld [vmem:[%s195 + $0xb38] sm:$0xff]
        %v581 = vld [vmem:[%s195 + $0xb40] sm:$0xff]
        %v582 = vld [vmem:[%s195 + $0xb48] sm:$0xff]
        %v583 = vld [vmem:[%s195 + $0xb50] sm:$0xff]
        %v584 = vld [vmem:[%s195 + $0xb58] sm:$0xff]
        %v585 = vld [vmem:[%s195 + $0xb60] sm:$0xff]
        %v586 = vld [vmem:[%s195 + $0xb68] sm:$0xff]
        %v587 = vld [vmem:[%s195 + $0xb70] sm:$0xff]
        %v588 = vld [vmem:[%s195 + $0xb78] sm:$0xff]
        %v589 = vld [vmem:[%s195 + $0xb80] sm:$0xff]
        %v590 = vld [vmem:[%s195 + $0xb88] sm:$0xff]
        %v591 = vld [vmem:[%s195 + $0xb90] sm:$0xff]
        %v592 = vld [vmem:[%s195 + $0xb98] sm:$0xff]
        %v593 = vld [vmem:[%s195 + $0xba0] sm:$0xff]
        %v594 = vld [vmem:[%s195 + $0xba8] sm:$0xff]
        %v595 = vld [vmem:[%s195 + $0xbb0] sm:$0xff]
        %v596 = vld [vmem:[%s195 + $0xbb8] sm:$0xff]
        %v597 = vld [vmem:[%s195 + $0xbc0] sm:$0xff]
        %v598 = vld [vmem:[%s195 + $0xbc8] sm:$0xff]
        %v599 = vld [vmem:[%s195 + $0xbd0] sm:$0xff]
        %v600 = vld [vmem:[%s195 + $0xbd8] sm:$0xff]
        %v601 = vld [vmem:[%s195 + $0xbe0] sm:$0xff]
        %v602 = vld [vmem:[%s195 + $0xbe8] sm:$0xff]
        %v603 = vld [vmem:[%s195 + $0xbf0] sm:$0xff]
        %v604 = vld [vmem:[%s195 + $0xbf8] sm:$0xff]
        %v605 = vld [vmem:[%s195 + $0xc00] sm:$0xff]
        %v606 = vld [vmem:[%s195 + $0xc08] sm:$0xff]
        %v607 = vld [vmem:[%s195 + $0xc10] sm:$0xff]
        %v608 = vld [vmem:[%s195 + $0xc18] sm:$0xff]
        %v609 = vld [vmem:[%s195 + $0xc20] sm:$0xff]
        %v610 = vld [vmem:[%s195 + $0xc28] sm:$0xff]
        %v611 = vld [vmem:[%s195 + $0xc30] sm:$0xff]
        %v612 = vld [vmem:[%s195 + $0xc38] sm:$0xff]
        %v613 = vld [vmem:[%s195 + $0xc40] sm:$0xff]
        %v614 = vld [vmem:[%s195 + $0xc48] sm:$0xff]
        %v615 = vld [vmem:[%s195 + $0xc50] sm:$0xff]
        %v616 = vld [vmem:[%s195 + $0xc58] sm:$0xff]
        %v617 = vld [vmem:[%s195 + $0xc60] sm:$0xff]
        %v618 = vld [vmem:[%s195 + $0xc68] sm:$0xff]
        %v619 = vld [vmem:[%s195 + $0xc70] sm:$0xff]
        %v620 = vld [vmem:[%s195 + $0xc78] sm:$0xff]
        %v621 = vld [vmem:[%s195 + $0xc80] sm:$0xff]
        %v622 = vld [vmem:[%s195 + $0xc88] sm:$0xff]
        %v623 = vld [vmem:[%s195 + $0xc90] sm:$0xff]
        %v624 = vld [vmem:[%s195 + $0xc98] sm:$0xff]
        %v625 = vld [vmem:[%s195 + $0xca0] sm:$0xff]
        %v626 = vld [vmem:[%s195 + $0xca8] sm:$0xff]
        %v627 = vld [vmem:[%s195 + $0xcb0] sm:$0xff]
        %v628 = vld [vmem:[%s195 + $0xcb8] sm:$0xff]
        %v629 = vld [vmem:[%s195 + $0xcc0] sm:$0xff]
        %v630 = vld [vmem:[%s195 + $0xcc8] sm:$0xff]
        %v631 = vld [vmem:[%s195 + $0xcd0] sm:$0xff]
        %v632 = vld [vmem:[%s195 + $0xcd8] sm:$0xff]
        %v633 = vld [vmem:[%s195 + $0xce0] sm:$0xff]
        %v634 = vld [vmem:[%s195 + $0xce8] sm:$0xff]
        %v635 = vld [vmem:[%s195 + $0xcf0] sm:$0xff]
        %v636 = vld [vmem:[%s195 + $0xcf8] sm:$0xff]
        %v637 = vld [vmem:[%s195 + $0xd00] sm:$0xff]
        %v638 = vld [vmem:[%s195 + $0xd08] sm:$0xff]
        %v639 = vld [vmem:[%s195 + $0xd10] sm:$0xff]
        %v640 = vld [vmem:[%s195 + $0xd18] sm:$0xff]
        %v641 = vld [vmem:[%s195 + $0xd20] sm:$0xff]
        %v642 = vld [vmem:[%s195 + $0xd28] sm:$0xff]
        %v643 = vld [vmem:[%s195 + $0xd30] sm:$0xff]
        %v644 = vld [vmem:[%s195 + $0xd38] sm:$0xff]
        %v645 = vld [vmem:[%s195 + $0xd40] sm:$0xff]
        %v646 = vld [vmem:[%s195 + $0xd48] sm:$0xff]
        %v647 = vld [vmem:[%s195 + $0xd50] sm:$0xff]
        %v648 = vld [vmem:[%s195 + $0xd58] sm:$0xff]
        %v649 = vld [vmem:[%s195 + $0xd60] sm:$0xff]
        %v650 = vld [vmem:[%s195 + $0xd68] sm:$0xff]
        %v651 = vld [vmem:[%s195 + $0xd70] sm:$0xff]
        %v652 = vld [vmem:[%s195 + $0xd78] sm:$0xff]
        %v653 = vld [vmem:[%s195 + $0xd80] sm:$0xff]
        %v654 = vld [vmem:[%s195 + $0xd88] sm:$0xff]
        %v655 = vld [vmem:[%s195 + $0xd90] sm:$0xff]
        %v656 = vld [vmem:[%s195 + $0xd98] sm:$0xff]
        %v657 = vld [vmem:[%s195 + $0xda0] sm:$0xff]
        %v658 = vld [vmem:[%s195 + $0xda8] sm:$0xff]
        %v659 = vld [vmem:[%s195 + $0xdb0] sm:$0xff]
        %v660 = vld [vmem:[%s195 + $0xdb8] sm:$0xff]
        %v661 = vld [vmem:[%s195 + $0xdc0] sm:$0xff]
        %v662 = vld [vmem:[%s195 + $0xdc8] sm:$0xff]
        %v663 = vld [vmem:[%s195 + $0xdd0] sm:$0xff]
        %v664 = vld [vmem:[%s195 + $0xdd8] sm:$0xff]
        %v665 = vld [vmem:[%s195 + $0xde0] sm:$0xff]
        %v666 = vld [vmem:[%s195 + $0xde8] sm:$0xff]
        %v667 = vld [vmem:[%s195 + $0xdf0] sm:$0xff]
        %v668 = vld [vmem:[%s195 + $0xdf8] sm:$0xff]
        %v669 = vld [vmem:[%s195 + $0xe00] sm:$0xff]
        %v670 = vld [vmem:[%s195 + $0xe08] sm:$0xff]
        %v671 = vld [vmem:[%s195 + $0xe10] sm:$0xff]
        %v672 = vld [vmem:[%s195 + $0xe18] sm:$0xff]
        %v673 = vld [vmem:[%s195 + $0xe20] sm:$0xff]
        %v674 = vld [vmem:[%s195 + $0xe28] sm:$0xff]
        %v675 = vld [vmem:[%s195 + $0xe30] sm:$0xff]
        %v676 = vld [vmem:[%s195 + $0xe38] sm:$0xff]
        %v677 = vld [vmem:[%s195 + $0xe40] sm:$0xff]
        %v678 = vld [vmem:[%s195 + $0xe48] sm:$0xff]
        %v679 = vld [vmem:[%s195 + $0xe50] sm:$0xff]
        %v680 = vld [vmem:[%s195 + $0xe58] sm:$0xff]
        %v681 = vld [vmem:[%s195 + $0xe60] sm:$0xff]
        %v682 = vld [vmem:[%s195 + $0xe68] sm:$0xff]
        %v683 = vld [vmem:[%s195 + $0xe70] sm:$0xff]
        %v684 = vld [vmem:[%s195 + $0xe78] sm:$0xff]
        %v685 = vld [vmem:[%s195 + $0xe80] sm:$0xff]
        %v686 = vld [vmem:[%s195 + $0xe88] sm:$0xff]
        %v687 = vld [vmem:[%s195 + $0xe90] sm:$0xff]
        %v688 = vld [vmem:[%s195 + $0xe98] sm:$0xff]
        %v689 = vld [vmem:[%s195 + $0xea0] sm:$0xff]
        %v690 = vld [vmem:[%s195 + $0xea8] sm:$0xff]
        %v691 = vld [vmem:[%s195 + $0xeb0] sm:$0xff]
        %v692 = vld [vmem:[%s195 + $0xeb8] sm:$0xff]
        %v693 = vld [vmem:[%s195 + $0xec0] sm:$0xff]
        %v694 = vld [vmem:[%s195 + $0xec8] sm:$0xff]
        %v695 = vld [vmem:[%s195 + $0xed0] sm:$0xff]
        %v696 = vld [vmem:[%s195 + $0xed8] sm:$0xff]
        %v697 = vld [vmem:[%s195 + $0xee0] sm:$0xff]
        %v698 = vld [vmem:[%s195 + $0xee8] sm:$0xff]
        %v699 = vld [vmem:[%s195 + $0xef0] sm:$0xff]
        %v700 = vld [vmem:[%s195 + $0xef8] sm:$0xff]
        %v701 = vld [vmem:[%s195 + $0xf00] sm:$0xff]
        %v702 = vld [vmem:[%s195 + $0xf08] sm:$0xff]
        %v703 = vld [vmem:[%s195 + $0xf10] sm:$0xff]
        %v704 = vld [vmem:[%s195 + $0xf18] sm:$0xff]
        %v705 = vld [vmem:[%s195 + $0xf20] sm:$0xff]
        %v706 = vld [vmem:[%s195 + $0xf28] sm:$0xff]
        %v707 = vld [vmem:[%s195 + $0xf30] sm:$0xff]
        %v708 = vld [vmem:[%s195 + $0xf38] sm:$0xff]
        %v709 = vld [vmem:[%s195 + $0xf40] sm:$0xff]
        %v710 = vld [vmem:[%s195 + $0xf48] sm:$0xff]
        %v711 = vld [vmem:[%s195 + $0xf50] sm:$0xff]
        %v712 = vld [vmem:[%s195 + $0xf58] sm:$0xff]
        %v713 = vld [vmem:[%s195 + $0xf60] sm:$0xff]
        %v714 = vld [vmem:[%s195 + $0xf68] sm:$0xff]
        %v715 = vld [vmem:[%s195 + $0xf70] sm:$0xff]
        %v716 = vld [vmem:[%s195 + $0xf78] sm:$0xff]
        %v717 = vld [vmem:[%s195 + $0xf80] sm:$0xff]
        %v718 = vld [vmem:[%s195 + $0xf88] sm:$0xff]
        %v719 = vld [vmem:[%s195 + $0xf90] sm:$0xff]
        %v720 = vld [vmem:[%s195 + $0xf98] sm:$0xff]
        %v721 = vld [vmem:[%s195 + $0xfa0] sm:$0xff]
        %v722 = vld [vmem:[%s195 + $0xfa8] sm:$0xff]
        %v723 = vld [vmem:[%s195 + $0xfb0] sm:$0xff]
        %v724 = vld [vmem:[%s195 + $0xfb8] sm:$0xff]
        %v725 = vld [vmem:[%s195 + $0xfc0] sm:$0xff]
        %v726 = vld [vmem:[%s195 + $0xfc8] sm:$0xff]
        %v727 = vld [vmem:[%s195 + $0xfd0] sm:$0xff]
        %v728 = vld [vmem:[%s195 + $0xfd8] sm:$0xff]
        %v729 = vld [vmem:[%s195 + $0xfe0] sm:$0xff]
        %v730 = vld [vmem:[%s195 + $0xfe8] sm:$0xff]
        %v731 = vld [vmem:[%s195 + $0xff0] sm:$0xff]
        %v732 = vld [vmem:[%s195 + $0xff8] sm:$0xff]
        %v741 = vunpack.c.l.b16 %v213
        %v742 = vunpack.c.h.b16 %v213
        %v743 = vunpack.c.l.b16 %v214
        %v744 = vunpack.c.h.b16 %v214
        %v745 = vunpack.c.l.b16 %v215
        %v746 = vunpack.c.h.b16 %v215
        %v747 = vunpack.c.l.b16 %v216
        %v748 = vunpack.c.h.b16 %v216
        %v749 = vunpack.c.l.b16 %v217
        %v750 = vunpack.c.h.b16 %v217
        %v751 = vunpack.c.l.b16 %v218
        %v752 = vunpack.c.h.b16 %v218
        %v753 = vunpack.c.l.b16 %v219
        %v754 = vunpack.c.h.b16 %v219
        %v755 = vunpack.c.l.b16 %v220
        %v756 = vunpack.c.h.b16 %v220
        %v757 = vpack.c.b16 %v741, %v741
        %v758 = vpack.c.b16 %v742, %v742
        %v759 = vpack.c.b16 %v743, %v743
        %v760 = vpack.c.b16 %v744, %v744
        %v761 = vpack.c.b16 %v745, %v745
        %v762 = vpack.c.b16 %v746, %v746
        %v763 = vpack.c.b16 %v747, %v747
        %v764 = vpack.c.b16 %v748, %v748
        %v765 = vpack.c.b16 %v749, %v749
        %v766 = vpack.c.b16 %v750, %v750
        %v767 = vpack.c.b16 %v751, %v751
        %v768 = vpack.c.b16 %v752, %v752
        %v769 = vpack.c.b16 %v753, %v753
        %v770 = vpack.c.b16 %v754, %v754
        %v771 = vpack.c.b16 %v755, %v755
        %v772 = vpack.c.b16 %v756, %v756
        %v1301 = vunpack.c.l.b16 %v221
        %v1302 = vunpack.c.h.b16 %v221
        %v1303 = vunpack.c.l.b16 %v222
        %v1304 = vunpack.c.h.b16 %v222
        %v1305 = vunpack.c.l.b16 %v223
        %v1306 = vunpack.c.h.b16 %v223
        %v1307 = vunpack.c.l.b16 %v224
        %v1308 = vunpack.c.h.b16 %v224
        %v1309 = vunpack.c.l.b16 %v225
        %v1310 = vunpack.c.h.b16 %v225
        %v1311 = vunpack.c.l.b16 %v226
        %v1312 = vunpack.c.h.b16 %v226
        %v1313 = vunpack.c.l.b16 %v227
        %v1314 = vunpack.c.h.b16 %v227
        %v1315 = vunpack.c.l.b16 %v228
        %v1316 = vunpack.c.h.b16 %v228
        %v1317 = vunpack.c.l.b16 %v229
        %v1318 = vunpack.c.h.b16 %v229
        %v1319 = vunpack.c.l.b16 %v230
        %v1320 = vunpack.c.h.b16 %v230
        %v1321 = vunpack.c.l.b16 %v231
        %v1322 = vunpack.c.h.b16 %v231
        %v1323 = vunpack.c.l.b16 %v232
        %v1324 = vunpack.c.h.b16 %v232
        %v1325 = vunpack.c.l.b16 %v233
        %v1326 = vunpack.c.h.b16 %v233
        %v1327 = vunpack.c.l.b16 %v234
        %v1328 = vunpack.c.h.b16 %v234
        %v1329 = vunpack.c.l.b16 %v235
        %v1330 = vunpack.c.h.b16 %v235
        %v1331 = vunpack.c.l.b16 %v236
        %v1332 = vunpack.c.h.b16 %v236
        %v1333 = vunpack.c.l.b16 %v237
        %v1334 = vunpack.c.h.b16 %v237
        %v1335 = vunpack.c.l.b16 %v238
        %v1336 = vunpack.c.h.b16 %v238
        %v1337 = vunpack.c.l.b16 %v239
        %v1338 = vunpack.c.h.b16 %v239
        %v1339 = vunpack.c.l.b16 %v240
        %v1340 = vunpack.c.h.b16 %v240
        %v1341 = vunpack.c.l.b16 %v241
        %v1342 = vunpack.c.h.b16 %v241
        %v1343 = vunpack.c.l.b16 %v242
        %v1344 = vunpack.c.h.b16 %v242
        %v1345 = vunpack.c.l.b16 %v243
        %v1346 = vunpack.c.h.b16 %v243
        %v1347 = vunpack.c.l.b16 %v244
        %v1348 = vunpack.c.h.b16 %v244
        %v1349 = vunpack.c.l.b16 %v245
        %v1350 = vunpack.c.h.b16 %v245
        %v1351 = vunpack.c.l.b16 %v246
        %v1352 = vunpack.c.h.b16 %v246
        %v1353 = vunpack.c.l.b16 %v247
        %v1354 = vunpack.c.h.b16 %v247
        %v1355 = vunpack.c.l.b16 %v248
        %v1356 = vunpack.c.h.b16 %v248
        %v1357 = vunpack.c.l.b16 %v249
        %v1358 = vunpack.c.h.b16 %v249
        %v1359 = vunpack.c.l.b16 %v250
        %v1360 = vunpack.c.h.b16 %v250
        %v1361 = vunpack.c.l.b16 %v251
        %v1362 = vunpack.c.h.b16 %v251
        %v1363 = vunpack.c.l.b16 %v252
        %v1364 = vunpack.c.h.b16 %v252
        %v1365 = vunpack.c.l.b16 %v253
        %v1366 = vunpack.c.h.b16 %v253
        %v1367 = vunpack.c.l.b16 %v254
        %v1368 = vunpack.c.h.b16 %v254
        %v1369 = vunpack.c.l.b16 %v255
        %v1370 = vunpack.c.h.b16 %v255
        %v1371 = vunpack.c.l.b16 %v256
        %v1372 = vunpack.c.h.b16 %v256
        %v1373 = vunpack.c.l.b16 %v257
        %v1374 = vunpack.c.h.b16 %v257
        %v1375 = vunpack.c.l.b16 %v258
        %v1376 = vunpack.c.h.b16 %v258
        %v1377 = vunpack.c.l.b16 %v259
        %v1378 = vunpack.c.h.b16 %v259
        %v1379 = vunpack.c.l.b16 %v260
        %v1380 = vunpack.c.h.b16 %v260
        %v1381 = vunpack.c.l.b16 %v261
        %v1382 = vunpack.c.h.b16 %v261
        %v1383 = vunpack.c.l.b16 %v262
        %v1384 = vunpack.c.h.b16 %v262
        %v1385 = vunpack.c.l.b16 %v263
        %v1386 = vunpack.c.h.b16 %v263
        %v1387 = vunpack.c.l.b16 %v264
        %v1388 = vunpack.c.h.b16 %v264
        %v1389 = vunpack.c.l.b16 %v265
        %v1390 = vunpack.c.h.b16 %v265
        %v1391 = vunpack.c.l.b16 %v266
        %v1392 = vunpack.c.h.b16 %v266
        %v1393 = vunpack.c.l.b16 %v267
        %v1394 = vunpack.c.h.b16 %v267
        %v1395 = vunpack.c.l.b16 %v268
        %v1396 = vunpack.c.h.b16 %v268
        %v1397 = vunpack.c.l.b16 %v269
        %v1398 = vunpack.c.h.b16 %v269
        %v1399 = vunpack.c.l.b16 %v270
        %v1400 = vunpack.c.h.b16 %v270
        %v1401 = vunpack.c.l.b16 %v271
        %v1402 = vunpack.c.h.b16 %v271
        %v1403 = vunpack.c.l.b16 %v272
        %v1404 = vunpack.c.h.b16 %v272
        %v1405 = vunpack.c.l.b16 %v273
        %v1406 = vunpack.c.h.b16 %v273
        %v1407 = vunpack.c.l.b16 %v274
        %v1408 = vunpack.c.h.b16 %v274
        %v1409 = vunpack.c.l.b16 %v275
        %v1410 = vunpack.c.h.b16 %v275
        %v1411 = vunpack.c.l.b16 %v276
        %v1412 = vunpack.c.h.b16 %v276
        %v1413 = vunpack.c.l.b16 %v277
        %v1414 = vunpack.c.h.b16 %v277
        %v1415 = vunpack.c.l.b16 %v278
        %v1416 = vunpack.c.h.b16 %v278
        %v1417 = vunpack.c.l.b16 %v279
        %v1418 = vunpack.c.h.b16 %v279
        %v1419 = vunpack.c.l.b16 %v280
        %v1420 = vunpack.c.h.b16 %v280
        %v1421 = vunpack.c.l.b16 %v281
        %v1422 = vunpack.c.h.b16 %v281
        %v1423 = vunpack.c.l.b16 %v282
        %v1424 = vunpack.c.h.b16 %v282
        %v1425 = vunpack.c.l.b16 %v283
        %v1426 = vunpack.c.h.b16 %v283
        %v1427 = vunpack.c.l.b16 %v284
        %v1428 = vunpack.c.h.b16 %v284
        %v1429 = vunpack.c.l.b16 %v285
        %v1430 = vunpack.c.h.b16 %v285
        %v1431 = vunpack.c.l.b16 %v286
        %v1432 = vunpack.c.h.b16 %v286
        %v1433 = vunpack.c.l.b16 %v287
        %v1434 = vunpack.c.h.b16 %v287
        %v1435 = vunpack.c.l.b16 %v288
        %v1436 = vunpack.c.h.b16 %v288
        %v1437 = vunpack.c.l.b16 %v289
        %v1438 = vunpack.c.h.b16 %v289
        %v1439 = vunpack.c.l.b16 %v290
        %v1440 = vunpack.c.h.b16 %v290
        %v1441 = vunpack.c.l.b16 %v291
        %v1442 = vunpack.c.h.b16 %v291
        %v1443 = vunpack.c.l.b16 %v292
        %v1444 = vunpack.c.h.b16 %v292
        %v1445 = vunpack.c.l.b16 %v293
        %v1446 = vunpack.c.h.b16 %v293
        %v1447 = vunpack.c.l.b16 %v294
        %v1448 = vunpack.c.h.b16 %v294
        %v1449 = vunpack.c.l.b16 %v295
        %v1450 = vunpack.c.h.b16 %v295
        %v1451 = vunpack.c.l.b16 %v296
        %v1452 = vunpack.c.h.b16 %v296
        %v1453 = vunpack.c.l.b16 %v297
        %v1454 = vunpack.c.h.b16 %v297
        %v1455 = vunpack.c.l.b16 %v298
        %v1456 = vunpack.c.h.b16 %v298
        %v1457 = vunpack.c.l.b16 %v299
        %v1458 = vunpack.c.h.b16 %v299
        %v1459 = vunpack.c.l.b16 %v300
        %v1460 = vunpack.c.h.b16 %v300
        %v1461 = vunpack.c.l.b16 %v301
        %v1462 = vunpack.c.h.b16 %v301
        %v1463 = vunpack.c.l.b16 %v302
        %v1464 = vunpack.c.h.b16 %v302
        %v1465 = vunpack.c.l.b16 %v303
        %v1466 = vunpack.c.h.b16 %v303
        %v1467 = vunpack.c.l.b16 %v304
        %v1468 = vunpack.c.h.b16 %v304
        %v1469 = vunpack.c.l.b16 %v305
        %v1470 = vunpack.c.h.b16 %v305
        %v1471 = vunpack.c.l.b16 %v306
        %v1472 = vunpack.c.h.b16 %v306
        %v1473 = vunpack.c.l.b16 %v307
        %v1474 = vunpack.c.h.b16 %v307
        %v1475 = vunpack.c.l.b16 %v308
        %v1476 = vunpack.c.h.b16 %v308
        %v1477 = vunpack.c.l.b16 %v309
        %v1478 = vunpack.c.h.b16 %v309
        %v1479 = vunpack.c.l.b16 %v310
        %v1480 = vunpack.c.h.b16 %v310
        %v1481 = vunpack.c.l.b16 %v311
        %v1482 = vunpack.c.h.b16 %v311
        %v1483 = vunpack.c.l.b16 %v312
        %v1484 = vunpack.c.h.b16 %v312
        %v1485 = vunpack.c.l.b16 %v313
        %v1486 = vunpack.c.h.b16 %v313
        %v1487 = vunpack.c.l.b16 %v314
        %v1488 = vunpack.c.h.b16 %v314
        %v1489 = vunpack.c.l.b16 %v315
        %v1490 = vunpack.c.h.b16 %v315
        %v1491 = vunpack.c.l.b16 %v316
        %v1492 = vunpack.c.h.b16 %v316
        %v1493 = vunpack.c.l.b16 %v317
        %v1494 = vunpack.c.h.b16 %v317
        %v1495 = vunpack.c.l.b16 %v318
        %v1496 = vunpack.c.h.b16 %v318
        %v1497 = vunpack.c.l.b16 %v319
        %v1498 = vunpack.c.h.b16 %v319
        %v1499 = vunpack.c.l.b16 %v320
        %v1500 = vunpack.c.h.b16 %v320
        %v1501 = vunpack.c.l.b16 %v321
        %v1502 = vunpack.c.h.b16 %v321
        %v1503 = vunpack.c.l.b16 %v322
        %v1504 = vunpack.c.h.b16 %v322
        %v1505 = vunpack.c.l.b16 %v323
        %v1506 = vunpack.c.h.b16 %v323
        %v1507 = vunpack.c.l.b16 %v324
        %v1508 = vunpack.c.h.b16 %v324
        %v1509 = vunpack.c.l.b16 %v325
        %v1510 = vunpack.c.h.b16 %v325
        %v1511 = vunpack.c.l.b16 %v326
        %v1512 = vunpack.c.h.b16 %v326
        %v1513 = vunpack.c.l.b16 %v327
        %v1514 = vunpack.c.h.b16 %v327
        %v1515 = vunpack.c.l.b16 %v328
        %v1516 = vunpack.c.h.b16 %v328
        %v1517 = vunpack.c.l.b16 %v329
        %v1518 = vunpack.c.h.b16 %v329
        %v1519 = vunpack.c.l.b16 %v330
        %v1520 = vunpack.c.h.b16 %v330
        %v1521 = vunpack.c.l.b16 %v331
        %v1522 = vunpack.c.h.b16 %v331
        %v1523 = vunpack.c.l.b16 %v332
        %v1524 = vunpack.c.h.b16 %v332
        %v1525 = vunpack.c.l.b16 %v333
        %v1526 = vunpack.c.h.b16 %v333
        %v1527 = vunpack.c.l.b16 %v334
        %v1528 = vunpack.c.h.b16 %v334
        %v1529 = vunpack.c.l.b16 %v335
        %v1530 = vunpack.c.h.b16 %v335
        %v1531 = vunpack.c.l.b16 %v336
        %v1532 = vunpack.c.h.b16 %v336
        %v1533 = vunpack.c.l.b16 %v337
        %v1534 = vunpack.c.h.b16 %v337
        %v1535 = vunpack.c.l.b16 %v338
        %v1536 = vunpack.c.h.b16 %v338
        %v1537 = vunpack.c.l.b16 %v339
        %v1538 = vunpack.c.h.b16 %v339
        %v1539 = vunpack.c.l.b16 %v340
        %v1540 = vunpack.c.h.b16 %v340
        %v1541 = vunpack.c.l.b16 %v341
        %v1542 = vunpack.c.h.b16 %v341
        %v1543 = vunpack.c.l.b16 %v342
        %v1544 = vunpack.c.h.b16 %v342
        %v1545 = vunpack.c.l.b16 %v343
        %v1546 = vunpack.c.h.b16 %v343
        %v1547 = vunpack.c.l.b16 %v344
        %v1548 = vunpack.c.h.b16 %v344
        %v1549 = vunpack.c.l.b16 %v345
        %v1550 = vunpack.c.h.b16 %v345
        %v1551 = vunpack.c.l.b16 %v346
        %v1552 = vunpack.c.h.b16 %v346
        %v1553 = vunpack.c.l.b16 %v347
        %v1554 = vunpack.c.h.b16 %v347
        %v1555 = vunpack.c.l.b16 %v348
        %v1556 = vunpack.c.h.b16 %v348
        %v1557 = vunpack.c.l.b16 %v349
        %v1558 = vunpack.c.h.b16 %v349
        %v1559 = vunpack.c.l.b16 %v350
        %v1560 = vunpack.c.h.b16 %v350
        %v1561 = vunpack.c.l.b16 %v351
        %v1562 = vunpack.c.h.b16 %v351
        %v1563 = vunpack.c.l.b16 %v352
        %v1564 = vunpack.c.h.b16 %v352
        %v1565 = vunpack.c.l.b16 %v353
        %v1566 = vunpack.c.h.b16 %v353
        %v1567 = vunpack.c.l.b16 %v354
        %v1568 = vunpack.c.h.b16 %v354
        %v1569 = vunpack.c.l.b16 %v355
        %v1570 = vunpack.c.h.b16 %v355
        %v1571 = vunpack.c.l.b16 %v356
        %v1572 = vunpack.c.h.b16 %v356
        %v1573 = vunpack.c.l.b16 %v357
        %v1574 = vunpack.c.h.b16 %v357
        %v1575 = vunpack.c.l.b16 %v358
        %v1576 = vunpack.c.h.b16 %v358
        %v1577 = vunpack.c.l.b16 %v359
        %v1578 = vunpack.c.h.b16 %v359
        %v1579 = vunpack.c.l.b16 %v360
        %v1580 = vunpack.c.h.b16 %v360
        %v1581 = vunpack.c.l.b16 %v361
        %v1582 = vunpack.c.h.b16 %v361
        %v1583 = vunpack.c.l.b16 %v362
        %v1584 = vunpack.c.h.b16 %v362
        %v1585 = vunpack.c.l.b16 %v363
        %v1586 = vunpack.c.h.b16 %v363
        %v1587 = vunpack.c.l.b16 %v364
        %v1588 = vunpack.c.h.b16 %v364
        %v1589 = vunpack.c.l.b16 %v365
        %v1590 = vunpack.c.h.b16 %v365
        %v1591 = vunpack.c.l.b16 %v366
        %v1592 = vunpack.c.h.b16 %v366
        %v1593 = vunpack.c.l.b16 %v367
        %v1594 = vunpack.c.h.b16 %v367
        %v1595 = vunpack.c.l.b16 %v368
        %v1596 = vunpack.c.h.b16 %v368
        %v1597 = vunpack.c.l.b16 %v369
        %v1598 = vunpack.c.h.b16 %v369
        %v1599 = vunpack.c.l.b16 %v370
        %v1600 = vunpack.c.h.b16 %v370
        %v1601 = vunpack.c.l.b16 %v371
        %v1602 = vunpack.c.h.b16 %v371
        %v1603 = vunpack.c.l.b16 %v372
        %v1604 = vunpack.c.h.b16 %v372
        %v1605 = vunpack.c.l.b16 %v373
        %v1606 = vunpack.c.h.b16 %v373
        %v1607 = vunpack.c.l.b16 %v374
        %v1608 = vunpack.c.h.b16 %v374
        %v1609 = vunpack.c.l.b16 %v375
        %v1610 = vunpack.c.h.b16 %v375
        %v1611 = vunpack.c.l.b16 %v376
        %v1612 = vunpack.c.h.b16 %v376
        %v1613 = vunpack.c.l.b16 %v377
        %v1614 = vunpack.c.h.b16 %v377
        %v1615 = vunpack.c.l.b16 %v378
        %v1616 = vunpack.c.h.b16 %v378
        %v1617 = vunpack.c.l.b16 %v379
        %v1618 = vunpack.c.h.b16 %v379
        %v1619 = vunpack.c.l.b16 %v380
        %v1620 = vunpack.c.h.b16 %v380
        %v1621 = vunpack.c.l.b16 %v381
        %v1622 = vunpack.c.h.b16 %v381
        %v1623 = vunpack.c.l.b16 %v382
        %v1624 = vunpack.c.h.b16 %v382
        %v1625 = vunpack.c.l.b16 %v383
        %v1626 = vunpack.c.h.b16 %v383
        %v1627 = vunpack.c.l.b16 %v384
        %v1628 = vunpack.c.h.b16 %v384
        %v1629 = vunpack.c.l.b16 %v385
        %v1630 = vunpack.c.h.b16 %v385
        %v1631 = vunpack.c.l.b16 %v386
        %v1632 = vunpack.c.h.b16 %v386
        %v1633 = vunpack.c.l.b16 %v387
        %v1634 = vunpack.c.h.b16 %v387
        %v1635 = vunpack.c.l.b16 %v388
        %v1636 = vunpack.c.h.b16 %v388
        %v1637 = vunpack.c.l.b16 %v389
        %v1638 = vunpack.c.h.b16 %v389
        %v1639 = vunpack.c.l.b16 %v390
        %v1640 = vunpack.c.h.b16 %v390
        %v1641 = vunpack.c.l.b16 %v391
        %v1642 = vunpack.c.h.b16 %v391
        %v1643 = vunpack.c.l.b16 %v392
        %v1644 = vunpack.c.h.b16 %v392
        %v1645 = vunpack.c.l.b16 %v393
        %v1646 = vunpack.c.h.b16 %v393
        %v1647 = vunpack.c.l.b16 %v394
        %v1648 = vunpack.c.h.b16 %v394
        %v1649 = vunpack.c.l.b16 %v395
        %v1650 = vunpack.c.h.b16 %v395
        %v1651 = vunpack.c.l.b16 %v396
        %v1652 = vunpack.c.h.b16 %v396
        %v1653 = vunpack.c.l.b16 %v397
        %v1654 = vunpack.c.h.b16 %v397
        %v1655 = vunpack.c.l.b16 %v398
        %v1656 = vunpack.c.h.b16 %v398
        %v1657 = vunpack.c.l.b16 %v399
        %v1658 = vunpack.c.h.b16 %v399
        %v1659 = vunpack.c.l.b16 %v400
        %v1660 = vunpack.c.h.b16 %v400
        %v1661 = vunpack.c.l.b16 %v401
        %v1662 = vunpack.c.h.b16 %v401
        %v1663 = vunpack.c.l.b16 %v402
        %v1664 = vunpack.c.h.b16 %v402
        %v1665 = vunpack.c.l.b16 %v403
        %v1666 = vunpack.c.h.b16 %v403
        %v1667 = vunpack.c.l.b16 %v404
        %v1668 = vunpack.c.h.b16 %v404
        %v1669 = vunpack.c.l.b16 %v405
        %v1670 = vunpack.c.h.b16 %v405
        %v1671 = vunpack.c.l.b16 %v406
        %v1672 = vunpack.c.h.b16 %v406
        %v1673 = vunpack.c.l.b16 %v407
        %v1674 = vunpack.c.h.b16 %v407
        %v1675 = vunpack.c.l.b16 %v408
        %v1676 = vunpack.c.h.b16 %v408
        %v1677 = vunpack.c.l.b16 %v409
        %v1678 = vunpack.c.h.b16 %v409
        %v1679 = vunpack.c.l.b16 %v410
        %v1680 = vunpack.c.h.b16 %v410
        %v1681 = vunpack.c.l.b16 %v411
        %v1682 = vunpack.c.h.b16 %v411
        %v1683 = vunpack.c.l.b16 %v412
        %v1684 = vunpack.c.h.b16 %v412
        %v1685 = vunpack.c.l.b16 %v413
        %v1686 = vunpack.c.h.b16 %v413
        %v1687 = vunpack.c.l.b16 %v414
        %v1688 = vunpack.c.h.b16 %v414
        %v1689 = vunpack.c.l.b16 %v415
        %v1690 = vunpack.c.h.b16 %v415
        %v1691 = vunpack.c.l.b16 %v416
        %v1692 = vunpack.c.h.b16 %v416
        %v1693 = vunpack.c.l.b16 %v417
        %v1694 = vunpack.c.h.b16 %v417
        %v1695 = vunpack.c.l.b16 %v418
        %v1696 = vunpack.c.h.b16 %v418
        %v1697 = vunpack.c.l.b16 %v419
        %v1698 = vunpack.c.h.b16 %v419
        %v1699 = vunpack.c.l.b16 %v420
        %v1700 = vunpack.c.h.b16 %v420
        %v1701 = vunpack.c.l.b16 %v421
        %v1702 = vunpack.c.h.b16 %v421
        %v1703 = vunpack.c.l.b16 %v422
        %v1704 = vunpack.c.h.b16 %v422
        %v1705 = vunpack.c.l.b16 %v423
        %v1706 = vunpack.c.h.b16 %v423
        %v1707 = vunpack.c.l.b16 %v424
        %v1708 = vunpack.c.h.b16 %v424
        %v1709 = vunpack.c.l.b16 %v425
        %v1710 = vunpack.c.h.b16 %v425
        %v1711 = vunpack.c.l.b16 %v426
        %v1712 = vunpack.c.h.b16 %v426
        %v1713 = vunpack.c.l.b16 %v427
        %v1714 = vunpack.c.h.b16 %v427
        %v1715 = vunpack.c.l.b16 %v428
        %v1716 = vunpack.c.h.b16 %v428
        %v1717 = vunpack.c.l.b16 %v429
        %v1718 = vunpack.c.h.b16 %v429
        %v1719 = vunpack.c.l.b16 %v430
        %v1720 = vunpack.c.h.b16 %v430
        %v1721 = vunpack.c.l.b16 %v431
        %v1722 = vunpack.c.h.b16 %v431
        %v1723 = vunpack.c.l.b16 %v432
        %v1724 = vunpack.c.h.b16 %v432
        %v1725 = vunpack.c.l.b16 %v433
        %v1726 = vunpack.c.h.b16 %v433
        %v1727 = vunpack.c.l.b16 %v434
        %v1728 = vunpack.c.h.b16 %v434
        %v1729 = vunpack.c.l.b16 %v435
        %v1730 = vunpack.c.h.b16 %v435
        %v1731 = vunpack.c.l.b16 %v436
        %v1732 = vunpack.c.h.b16 %v436
        %v1733 = vunpack.c.l.b16 %v437
        %v1734 = vunpack.c.h.b16 %v437
        %v1735 = vunpack.c.l.b16 %v438
        %v1736 = vunpack.c.h.b16 %v438
        %v1737 = vunpack.c.l.b16 %v439
        %v1738 = vunpack.c.h.b16 %v439
        %v1739 = vunpack.c.l.b16 %v440
        %v1740 = vunpack.c.h.b16 %v440
        %v1741 = vunpack.c.l.b16 %v441
        %v1742 = vunpack.c.h.b16 %v441
        %v1743 = vunpack.c.l.b16 %v442
        %v1744 = vunpack.c.h.b16 %v442
        %v1745 = vunpack.c.l.b16 %v443
        %v1746 = vunpack.c.h.b16 %v443
        %v1747 = vunpack.c.l.b16 %v444
        %v1748 = vunpack.c.h.b16 %v444
        %v1749 = vunpack.c.l.b16 %v445
        %v1750 = vunpack.c.h.b16 %v445
        %v1751 = vunpack.c.l.b16 %v446
        %v1752 = vunpack.c.h.b16 %v446
        %v1753 = vunpack.c.l.b16 %v447
        %v1754 = vunpack.c.h.b16 %v447
        %v1755 = vunpack.c.l.b16 %v448
        %v1756 = vunpack.c.h.b16 %v448
        %v1757 = vunpack.c.l.b16 %v449
        %v1758 = vunpack.c.h.b16 %v449
        %v1759 = vunpack.c.l.b16 %v450
        %v1760 = vunpack.c.h.b16 %v450
        %v1761 = vunpack.c.l.b16 %v451
        %v1762 = vunpack.c.h.b16 %v451
        %v1763 = vunpack.c.l.b16 %v452
        %v1764 = vunpack.c.h.b16 %v452
        %v1765 = vunpack.c.l.b16 %v453
        %v1766 = vunpack.c.h.b16 %v453
        %v1767 = vunpack.c.l.b16 %v454
        %v1768 = vunpack.c.h.b16 %v454
        %v1769 = vunpack.c.l.b16 %v455
        %v1770 = vunpack.c.h.b16 %v455
        %v1771 = vunpack.c.l.b16 %v456
        %v1772 = vunpack.c.h.b16 %v456
        %v1773 = vunpack.c.l.b16 %v457
        %v1774 = vunpack.c.h.b16 %v457
        %v1775 = vunpack.c.l.b16 %v458
        %v1776 = vunpack.c.h.b16 %v458
        %v1777 = vunpack.c.l.b16 %v459
        %v1778 = vunpack.c.h.b16 %v459
        %v1779 = vunpack.c.l.b16 %v460
        %v1780 = vunpack.c.h.b16 %v460
        %v1781 = vunpack.c.l.b16 %v461
        %v1782 = vunpack.c.h.b16 %v461
        %v1783 = vunpack.c.l.b16 %v462
        %v1784 = vunpack.c.h.b16 %v462
        %v1785 = vunpack.c.l.b16 %v463
        %v1786 = vunpack.c.h.b16 %v463
        %v1787 = vunpack.c.l.b16 %v464
        %v1788 = vunpack.c.h.b16 %v464
        %v1789 = vunpack.c.l.b16 %v465
        %v1790 = vunpack.c.h.b16 %v465
        %v1791 = vunpack.c.l.b16 %v466
        %v1792 = vunpack.c.h.b16 %v466
        %v1793 = vunpack.c.l.b16 %v467
        %v1794 = vunpack.c.h.b16 %v467
        %v1795 = vunpack.c.l.b16 %v468
        %v1796 = vunpack.c.h.b16 %v468
        %v1797 = vunpack.c.l.b16 %v469
        %v1798 = vunpack.c.h.b16 %v469
        %v1799 = vunpack.c.l.b16 %v470
        %v1800 = vunpack.c.h.b16 %v470
        %v1801 = vunpack.c.l.b16 %v471
        %v1802 = vunpack.c.h.b16 %v471
        %v1803 = vunpack.c.l.b16 %v472
        %v1804 = vunpack.c.h.b16 %v472
        %v1805 = vunpack.c.l.b16 %v473
        %v1806 = vunpack.c.h.b16 %v473
        %v1807 = vunpack.c.l.b16 %v474
        %v1808 = vunpack.c.h.b16 %v474
        %v1809 = vunpack.c.l.b16 %v475
        %v1810 = vunpack.c.h.b16 %v475
        %v1811 = vunpack.c.l.b16 %v476
        %v1812 = vunpack.c.h.b16 %v476
        %v1813 = vunpack.c.l.b16 %v477
        %v1814 = vunpack.c.h.b16 %v477
        %v1815 = vunpack.c.l.b16 %v478
        %v1816 = vunpack.c.h.b16 %v478
        %v1817 = vunpack.c.l.b16 %v479
        %v1818 = vunpack.c.h.b16 %v479
        %v1819 = vunpack.c.l.b16 %v480
        %v1820 = vunpack.c.h.b16 %v480
        %v1821 = vunpack.c.l.b16 %v481
        %v1822 = vunpack.c.h.b16 %v481
        %v1823 = vunpack.c.l.b16 %v482
        %v1824 = vunpack.c.h.b16 %v482
        %v1825 = vunpack.c.l.b16 %v483
        %v1826 = vunpack.c.h.b16 %v483
        %v1827 = vunpack.c.l.b16 %v484
        %v1828 = vunpack.c.h.b16 %v484
        %v1829 = vunpack.c.l.b16 %v485
        %v1830 = vunpack.c.h.b16 %v485
        %v1831 = vunpack.c.l.b16 %v486
        %v1832 = vunpack.c.h.b16 %v486
        %v1833 = vunpack.c.l.b16 %v487
        %v1834 = vunpack.c.h.b16 %v487
        %v1835 = vunpack.c.l.b16 %v488
        %v1836 = vunpack.c.h.b16 %v488
        %v1837 = vunpack.c.l.b16 %v489
        %v1838 = vunpack.c.h.b16 %v489
        %v1839 = vunpack.c.l.b16 %v490
        %v1840 = vunpack.c.h.b16 %v490
        %v1841 = vunpack.c.l.b16 %v491
        %v1842 = vunpack.c.h.b16 %v491
        %v1843 = vunpack.c.l.b16 %v492
        %v1844 = vunpack.c.h.b16 %v492
        %v1845 = vunpack.c.l.b16 %v493
        %v1846 = vunpack.c.h.b16 %v493
        %v1847 = vunpack.c.l.b16 %v494
        %v1848 = vunpack.c.h.b16 %v494
        %v1849 = vunpack.c.l.b16 %v495
        %v1850 = vunpack.c.h.b16 %v495
        %v1851 = vunpack.c.l.b16 %v496
        %v1852 = vunpack.c.h.b16 %v496
        %v1853 = vunpack.c.l.b16 %v497
        %v1854 = vunpack.c.h.b16 %v497
        %v1855 = vunpack.c.l.b16 %v498
        %v1856 = vunpack.c.h.b16 %v498
        %v1857 = vunpack.c.l.b16 %v499
        %v1858 = vunpack.c.h.b16 %v499
        %v1859 = vunpack.c.l.b16 %v500
        %v1860 = vunpack.c.h.b16 %v500
        %v1861 = vunpack.c.l.b16 %v501
        %v1862 = vunpack.c.h.b16 %v501
        %v1863 = vunpack.c.l.b16 %v502
        %v1864 = vunpack.c.h.b16 %v502
        %v1865 = vunpack.c.l.b16 %v503
        %v1866 = vunpack.c.h.b16 %v503
        %v1867 = vunpack.c.l.b16 %v504
        %v1868 = vunpack.c.h.b16 %v504
        %v1869 = vunpack.c.l.b16 %v505
        %v1870 = vunpack.c.h.b16 %v505
        %v1871 = vunpack.c.l.b16 %v506
        %v1872 = vunpack.c.h.b16 %v506
        %v1873 = vunpack.c.l.b16 %v507
        %v1874 = vunpack.c.h.b16 %v507
        %v1875 = vunpack.c.l.b16 %v508
        %v1876 = vunpack.c.h.b16 %v508
        %v1877 = vunpack.c.l.b16 %v509
        %v1878 = vunpack.c.h.b16 %v509
        %v1879 = vunpack.c.l.b16 %v510
        %v1880 = vunpack.c.h.b16 %v510
        %v1881 = vunpack.c.l.b16 %v511
        %v1882 = vunpack.c.h.b16 %v511
        %v1883 = vunpack.c.l.b16 %v512
        %v1884 = vunpack.c.h.b16 %v512
        %v1885 = vunpack.c.l.b16 %v513
        %v1886 = vunpack.c.h.b16 %v513
        %v1887 = vunpack.c.l.b16 %v514
        %v1888 = vunpack.c.h.b16 %v514
        %v1889 = vunpack.c.l.b16 %v515
        %v1890 = vunpack.c.h.b16 %v515
        %v1891 = vunpack.c.l.b16 %v516
        %v1892 = vunpack.c.h.b16 %v516
        %v1893 = vunpack.c.l.b16 %v517
        %v1894 = vunpack.c.h.b16 %v517
        %v1895 = vunpack.c.l.b16 %v518
        %v1896 = vunpack.c.h.b16 %v518
        %v1897 = vunpack.c.l.b16 %v519
        %v1898 = vunpack.c.h.b16 %v519
        %v1899 = vunpack.c.l.b16 %v520
        %v1900 = vunpack.c.h.b16 %v520
        %v1901 = vunpack.c.l.b16 %v521
        %v1902 = vunpack.c.h.b16 %v521
        %v1903 = vunpack.c.l.b16 %v522
        %v1904 = vunpack.c.h.b16 %v522
        %v1905 = vunpack.c.l.b16 %v523
        %v1906 = vunpack.c.h.b16 %v523
        %v1907 = vunpack.c.l.b16 %v524
        %v1908 = vunpack.c.h.b16 %v524
        %v1909 = vunpack.c.l.b16 %v525
        %v1910 = vunpack.c.h.b16 %v525
        %v1911 = vunpack.c.l.b16 %v526
        %v1912 = vunpack.c.h.b16 %v526
        %v1913 = vunpack.c.l.b16 %v527
        %v1914 = vunpack.c.h.b16 %v527
        %v1915 = vunpack.c.l.b16 %v528
        %v1916 = vunpack.c.h.b16 %v528
        %v1917 = vunpack.c.l.b16 %v529
        %v1918 = vunpack.c.h.b16 %v529
        %v1919 = vunpack.c.l.b16 %v530
        %v1920 = vunpack.c.h.b16 %v530
        %v1921 = vunpack.c.l.b16 %v531
        %v1922 = vunpack.c.h.b16 %v531
        %v1923 = vunpack.c.l.b16 %v532
        %v1924 = vunpack.c.h.b16 %v532
        %v1925 = vunpack.c.l.b16 %v533
        %v1926 = vunpack.c.h.b16 %v533
        %v1927 = vunpack.c.l.b16 %v534
        %v1928 = vunpack.c.h.b16 %v534
        %v1929 = vunpack.c.l.b16 %v535
        %v1930 = vunpack.c.h.b16 %v535
        %v1931 = vunpack.c.l.b16 %v536
        %v1932 = vunpack.c.h.b16 %v536
        %v1933 = vunpack.c.l.b16 %v537
        %v1934 = vunpack.c.h.b16 %v537
        %v1935 = vunpack.c.l.b16 %v538
        %v1936 = vunpack.c.h.b16 %v538
        %v1937 = vunpack.c.l.b16 %v539
        %v1938 = vunpack.c.h.b16 %v539
        %v1939 = vunpack.c.l.b16 %v540
        %v1940 = vunpack.c.h.b16 %v540
        %v1941 = vunpack.c.l.b16 %v541
        %v1942 = vunpack.c.h.b16 %v541
        %v1943 = vunpack.c.l.b16 %v542
        %v1944 = vunpack.c.h.b16 %v542
        %v1945 = vunpack.c.l.b16 %v543
        %v1946 = vunpack.c.h.b16 %v543
        %v1947 = vunpack.c.l.b16 %v544
        %v1948 = vunpack.c.h.b16 %v544
        %v1949 = vunpack.c.l.b16 %v545
        %v1950 = vunpack.c.h.b16 %v545
        %v1951 = vunpack.c.l.b16 %v546
        %v1952 = vunpack.c.h.b16 %v546
        %v1953 = vunpack.c.l.b16 %v547
        %v1954 = vunpack.c.h.b16 %v547
        %v1955 = vunpack.c.l.b16 %v548
        %v1956 = vunpack.c.h.b16 %v548
        %v1957 = vunpack.c.l.b16 %v549
        %v1958 = vunpack.c.h.b16 %v549
        %v1959 = vunpack.c.l.b16 %v550
        %v1960 = vunpack.c.h.b16 %v550
        %v1961 = vunpack.c.l.b16 %v551
        %v1962 = vunpack.c.h.b16 %v551
        %v1963 = vunpack.c.l.b16 %v552
        %v1964 = vunpack.c.h.b16 %v552
        %v1965 = vunpack.c.l.b16 %v553
        %v1966 = vunpack.c.h.b16 %v553
        %v1967 = vunpack.c.l.b16 %v554
        %v1968 = vunpack.c.h.b16 %v554
        %v1969 = vunpack.c.l.b16 %v555
        %v1970 = vunpack.c.h.b16 %v555
        %v1971 = vunpack.c.l.b16 %v556
        %v1972 = vunpack.c.h.b16 %v556
        %v1973 = vunpack.c.l.b16 %v557
        %v1974 = vunpack.c.h.b16 %v557
        %v1975 = vunpack.c.l.b16 %v558
        %v1976 = vunpack.c.h.b16 %v558
        %v1977 = vunpack.c.l.b16 %v559
        %v1978 = vunpack.c.h.b16 %v559
        %v1979 = vunpack.c.l.b16 %v560
        %v1980 = vunpack.c.h.b16 %v560
        %v1981 = vunpack.c.l.b16 %v561
        %v1982 = vunpack.c.h.b16 %v561
        %v1983 = vunpack.c.l.b16 %v562
        %v1984 = vunpack.c.h.b16 %v562
        %v1985 = vunpack.c.l.b16 %v563
        %v1986 = vunpack.c.h.b16 %v563
        %v1987 = vunpack.c.l.b16 %v564
        %v1988 = vunpack.c.h.b16 %v564
        %v1989 = vunpack.c.l.b16 %v565
        %v1990 = vunpack.c.h.b16 %v565
        %v1991 = vunpack.c.l.b16 %v566
        %v1992 = vunpack.c.h.b16 %v566
        %v1993 = vunpack.c.l.b16 %v567
        %v1994 = vunpack.c.h.b16 %v567
        %v1995 = vunpack.c.l.b16 %v568
        %v1996 = vunpack.c.h.b16 %v568
        %v1997 = vunpack.c.l.b16 %v569
        %v1998 = vunpack.c.h.b16 %v569
        %v1999 = vunpack.c.l.b16 %v570
        %v2000 = vunpack.c.h.b16 %v570
        %v2001 = vunpack.c.l.b16 %v571
        %v2002 = vunpack.c.h.b16 %v571
        %v2003 = vunpack.c.l.b16 %v572
        %v2004 = vunpack.c.h.b16 %v572
        %v2005 = vunpack.c.l.b16 %v573
        %v2006 = vunpack.c.h.b16 %v573
        %v2007 = vunpack.c.l.b16 %v574
        %v2008 = vunpack.c.h.b16 %v574
        %v2009 = vunpack.c.l.b16 %v575
        %v2010 = vunpack.c.h.b16 %v575
        %v2011 = vunpack.c.l.b16 %v576
        %v2012 = vunpack.c.h.b16 %v576
        %v2013 = vunpack.c.l.b16 %v577
        %v2014 = vunpack.c.h.b16 %v577
        %v2015 = vunpack.c.l.b16 %v578
        %v2016 = vunpack.c.h.b16 %v578
        %v2017 = vunpack.c.l.b16 %v579
        %v2018 = vunpack.c.h.b16 %v579
        %v2019 = vunpack.c.l.b16 %v580
        %v2020 = vunpack.c.h.b16 %v580
        %v2021 = vunpack.c.l.b16 %v581
        %v2022 = vunpack.c.h.b16 %v581
        %v2023 = vunpack.c.l.b16 %v582
        %v2024 = vunpack.c.h.b16 %v582
        %v2025 = vunpack.c.l.b16 %v583
        %v2026 = vunpack.c.h.b16 %v583
        %v2027 = vunpack.c.l.b16 %v584
        %v2028 = vunpack.c.h.b16 %v584
        %v2029 = vunpack.c.l.b16 %v585
        %v2030 = vunpack.c.h.b16 %v585
        %v2031 = vunpack.c.l.b16 %v586
        %v2032 = vunpack.c.h.b16 %v586
        %v2033 = vunpack.c.l.b16 %v587
        %v2034 = vunpack.c.h.b16 %v587
        %v2035 = vunpack.c.l.b16 %v588
        %v2036 = vunpack.c.h.b16 %v588
        %v2037 = vunpack.c.l.b16 %v589
        %v2038 = vunpack.c.h.b16 %v589
        %v2039 = vunpack.c.l.b16 %v590
        %v2040 = vunpack.c.h.b16 %v590
        %v2041 = vunpack.c.l.b16 %v591
        %v2042 = vunpack.c.h.b16 %v591
        %v2043 = vunpack.c.l.b16 %v592
        %v2044 = vunpack.c.h.b16 %v592
        %v2045 = vunpack.c.l.b16 %v593
        %v2046 = vunpack.c.h.b16 %v593
        %v2047 = vunpack.c.l.b16 %v594
        %v2048 = vunpack.c.h.b16 %v594
        %v2049 = vunpack.c.l.b16 %v595
        %v2050 = vunpack.c.h.b16 %v595
        %v2051 = vunpack.c.l.b16 %v596
        %v2052 = vunpack.c.h.b16 %v596
        %v2053 = vunpack.c.l.b16 %v597
        %v2054 = vunpack.c.h.b16 %v597
        %v2055 = vunpack.c.l.b16 %v598
        %v2056 = vunpack.c.h.b16 %v598
        %v2057 = vunpack.c.l.b16 %v599
        %v2058 = vunpack.c.h.b16 %v599
        %v2059 = vunpack.c.l.b16 %v600
        %v2060 = vunpack.c.h.b16 %v600
        %v2061 = vunpack.c.l.b16 %v601
        %v2062 = vunpack.c.h.b16 %v601
        %v2063 = vunpack.c.l.b16 %v602
        %v2064 = vunpack.c.h.b16 %v602
        %v2065 = vunpack.c.l.b16 %v603
        %v2066 = vunpack.c.h.b16 %v603
        %v2067 = vunpack.c.l.b16 %v604
        %v2068 = vunpack.c.h.b16 %v604
        %v2069 = vunpack.c.l.b16 %v605
        %v2070 = vunpack.c.h.b16 %v605
        %v2071 = vunpack.c.l.b16 %v606
        %v2072 = vunpack.c.h.b16 %v606
        %v2073 = vunpack.c.l.b16 %v607
        %v2074 = vunpack.c.h.b16 %v607
        %v2075 = vunpack.c.l.b16 %v608
        %v2076 = vunpack.c.h.b16 %v608
        %v2077 = vunpack.c.l.b16 %v609
        %v2078 = vunpack.c.h.b16 %v609
        %v2079 = vunpack.c.l.b16 %v610
        %v2080 = vunpack.c.h.b16 %v610
        %v2081 = vunpack.c.l.b16 %v611
        %v2082 = vunpack.c.h.b16 %v611
        %v2083 = vunpack.c.l.b16 %v612
        %v2084 = vunpack.c.h.b16 %v612
        %v2085 = vunpack.c.l.b16 %v613
        %v2086 = vunpack.c.h.b16 %v613
        %v2087 = vunpack.c.l.b16 %v614
        %v2088 = vunpack.c.h.b16 %v614
        %v2089 = vunpack.c.l.b16 %v615
        %v2090 = vunpack.c.h.b16 %v615
        %v2091 = vunpack.c.l.b16 %v616
        %v2092 = vunpack.c.h.b16 %v616
        %v2093 = vunpack.c.l.b16 %v617
        %v2094 = vunpack.c.h.b16 %v617
        %v2095 = vunpack.c.l.b16 %v618
        %v2096 = vunpack.c.h.b16 %v618
        %v2097 = vunpack.c.l.b16 %v619
        %v2098 = vunpack.c.h.b16 %v619
        %v2099 = vunpack.c.l.b16 %v620
        %v2100 = vunpack.c.h.b16 %v620
        %v2101 = vunpack.c.l.b16 %v621
        %v2102 = vunpack.c.h.b16 %v621
        %v2103 = vunpack.c.l.b16 %v622
        %v2104 = vunpack.c.h.b16 %v622
        %v2105 = vunpack.c.l.b16 %v623
        %v2106 = vunpack.c.h.b16 %v623
        %v2107 = vunpack.c.l.b16 %v624
        %v2108 = vunpack.c.h.b16 %v624
        %v2109 = vunpack.c.l.b16 %v625
        %v2110 = vunpack.c.h.b16 %v625
        %v2111 = vunpack.c.l.b16 %v626
        %v2112 = vunpack.c.h.b16 %v626
        %v2113 = vunpack.c.l.b16 %v627
        %v2114 = vunpack.c.h.b16 %v627
        %v2115 = vunpack.c.l.b16 %v628
        %v2116 = vunpack.c.h.b16 %v628
        %v2117 = vunpack.c.l.b16 %v629
        %v2118 = vunpack.c.h.b16 %v629
        %v2119 = vunpack.c.l.b16 %v630
        %v2120 = vunpack.c.h.b16 %v630
        %v2121 = vunpack.c.l.b16 %v631
        %v2122 = vunpack.c.h.b16 %v631
        %v2123 = vunpack.c.l.b16 %v632
        %v2124 = vunpack.c.h.b16 %v632
        %v2125 = vunpack.c.l.b16 %v633
        %v2126 = vunpack.c.h.b16 %v633
        %v2127 = vunpack.c.l.b16 %v634
        %v2128 = vunpack.c.h.b16 %v634
        %v2129 = vunpack.c.l.b16 %v635
        %v2130 = vunpack.c.h.b16 %v635
        %v2131 = vunpack.c.l.b16 %v636
        %v2132 = vunpack.c.h.b16 %v636
        %v2133 = vunpack.c.l.b16 %v637
        %v2134 = vunpack.c.h.b16 %v637
        %v2135 = vunpack.c.l.b16 %v638
        %v2136 = vunpack.c.h.b16 %v638
        %v2137 = vunpack.c.l.b16 %v639
        %v2138 = vunpack.c.h.b16 %v639
        %v2139 = vunpack.c.l.b16 %v640
        %v2140 = vunpack.c.h.b16 %v640
        %v2141 = vunpack.c.l.b16 %v641
        %v2142 = vunpack.c.h.b16 %v641
        %v2143 = vunpack.c.l.b16 %v642
        %v2144 = vunpack.c.h.b16 %v642
        %v2145 = vunpack.c.l.b16 %v643
        %v2146 = vunpack.c.h.b16 %v643
        %v2147 = vunpack.c.l.b16 %v644
        %v2148 = vunpack.c.h.b16 %v644
        %v2149 = vunpack.c.l.b16 %v645
        %v2150 = vunpack.c.h.b16 %v645
        %v2151 = vunpack.c.l.b16 %v646
        %v2152 = vunpack.c.h.b16 %v646
        %v2153 = vunpack.c.l.b16 %v647
        %v2154 = vunpack.c.h.b16 %v647
        %v2155 = vunpack.c.l.b16 %v648
        %v2156 = vunpack.c.h.b16 %v648
        %v2157 = vunpack.c.l.b16 %v649
        %v2158 = vunpack.c.h.b16 %v649
        %v2159 = vunpack.c.l.b16 %v650
        %v2160 = vunpack.c.h.b16 %v650
        %v2161 = vunpack.c.l.b16 %v651
        %v2162 = vunpack.c.h.b16 %v651
        %v2163 = vunpack.c.l.b16 %v652
        %v2164 = vunpack.c.h.b16 %v652
        %v2165 = vunpack.c.l.b16 %v653
        %v2166 = vunpack.c.h.b16 %v653
        %v2167 = vunpack.c.l.b16 %v654
        %v2168 = vunpack.c.h.b16 %v654
        %v2169 = vunpack.c.l.b16 %v655
        %v2170 = vunpack.c.h.b16 %v655
        %v2171 = vunpack.c.l.b16 %v656
        %v2172 = vunpack.c.h.b16 %v656
        %v2173 = vunpack.c.l.b16 %v657
        %v2174 = vunpack.c.h.b16 %v657
        %v2175 = vunpack.c.l.b16 %v658
        %v2176 = vunpack.c.h.b16 %v658
        %v2177 = vunpack.c.l.b16 %v659
        %v2178 = vunpack.c.h.b16 %v659
        %v2179 = vunpack.c.l.b16 %v660
        %v2180 = vunpack.c.h.b16 %v660
        %v2181 = vunpack.c.l.b16 %v661
        %v2182 = vunpack.c.h.b16 %v661
        %v2183 = vunpack.c.l.b16 %v662
        %v2184 = vunpack.c.h.b16 %v662
        %v2185 = vunpack.c.l.b16 %v663
        %v2186 = vunpack.c.h.b16 %v663
        %v2187 = vunpack.c.l.b16 %v664
        %v2188 = vunpack.c.h.b16 %v664
        %v2189 = vunpack.c.l.b16 %v665
        %v2190 = vunpack.c.h.b16 %v665
        %v2191 = vunpack.c.l.b16 %v666
        %v2192 = vunpack.c.h.b16 %v666
        %v2193 = vunpack.c.l.b16 %v667
        %v2194 = vunpack.c.h.b16 %v667
        %v2195 = vunpack.c.l.b16 %v668
        %v2196 = vunpack.c.h.b16 %v668
        %v2197 = vunpack.c.l.b16 %v669
        %v2198 = vunpack.c.h.b16 %v669
        %v2199 = vunpack.c.l.b16 %v670
        %v2200 = vunpack.c.h.b16 %v670
        %v2201 = vunpack.c.l.b16 %v671
        %v2202 = vunpack.c.h.b16 %v671
        %v2203 = vunpack.c.l.b16 %v672
        %v2204 = vunpack.c.h.b16 %v672
        %v2205 = vunpack.c.l.b16 %v673
        %v2206 = vunpack.c.h.b16 %v673
        %v2207 = vunpack.c.l.b16 %v674
        %v2208 = vunpack.c.h.b16 %v674
        %v2209 = vunpack.c.l.b16 %v675
        %v2210 = vunpack.c.h.b16 %v675
        %v2211 = vunpack.c.l.b16 %v676
        %v2212 = vunpack.c.h.b16 %v676
        %v2213 = vunpack.c.l.b16 %v677
        %v2214 = vunpack.c.h.b16 %v677
        %v2215 = vunpack.c.l.b16 %v678
        %v2216 = vunpack.c.h.b16 %v678
        %v2217 = vunpack.c.l.b16 %v679
        %v2218 = vunpack.c.h.b16 %v679
        %v2219 = vunpack.c.l.b16 %v680
        %v2220 = vunpack.c.h.b16 %v680
        %v2221 = vunpack.c.l.b16 %v681
        %v2222 = vunpack.c.h.b16 %v681
        %v2223 = vunpack.c.l.b16 %v682
        %v2224 = vunpack.c.h.b16 %v682
        %v2225 = vunpack.c.l.b16 %v683
        %v2226 = vunpack.c.h.b16 %v683
        %v2227 = vunpack.c.l.b16 %v684
        %v2228 = vunpack.c.h.b16 %v684
        %v2229 = vunpack.c.l.b16 %v685
        %v2230 = vunpack.c.h.b16 %v685
        %v2231 = vunpack.c.l.b16 %v686
        %v2232 = vunpack.c.h.b16 %v686
        %v2233 = vunpack.c.l.b16 %v687
        %v2234 = vunpack.c.h.b16 %v687
        %v2235 = vunpack.c.l.b16 %v688
        %v2236 = vunpack.c.h.b16 %v688
        %v2237 = vunpack.c.l.b16 %v689
        %v2238 = vunpack.c.h.b16 %v689
        %v2239 = vunpack.c.l.b16 %v690
        %v2240 = vunpack.c.h.b16 %v690
        %v2241 = vunpack.c.l.b16 %v691
        %v2242 = vunpack.c.h.b16 %v691
        %v2243 = vunpack.c.l.b16 %v692
        %v2244 = vunpack.c.h.b16 %v692
        %v2245 = vunpack.c.l.b16 %v693
        %v2246 = vunpack.c.h.b16 %v693
        %v2247 = vunpack.c.l.b16 %v694
        %v2248 = vunpack.c.h.b16 %v694
        %v2249 = vunpack.c.l.b16 %v695
        %v2250 = vunpack.c.h.b16 %v695
        %v2251 = vunpack.c.l.b16 %v696
        %v2252 = vunpack.c.h.b16 %v696
        %v2253 = vunpack.c.l.b16 %v697
        %v2254 = vunpack.c.h.b16 %v697
        %v2255 = vunpack.c.l.b16 %v698
        %v2256 = vunpack.c.h.b16 %v698
        %v2257 = vunpack.c.l.b16 %v699
        %v2258 = vunpack.c.h.b16 %v699
        %v2259 = vunpack.c.l.b16 %v700
        %v2260 = vunpack.c.h.b16 %v700
        %v2261 = vunpack.c.l.b16 %v701
        %v2262 = vunpack.c.h.b16 %v701
        %v2263 = vunpack.c.l.b16 %v702
        %v2264 = vunpack.c.h.b16 %v702
        %v2265 = vunpack.c.l.b16 %v703
        %v2266 = vunpack.c.h.b16 %v703
        %v2267 = vunpack.c.l.b16 %v704
        %v2268 = vunpack.c.h.b16 %v704
        %v2269 = vunpack.c.l.b16 %v705
        %v2270 = vunpack.c.h.b16 %v705
        %v2271 = vunpack.c.l.b16 %v706
        %v2272 = vunpack.c.h.b16 %v706
        %v2273 = vunpack.c.l.b16 %v707
        %v2274 = vunpack.c.h.b16 %v707
        %v2275 = vunpack.c.l.b16 %v708
        %v2276 = vunpack.c.h.b16 %v708
        %v2277 = vunpack.c.l.b16 %v709
        %v2278 = vunpack.c.h.b16 %v709
        %v2279 = vunpack.c.l.b16 %v710
        %v2280 = vunpack.c.h.b16 %v710
        %v2281 = vunpack.c.l.b16 %v711
        %v2282 = vunpack.c.h.b16 %v711
        %v2283 = vunpack.c.l.b16 %v712
        %v2284 = vunpack.c.h.b16 %v712
        %v2285 = vunpack.c.l.b16 %v713
        %v2286 = vunpack.c.h.b16 %v713
        %v2287 = vunpack.c.l.b16 %v714
        %v2288 = vunpack.c.h.b16 %v714
        %v2289 = vunpack.c.l.b16 %v715
        %v2290 = vunpack.c.h.b16 %v715
        %v2291 = vunpack.c.l.b16 %v716
        %v2292 = vunpack.c.h.b16 %v716
        %v2293 = vunpack.c.l.b16 %v717
        %v2294 = vunpack.c.h.b16 %v717
        %v2295 = vunpack.c.l.b16 %v718
        %v2296 = vunpack.c.h.b16 %v718
        %v2297 = vunpack.c.l.b16 %v719
        %v2298 = vunpack.c.h.b16 %v719
        %v2299 = vunpack.c.l.b16 %v720
        %v2300 = vunpack.c.h.b16 %v720
        %v2301 = vunpack.c.l.b16 %v721
        %v2302 = vunpack.c.h.b16 %v721
        %v2303 = vunpack.c.l.b16 %v722
        %v2304 = vunpack.c.h.b16 %v722
        %v2305 = vunpack.c.l.b16 %v723
        %v2306 = vunpack.c.h.b16 %v723
        %v2307 = vunpack.c.l.b16 %v724
        %v2308 = vunpack.c.h.b16 %v724
        %v2309 = vunpack.c.l.b16 %v725
        %v2310 = vunpack.c.h.b16 %v725
        %v2311 = vunpack.c.l.b16 %v726
        %v2312 = vunpack.c.h.b16 %v726
        %v2313 = vunpack.c.l.b16 %v727
        %v2314 = vunpack.c.h.b16 %v727
        %v2315 = vunpack.c.l.b16 %v728
        %v2316 = vunpack.c.h.b16 %v728
        %v2317 = vunpack.c.l.b16 %v729
        %v2318 = vunpack.c.h.b16 %v729
        %v2319 = vunpack.c.l.b16 %v730
        %v2320 = vunpack.c.h.b16 %v730
        %v2321 = vunpack.c.l.b16 %v731
        %v2322 = vunpack.c.h.b16 %v731
        %v2323 = vunpack.c.l.b16 %v732
        %v2324 = vunpack.c.h.b16 %v732
        %v2325 = vpack.c.b16 %v1305, %v1301
        %v2326 = vpack.c.b16 %v1306, %v1302
        %v2327 = vpack.c.b16 %v1307, %v1303
        %v2328 = vpack.c.b16 %v1308, %v1304
        %v2329 = vpack.c.b16 %v1313, %v1309
        %v2330 = vpack.c.b16 %v1314, %v1310
        %v2331 = vpack.c.b16 %v1315, %v1311
        %v2332 = vpack.c.b16 %v1316, %v1312
        %v2333 = vpack.c.b16 %v1321, %v1317
        %v2334 = vpack.c.b16 %v1322, %v1318
        %v2335 = vpack.c.b16 %v1323, %v1319
        %v2336 = vpack.c.b16 %v1324, %v1320
        %v2337 = vpack.c.b16 %v1329, %v1325
        %v2338 = vpack.c.b16 %v1330, %v1326
        %v2339 = vpack.c.b16 %v1331, %v1327
        %v2340 = vpack.c.b16 %v1332, %v1328
        %v2341 = vpack.c.b16 %v1337, %v1333
        %v2342 = vpack.c.b16 %v1338, %v1334
        %v2343 = vpack.c.b16 %v1339, %v1335
        %v2344 = vpack.c.b16 %v1340, %v1336
        %v2345 = vpack.c.b16 %v1345, %v1341
        %v2346 = vpack.c.b16 %v1346, %v1342
        %v2347 = vpack.c.b16 %v1347, %v1343
        %v2348 = vpack.c.b16 %v1348, %v1344
        %v2349 = vpack.c.b16 %v1353, %v1349
        %v2350 = vpack.c.b16 %v1354, %v1350
        %v2351 = vpack.c.b16 %v1355, %v1351
        %v2352 = vpack.c.b16 %v1356, %v1352
        %v2353 = vpack.c.b16 %v1361, %v1357
        %v2354 = vpack.c.b16 %v1362, %v1358
        %v2355 = vpack.c.b16 %v1363, %v1359
        %v2356 = vpack.c.b16 %v1364, %v1360
        %v2357 = vpack.c.b16 %v1369, %v1365
        %v2358 = vpack.c.b16 %v1370, %v1366
        %v2359 = vpack.c.b16 %v1371, %v1367
        %v2360 = vpack.c.b16 %v1372, %v1368
        %v2361 = vpack.c.b16 %v1377, %v1373
        %v2362 = vpack.c.b16 %v1378, %v1374
        %v2363 = vpack.c.b16 %v1379, %v1375
        %v2364 = vpack.c.b16 %v1380, %v1376
        %v2365 = vpack.c.b16 %v1385, %v1381
        %v2366 = vpack.c.b16 %v1386, %v1382
        %v2367 = vpack.c.b16 %v1387, %v1383
        %v2368 = vpack.c.b16 %v1388, %v1384
        %v2369 = vpack.c.b16 %v1393, %v1389
        %v2370 = vpack.c.b16 %v1394, %v1390
        %v2371 = vpack.c.b16 %v1395, %v1391
        %v2372 = vpack.c.b16 %v1396, %v1392
        %v2373 = vpack.c.b16 %v1401, %v1397
        %v2374 = vpack.c.b16 %v1402, %v1398
        %v2375 = vpack.c.b16 %v1403, %v1399
        %v2376 = vpack.c.b16 %v1404, %v1400
        %v2377 = vpack.c.b16 %v1409, %v1405
        %v2378 = vpack.c.b16 %v1410, %v1406
        %v2379 = vpack.c.b16 %v1411, %v1407
        %v2380 = vpack.c.b16 %v1412, %v1408
        %v2381 = vpack.c.b16 %v1417, %v1413
        %v2382 = vpack.c.b16 %v1418, %v1414
        %v2383 = vpack.c.b16 %v1419, %v1415
        %v2384 = vpack.c.b16 %v1420, %v1416
        %v2385 = vpack.c.b16 %v1425, %v1421
        %v2386 = vpack.c.b16 %v1426, %v1422
        %v2387 = vpack.c.b16 %v1427, %v1423
        %v2388 = vpack.c.b16 %v1428, %v1424
        %v2389 = vpack.c.b16 %v1433, %v1429
        %v2390 = vpack.c.b16 %v1434, %v1430
        %v2391 = vpack.c.b16 %v1435, %v1431
        %v2392 = vpack.c.b16 %v1436, %v1432
        %v2393 = vpack.c.b16 %v1441, %v1437
        %v2394 = vpack.c.b16 %v1442, %v1438
        %v2395 = vpack.c.b16 %v1443, %v1439
        %v2396 = vpack.c.b16 %v1444, %v1440
        %v2397 = vpack.c.b16 %v1449, %v1445
        %v2398 = vpack.c.b16 %v1450, %v1446
        %v2399 = vpack.c.b16 %v1451, %v1447
        %v2400 = vpack.c.b16 %v1452, %v1448
        %v2401 = vpack.c.b16 %v1457, %v1453
        %v2402 = vpack.c.b16 %v1458, %v1454
        %v2403 = vpack.c.b16 %v1459, %v1455
        %v2404 = vpack.c.b16 %v1460, %v1456
        %v2405 = vpack.c.b16 %v1465, %v1461
        %v2406 = vpack.c.b16 %v1466, %v1462
        %v2407 = vpack.c.b16 %v1467, %v1463
        %v2408 = vpack.c.b16 %v1468, %v1464
        %v2409 = vpack.c.b16 %v1473, %v1469
        %v2410 = vpack.c.b16 %v1474, %v1470
        %v2411 = vpack.c.b16 %v1475, %v1471
        %v2412 = vpack.c.b16 %v1476, %v1472
        %v2413 = vpack.c.b16 %v1481, %v1477
        %v2414 = vpack.c.b16 %v1482, %v1478
        %v2415 = vpack.c.b16 %v1483, %v1479
        %v2416 = vpack.c.b16 %v1484, %v1480
        %v2417 = vpack.c.b16 %v1489, %v1485
        %v2418 = vpack.c.b16 %v1490, %v1486
        %v2419 = vpack.c.b16 %v1491, %v1487
        %v2420 = vpack.c.b16 %v1492, %v1488
        %v2421 = vpack.c.b16 %v1497, %v1493
        %v2422 = vpack.c.b16 %v1498, %v1494
        %v2423 = vpack.c.b16 %v1499, %v1495
        %v2424 = vpack.c.b16 %v1500, %v1496
        %v2425 = vpack.c.b16 %v1505, %v1501
        %v2426 = vpack.c.b16 %v1506, %v1502
        %v2427 = vpack.c.b16 %v1507, %v1503
        %v2428 = vpack.c.b16 %v1508, %v1504
        %v2429 = vpack.c.b16 %v1513, %v1509
        %v2430 = vpack.c.b16 %v1514, %v1510
        %v2431 = vpack.c.b16 %v1515, %v1511
        %v2432 = vpack.c.b16 %v1516, %v1512
        %v2433 = vpack.c.b16 %v1521, %v1517
        %v2434 = vpack.c.b16 %v1522, %v1518
        %v2435 = vpack.c.b16 %v1523, %v1519
        %v2436 = vpack.c.b16 %v1524, %v1520
        %v2437 = vpack.c.b16 %v1529, %v1525
        %v2438 = vpack.c.b16 %v1530, %v1526
        %v2439 = vpack.c.b16 %v1531, %v1527
        %v2440 = vpack.c.b16 %v1532, %v1528
        %v2441 = vpack.c.b16 %v1537, %v1533
        %v2442 = vpack.c.b16 %v1538, %v1534
        %v2443 = vpack.c.b16 %v1539, %v1535
        %v2444 = vpack.c.b16 %v1540, %v1536
        %v2445 = vpack.c.b16 %v1545, %v1541
        %v2446 = vpack.c.b16 %v1546, %v1542
        %v2447 = vpack.c.b16 %v1547, %v1543
        %v2448 = vpack.c.b16 %v1548, %v1544
        %v2449 = vpack.c.b16 %v1553, %v1549
        %v2450 = vpack.c.b16 %v1554, %v1550
        %v2451 = vpack.c.b16 %v1555, %v1551
        %v2452 = vpack.c.b16 %v1556, %v1552
        %v2453 = vpack.c.b16 %v1561, %v1557
        %v2454 = vpack.c.b16 %v1562, %v1558
        %v2455 = vpack.c.b16 %v1563, %v1559
        %v2456 = vpack.c.b16 %v1564, %v1560
        %v2457 = vpack.c.b16 %v1569, %v1565
        %v2458 = vpack.c.b16 %v1570, %v1566
        %v2459 = vpack.c.b16 %v1571, %v1567
        %v2460 = vpack.c.b16 %v1572, %v1568
        %v2461 = vpack.c.b16 %v1577, %v1573
        %v2462 = vpack.c.b16 %v1578, %v1574
        %v2463 = vpack.c.b16 %v1579, %v1575
        %v2464 = vpack.c.b16 %v1580, %v1576
        %v2465 = vpack.c.b16 %v1585, %v1581
        %v2466 = vpack.c.b16 %v1586, %v1582
        %v2467 = vpack.c.b16 %v1587, %v1583
        %v2468 = vpack.c.b16 %v1588, %v1584
        %v2469 = vpack.c.b16 %v1593, %v1589
        %v2470 = vpack.c.b16 %v1594, %v1590
        %v2471 = vpack.c.b16 %v1595, %v1591
        %v2472 = vpack.c.b16 %v1596, %v1592
        %v2473 = vpack.c.b16 %v1601, %v1597
        %v2474 = vpack.c.b16 %v1602, %v1598
        %v2475 = vpack.c.b16 %v1603, %v1599
        %v2476 = vpack.c.b16 %v1604, %v1600
        %v2477 = vpack.c.b16 %v1609, %v1605
        %v2478 = vpack.c.b16 %v1610, %v1606
        %v2479 = vpack.c.b16 %v1611, %v1607
        %v2480 = vpack.c.b16 %v1612, %v1608
        %v2481 = vpack.c.b16 %v1617, %v1613
        %v2482 = vpack.c.b16 %v1618, %v1614
        %v2483 = vpack.c.b16 %v1619, %v1615
        %v2484 = vpack.c.b16 %v1620, %v1616
        %v2485 = vpack.c.b16 %v1625, %v1621
        %v2486 = vpack.c.b16 %v1626, %v1622
        %v2487 = vpack.c.b16 %v1627, %v1623
        %v2488 = vpack.c.b16 %v1628, %v1624
        %v2489 = vpack.c.b16 %v1633, %v1629
        %v2490 = vpack.c.b16 %v1634, %v1630
        %v2491 = vpack.c.b16 %v1635, %v1631
        %v2492 = vpack.c.b16 %v1636, %v1632
        %v2493 = vpack.c.b16 %v1641, %v1637
        %v2494 = vpack.c.b16 %v1642, %v1638
        %v2495 = vpack.c.b16 %v1643, %v1639
        %v2496 = vpack.c.b16 %v1644, %v1640
        %v2497 = vpack.c.b16 %v1649, %v1645
        %v2498 = vpack.c.b16 %v1650, %v1646
        %v2499 = vpack.c.b16 %v1651, %v1647
        %v2500 = vpack.c.b16 %v1652, %v1648
        %v2501 = vpack.c.b16 %v1657, %v1653
        %v2502 = vpack.c.b16 %v1658, %v1654
        %v2503 = vpack.c.b16 %v1659, %v1655
        %v2504 = vpack.c.b16 %v1660, %v1656
        %v2505 = vpack.c.b16 %v1665, %v1661
        %v2506 = vpack.c.b16 %v1666, %v1662
        %v2507 = vpack.c.b16 %v1667, %v1663
        %v2508 = vpack.c.b16 %v1668, %v1664
        %v2509 = vpack.c.b16 %v1673, %v1669
        %v2510 = vpack.c.b16 %v1674, %v1670
        %v2511 = vpack.c.b16 %v1675, %v1671
        %v2512 = vpack.c.b16 %v1676, %v1672
        %v2513 = vpack.c.b16 %v1681, %v1677
        %v2514 = vpack.c.b16 %v1682, %v1678
        %v2515 = vpack.c.b16 %v1683, %v1679
        %v2516 = vpack.c.b16 %v1684, %v1680
        %v2517 = vpack.c.b16 %v1689, %v1685
        %v2518 = vpack.c.b16 %v1690, %v1686
        %v2519 = vpack.c.b16 %v1691, %v1687
        %v2520 = vpack.c.b16 %v1692, %v1688
        %v2521 = vpack.c.b16 %v1697, %v1693
        %v2522 = vpack.c.b16 %v1698, %v1694
        %v2523 = vpack.c.b16 %v1699, %v1695
        %v2524 = vpack.c.b16 %v1700, %v1696
        %v2525 = vpack.c.b16 %v1705, %v1701
        %v2526 = vpack.c.b16 %v1706, %v1702
        %v2527 = vpack.c.b16 %v1707, %v1703
        %v2528 = vpack.c.b16 %v1708, %v1704
        %v2529 = vpack.c.b16 %v1713, %v1709
        %v2530 = vpack.c.b16 %v1714, %v1710
        %v2531 = vpack.c.b16 %v1715, %v1711
        %v2532 = vpack.c.b16 %v1716, %v1712
        %v2533 = vpack.c.b16 %v1721, %v1717
        %v2534 = vpack.c.b16 %v1722, %v1718
        %v2535 = vpack.c.b16 %v1723, %v1719
        %v2536 = vpack.c.b16 %v1724, %v1720
        %v2537 = vpack.c.b16 %v1729, %v1725
        %v2538 = vpack.c.b16 %v1730, %v1726
        %v2539 = vpack.c.b16 %v1731, %v1727
        %v2540 = vpack.c.b16 %v1732, %v1728
        %v2541 = vpack.c.b16 %v1737, %v1733
        %v2542 = vpack.c.b16 %v1738, %v1734
        %v2543 = vpack.c.b16 %v1739, %v1735
        %v2544 = vpack.c.b16 %v1740, %v1736
        %v2545 = vpack.c.b16 %v1745, %v1741
        %v2546 = vpack.c.b16 %v1746, %v1742
        %v2547 = vpack.c.b16 %v1747, %v1743
        %v2548 = vpack.c.b16 %v1748, %v1744
        %v2549 = vpack.c.b16 %v1753, %v1749
        %v2550 = vpack.c.b16 %v1754, %v1750
        %v2551 = vpack.c.b16 %v1755, %v1751
        %v2552 = vpack.c.b16 %v1756, %v1752
        %v2553 = vpack.c.b16 %v1761, %v1757
        %v2554 = vpack.c.b16 %v1762, %v1758
        %v2555 = vpack.c.b16 %v1763, %v1759
        %v2556 = vpack.c.b16 %v1764, %v1760
        %v2557 = vpack.c.b16 %v1769, %v1765
        %v2558 = vpack.c.b16 %v1770, %v1766
        %v2559 = vpack.c.b16 %v1771, %v1767
        %v2560 = vpack.c.b16 %v1772, %v1768
        %v2561 = vpack.c.b16 %v1777, %v1773
        %v2562 = vpack.c.b16 %v1778, %v1774
        %v2563 = vpack.c.b16 %v1779, %v1775
        %v2564 = vpack.c.b16 %v1780, %v1776
        %v2565 = vpack.c.b16 %v1785, %v1781
        %v2566 = vpack.c.b16 %v1786, %v1782
        %v2567 = vpack.c.b16 %v1787, %v1783
        %v2568 = vpack.c.b16 %v1788, %v1784
        %v2569 = vpack.c.b16 %v1793, %v1789
        %v2570 = vpack.c.b16 %v1794, %v1790
        %v2571 = vpack.c.b16 %v1795, %v1791
        %v2572 = vpack.c.b16 %v1796, %v1792
        %v2573 = vpack.c.b16 %v1801, %v1797
        %v2574 = vpack.c.b16 %v1802, %v1798
        %v2575 = vpack.c.b16 %v1803, %v1799
        %v2576 = vpack.c.b16 %v1804, %v1800
        %v2577 = vpack.c.b16 %v1809, %v1805
        %v2578 = vpack.c.b16 %v1810, %v1806
        %v2579 = vpack.c.b16 %v1811, %v1807
        %v2580 = vpack.c.b16 %v1812, %v1808
        %v2581 = vpack.c.b16 %v1817, %v1813
        %v2582 = vpack.c.b16 %v1818, %v1814
        %v2583 = vpack.c.b16 %v1819, %v1815
        %v2584 = vpack.c.b16 %v1820, %v1816
        %v2585 = vpack.c.b16 %v1825, %v1821
        %v2586 = vpack.c.b16 %v1826, %v1822
        %v2587 = vpack.c.b16 %v1827, %v1823
        %v2588 = vpack.c.b16 %v1828, %v1824
        %v2589 = vpack.c.b16 %v1833, %v1829
        %v2590 = vpack.c.b16 %v1834, %v1830
        %v2591 = vpack.c.b16 %v1835, %v1831
        %v2592 = vpack.c.b16 %v1836, %v1832
        %v2593 = vpack.c.b16 %v1841, %v1837
        %v2594 = vpack.c.b16 %v1842, %v1838
        %v2595 = vpack.c.b16 %v1843, %v1839
        %v2596 = vpack.c.b16 %v1844, %v1840
        %v2597 = vpack.c.b16 %v1849, %v1845
        %v2598 = vpack.c.b16 %v1850, %v1846
        %v2599 = vpack.c.b16 %v1851, %v1847
        %v2600 = vpack.c.b16 %v1852, %v1848
        %v2601 = vpack.c.b16 %v1857, %v1853
        %v2602 = vpack.c.b16 %v1858, %v1854
        %v2603 = vpack.c.b16 %v1859, %v1855
        %v2604 = vpack.c.b16 %v1860, %v1856
        %v2605 = vpack.c.b16 %v1865, %v1861
        %v2606 = vpack.c.b16 %v1866, %v1862
        %v2607 = vpack.c.b16 %v1867, %v1863
        %v2608 = vpack.c.b16 %v1868, %v1864
        %v2609 = vpack.c.b16 %v1873, %v1869
        %v2610 = vpack.c.b16 %v1874, %v1870
        %v2611 = vpack.c.b16 %v1875, %v1871
        %v2612 = vpack.c.b16 %v1876, %v1872
        %v2613 = vpack.c.b16 %v1881, %v1877
        %v2614 = vpack.c.b16 %v1882, %v1878
        %v2615 = vpack.c.b16 %v1883, %v1879
        %v2616 = vpack.c.b16 %v1884, %v1880
        %v2617 = vpack.c.b16 %v1889, %v1885
        %v2618 = vpack.c.b16 %v1890, %v1886
        %v2619 = vpack.c.b16 %v1891, %v1887
        %v2620 = vpack.c.b16 %v1892, %v1888
        %v2621 = vpack.c.b16 %v1897, %v1893
        %v2622 = vpack.c.b16 %v1898, %v1894
        %v2623 = vpack.c.b16 %v1899, %v1895
        %v2624 = vpack.c.b16 %v1900, %v1896
        %v2625 = vpack.c.b16 %v1905, %v1901
        %v2626 = vpack.c.b16 %v1906, %v1902
        %v2627 = vpack.c.b16 %v1907, %v1903
        %v2628 = vpack.c.b16 %v1908, %v1904
        %v2629 = vpack.c.b16 %v1913, %v1909
        %v2630 = vpack.c.b16 %v1914, %v1910
        %v2631 = vpack.c.b16 %v1915, %v1911
        %v2632 = vpack.c.b16 %v1916, %v1912
        %v2633 = vpack.c.b16 %v1921, %v1917
        %v2634 = vpack.c.b16 %v1922, %v1918
        %v2635 = vpack.c.b16 %v1923, %v1919
        %v2636 = vpack.c.b16 %v1924, %v1920
        %v2637 = vpack.c.b16 %v1929, %v1925
        %v2638 = vpack.c.b16 %v1930, %v1926
        %v2639 = vpack.c.b16 %v1931, %v1927
        %v2640 = vpack.c.b16 %v1932, %v1928
        %v2641 = vpack.c.b16 %v1937, %v1933
        %v2642 = vpack.c.b16 %v1938, %v1934
        %v2643 = vpack.c.b16 %v1939, %v1935
        %v2644 = vpack.c.b16 %v1940, %v1936
        %v2645 = vpack.c.b16 %v1945, %v1941
        %v2646 = vpack.c.b16 %v1946, %v1942
        %v2647 = vpack.c.b16 %v1947, %v1943
        %v2648 = vpack.c.b16 %v1948, %v1944
        %v2649 = vpack.c.b16 %v1953, %v1949
        %v2650 = vpack.c.b16 %v1954, %v1950
        %v2651 = vpack.c.b16 %v1955, %v1951
        %v2652 = vpack.c.b16 %v1956, %v1952
        %v2653 = vpack.c.b16 %v1961, %v1957
        %v2654 = vpack.c.b16 %v1962, %v1958
        %v2655 = vpack.c.b16 %v1963, %v1959
        %v2656 = vpack.c.b16 %v1964, %v1960
        %v2657 = vpack.c.b16 %v1969, %v1965
        %v2658 = vpack.c.b16 %v1970, %v1966
        %v2659 = vpack.c.b16 %v1971, %v1967
        %v2660 = vpack.c.b16 %v1972, %v1968
        %v2661 = vpack.c.b16 %v1977, %v1973
        %v2662 = vpack.c.b16 %v1978, %v1974
        %v2663 = vpack.c.b16 %v1979, %v1975
        %v2664 = vpack.c.b16 %v1980, %v1976
        %v2665 = vpack.c.b16 %v1985, %v1981
        %v2666 = vpack.c.b16 %v1986, %v1982
        %v2667 = vpack.c.b16 %v1987, %v1983
        %v2668 = vpack.c.b16 %v1988, %v1984
        %v2669 = vpack.c.b16 %v1993, %v1989
        %v2670 = vpack.c.b16 %v1994, %v1990
        %v2671 = vpack.c.b16 %v1995, %v1991
        %v2672 = vpack.c.b16 %v1996, %v1992
        %v2673 = vpack.c.b16 %v2001, %v1997
        %v2674 = vpack.c.b16 %v2002, %v1998
        %v2675 = vpack.c.b16 %v2003, %v1999
        %v2676 = vpack.c.b16 %v2004, %v2000
        %v2677 = vpack.c.b16 %v2009, %v2005
        %v2678 = vpack.c.b16 %v2010, %v2006
        %v2679 = vpack.c.b16 %v2011, %v2007
        %v2680 = vpack.c.b16 %v2012, %v2008
        %v2681 = vpack.c.b16 %v2017, %v2013
        %v2682 = vpack.c.b16 %v2018, %v2014
        %v2683 = vpack.c.b16 %v2019, %v2015
        %v2684 = vpack.c.b16 %v2020, %v2016
        %v2685 = vpack.c.b16 %v2025, %v2021
        %v2686 = vpack.c.b16 %v2026, %v2022
        %v2687 = vpack.c.b16 %v2027, %v2023
        %v2688 = vpack.c.b16 %v2028, %v2024
        %v2689 = vpack.c.b16 %v2033, %v2029
        %v2690 = vpack.c.b16 %v2034, %v2030
        %v2691 = vpack.c.b16 %v2035, %v2031
        %v2692 = vpack.c.b16 %v2036, %v2032
        %v2693 = vpack.c.b16 %v2041, %v2037
        %v2694 = vpack.c.b16 %v2042, %v2038
        %v2695 = vpack.c.b16 %v2043, %v2039
        %v2696 = vpack.c.b16 %v2044, %v2040
        %v2697 = vpack.c.b16 %v2049, %v2045
        %v2698 = vpack.c.b16 %v2050, %v2046
        %v2699 = vpack.c.b16 %v2051, %v2047
        %v2700 = vpack.c.b16 %v2052, %v2048
        %v2701 = vpack.c.b16 %v2057, %v2053
        %v2702 = vpack.c.b16 %v2058, %v2054
        %v2703 = vpack.c.b16 %v2059, %v2055
        %v2704 = vpack.c.b16 %v2060, %v2056
        %v2705 = vpack.c.b16 %v2065, %v2061
        %v2706 = vpack.c.b16 %v2066, %v2062
        %v2707 = vpack.c.b16 %v2067, %v2063
        %v2708 = vpack.c.b16 %v2068, %v2064
        %v2709 = vpack.c.b16 %v2073, %v2069
        %v2710 = vpack.c.b16 %v2074, %v2070
        %v2711 = vpack.c.b16 %v2075, %v2071
        %v2712 = vpack.c.b16 %v2076, %v2072
        %v2713 = vpack.c.b16 %v2081, %v2077
        %v2714 = vpack.c.b16 %v2082, %v2078
        %v2715 = vpack.c.b16 %v2083, %v2079
        %v2716 = vpack.c.b16 %v2084, %v2080
        %v2717 = vpack.c.b16 %v2089, %v2085
        %v2718 = vpack.c.b16 %v2090, %v2086
        %v2719 = vpack.c.b16 %v2091, %v2087
        %v2720 = vpack.c.b16 %v2092, %v2088
        %v2721 = vpack.c.b16 %v2097, %v2093
        %v2722 = vpack.c.b16 %v2098, %v2094
        %v2723 = vpack.c.b16 %v2099, %v2095
        %v2724 = vpack.c.b16 %v2100, %v2096
        %v2725 = vpack.c.b16 %v2105, %v2101
        %v2726 = vpack.c.b16 %v2106, %v2102
        %v2727 = vpack.c.b16 %v2107, %v2103
        %v2728 = vpack.c.b16 %v2108, %v2104
        %v2729 = vpack.c.b16 %v2113, %v2109
        %v2730 = vpack.c.b16 %v2114, %v2110
        %v2731 = vpack.c.b16 %v2115, %v2111
        %v2732 = vpack.c.b16 %v2116, %v2112
        %v2733 = vpack.c.b16 %v2121, %v2117
        %v2734 = vpack.c.b16 %v2122, %v2118
        %v2735 = vpack.c.b16 %v2123, %v2119
        %v2736 = vpack.c.b16 %v2124, %v2120
        %v2737 = vpack.c.b16 %v2129, %v2125
        %v2738 = vpack.c.b16 %v2130, %v2126
        %v2739 = vpack.c.b16 %v2131, %v2127
        %v2740 = vpack.c.b16 %v2132, %v2128
        %v2741 = vpack.c.b16 %v2137, %v2133
        %v2742 = vpack.c.b16 %v2138, %v2134
        %v2743 = vpack.c.b16 %v2139, %v2135
        %v2744 = vpack.c.b16 %v2140, %v2136
        %v2745 = vpack.c.b16 %v2145, %v2141
        %v2746 = vpack.c.b16 %v2146, %v2142
        %v2747 = vpack.c.b16 %v2147, %v2143
        %v2748 = vpack.c.b16 %v2148, %v2144
        %v2749 = vpack.c.b16 %v2153, %v2149
        %v2750 = vpack.c.b16 %v2154, %v2150
        %v2751 = vpack.c.b16 %v2155, %v2151
        %v2752 = vpack.c.b16 %v2156, %v2152
        %v2753 = vpack.c.b16 %v2161, %v2157
        %v2754 = vpack.c.b16 %v2162, %v2158
        %v2755 = vpack.c.b16 %v2163, %v2159
        %v2756 = vpack.c.b16 %v2164, %v2160
        %v2757 = vpack.c.b16 %v2169, %v2165
        %v2758 = vpack.c.b16 %v2170, %v2166
        %v2759 = vpack.c.b16 %v2171, %v2167
        %v2760 = vpack.c.b16 %v2172, %v2168
        %v2761 = vpack.c.b16 %v2177, %v2173
        %v2762 = vpack.c.b16 %v2178, %v2174
        %v2763 = vpack.c.b16 %v2179, %v2175
        %v2764 = vpack.c.b16 %v2180, %v2176
        %v2765 = vpack.c.b16 %v2185, %v2181
        %v2766 = vpack.c.b16 %v2186, %v2182
        %v2767 = vpack.c.b16 %v2187, %v2183
        %v2768 = vpack.c.b16 %v2188, %v2184
        %v2769 = vpack.c.b16 %v2193, %v2189
        %v2770 = vpack.c.b16 %v2194, %v2190
        %v2771 = vpack.c.b16 %v2195, %v2191
        %v2772 = vpack.c.b16 %v2196, %v2192
        %v2773 = vpack.c.b16 %v2201, %v2197
        %v2774 = vpack.c.b16 %v2202, %v2198
        %v2775 = vpack.c.b16 %v2203, %v2199
        %v2776 = vpack.c.b16 %v2204, %v2200
        %v2777 = vpack.c.b16 %v2209, %v2205
        %v2778 = vpack.c.b16 %v2210, %v2206
        %v2779 = vpack.c.b16 %v2211, %v2207
        %v2780 = vpack.c.b16 %v2212, %v2208
        %v2781 = vpack.c.b16 %v2217, %v2213
        %v2782 = vpack.c.b16 %v2218, %v2214
        %v2783 = vpack.c.b16 %v2219, %v2215
        %v2784 = vpack.c.b16 %v2220, %v2216
        %v2785 = vpack.c.b16 %v2225, %v2221
        %v2786 = vpack.c.b16 %v2226, %v2222
        %v2787 = vpack.c.b16 %v2227, %v2223
        %v2788 = vpack.c.b16 %v2228, %v2224
        %v2789 = vpack.c.b16 %v2233, %v2229
        %v2790 = vpack.c.b16 %v2234, %v2230
        %v2791 = vpack.c.b16 %v2235, %v2231
        %v2792 = vpack.c.b16 %v2236, %v2232
        %v2793 = vpack.c.b16 %v2241, %v2237
        %v2794 = vpack.c.b16 %v2242, %v2238
        %v2795 = vpack.c.b16 %v2243, %v2239
        %v2796 = vpack.c.b16 %v2244, %v2240
        %v2797 = vpack.c.b16 %v2249, %v2245
        %v2798 = vpack.c.b16 %v2250, %v2246
        %v2799 = vpack.c.b16 %v2251, %v2247
        %v2800 = vpack.c.b16 %v2252, %v2248
        %v2801 = vpack.c.b16 %v2257, %v2253
        %v2802 = vpack.c.b16 %v2258, %v2254
        %v2803 = vpack.c.b16 %v2259, %v2255
        %v2804 = vpack.c.b16 %v2260, %v2256
        %v2805 = vpack.c.b16 %v2265, %v2261
        %v2806 = vpack.c.b16 %v2266, %v2262
        %v2807 = vpack.c.b16 %v2267, %v2263
        %v2808 = vpack.c.b16 %v2268, %v2264
        %v2809 = vpack.c.b16 %v2273, %v2269
        %v2810 = vpack.c.b16 %v2274, %v2270
        %v2811 = vpack.c.b16 %v2275, %v2271
        %v2812 = vpack.c.b16 %v2276, %v2272
        %v2813 = vpack.c.b16 %v2281, %v2277
        %v2814 = vpack.c.b16 %v2282, %v2278
        %v2815 = vpack.c.b16 %v2283, %v2279
        %v2816 = vpack.c.b16 %v2284, %v2280
        %v2817 = vpack.c.b16 %v2289, %v2285
        %v2818 = vpack.c.b16 %v2290, %v2286
        %v2819 = vpack.c.b16 %v2291, %v2287
        %v2820 = vpack.c.b16 %v2292, %v2288
        %v2821 = vpack.c.b16 %v2297, %v2293
        %v2822 = vpack.c.b16 %v2298, %v2294
        %v2823 = vpack.c.b16 %v2299, %v2295
        %v2824 = vpack.c.b16 %v2300, %v2296
        %v2825 = vpack.c.b16 %v2305, %v2301
        %v2826 = vpack.c.b16 %v2306, %v2302
        %v2827 = vpack.c.b16 %v2307, %v2303
        %v2828 = vpack.c.b16 %v2308, %v2304
        %v2829 = vpack.c.b16 %v2313, %v2309
        %v2830 = vpack.c.b16 %v2314, %v2310
        %v2831 = vpack.c.b16 %v2315, %v2311
        %v2832 = vpack.c.b16 %v2316, %v2312
        %v2833 = vpack.c.b16 %v2321, %v2317
        %v2834 = vpack.c.b16 %v2322, %v2318
        %v2835 = vpack.c.b16 %v2323, %v2319
        %v2836 = vpack.c.b16 %v2324, %v2320
        %3349 = vmatprep.subr.bf16.mxu0 %v2326
        %3350 = vmatpush1.bf16.msra.mxu0 %v2325
        %3351 = vmatprep.subr.bf16.mxu0 %v2330
        %3352 = vmatpush1.bf16.msra.mxu0 %v2329
        %3353 = vmatprep.subr.bf16.mxu0 %v2334
        %3354 = vmatpush1.bf16.msra.mxu0 %v2333
        %3355 = vmatprep.subr.bf16.mxu0 %v2338
        %3356 = vmatpush1.bf16.msra.mxu0 %v2337
        %3357 = vmatprep.subr.bf16.mxu0 %v2342
        %3358 = vmatpush1.bf16.msra.mxu0 %v2341
        %3359 = vmatprep.subr.bf16.mxu0 %v2346
        %3360 = vmatpush1.bf16.msra.mxu0 %v2345
        %3361 = vmatprep.subr.bf16.mxu0 %v2350
        %3362 = vmatpush1.bf16.msra.mxu0 %v2349
        %3363 = vmatprep.subr.bf16.mxu0 %v2354
        %3364 = vmatpush1.bf16.msra.mxu0 %v2353
        %3365 = vmatprep.subr.bf16.mxu0 %v2358
        %3366 = vmatpush1.bf16.msra.mxu0 %v2357
        %3367 = vmatprep.subr.bf16.mxu0 %v2362
        %3368 = vmatpush1.bf16.msra.mxu0 %v2361
        %3369 = vmatprep.subr.bf16.mxu0 %v2366
        %3370 = vmatpush1.bf16.msra.mxu0 %v2365
        %3371 = vmatprep.subr.bf16.mxu0 %v2370
        %3372 = vmatpush1.bf16.msra.mxu0 %v2369
        %3373 = vmatprep.subr.bf16.mxu0 %v2374
        %3374 = vmatpush1.bf16.msra.mxu0 %v2373
        %3375 = vmatprep.subr.bf16.mxu0 %v2378
        %3376 = vmatpush1.bf16.msra.mxu0 %v2377
        %3377 = vmatprep.subr.bf16.mxu0 %v2382
        %3378 = vmatpush1.bf16.msra.mxu0 %v2381
        %3379 = vmatprep.subr.bf16.mxu0 %v2386
        %3380 = vmatpush1.bf16.msra.mxu0 %v2385
        %3381 = vmatprep.mubr.bf16.mxu0 %v758
        %3382 = vmatmul.mubr.bf16.gmra.mrb[0].mxu0 %v757
        %v3383 = vpop.f32.mrb[0].mxu0
        %v3384 = vadd.f32 0.0, %v3383
        %v3385 = vpop.f32.mrb[0].mxu0
        %v3386 = vadd.f32 0.0, %v3385
        %v3387 = vpop.f32.mrb[0].mxu0
        %v3388 = vpop.f32.mrb[0].mxu0
        %3389 = vdwg.mxu0
        %3390 = vmatprep.subr.bf16.mxu0 %v2390
        %3391 = vmatpush1.bf16.msra.mxu0 %v2389
        %3392 = vmatprep.subr.bf16.mxu0 %v2394
        %3393 = vmatpush1.bf16.msra.mxu0 %v2393
        %3394 = vmatprep.subr.bf16.mxu0 %v2398
        %3395 = vmatpush1.bf16.msra.mxu0 %v2397
        %3396 = vmatprep.subr.bf16.mxu0 %v2402
        %3397 = vmatpush1.bf16.msra.mxu0 %v2401
        %3398 = vmatprep.subr.bf16.mxu0 %v2406
        %3399 = vmatpush1.bf16.msra.mxu0 %v2405
        %3400 = vmatprep.subr.bf16.mxu0 %v2410
        %3401 = vmatpush1.bf16.msra.mxu0 %v2409
        %3402 = vmatprep.subr.bf16.mxu0 %v2414
        %3403 = vmatpush1.bf16.msra.mxu0 %v2413
        %3404 = vmatprep.subr.bf16.mxu0 %v2418
        %3405 = vmatpush1.bf16.msra.mxu0 %v2417
        %3406 = vmatprep.subr.bf16.mxu0 %v2422
        %3407 = vmatpush1.bf16.msra.mxu0 %v2421
        %3408 = vmatprep.subr.bf16.mxu0 %v2426
        %3409 = vmatpush1.bf16.msra.mxu0 %v2425
        %3410 = vmatprep.subr.bf16.mxu0 %v2430
        %3411 = vmatpush1.bf16.msra.mxu0 %v2429
        %3412 = vmatprep.subr.bf16.mxu0 %v2434
        %3413 = vmatpush1.bf16.msra.mxu0 %v2433
        %3414 = vmatprep.subr.bf16.mxu0 %v2438
        %3415 = vmatpush1.bf16.msra.mxu0 %v2437
        %3416 = vmatprep.subr.bf16.mxu0 %v2442
        %3417 = vmatpush1.bf16.msra.mxu0 %v2441
        %3418 = vmatprep.subr.bf16.mxu0 %v2446
        %3419 = vmatpush1.bf16.msra.mxu0 %v2445
        %3420 = vmatprep.subr.bf16.mxu0 %v2450
        %3421 = vmatpush1.bf16.msra.mxu0 %v2449
        %3422 = vmatprep.mubr.bf16.mxu0 %v760
        %3423 = vmatmul.mubr.bf16.gmra.mrb[0].mxu0 %v759
        %v3424 = vpop.f32.mrb[0].mxu0
        %v3425 = vadd.f32 %v3384, %v3424
        %v3426 = vpop.f32.mrb[0].mxu0
        %v3427 = vadd.f32 %v3386, %v3426
        %v3428 = vpop.f32.mrb[0].mxu0
        %v3429 = vpop.f32.mrb[0].mxu0
        %3430 = vdwg.mxu0
        %3431 = vmatprep.subr.bf16.mxu0 %v2454
        %3432 = vmatpush1.bf16.msra.mxu0 %v2453
        %3433 = vmatprep.subr.bf16.mxu0 %v2458
        %3434 = vmatpush1.bf16.msra.mxu0 %v2457
        %3435 = vmatprep.subr.bf16.mxu0 %v2462
        %3436 = vmatpush1.bf16.msra.mxu0 %v2461
        %3437 = vmatprep.subr.bf16.mxu0 %v2466
        %3438 = vmatpush1.bf16.msra.mxu0 %v2465
        %3439 = vmatprep.subr.bf16.mxu0 %v2470
        %3440 = vmatpush1.bf16.msra.mxu0 %v2469
        %3441 = vmatprep.subr.bf16.mxu0 %v2474
        %3442 = vmatpush1.bf16.msra.mxu0 %v2473
        %3443 = vmatprep.subr.bf16.mxu0 %v2478
        %3444 = vmatpush1.bf16.msra.mxu0 %v2477
        %3445 = vmatprep.subr.bf16.mxu0 %v2482
        %3446 = vmatpush1.bf16.msra.mxu0 %v2481
        %3447 = vmatprep.subr.bf16.mxu0 %v2486
        %3448 = vmatpush1.bf16.msra.mxu0 %v2485
        %3449 = vmatprep.subr.bf16.mxu0 %v2490
        %3450 = vmatpush1.bf16.msra.mxu0 %v2489
        %3451 = vmatprep.subr.bf16.mxu0 %v2494
        %3452 = vmatpush1.bf16.msra.mxu0 %v2493
        %3453 = vmatprep.subr.bf16.mxu0 %v2498
        %3454 = vmatpush1.bf16.msra.mxu0 %v2497
        %3455 = vmatprep.subr.bf16.mxu0 %v2502
        %3456 = vmatpush1.bf16.msra.mxu0 %v2501
        %3457 = vmatprep.subr.bf16.mxu0 %v2506
        %3458 = vmatpush1.bf16.msra.mxu0 %v2505
        %3459 = vmatprep.subr.bf16.mxu0 %v2510
        %3460 = vmatpush1.bf16.msra.mxu0 %v2509
        %3461 = vmatprep.subr.bf16.mxu0 %v2514
        %3462 = vmatpush1.bf16.msra.mxu0 %v2513
        %3463 = vmatprep.mubr.bf16.mxu0 %v762
        %3464 = vmatmul.mubr.bf16.gmra.mrb[0].mxu0 %v761
        %v3465 = vpop.f32.mrb[0].mxu0
        %v3466 = vadd.f32 %v3425, %v3465
        %v3467 = vpop.f32.mrb[0].mxu0
        %v3468 = vadd.f32 %v3427, %v3467
        %v3469 = vpop.f32.mrb[0].mxu0
        %v3470 = vpop.f32.mrb[0].mxu0
        %3471 = vdwg.mxu0
        %3472 = vmatprep.subr.bf16.mxu0 %v2518
        %3473 = vmatpush1.bf16.msra.mxu0 %v2517
        %3474 = vmatprep.subr.bf16.mxu0 %v2522
        %3475 = vmatpush1.bf16.msra.mxu0 %v2521
        %3476 = vmatprep.subr.bf16.mxu0 %v2526
        %3477 = vmatpush1.bf16.msra.mxu0 %v2525
        %3478 = vmatprep.subr.bf16.mxu0 %v2530
        %3479 = vmatpush1.bf16.msra.mxu0 %v2529
        %3480 = vmatprep.subr.bf16.mxu0 %v2534
        %3481 = vmatpush1.bf16.msra.mxu0 %v2533
        %3482 = vmatprep.subr.bf16.mxu0 %v2538
        %3483 = vmatpush1.bf16.msra.mxu0 %v2537
        %3484 = vmatprep.subr.bf16.mxu0 %v2542
        %3485 = vmatpush1.bf16.msra.mxu0 %v2541
        %3486 = vmatprep.subr.bf16.mxu0 %v2546
        %3487 = vmatpush1.bf16.msra.mxu0 %v2545
        %3488 = vmatprep.subr.bf16.mxu0 %v2550
        %3489 = vmatpush1.bf16.msra.mxu0 %v2549
        %3490 = vmatprep.subr.bf16.mxu0 %v2554
        %3491 = vmatpush1.bf16.msra.mxu0 %v2553
        %3492 = vmatprep.subr.bf16.mxu0 %v2558
        %3493 = vmatpush1.bf16.msra.mxu0 %v2557
        %3494 = vmatprep.subr.bf16.mxu0 %v2562
        %3495 = vmatpush1.bf16.msra.mxu0 %v2561
        %3496 = vmatprep.subr.bf16.mxu0 %v2566
        %3497 = vmatpush1.bf16.msra.mxu0 %v2565
        %3498 = vmatprep.subr.bf16.mxu0 %v2570
        %3499 = vmatpush1.bf16.msra.mxu0 %v2569
        %3500 = vmatprep.subr.bf16.mxu0 %v2574
        %3501 = vmatpush1.bf16.msra.mxu0 %v2573
        %3502 = vmatprep.subr.bf16.mxu0 %v2578
        %3503 = vmatpush1.bf16.msra.mxu0 %v2577
        %3504 = vmatprep.mubr.bf16.mxu0 %v764
        %3505 = vmatmul.mubr.bf16.gmra.mrb[0].mxu0 %v763
        %v3506 = vpop.f32.mrb[0].mxu0
        %v3507 = vadd.f32 %v3466, %v3506
        %v3508 = vpop.f32.mrb[0].mxu0
        %v3509 = vadd.f32 %v3468, %v3508
        %v3510 = vpop.f32.mrb[0].mxu0
        %v3511 = vpop.f32.mrb[0].mxu0
        %3512 = vdwg.mxu0
        %3513 = vmatprep.subr.bf16.mxu0 %v2582
        %3514 = vmatpush1.bf16.msra.mxu0 %v2581
        %3515 = vmatprep.subr.bf16.mxu0 %v2586
        %3516 = vmatpush1.bf16.msra.mxu0 %v2585
        %3517 = vmatprep.subr.bf16.mxu0 %v2590
        %3518 = vmatpush1.bf16.msra.mxu0 %v2589
        %3519 = vmatprep.subr.bf16.mxu0 %v2594
        %3520 = vmatpush1.bf16.msra.mxu0 %v2593
        %3521 = vmatprep.subr.bf16.mxu0 %v2598
        %3522 = vmatpush1.bf16.msra.mxu0 %v2597
        %3523 = vmatprep.subr.bf16.mxu0 %v2602
        %3524 = vmatpush1.bf16.msra.mxu0 %v2601
        %3525 = vmatprep.subr.bf16.mxu0 %v2606
        %3526 = vmatpush1.bf16.msra.mxu0 %v2605
        %3527 = vmatprep.subr.bf16.mxu0 %v2610
        %3528 = vmatpush1.bf16.msra.mxu0 %v2609
        %3529 = vmatprep.subr.bf16.mxu0 %v2614
        %3530 = vmatpush1.bf16.msra.mxu0 %v2613
        %3531 = vmatprep.subr.bf16.mxu0 %v2618
        %3532 = vmatpush1.bf16.msra.mxu0 %v2617
        %3533 = vmatprep.subr.bf16.mxu0 %v2622
        %3534 = vmatpush1.bf16.msra.mxu0 %v2621
        %3535 = vmatprep.subr.bf16.mxu0 %v2626
        %3536 = vmatpush1.bf16.msra.mxu0 %v2625
        %3537 = vmatprep.subr.bf16.mxu0 %v2630
        %3538 = vmatpush1.bf16.msra.mxu0 %v2629
        %3539 = vmatprep.subr.bf16.mxu0 %v2634
        %3540 = vmatpush1.bf16.msra.mxu0 %v2633
        %3541 = vmatprep.subr.bf16.mxu0 %v2638
        %3542 = vmatpush1.bf16.msra.mxu0 %v2637
        %3543 = vmatprep.subr.bf16.mxu0 %v2642
        %3544 = vmatpush1.bf16.msra.mxu0 %v2641
        %3545 = vmatprep.mubr.bf16.mxu0 %v766
        %3546 = vmatmul.mubr.bf16.gmra.mrb[0].mxu0 %v765
        %v3547 = vpop.f32.mrb[0].mxu0
        %v3548 = vadd.f32 %v3507, %v3547
        %v3549 = vpop.f32.mrb[0].mxu0
        %v3550 = vadd.f32 %v3509, %v3549
        %v3551 = vpop.f32.mrb[0].mxu0
        %v3552 = vpop.f32.mrb[0].mxu0
        %3553 = vdwg.mxu0
        %3554 = vmatprep.subr.bf16.mxu0 %v2646
        %3555 = vmatpush1.bf16.msra.mxu0 %v2645
        %3556 = vmatprep.subr.bf16.mxu0 %v2650
        %3557 = vmatpush1.bf16.msra.mxu0 %v2649
        %3558 = vmatprep.subr.bf16.mxu0 %v2654
        %3559 = vmatpush1.bf16.msra.mxu0 %v2653
        %3560 = vmatprep.subr.bf16.mxu0 %v2658
        %3561 = vmatpush1.bf16.msra.mxu0 %v2657
        %3562 = vmatprep.subr.bf16.mxu0 %v2662
        %3563 = vmatpush1.bf16.msra.mxu0 %v2661
        %3564 = vmatprep.subr.bf16.mxu0 %v2666
        %3565 = vmatpush1.bf16.msra.mxu0 %v2665
        %3566 = vmatprep.subr.bf16.mxu0 %v2670
        %3567 = vmatpush1.bf16.msra.mxu0 %v2669
        %3568 = vmatprep.subr.bf16.mxu0 %v2674
        %3569 = vmatpush1.bf16.msra.mxu0 %v2673
        %3570 = vmatprep.subr.bf16.mxu0 %v2678
        %3571 = vmatpush1.bf16.msra.mxu0 %v2677
        %3572 = vmatprep.subr.bf16.mxu0 %v2682
        %3573 = vmatpush1.bf16.msra.mxu0 %v2681
        %3574 = vmatprep.subr.bf16.mxu0 %v2686
        %3575 = vmatpush1.bf16.msra.mxu0 %v2685
        %3576 = vmatprep.subr.bf16.mxu0 %v2690
        %3577 = vmatpush1.bf16.msra.mxu0 %v2689
        %3578 = vmatprep.subr.bf16.mxu0 %v2694
        %3579 = vmatpush1.bf16.msra.mxu0 %v2693
        %3580 = vmatprep.subr.bf16.mxu0 %v2698
        %3581 = vmatpush1.bf16.msra.mxu0 %v2697
        %3582 = vmatprep.subr.bf16.mxu0 %v2702
        %3583 = vmatpush1.bf16.msra.mxu0 %v2701
        %3584 = vmatprep.subr.bf16.mxu0 %v2706
        %3585 = vmatpush1.bf16.msra.mxu0 %v2705
        %3586 = vmatprep.mubr.bf16.mxu0 %v768
        %3587 = vmatmul.mubr.bf16.gmra.mrb[0].mxu0 %v767
        %v3588 = vpop.f32.mrb[0].mxu0
        %v3589 = vadd.f32 %v3548, %v3588
        %v3590 = vpop.f32.mrb[0].mxu0
        %v3591 = vadd.f32 %v3550, %v3590
        %v3592 = vpop.f32.mrb[0].mxu0
        %v3593 = vpop.f32.mrb[0].mxu0
        %3594 = vdwg.mxu0
        %3595 = vmatprep.subr.bf16.mxu0 %v2710
        %3596 = vmatpush1.bf16.msra.mxu0 %v2709
        %3597 = vmatprep.subr.bf16.mxu0 %v2714
        %3598 = vmatpush1.bf16.msra.mxu0 %v2713
        %3599 = vmatprep.subr.bf16.mxu0 %v2718
        %3600 = vmatpush1.bf16.msra.mxu0 %v2717
        %3601 = vmatprep.subr.bf16.mxu0 %v2722
        %3602 = vmatpush1.bf16.msra.mxu0 %v2721
        %3603 = vmatprep.subr.bf16.mxu0 %v2726
        %3604 = vmatpush1.bf16.msra.mxu0 %v2725
        %3605 = vmatprep.subr.bf16.mxu0 %v2730
        %3606 = vmatpush1.bf16.msra.mxu0 %v2729
        %3607 = vmatprep.subr.bf16.mxu0 %v2734
        %3608 = vmatpush1.bf16.msra.mxu0 %v2733
        %3609 = vmatprep.subr.bf16.mxu0 %v2738
        %3610 = vmatpush1.bf16.msra.mxu0 %v2737
        %3611 = vmatprep.subr.bf16.mxu0 %v2742
        %3612 = vmatpush1.bf16.msra.mxu0 %v2741
        %3613 = vmatprep.subr.bf16.mxu0 %v2746
        %3614 = vmatpush1.bf16.msra.mxu0 %v2745
        %3615 = vmatprep.subr.bf16.mxu0 %v2750
        %3616 = vmatpush1.bf16.msra.mxu0 %v2749
        %3617 = vmatprep.subr.bf16.mxu0 %v2754
        %3618 = vmatpush1.bf16.msra.mxu0 %v2753
        %3619 = vmatprep.subr.bf16.mxu0 %v2758
        %3620 = vmatpush1.bf16.msra.mxu0 %v2757
        %3621 = vmatprep.subr.bf16.mxu0 %v2762
        %3622 = vmatpush1.bf16.msra.mxu0 %v2761
        %3623 = vmatprep.subr.bf16.mxu0 %v2766
        %3624 = vmatpush1.bf16.msra.mxu0 %v2765
        %3625 = vmatprep.subr.bf16.mxu0 %v2770
        %3626 = vmatpush1.bf16.msra.mxu0 %v2769
        %3627 = vmatprep.mubr.bf16.mxu0 %v770
        %3628 = vmatmul.mubr.bf16.gmra.mrb[0].mxu0 %v769
        %v3629 = vpop.f32.mrb[0].mxu0
        %v3630 = vadd.f32 %v3589, %v3629
        %v3631 = vpop.f32.mrb[0].mxu0
        %v3632 = vadd.f32 %v3591, %v3631
        %v3633 = vpop.f32.mrb[0].mxu0
        %v3634 = vpop.f32.mrb[0].mxu0
        %3635 = vdwg.mxu0
        %3636 = vmatprep.subr.bf16.mxu0 %v2774
        %3637 = vmatpush1.bf16.msra.mxu0 %v2773
        %3638 = vmatprep.subr.bf16.mxu0 %v2778
        %3639 = vmatpush1.bf16.msra.mxu0 %v2777
        %3640 = vmatprep.subr.bf16.mxu0 %v2782
        %3641 = vmatpush1.bf16.msra.mxu0 %v2781
        %3642 = vmatprep.subr.bf16.mxu0 %v2786
        %3643 = vmatpush1.bf16.msra.mxu0 %v2785
        %3644 = vmatprep.subr.bf16.mxu0 %v2790
        %3645 = vmatpush1.bf16.msra.mxu0 %v2789
        %3646 = vmatprep.subr.bf16.mxu0 %v2794
        %3647 = vmatpush1.bf16.msra.mxu0 %v2793
        %3648 = vmatprep.subr.bf16.mxu0 %v2798
        %3649 = vmatpush1.bf16.msra.mxu0 %v2797
        %3650 = vmatprep.subr.bf16.mxu0 %v2802
        %3651 = vmatpush1.bf16.msra.mxu0 %v2801
        %3652 = vmatprep.subr.bf16.mxu0 %v2806
        %3653 = vmatpush1.bf16.msra.mxu0 %v2805
        %3654 = vmatprep.subr.bf16.mxu0 %v2810
        %3655 = vmatpush1.bf16.msra.mxu0 %v2809
        %3656 = vmatprep.subr.bf16.mxu0 %v2814
        %3657 = vmatpush1.bf16.msra.mxu0 %v2813
        %3658 = vmatprep.subr.bf16.mxu0 %v2818
        %3659 = vmatpush1.bf16.msra.mxu0 %v2817
        %3660 = vmatprep.subr.bf16.mxu0 %v2822
        %3661 = vmatpush1.bf16.msra.mxu0 %v2821
        %3662 = vmatprep.subr.bf16.mxu0 %v2826
        %3663 = vmatpush1.bf16.msra.mxu0 %v2825
        %3664 = vmatprep.subr.bf16.mxu0 %v2830
        %3665 = vmatpush1.bf16.msra.mxu0 %v2829
        %3666 = vmatprep.subr.bf16.mxu0 %v2834
        %3667 = vmatpush1.bf16.msra.mxu0 %v2833
        %3668 = vmatprep.mubr.bf16.mxu0 %v772
        %3669 = vmatmul.mubr.bf16.gmra.mrb[0].mxu0 %v771
        %v3670 = vpop.f32.mrb[0].mxu0
        %v3671 = vadd.f32 %v3630, %v3670
        %v3672 = vpop.f32.mrb[0].mxu0
        %v3673 = vadd.f32 %v3632, %v3672
        %v3674 = vpop.f32.mrb[0].mxu0
        %v3675 = vpop.f32.mrb[0].mxu0
        %3676 = vdwg.mxu0
        %3677 = vmatprep.subr.bf16.mxu0 %v2328
        %3678 = vmatpush1.bf16.msra.mxu0 %v2327
        %3679 = vmatprep.subr.bf16.mxu0 %v2332
        %3680 = vmatpush1.bf16.msra.mxu0 %v2331
        %3681 = vmatprep.subr.bf16.mxu0 %v2336
        %3682 = vmatpush1.bf16.msra.mxu0 %v2335
        %3683 = vmatprep.subr.bf16.mxu0 %v2340
        %3684 = vmatpush1.bf16.msra.mxu0 %v2339
        %3685 = vmatprep.subr.bf16.mxu0 %v2344
        %3686 = vmatpush1.bf16.msra.mxu0 %v2343
        %3687 = vmatprep.subr.bf16.mxu0 %v2348
        %3688 = vmatpush1.bf16.msra.mxu0 %v2347
        %3689 = vmatprep.subr.bf16.mxu0 %v2352
        %3690 = vmatpush1.bf16.msra.mxu0 %v2351
        %3691 = vmatprep.subr.bf16.mxu0 %v2356
        %3692 = vmatpush1.bf16.msra.mxu0 %v2355
        %3693 = vmatprep.subr.bf16.mxu0 %v2360
        %3694 = vmatpush1.bf16.msra.mxu0 %v2359
        %3695 = vmatprep.subr.bf16.mxu0 %v2364
        %3696 = vmatpush1.bf16.msra.mxu0 %v2363
        %3697 = vmatprep.subr.bf16.mxu0 %v2368
        %3698 = vmatpush1.bf16.msra.mxu0 %v2367
        %3699 = vmatprep.subr.bf16.mxu0 %v2372
        %3700 = vmatpush1.bf16.msra.mxu0 %v2371
        %3701 = vmatprep.subr.bf16.mxu0 %v2376
        %3702 = vmatpush1.bf16.msra.mxu0 %v2375
        %3703 = vmatprep.subr.bf16.mxu0 %v2380
        %3704 = vmatpush1.bf16.msra.mxu0 %v2379
        %3705 = vmatprep.subr.bf16.mxu0 %v2384
        %3706 = vmatpush1.bf16.msra.mxu0 %v2383
        %3707 = vmatprep.subr.bf16.mxu0 %v2388
        %3708 = vmatpush1.bf16.msra.mxu0 %v2387
        %3709 = vmatprep.mubr.bf16.mxu0 %v758
        %3710 = vmatmul.mubr.bf16.gmra.mrb[0].mxu0 %v757
        %v3711 = vpop.f32.mrb[0].mxu0
        %v3712 = vadd.f32 0.0, %v3711
        %v3713 = vpop.f32.mrb[0].mxu0
        %v3714 = vadd.f32 0.0, %v3713
        %v3715 = vpop.f32.mrb[0].mxu0
        %v3716 = vpop.f32.mrb[0].mxu0
        %3717 = vdwg.mxu0
        %3718 = vmatprep.subr.bf16.mxu0 %v2392
        %3719 = vmatpush1.bf16.msra.mxu0 %v2391
        %3720 = vmatprep.subr.bf16.mxu0 %v2396
        %3721 = vmatpush1.bf16.msra.mxu0 %v2395
        %3722 = vmatprep.subr.bf16.mxu0 %v2400
        %3723 = vmatpush1.bf16.msra.mxu0 %v2399
        %3724 = vmatprep.subr.bf16.mxu0 %v2404
        %3725 = vmatpush1.bf16.msra.mxu0 %v2403
        %3726 = vmatprep.subr.bf16.mxu0 %v2408
        %3727 = vmatpush1.bf16.msra.mxu0 %v2407
        %3728 = vmatprep.subr.bf16.mxu0 %v2412
        %3729 = vmatpush1.bf16.msra.mxu0 %v2411
        %3730 = vmatprep.subr.bf16.mxu0 %v2416
        %3731 = vmatpush1.bf16.msra.mxu0 %v2415
        %3732 = vmatprep.subr.bf16.mxu0 %v2420
        %3733 = vmatpush1.bf16.msra.mxu0 %v2419
        %3734 = vmatprep.subr.bf16.mxu0 %v2424
        %3735 = vmatpush1.bf16.msra.mxu0 %v2423
        %3736 = vmatprep.subr.bf16.mxu0 %v2428
        %3737 = vmatpush1.bf16.msra.mxu0 %v2427
        %3738 = vmatprep.subr.bf16.mxu0 %v2432
        %3739 = vmatpush1.bf16.msra.mxu0 %v2431
        %3740 = vmatprep.subr.bf16.mxu0 %v2436
        %3741 = vmatpush1.bf16.msra.mxu0 %v2435
        %3742 = vmatprep.subr.bf16.mxu0 %v2440
        %3743 = vmatpush1.bf16.msra.mxu0 %v2439
        %3744 = vmatprep.subr.bf16.mxu0 %v2444
        %3745 = vmatpush1.bf16.msra.mxu0 %v2443
        %3746 = vmatprep.subr.bf16.mxu0 %v2448
        %3747 = vmatpush1.bf16.msra.mxu0 %v2447
        %3748 = vmatprep.subr.bf16.mxu0 %v2452
        %3749 = vmatpush1.bf16.msra.mxu0 %v2451
        %3750 = vmatprep.mubr.bf16.mxu0 %v760
        %3751 = vmatmul.mubr.bf16.gmra.mrb[0].mxu0 %v759
        %v3752 = vpop.f32.mrb[0].mxu0
        %v3753 = vadd.f32 %v3712, %v3752
        %v3754 = vpop.f32.mrb[0].mxu0
        %v3755 = vadd.f32 %v3714, %v3754
        %v3756 = vpop.f32.mrb[0].mxu0
        %v3757 = vpop.f32.mrb[0].mxu0
        %3758 = vdwg.mxu0
        %3759 = vmatprep.subr.bf16.mxu0 %v2456
        %3760 = vmatpush1.bf16.msra.mxu0 %v2455
        %3761 = vmatprep.subr.bf16.mxu0 %v2460
        %3762 = vmatpush1.bf16.msra.mxu0 %v2459
        %3763 = vmatprep.subr.bf16.mxu0 %v2464
        %3764 = vmatpush1.bf16.msra.mxu0 %v2463
        %3765 = vmatprep.subr.bf16.mxu0 %v2468
        %3766 = vmatpush1.bf16.msra.mxu0 %v2467
        %3767 = vmatprep.subr.bf16.mxu0 %v2472
        %3768 = vmatpush1.bf16.msra.mxu0 %v2471
        %3769 = vmatprep.subr.bf16.mxu0 %v2476
        %3770 = vmatpush1.bf16.msra.mxu0 %v2475
        %3771 = vmatprep.subr.bf16.mxu0 %v2480
        %3772 = vmatpush1.bf16.msra.mxu0 %v2479
        %3773 = vmatprep.subr.bf16.mxu0 %v2484
        %3774 = vmatpush1.bf16.msra.mxu0 %v2483
        %3775 = vmatprep.subr.bf16.mxu0 %v2488
        %3776 = vmatpush1.bf16.msra.mxu0 %v2487
        %3777 = vmatprep.subr.bf16.mxu0 %v2492
        %3778 = vmatpush1.bf16.msra.mxu0 %v2491
        %3779 = vmatprep.subr.bf16.mxu0 %v2496
        %3780 = vmatpush1.bf16.msra.mxu0 %v2495
        %3781 = vmatprep.subr.bf16.mxu0 %v2500
        %3782 = vmatpush1.bf16.msra.mxu0 %v2499
        %3783 = vmatprep.subr.bf16.mxu0 %v2504
        %3784 = vmatpush1.bf16.msra.mxu0 %v2503
        %3785 = vmatprep.subr.bf16.mxu0 %v2508
        %3786 = vmatpush1.bf16.msra.mxu0 %v2507
        %3787 = vmatprep.subr.bf16.mxu0 %v2512
        %3788 = vmatpush1.bf16.msra.mxu0 %v2511
        %3789 = vmatprep.subr.bf16.mxu0 %v2516
        %3790 = vmatpush1.bf16.msra.mxu0 %v2515
        %3791 = vmatprep.mubr.bf16.mxu0 %v762
        %3792 = vmatmul.mubr.bf16.gmra.mrb[0].mxu0 %v761
        %v3793 = vpop.f32.mrb[0].mxu0
        %v3794 = vadd.f32 %v3753, %v3793
        %v3795 = vpop.f32.mrb[0].mxu0
        %v3796 = vadd.f32 %v3755, %v3795
        %v3797 = vpop.f32.mrb[0].mxu0
        %v3798 = vpop.f32.mrb[0].mxu0
        %3799 = vdwg.mxu0
        %3800 = vmatprep.subr.bf16.mxu0 %v2520
        %3801 = vmatpush1.bf16.msra.mxu0 %v2519
        %3802 = vmatprep.subr.bf16.mxu0 %v2524
        %3803 = vmatpush1.bf16.msra.mxu0 %v2523
        %3804 = vmatprep.subr.bf16.mxu0 %v2528
        %3805 = vmatpush1.bf16.msra.mxu0 %v2527
        %3806 = vmatprep.subr.bf16.mxu0 %v2532
        %3807 = vmatpush1.bf16.msra.mxu0 %v2531
        %3808 = vmatprep.subr.bf16.mxu0 %v2536
        %3809 = vmatpush1.bf16.msra.mxu0 %v2535
        %3810 = vmatprep.subr.bf16.mxu0 %v2540
        %3811 = vmatpush1.bf16.msra.mxu0 %v2539
        %3812 = vmatprep.subr.bf16.mxu0 %v2544
        %3813 = vmatpush1.bf16.msra.mxu0 %v2543
        %3814 = vmatprep.subr.bf16.mxu0 %v2548
        %3815 = vmatpush1.bf16.msra.mxu0 %v2547
        %3816 = vmatprep.subr.bf16.mxu0 %v2552
        %3817 = vmatpush1.bf16.msra.mxu0 %v2551
        %3818 = vmatprep.subr.bf16.mxu0 %v2556
        %3819 = vmatpush1.bf16.msra.mxu0 %v2555
        %3820 = vmatprep.subr.bf16.mxu0 %v2560
        %3821 = vmatpush1.bf16.msra.mxu0 %v2559
        %3822 = vmatprep.subr.bf16.mxu0 %v2564
        %3823 = vmatpush1.bf16.msra.mxu0 %v2563
        %3824 = vmatprep.subr.bf16.mxu0 %v2568
        %3825 = vmatpush1.bf16.msra.mxu0 %v2567
        %3826 = vmatprep.subr.bf16.mxu0 %v2572
        %3827 = vmatpush1.bf16.msra.mxu0 %v2571
        %3828 = vmatprep.subr.bf16.mxu0 %v2576
        %3829 = vmatpush1.bf16.msra.mxu0 %v2575
        %3830 = vmatprep.subr.bf16.mxu0 %v2580
        %3831 = vmatpush1.bf16.msra.mxu0 %v2579
        %3832 = vmatprep.mubr.bf16.mxu0 %v764
        %3833 = vmatmul.mubr.bf16.gmra.mrb[0].mxu0 %v763
        %v3834 = vpop.f32.mrb[0].mxu0
        %v3835 = vadd.f32 %v3794, %v3834
        %v3836 = vpop.f32.mrb[0].mxu0
        %v3837 = vadd.f32 %v3796, %v3836
        %v3838 = vpop.f32.mrb[0].mxu0
        %v3839 = vpop.f32.mrb[0].mxu0
        %3840 = vdwg.mxu0
        %3841 = vmatprep.subr.bf16.mxu0 %v2584
        %3842 = vmatpush1.bf16.msra.mxu0 %v2583
        %3843 = vmatprep.subr.bf16.mxu0 %v2588
        %3844 = vmatpush1.bf16.msra.mxu0 %v2587
        %3845 = vmatprep.subr.bf16.mxu0 %v2592
        %3846 = vmatpush1.bf16.msra.mxu0 %v2591
        %3847 = vmatprep.subr.bf16.mxu0 %v2596
        %3848 = vmatpush1.bf16.msra.mxu0 %v2595
        %3849 = vmatprep.subr.bf16.mxu0 %v2600
        %3850 = vmatpush1.bf16.msra.mxu0 %v2599
        %3851 = vmatprep.subr.bf16.mxu0 %v2604
        %3852 = vmatpush1.bf16.msra.mxu0 %v2603
        %3853 = vmatprep.subr.bf16.mxu0 %v2608
        %3854 = vmatpush1.bf16.msra.mxu0 %v2607
        %3855 = vmatprep.subr.bf16.mxu0 %v2612
        %3856 = vmatpush1.bf16.msra.mxu0 %v2611
        %3857 = vmatprep.subr.bf16.mxu0 %v2616
        %3858 = vmatpush1.bf16.msra.mxu0 %v2615
        %3859 = vmatprep.subr.bf16.mxu0 %v2620
        %3860 = vmatpush1.bf16.msra.mxu0 %v2619
        %3861 = vmatprep.subr.bf16.mxu0 %v2624
        %3862 = vmatpush1.bf16.msra.mxu0 %v2623
        %3863 = vmatprep.subr.bf16.mxu0 %v2628
        %3864 = vmatpush1.bf16.msra.mxu0 %v2627
        %3865 = vmatprep.subr.bf16.mxu0 %v2632
        %3866 = vmatpush1.bf16.msra.mxu0 %v2631
        %3867 = vmatprep.subr.bf16.mxu0 %v2636
        %3868 = vmatpush1.bf16.msra.mxu0 %v2635
        %3869 = vmatprep.subr.bf16.mxu0 %v2640
        %3870 = vmatpush1.bf16.msra.mxu0 %v2639
        %3871 = vmatprep.subr.bf16.mxu0 %v2644
        %3872 = vmatpush1.bf16.msra.mxu0 %v2643
        %3873 = vmatprep.mubr.bf16.mxu0 %v766
        %3874 = vmatmul.mubr.bf16.gmra.mrb[0].mxu0 %v765
        %v3875 = vpop.f32.mrb[0].mxu0
        %v3876 = vadd.f32 %v3835, %v3875
        %v3877 = vpop.f32.mrb[0].mxu0
        %v3878 = vadd.f32 %v3837, %v3877
        %v3879 = vpop.f32.mrb[0].mxu0
        %v3880 = vpop.f32.mrb[0].mxu0
        %3881 = vdwg.mxu0
        %3882 = vmatprep.subr.bf16.mxu0 %v2648
        %3883 = vmatpush1.bf16.msra.mxu0 %v2647
        %3884 = vmatprep.subr.bf16.mxu0 %v2652
        %3885 = vmatpush1.bf16.msra.mxu0 %v2651
        %3886 = vmatprep.subr.bf16.mxu0 %v2656
        %3887 = vmatpush1.bf16.msra.mxu0 %v2655
        %3888 = vmatprep.subr.bf16.mxu0 %v2660
        %3889 = vmatpush1.bf16.msra.mxu0 %v2659
        %3890 = vmatprep.subr.bf16.mxu0 %v2664
        %3891 = vmatpush1.bf16.msra.mxu0 %v2663
        %3892 = vmatprep.subr.bf16.mxu0 %v2668
        %3893 = vmatpush1.bf16.msra.mxu0 %v2667
        %3894 = vmatprep.subr.bf16.mxu0 %v2672
        %3895 = vmatpush1.bf16.msra.mxu0 %v2671
        %3896 = vmatprep.subr.bf16.mxu0 %v2676
        %3897 = vmatpush1.bf16.msra.mxu0 %v2675
        %3898 = vmatprep.subr.bf16.mxu0 %v2680
        %3899 = vmatpush1.bf16.msra.mxu0 %v2679
        %3900 = vmatprep.subr.bf16.mxu0 %v2684
        %3901 = vmatpush1.bf16.msra.mxu0 %v2683
        %3902 = vmatprep.subr.bf16.mxu0 %v2688
        %3903 = vmatpush1.bf16.msra.mxu0 %v2687
        %3904 = vmatprep.subr.bf16.mxu0 %v2692
        %3905 = vmatpush1.bf16.msra.mxu0 %v2691
        %3906 = vmatprep.subr.bf16.mxu0 %v2696
        %3907 = vmatpush1.bf16.msra.mxu0 %v2695
        %3908 = vmatprep.subr.bf16.mxu0 %v2700
        %3909 = vmatpush1.bf16.msra.mxu0 %v2699
        %3910 = vmatprep.subr.bf16.mxu0 %v2704
        %3911 = vmatpush1.bf16.msra.mxu0 %v2703
        %3912 = vmatprep.subr.bf16.mxu0 %v2708
        %3913 = vmatpush1.bf16.msra.mxu0 %v2707
        %3914 = vmatprep.mubr.bf16.mxu0 %v768
        %3915 = vmatmul.mubr.bf16.gmra.mrb[0].mxu0 %v767
        %v3916 = vpop.f32.mrb[0].mxu0
        %v3917 = vadd.f32 %v3876, %v3916
        %v3918 = vpop.f32.mrb[0].mxu0
        %v3919 = vadd.f32 %v3878, %v3918
        %v3920 = vpop.f32.mrb[0].mxu0
        %v3921 = vpop.f32.mrb[0].mxu0
        %3922 = vdwg.mxu0
        %3923 = vmatprep.subr.bf16.mxu0 %v2712
        %3924 = vmatpush1.bf16.msra.mxu0 %v2711
        %3925 = vmatprep.subr.bf16.mxu0 %v2716
        %3926 = vmatpush1.bf16.msra.mxu0 %v2715
        %3927 = vmatprep.subr.bf16.mxu0 %v2720
        %3928 = vmatpush1.bf16.msra.mxu0 %v2719
        %3929 = vmatprep.subr.bf16.mxu0 %v2724
        %3930 = vmatpush1.bf16.msra.mxu0 %v2723
        %3931 = vmatprep.subr.bf16.mxu0 %v2728
        %3932 = vmatpush1.bf16.msra.mxu0 %v2727
        %3933 = vmatprep.subr.bf16.mxu0 %v2732
        %3934 = vmatpush1.bf16.msra.mxu0 %v2731
        %3935 = vmatprep.subr.bf16.mxu0 %v2736
        %3936 = vmatpush1.bf16.msra.mxu0 %v2735
        %3937 = vmatprep.subr.bf16.mxu0 %v2740
        %3938 = vmatpush1.bf16.msra.mxu0 %v2739
        %3939 = vmatprep.subr.bf16.mxu0 %v2744
        %3940 = vmatpush1.bf16.msra.mxu0 %v2743
        %3941 = vmatprep.subr.bf16.mxu0 %v2748
        %3942 = vmatpush1.bf16.msra.mxu0 %v2747
        %3943 = vmatprep.subr.bf16.mxu0 %v2752
        %3944 = vmatpush1.bf16.msra.mxu0 %v2751
        %3945 = vmatprep.subr.bf16.mxu0 %v2756
        %3946 = vmatpush1.bf16.msra.mxu0 %v2755
        %3947 = vmatprep.subr.bf16.mxu0 %v2760
        %3948 = vmatpush1.bf16.msra.mxu0 %v2759
        %3949 = vmatprep.subr.bf16.mxu0 %v2764
        %3950 = vmatpush1.bf16.msra.mxu0 %v2763
        %3951 = vmatprep.subr.bf16.mxu0 %v2768
        %3952 = vmatpush1.bf16.msra.mxu0 %v2767
        %3953 = vmatprep.subr.bf16.mxu0 %v2772
        %3954 = vmatpush1.bf16.msra.mxu0 %v2771
        %3955 = vmatprep.mubr.bf16.mxu0 %v770
        %3956 = vmatmul.mubr.bf16.gmra.mrb[0].mxu0 %v769
        %v3957 = vpop.f32.mrb[0].mxu0
        %v3958 = vadd.f32 %v3917, %v3957
        %v3959 = vpop.f32.mrb[0].mxu0
        %v3960 = vadd.f32 %v3919, %v3959
        %v3961 = vpop.f32.mrb[0].mxu0
        %v3962 = vpop.f32.mrb[0].mxu0
        %3963 = vdwg.mxu0
        %3964 = vmatprep.subr.bf16.mxu0 %v2776
        %3965 = vmatpush1.bf16.msra.mxu0 %v2775
        %3966 = vmatprep.subr.bf16.mxu0 %v2780
        %3967 = vmatpush1.bf16.msra.mxu0 %v2779
        %3968 = vmatprep.subr.bf16.mxu0 %v2784
        %3969 = vmatpush1.bf16.msra.mxu0 %v2783
        %3970 = vmatprep.subr.bf16.mxu0 %v2788
        %3971 = vmatpush1.bf16.msra.mxu0 %v2787
        %3972 = vmatprep.subr.bf16.mxu0 %v2792
        %3973 = vmatpush1.bf16.msra.mxu0 %v2791
        %3974 = vmatprep.subr.bf16.mxu0 %v2796
        %3975 = vmatpush1.bf16.msra.mxu0 %v2795
        %3976 = vmatprep.subr.bf16.mxu0 %v2800
        %3977 = vmatpush1.bf16.msra.mxu0 %v2799
        %3978 = vmatprep.subr.bf16.mxu0 %v2804
        %3979 = vmatpush1.bf16.msra.mxu0 %v2803
        %3980 = vmatprep.subr.bf16.mxu0 %v2808
        %3981 = vmatpush1.bf16.msra.mxu0 %v2807
        %3982 = vmatprep.subr.bf16.mxu0 %v2812
        %3983 = vmatpush1.bf16.msra.mxu0 %v2811
        %3984 = vmatprep.subr.bf16.mxu0 %v2816
        %3985 = vmatpush1.bf16.msra.mxu0 %v2815
        %3986 = vmatprep.subr.bf16.mxu0 %v2820
        %3987 = vmatpush1.bf16.msra.mxu0 %v2819
        %3988 = vmatprep.subr.bf16.mxu0 %v2824
        %3989 = vmatpush1.bf16.msra.mxu0 %v2823
        %3990 = vmatprep.subr.bf16.mxu0 %v2828
        %3991 = vmatpush1.bf16.msra.mxu0 %v2827
        %3992 = vmatprep.subr.bf16.mxu0 %v2832
        %3993 = vmatpush1.bf16.msra.mxu0 %v2831
        %3994 = vmatprep.subr.bf16.mxu0 %v2836
        %3995 = vmatpush1.bf16.msra.mxu0 %v2835
        %3996 = vmatprep.mubr.bf16.mxu0 %v772
        %3997 = vmatmul.mubr.bf16.gmra.mrb[0].mxu0 %v771
        %v3998 = vpop.f32.mrb[0].mxu0
        %v3999 = vadd.f32 %v3958, %v3998
        %v4000 = vpop.f32.mrb[0].mxu0
        %v4001 = vadd.f32 %v3960, %v4000
        %v4002 = vpop.f32.mrb[0].mxu0
        %v4003 = vpop.f32.mrb[0].mxu0
        %4004 = vdwg.mxu0
        %v4005 = vadd.f32 %v209, %v3671
        %v4006 = vadd.f32 %v210, %v3673
        %v4007 = vadd.f32 %v211, %v3999
        %v4008 = vadd.f32 %v212, %v4001
        %4009 = vst [vmem:[#allocation2] sm:$0xff] %v4005
        %4010 = vst [vmem:[#allocation2 + $0x8] sm:$0xff] %v4006
        %4011 = vst [vmem:[#allocation2 + $0x10] sm:$0xff] %v4007
        %4012 = vst [vmem:[#allocation2 + $0x18] sm:$0xff] %v4008
      $region40: #{spectrum_encoder_forward.5} parent=31 // pred_fallthru
        _
      %p4013 = scmp.eq.s32.totalorder %s21, 1
      // Predicated region
      $region41: #{spectrum_encoder_forward.5} parent=31 // pred_check
        %p4014 = pneg %p4013
      $region42: #{spectrum_encoder_forward.5} parent=31 // pred_check_branch
        %4016 = sbr.rel (%p4014) target = $region44
      $region43: #{spectrum_encoder_forward.5} parent=31 // pred_region
        %v4017 = vld [vmem:[#allocation2] sm:$0xff]
        %v4018 = vld [vmem:[#allocation2 + $0x8] sm:$0xff]
        %v4019 = vld [vmem:[#allocation2 + $0x10] sm:$0xff]
        %v4020 = vld [vmem:[#allocation2 + $0x18] sm:$0xff]
        %v4021 = vld [vmem:[%s3] sm:$0xf]
        %v4023 = vlaneseq
        %v4024 = vshrl.u32 %v4023, 7
        %v4025 = vsub.s32 0, %v4024
        %v4026 = vrot.slane %v4021, %v4025
        %v4027 = vlaneseq
        %v4028 = vshrl.u32 %v4027, 7
        %v4029 = vsub.s32 1, %v4028
        %v4030 = vrot.slane %v4021, %v4029
        %v4031 = vlaneseq
        %v4032 = vshrl.u32 %v4031, 7
        %v4033 = vsub.s32 2, %v4032
        %v4034 = vrot.slane %v4021, %v4033
        %v4035 = vlaneseq
        %v4036 = vshrl.u32 %v4035, 7
        %v4037 = vsub.s32 3, %v4036
        %v4038 = vrot.slane %v4021, %v4037
        %v4043 = vadd.f32 %v4017, %v4026
        %v4044 = vadd.f32 %v4018, %v4030
        %v4045 = vadd.f32 %v4019, %v4034
        %v4046 = vadd.f32 %v4020, %v4038
        %v4047 = vmax.f32 %v4043, 0.0
        %v4048 = vmax.f32 %v4044, 0.0
        %v4049 = vmax.f32 %v4045, 0.0
        %v4050 = vmax.f32 %v4046, 0.0
        %v4051 = vpack.c.bf16 %v4047, %v4047
        %v4052 = vpack.c.bf16 %v4048, %v4048
        %v4053 = vpack.c.bf16 %v4049, %v4049
        %v4054 = vpack.c.bf16 %v4050, %v4050
        %v4055 = vld [vmem:[%s195] sm:$0xff]
        %v4056 = vld [vmem:[%s195 + $0x8] sm:$0xff]
        %v4057 = vld [vmem:[%s195 + $0x10] sm:$0xff]
        %v4058 = vld [vmem:[%s195 + $0x18] sm:$0xff]
        %v4059 = vld [vmem:[%s195 + $0x20] sm:$0xff]
        %v4060 = vld [vmem:[%s195 + $0x28] sm:$0xff]
        %v4061 = vld [vmem:[%s195 + $0x30] sm:$0xff]
        %v4062 = vld [vmem:[%s195 + $0x38] sm:$0xff]
        %v4063 = vld [vmem:[%s195 + $0x40] sm:$0xff]
        %v4064 = vld [vmem:[%s195 + $0x48] sm:$0xff]
        %v4065 = vld [vmem:[%s195 + $0x50] sm:$0xff]
        %v4066 = vld [vmem:[%s195 + $0x58] sm:$0xff]
        %v4067 = vld [vmem:[%s195 + $0x60] sm:$0xff]
        %v4068 = vld [vmem:[%s195 + $0x68] sm:$0xff]
        %v4069 = vld [vmem:[%s195 + $0x70] sm:$0xff]
        %v4070 = vld [vmem:[%s195 + $0x78] sm:$0xff]
        %v4071 = vld [vmem:[%s195 + $0x80] sm:$0xff]
        %v4072 = vld [vmem:[%s195 + $0x88] sm:$0xff]
        %v4073 = vld [vmem:[%s195 + $0x90] sm:$0xff]
        %v4074 = vld [vmem:[%s195 + $0x98] sm:$0xff]
        %v4075 = vld [vmem:[%s195 + $0xa0] sm:$0xff]
        %v4076 = vld [vmem:[%s195 + $0xa8] sm:$0xff]
        %v4077 = vld [vmem:[%s195 + $0xb0] sm:$0xff]
        %v4078 = vld [vmem:[%s195 + $0xb8] sm:$0xff]
        %v4079 = vld [vmem:[%s195 + $0xc0] sm:$0xff]
        %v4080 = vld [vmem:[%s195 + $0xc8] sm:$0xff]
        %v4081 = vld [vmem:[%s195 + $0xd0] sm:$0xff]
        %v4082 = vld [vmem:[%s195 + $0xd8] sm:$0xff]
        %v4083 = vld [vmem:[%s195 + $0xe0] sm:$0xff]
        %v4084 = vld [vmem:[%s195 + $0xe8] sm:$0xff]
        %v4085 = vld [vmem:[%s195 + $0xf0] sm:$0xff]
        %v4086 = vld [vmem:[%s195 + $0xf8] sm:$0xff]
        %v4087 = vld [vmem:[%s195 + $0x100] sm:$0xff]
        %v4088 = vld [vmem:[%s195 + $0x108] sm:$0xff]
        %v4089 = vld [vmem:[%s195 + $0x110] sm:$0xff]
        %v4090 = vld [vmem:[%s195 + $0x118] sm:$0xff]
        %v4091 = vld [vmem:[%s195 + $0x120] sm:$0xff]
        %v4092 = vld [vmem:[%s195 + $0x128] sm:$0xff]
        %v4093 = vld [vmem:[%s195 + $0x130] sm:$0xff]
        %v4094 = vld [vmem:[%s195 + $0x138] sm:$0xff]
        %v4095 = vld [vmem:[%s195 + $0x140] sm:$0xff]
        %v4096 = vld [vmem:[%s195 + $0x148] sm:$0xff]
        %v4097 = vld [vmem:[%s195 + $0x150] sm:$0xff]
        %v4098 = vld [vmem:[%s195 + $0x158] sm:$0xff]
        %v4099 = vld [vmem:[%s195 + $0x160] sm:$0xff]
        %v4100 = vld [vmem:[%s195 + $0x168] sm:$0xff]
        %v4101 = vld [vmem:[%s195 + $0x170] sm:$0xff]
        %v4102 = vld [vmem:[%s195 + $0x178] sm:$0xff]
        %v4103 = vld [vmem:[%s195 + $0x180] sm:$0xff]
        %v4104 = vld [vmem:[%s195 + $0x188] sm:$0xff]
        %v4105 = vld [vmem:[%s195 + $0x190] sm:$0xff]
        %v4106 = vld [vmem:[%s195 + $0x198] sm:$0xff]
        %v4107 = vld [vmem:[%s195 + $0x1a0] sm:$0xff]
        %v4108 = vld [vmem:[%s195 + $0x1a8] sm:$0xff]
        %v4109 = vld [vmem:[%s195 + $0x1b0] sm:$0xff]
        %v4110 = vld [vmem:[%s195 + $0x1b8] sm:$0xff]
        %v4111 = vld [vmem:[%s195 + $0x1c0] sm:$0xff]
        %v4112 = vld [vmem:[%s195 + $0x1c8] sm:$0xff]
        %v4113 = vld [vmem:[%s195 + $0x1d0] sm:$0xff]
        %v4114 = vld [vmem:[%s195 + $0x1d8] sm:$0xff]
        %v4115 = vld [vmem:[%s195 + $0x1e0] sm:$0xff]
        %v4116 = vld [vmem:[%s195 + $0x1e8] sm:$0xff]
        %v4117 = vld [vmem:[%s195 + $0x1f0] sm:$0xff]
        %v4118 = vld [vmem:[%s195 + $0x1f8] sm:$0xff]
        %v4119 = vld [vmem:[%s195 + $0x200] sm:$0xff]
        %v4120 = vld [vmem:[%s195 + $0x208] sm:$0xff]
        %v4121 = vld [vmem:[%s195 + $0x210] sm:$0xff]
        %v4122 = vld [vmem:[%s195 + $0x218] sm:$0xff]
        %v4123 = vld [vmem:[%s195 + $0x220] sm:$0xff]
        %v4124 = vld [vmem:[%s195 + $0x228] sm:$0xff]
        %v4125 = vld [vmem:[%s195 + $0x230] sm:$0xff]
        %v4126 = vld [vmem:[%s195 + $0x238] sm:$0xff]
        %v4127 = vld [vmem:[%s195 + $0x240] sm:$0xff]
        %v4128 = vld [vmem:[%s195 + $0x248] sm:$0xff]
        %v4129 = vld [vmem:[%s195 + $0x250] sm:$0xff]
        %v4130 = vld [vmem:[%s195 + $0x258] sm:$0xff]
        %v4131 = vld [vmem:[%s195 + $0x260] sm:$0xff]
        %v4132 = vld [vmem:[%s195 + $0x268] sm:$0xff]
        %v4133 = vld [vmem:[%s195 + $0x270] sm:$0xff]
        %v4134 = vld [vmem:[%s195 + $0x278] sm:$0xff]
        %v4135 = vld [vmem:[%s195 + $0x280] sm:$0xff]
        %v4136 = vld [vmem:[%s195 + $0x288] sm:$0xff]
        %v4137 = vld [vmem:[%s195 + $0x290] sm:$0xff]
        %v4138 = vld [vmem:[%s195 + $0x298] sm:$0xff]
        %v4139 = vld [vmem:[%s195 + $0x2a0] sm:$0xff]
        %v4140 = vld [vmem:[%s195 + $0x2a8] sm:$0xff]
        %v4141 = vld [vmem:[%s195 + $0x2b0] sm:$0xff]
        %v4142 = vld [vmem:[%s195 + $0x2b8] sm:$0xff]
        %v4143 = vld [vmem:[%s195 + $0x2c0] sm:$0xff]
        %v4144 = vld [vmem:[%s195 + $0x2c8] sm:$0xff]
        %v4145 = vld [vmem:[%s195 + $0x2d0] sm:$0xff]
        %v4146 = vld [vmem:[%s195 + $0x2d8] sm:$0xff]
        %v4147 = vld [vmem:[%s195 + $0x2e0] sm:$0xff]
        %v4148 = vld [vmem:[%s195 + $0x2e8] sm:$0xff]
        %v4149 = vld [vmem:[%s195 + $0x2f0] sm:$0xff]
        %v4150 = vld [vmem:[%s195 + $0x2f8] sm:$0xff]
        %v4151 = vld [vmem:[%s195 + $0x300] sm:$0xff]
        %v4152 = vld [vmem:[%s195 + $0x308] sm:$0xff]
        %v4153 = vld [vmem:[%s195 + $0x310] sm:$0xff]
        %v4154 = vld [vmem:[%s195 + $0x318] sm:$0xff]
        %v4155 = vld [vmem:[%s195 + $0x320] sm:$0xff]
        %v4156 = vld [vmem:[%s195 + $0x328] sm:$0xff]
        %v4157 = vld [vmem:[%s195 + $0x330] sm:$0xff]
        %v4158 = vld [vmem:[%s195 + $0x338] sm:$0xff]
        %v4159 = vld [vmem:[%s195 + $0x340] sm:$0xff]
        %v4160 = vld [vmem:[%s195 + $0x348] sm:$0xff]
        %v4161 = vld [vmem:[%s195 + $0x350] sm:$0xff]
        %v4162 = vld [vmem:[%s195 + $0x358] sm:$0xff]
        %v4163 = vld [vmem:[%s195 + $0x360] sm:$0xff]
        %v4164 = vld [vmem:[%s195 + $0x368] sm:$0xff]
        %v4165 = vld [vmem:[%s195 + $0x370] sm:$0xff]
        %v4166 = vld [vmem:[%s195 + $0x378] sm:$0xff]
        %v4167 = vld [vmem:[%s195 + $0x380] sm:$0xff]
        %v4168 = vld [vmem:[%s195 + $0x388] sm:$0xff]
        %v4169 = vld [vmem:[%s195 + $0x390] sm:$0xff]
        %v4170 = vld [vmem:[%s195 + $0x398] sm:$0xff]
        %v4171 = vld [vmem:[%s195 + $0x3a0] sm:$0xff]
        %v4172 = vld [vmem:[%s195 + $0x3a8] sm:$0xff]
        %v4173 = vld [vmem:[%s195 + $0x3b0] sm:$0xff]
        %v4174 = vld [vmem:[%s195 + $0x3b8] sm:$0xff]
        %v4175 = vld [vmem:[%s195 + $0x3c0] sm:$0xff]
        %v4176 = vld [vmem:[%s195 + $0x3c8] sm:$0xff]
        %v4177 = vld [vmem:[%s195 + $0x3d0] sm:$0xff]
        %v4178 = vld [vmem:[%s195 + $0x3d8] sm:$0xff]
        %v4179 = vld [vmem:[%s195 + $0x3e0] sm:$0xff]
        %v4180 = vld [vmem:[%s195 + $0x3e8] sm:$0xff]
        %v4181 = vld [vmem:[%s195 + $0x3f0] sm:$0xff]
        %v4182 = vld [vmem:[%s195 + $0x3f8] sm:$0xff]
        %s4183 = scalar_lea.vmem %s3, 4
        %v4184 = vld [vmem:[%s4183] sm:$0xf]
        %v4186 = vlaneseq
        %v4187 = vshrl.u32 %v4186, 7
        %v4188 = vsub.s32 0, %v4187
        %v4189 = vrot.slane %v4184, %v4188
        %v4190 = vlaneseq
        %v4191 = vshrl.u32 %v4190, 7
        %v4192 = vsub.s32 1, %v4191
        %v4193 = vrot.slane %v4184, %v4192
        %v4194 = vlaneseq
        %v4195 = vshrl.u32 %v4194, 7
        %v4196 = vsub.s32 2, %v4195
        %v4197 = vrot.slane %v4184, %v4196
        %v4198 = vlaneseq
        %v4199 = vshrl.u32 %v4198, 7
        %v4200 = vsub.s32 3, %v4199
        %v4201 = vrot.slane %v4184, %v4200
        %v4334 = vunpack.c.l.b16 %v4055
        %v4335 = vunpack.c.h.b16 %v4055
        %v4336 = vunpack.c.l.b16 %v4056
        %v4337 = vunpack.c.h.b16 %v4056
        %v4338 = vunpack.c.l.b16 %v4057
        %v4339 = vunpack.c.h.b16 %v4057
        %v4340 = vunpack.c.l.b16 %v4058
        %v4341 = vunpack.c.h.b16 %v4058
        %v4342 = vunpack.c.l.b16 %v4059
        %v4343 = vunpack.c.h.b16 %v4059
        %v4344 = vunpack.c.l.b16 %v4060
        %v4345 = vunpack.c.h.b16 %v4060
        %v4346 = vunpack.c.l.b16 %v4061
        %v4347 = vunpack.c.h.b16 %v4061
        %v4348 = vunpack.c.l.b16 %v4062
        %v4349 = vunpack.c.h.b16 %v4062
        %v4350 = vunpack.c.l.b16 %v4063
        %v4351 = vunpack.c.h.b16 %v4063
        %v4352 = vunpack.c.l.b16 %v4064
        %v4353 = vunpack.c.h.b16 %v4064
        %v4354 = vunpack.c.l.b16 %v4065
        %v4355 = vunpack.c.h.b16 %v4065
        %v4356 = vunpack.c.l.b16 %v4066
        %v4357 = vunpack.c.h.b16 %v4066
        %v4358 = vunpack.c.l.b16 %v4067
        %v4359 = vunpack.c.h.b16 %v4067
        %v4360 = vunpack.c.l.b16 %v4068
        %v4361 = vunpack.c.h.b16 %v4068
        %v4362 = vunpack.c.l.b16 %v4069
        %v4363 = vunpack.c.h.b16 %v4069
        %v4364 = vunpack.c.l.b16 %v4070
        %v4365 = vunpack.c.h.b16 %v4070
        %v4366 = vunpack.c.l.b16 %v4071
        %v4367 = vunpack.c.h.b16 %v4071
        %v4368 = vunpack.c.l.b16 %v4072
        %v4369 = vunpack.c.h.b16 %v4072
        %v4370 = vunpack.c.l.b16 %v4073
        %v4371 = vunpack.c.h.b16 %v4073
        %v4372 = vunpack.c.l.b16 %v4074
        %v4373 = vunpack.c.h.b16 %v4074
        %v4374 = vunpack.c.l.b16 %v4075
        %v4375 = vunpack.c.h.b16 %v4075
        %v4376 = vunpack.c.l.b16 %v4076
        %v4377 = vunpack.c.h.b16 %v4076
        %v4378 = vunpack.c.l.b16 %v4077
        %v4379 = vunpack.c.h.b16 %v4077
        %v4380 = vunpack.c.l.b16 %v4078
        %v4381 = vunpack.c.h.b16 %v4078
        %v4382 = vunpack.c.l.b16 %v4079
        %v4383 = vunpack.c.h.b16 %v4079
        %v4384 = vunpack.c.l.b16 %v4080
        %v4385 = vunpack.c.h.b16 %v4080
        %v4386 = vunpack.c.l.b16 %v4081
        %v4387 = vunpack.c.h.b16 %v4081
        %v4388 = vunpack.c.l.b16 %v4082
        %v4389 = vunpack.c.h.b16 %v4082
        %v4390 = vunpack.c.l.b16 %v4083
        %v4391 = vunpack.c.h.b16 %v4083
        %v4392 = vunpack.c.l.b16 %v4084
        %v4393 = vunpack.c.h.b16 %v4084
        %v4394 = vunpack.c.l.b16 %v4085
        %v4395 = vunpack.c.h.b16 %v4085
        %v4396 = vunpack.c.l.b16 %v4086
        %v4397 = vunpack.c.h.b16 %v4086
        %v4398 = vunpack.c.l.b16 %v4087
        %v4399 = vunpack.c.h.b16 %v4087
        %v4400 = vunpack.c.l.b16 %v4088
        %v4401 = vunpack.c.h.b16 %v4088
        %v4402 = vunpack.c.l.b16 %v4089
        %v4403 = vunpack.c.h.b16 %v4089
        %v4404 = vunpack.c.l.b16 %v4090
        %v4405 = vunpack.c.h.b16 %v4090
        %v4406 = vunpack.c.l.b16 %v4091
        %v4407 = vunpack.c.h.b16 %v4091
        %v4408 = vunpack.c.l.b16 %v4092
        %v4409 = vunpack.c.h.b16 %v4092
        %v4410 = vunpack.c.l.b16 %v4093
        %v4411 = vunpack.c.h.b16 %v4093
        %v4412 = vunpack.c.l.b16 %v4094
        %v4413 = vunpack.c.h.b16 %v4094
        %v4414 = vunpack.c.l.b16 %v4095
        %v4415 = vunpack.c.h.b16 %v4095
        %v4416 = vunpack.c.l.b16 %v4096
        %v4417 = vunpack.c.h.b16 %v4096
        %v4418 = vunpack.c.l.b16 %v4097
        %v4419 = vunpack.c.h.b16 %v4097
        %v4420 = vunpack.c.l.b16 %v4098
        %v4421 = vunpack.c.h.b16 %v4098
        %v4422 = vunpack.c.l.b16 %v4099
        %v4423 = vunpack.c.h.b16 %v4099
        %v4424 = vunpack.c.l.b16 %v4100
        %v4425 = vunpack.c.h.b16 %v4100
        %v4426 = vunpack.c.l.b16 %v4101
        %v4427 = vunpack.c.h.b16 %v4101
        %v4428 = vunpack.c.l.b16 %v4102
        %v4429 = vunpack.c.h.b16 %v4102
        %v4430 = vunpack.c.l.b16 %v4103
        %v4431 = vunpack.c.h.b16 %v4103
        %v4432 = vunpack.c.l.b16 %v4104
        %v4433 = vunpack.c.h.b16 %v4104
        %v4434 = vunpack.c.l.b16 %v4105
        %v4435 = vunpack.c.h.b16 %v4105
        %v4436 = vunpack.c.l.b16 %v4106
        %v4437 = vunpack.c.h.b16 %v4106
        %v4438 = vunpack.c.l.b16 %v4107
        %v4439 = vunpack.c.h.b16 %v4107
        %v4440 = vunpack.c.l.b16 %v4108
        %v4441 = vunpack.c.h.b16 %v4108
        %v4442 = vunpack.c.l.b16 %v4109
        %v4443 = vunpack.c.h.b16 %v4109
        %v4444 = vunpack.c.l.b16 %v4110
        %v4445 = vunpack.c.h.b16 %v4110
        %v4446 = vunpack.c.l.b16 %v4111
        %v4447 = vunpack.c.h.b16 %v4111
        %v4448 = vunpack.c.l.b16 %v4112
        %v4449 = vunpack.c.h.b16 %v4112
        %v4450 = vunpack.c.l.b16 %v4113
        %v4451 = vunpack.c.h.b16 %v4113
        %v4452 = vunpack.c.l.b16 %v4114
        %v4453 = vunpack.c.h.b16 %v4114
        %v4454 = vunpack.c.l.b16 %v4115
        %v4455 = vunpack.c.h.b16 %v4115
        %v4456 = vunpack.c.l.b16 %v4116
        %v4457 = vunpack.c.h.b16 %v4116
        %v4458 = vunpack.c.l.b16 %v4117
        %v4459 = vunpack.c.h.b16 %v4117
        %v4460 = vunpack.c.l.b16 %v4118
        %v4461 = vunpack.c.h.b16 %v4118
        %v4462 = vunpack.c.l.b16 %v4119
        %v4463 = vunpack.c.h.b16 %v4119
        %v4464 = vunpack.c.l.b16 %v4120
        %v4465 = vunpack.c.h.b16 %v4120
        %v4466 = vunpack.c.l.b16 %v4121
        %v4467 = vunpack.c.h.b16 %v4121
        %v4468 = vunpack.c.l.b16 %v4122
        %v4469 = vunpack.c.h.b16 %v4122
        %v4470 = vunpack.c.l.b16 %v4123
        %v4471 = vunpack.c.h.b16 %v4123
        %v4472 = vunpack.c.l.b16 %v4124
        %v4473 = vunpack.c.h.b16 %v4124
        %v4474 = vunpack.c.l.b16 %v4125
        %v4475 = vunpack.c.h.b16 %v4125
        %v4476 = vunpack.c.l.b16 %v4126
        %v4477 = vunpack.c.h.b16 %v4126
        %v4478 = vunpack.c.l.b16 %v4127
        %v4479 = vunpack.c.h.b16 %v4127
        %v4480 = vunpack.c.l.b16 %v4128
        %v4481 = vunpack.c.h.b16 %v4128
        %v4482 = vunpack.c.l.b16 %v4129
        %v4483 = vunpack.c.h.b16 %v4129
        %v4484 = vunpack.c.l.b16 %v4130
        %v4485 = vunpack.c.h.b16 %v4130
        %v4486 = vunpack.c.l.b16 %v4131
        %v4487 = vunpack.c.h.b16 %v4131
        %v4488 = vunpack.c.l.b16 %v4132
        %v4489 = vunpack.c.h.b16 %v4132
        %v4490 = vunpack.c.l.b16 %v4133
        %v4491 = vunpack.c.h.b16 %v4133
        %v4492 = vunpack.c.l.b16 %v4134
        %v4493 = vunpack.c.h.b16 %v4134
        %v4494 = vunpack.c.l.b16 %v4135
        %v4495 = vunpack.c.h.b16 %v4135
        %v4496 = vunpack.c.l.b16 %v4136
        %v4497 = vunpack.c.h.b16 %v4136
        %v4498 = vunpack.c.l.b16 %v4137
        %v4499 = vunpack.c.h.b16 %v4137
        %v4500 = vunpack.c.l.b16 %v4138
        %v4501 = vunpack.c.h.b16 %v4138
        %v4502 = vunpack.c.l.b16 %v4139
        %v4503 = vunpack.c.h.b16 %v4139
        %v4504 = vunpack.c.l.b16 %v4140
        %v4505 = vunpack.c.h.b16 %v4140
        %v4506 = vunpack.c.l.b16 %v4141
        %v4507 = vunpack.c.h.b16 %v4141
        %v4508 = vunpack.c.l.b16 %v4142
        %v4509 = vunpack.c.h.b16 %v4142
        %v4510 = vunpack.c.l.b16 %v4143
        %v4511 = vunpack.c.h.b16 %v4143
        %v4512 = vunpack.c.l.b16 %v4144
        %v4513 = vunpack.c.h.b16 %v4144
        %v4514 = vunpack.c.l.b16 %v4145
        %v4515 = vunpack.c.h.b16 %v4145
        %v4516 = vunpack.c.l.b16 %v4146
        %v4517 = vunpack.c.h.b16 %v4146
        %v4518 = vunpack.c.l.b16 %v4147
        %v4519 = vunpack.c.h.b16 %v4147
        %v4520 = vunpack.c.l.b16 %v4148
        %v4521 = vunpack.c.h.b16 %v4148
        %v4522 = vunpack.c.l.b16 %v4149
        %v4523 = vunpack.c.h.b16 %v4149
        %v4524 = vunpack.c.l.b16 %v4150
        %v4525 = vunpack.c.h.b16 %v4150
        %v4526 = vunpack.c.l.b16 %v4151
        %v4527 = vunpack.c.h.b16 %v4151
        %v4528 = vunpack.c.l.b16 %v4152
        %v4529 = vunpack.c.h.b16 %v4152
        %v4530 = vunpack.c.l.b16 %v4153
        %v4531 = vunpack.c.h.b16 %v4153
        %v4532 = vunpack.c.l.b16 %v4154
        %v4533 = vunpack.c.h.b16 %v4154
        %v4534 = vunpack.c.l.b16 %v4155
        %v4535 = vunpack.c.h.b16 %v4155
        %v4536 = vunpack.c.l.b16 %v4156
        %v4537 = vunpack.c.h.b16 %v4156
        %v4538 = vunpack.c.l.b16 %v4157
        %v4539 = vunpack.c.h.b16 %v4157
        %v4540 = vunpack.c.l.b16 %v4158
        %v4541 = vunpack.c.h.b16 %v4158
        %v4542 = vunpack.c.l.b16 %v4159
        %v4543 = vunpack.c.h.b16 %v4159
        %v4544 = vunpack.c.l.b16 %v4160
        %v4545 = vunpack.c.h.b16 %v4160
        %v4546 = vunpack.c.l.b16 %v4161
        %v4547 = vunpack.c.h.b16 %v4161
        %v4548 = vunpack.c.l.b16 %v4162
        %v4549 = vunpack.c.h.b16 %v4162
        %v4550 = vunpack.c.l.b16 %v4163
        %v4551 = vunpack.c.h.b16 %v4163
        %v4552 = vunpack.c.l.b16 %v4164
        %v4553 = vunpack.c.h.b16 %v4164
        %v4554 = vunpack.c.l.b16 %v4165
        %v4555 = vunpack.c.h.b16 %v4165
        %v4556 = vunpack.c.l.b16 %v4166
        %v4557 = vunpack.c.h.b16 %v4166
        %v4558 = vunpack.c.l.b16 %v4167
        %v4559 = vunpack.c.h.b16 %v4167
        %v4560 = vunpack.c.l.b16 %v4168
        %v4561 = vunpack.c.h.b16 %v4168
        %v4562 = vunpack.c.l.b16 %v4169
        %v4563 = vunpack.c.h.b16 %v4169
        %v4564 = vunpack.c.l.b16 %v4170
        %v4565 = vunpack.c.h.b16 %v4170
        %v4566 = vunpack.c.l.b16 %v4171
        %v4567 = vunpack.c.h.b16 %v4171
        %v4568 = vunpack.c.l.b16 %v4172
        %v4569 = vunpack.c.h.b16 %v4172
        %v4570 = vunpack.c.l.b16 %v4173
        %v4571 = vunpack.c.h.b16 %v4173
        %v4572 = vunpack.c.l.b16 %v4174
        %v4573 = vunpack.c.h.b16 %v4174
        %v4574 = vunpack.c.l.b16 %v4175
        %v4575 = vunpack.c.h.b16 %v4175
        %v4576 = vunpack.c.l.b16 %v4176
        %v4577 = vunpack.c.h.b16 %v4176
        %v4578 = vunpack.c.l.b16 %v4177
        %v4579 = vunpack.c.h.b16 %v4177
        %v4580 = vunpack.c.l.b16 %v4178
        %v4581 = vunpack.c.h.b16 %v4178
        %v4582 = vunpack.c.l.b16 %v4179
        %v4583 = vunpack.c.h.b16 %v4179
        %v4584 = vunpack.c.l.b16 %v4180
        %v4585 = vunpack.c.h.b16 %v4180
        %v4586 = vunpack.c.l.b16 %v4181
        %v4587 = vunpack.c.h.b16 %v4181
        %v4588 = vunpack.c.l.b16 %v4182
        %v4589 = vunpack.c.h.b16 %v4182
        %v4590 = vpack.c.b16 %v4338, %v4334
        %v4591 = vpack.c.b16 %v4339, %v4335
        %v4592 = vpack.c.b16 %v4340, %v4336
        %v4593 = vpack.c.b16 %v4341, %v4337
        %v4594 = vpack.c.b16 %v4346, %v4342
        %v4595 = vpack.c.b16 %v4347, %v4343
        %v4596 = vpack.c.b16 %v4348, %v4344
        %v4597 = vpack.c.b16 %v4349, %v4345
        %v4598 = vpack.c.b16 %v4354, %v4350
        %v4599 = vpack.c.b16 %v4355, %v4351
        %v4600 = vpack.c.b16 %v4356, %v4352
        %v4601 = vpack.c.b16 %v4357, %v4353
        %v4602 = vpack.c.b16 %v4362, %v4358
        %v4603 = vpack.c.b16 %v4363, %v4359
        %v4604 = vpack.c.b16 %v4364, %v4360
        %v4605 = vpack.c.b16 %v4365, %v4361
        %v4606 = vpack.c.b16 %v4370, %v4366
        %v4607 = vpack.c.b16 %v4371, %v4367
        %v4608 = vpack.c.b16 %v4372, %v4368
        %v4609 = vpack.c.b16 %v4373, %v4369
        %v4610 = vpack.c.b16 %v4378, %v4374
        %v4611 = vpack.c.b16 %v4379, %v4375
        %v4612 = vpack.c.b16 %v4380, %v4376
        %v4613 = vpack.c.b16 %v4381, %v4377
        %v4614 = vpack.c.b16 %v4386, %v4382
        %v4615 = vpack.c.b16 %v4387, %v4383
        %v4616 = vpack.c.b16 %v4388, %v4384
        %v4617 = vpack.c.b16 %v4389, %v4385
        %v4618 = vpack.c.b16 %v4394, %v4390
        %v4619 = vpack.c.b16 %v4395, %v4391
        %v4620 = vpack.c.b16 %v4396, %v4392
        %v4621 = vpack.c.b16 %v4397, %v4393
        %v4622 = vpack.c.b16 %v4402, %v4398
        %v4623 = vpack.c.b16 %v4403, %v4399
        %v4624 = vpack.c.b16 %v4404, %v4400
        %v4625 = vpack.c.b16 %v4405, %v4401
        %v4626 = vpack.c.b16 %v4410, %v4406
        %v4627 = vpack.c.b16 %v4411, %v4407
        %v4628 = vpack.c.b16 %v4412, %v4408
        %v4629 = vpack.c.b16 %v4413, %v4409
        %v4630 = vpack.c.b16 %v4418, %v4414
        %v4631 = vpack.c.b16 %v4419, %v4415
        %v4632 = vpack.c.b16 %v4420, %v4416
        %v4633 = vpack.c.b16 %v4421, %v4417
        %v4634 = vpack.c.b16 %v4426, %v4422
        %v4635 = vpack.c.b16 %v4427, %v4423
        %v4636 = vpack.c.b16 %v4428, %v4424
        %v4637 = vpack.c.b16 %v4429, %v4425
        %v4638 = vpack.c.b16 %v4434, %v4430
        %v4639 = vpack.c.b16 %v4435, %v4431
        %v4640 = vpack.c.b16 %v4436, %v4432
        %v4641 = vpack.c.b16 %v4437, %v4433
        %v4642 = vpack.c.b16 %v4442, %v4438
        %v4643 = vpack.c.b16 %v4443, %v4439
        %v4644 = vpack.c.b16 %v4444, %v4440
        %v4645 = vpack.c.b16 %v4445, %v4441
        %v4646 = vpack.c.b16 %v4450, %v4446
        %v4647 = vpack.c.b16 %v4451, %v4447
        %v4648 = vpack.c.b16 %v4452, %v4448
        %v4649 = vpack.c.b16 %v4453, %v4449
        %v4650 = vpack.c.b16 %v4458, %v4454
        %v4651 = vpack.c.b16 %v4459, %v4455
        %v4652 = vpack.c.b16 %v4460, %v4456
        %v4653 = vpack.c.b16 %v4461, %v4457
        %v4654 = vpack.c.b16 %v4466, %v4462
        %v4655 = vpack.c.b16 %v4467, %v4463
        %v4656 = vpack.c.b16 %v4468, %v4464
        %v4657 = vpack.c.b16 %v4469, %v4465
        %v4658 = vpack.c.b16 %v4474, %v4470
        %v4659 = vpack.c.b16 %v4475, %v4471
        %v4660 = vpack.c.b16 %v4476, %v4472
        %v4661 = vpack.c.b16 %v4477, %v4473
        %v4662 = vpack.c.b16 %v4482, %v4478
        %v4663 = vpack.c.b16 %v4483, %v4479
        %v4664 = vpack.c.b16 %v4484, %v4480
        %v4665 = vpack.c.b16 %v4485, %v4481
        %v4666 = vpack.c.b16 %v4490, %v4486
        %v4667 = vpack.c.b16 %v4491, %v4487
        %v4668 = vpack.c.b16 %v4492, %v4488
        %v4669 = vpack.c.b16 %v4493, %v4489
        %v4670 = vpack.c.b16 %v4498, %v4494
        %v4671 = vpack.c.b16 %v4499, %v4495
        %v4672 = vpack.c.b16 %v4500, %v4496
        %v4673 = vpack.c.b16 %v4501, %v4497
        %v4674 = vpack.c.b16 %v4506, %v4502
        %v4675 = vpack.c.b16 %v4507, %v4503
        %v4676 = vpack.c.b16 %v4508, %v4504
        %v4677 = vpack.c.b16 %v4509, %v4505
        %v4678 = vpack.c.b16 %v4514, %v4510
        %v4679 = vpack.c.b16 %v4515, %v4511
        %v4680 = vpack.c.b16 %v4516, %v4512
        %v4681 = vpack.c.b16 %v4517, %v4513
        %v4682 = vpack.c.b16 %v4522, %v4518
        %v4683 = vpack.c.b16 %v4523, %v4519
        %v4684 = vpack.c.b16 %v4524, %v4520
        %v4685 = vpack.c.b16 %v4525, %v4521
        %v4686 = vpack.c.b16 %v4530, %v4526
        %v4687 = vpack.c.b16 %v4531, %v4527
        %v4688 = vpack.c.b16 %v4532, %v4528
        %v4689 = vpack.c.b16 %v4533, %v4529
        %v4690 = vpack.c.b16 %v4538, %v4534
        %v4691 = vpack.c.b16 %v4539, %v4535
        %v4692 = vpack.c.b16 %v4540, %v4536
        %v4693 = vpack.c.b16 %v4541, %v4537
        %v4694 = vpack.c.b16 %v4546, %v4542
        %v4695 = vpack.c.b16 %v4547, %v4543
        %v4696 = vpack.c.b16 %v4548, %v4544
        %v4697 = vpack.c.b16 %v4549, %v4545
        %v4698 = vpack.c.b16 %v4554, %v4550
        %v4699 = vpack.c.b16 %v4555, %v4551
        %v4700 = vpack.c.b16 %v4556, %v4552
        %v4701 = vpack.c.b16 %v4557, %v4553
        %v4702 = vpack.c.b16 %v4562, %v4558
        %v4703 = vpack.c.b16 %v4563, %v4559
        %v4704 = vpack.c.b16 %v4564, %v4560
        %v4705 = vpack.c.b16 %v4565, %v4561
        %v4706 = vpack.c.b16 %v4570, %v4566
        %v4707 = vpack.c.b16 %v4571, %v4567
        %v4708 = vpack.c.b16 %v4572, %v4568
        %v4709 = vpack.c.b16 %v4573, %v4569
        %v4710 = vpack.c.b16 %v4578, %v4574
        %v4711 = vpack.c.b16 %v4579, %v4575
        %v4712 = vpack.c.b16 %v4580, %v4576
        %v4713 = vpack.c.b16 %v4581, %v4577
        %v4714 = vpack.c.b16 %v4586, %v4582
        %v4715 = vpack.c.b16 %v4587, %v4583
        %v4716 = vpack.c.b16 %v4588, %v4584
        %v4717 = vpack.c.b16 %v4589, %v4585
        %4846 = vmatprep.subr.bf16.mxu0 %v4591
        %4847 = vmatpush1.bf16.msra.mxu0 %v4590
        %4848 = vmatprep.subr.bf16.mxu0 %v4595
        %4849 = vmatpush1.bf16.msra.mxu0 %v4594
        %4850 = vmatprep.subr.bf16.mxu0 %v4599
        %4851 = vmatpush1.bf16.msra.mxu0 %v4598
        %4852 = vmatprep.subr.bf16.mxu0 %v4603
        %4853 = vmatpush1.bf16.msra.mxu0 %v4602
        %4854 = vmatprep.subr.bf16.mxu0 %v4607
        %4855 = vmatpush1.bf16.msra.mxu0 %v4606
        %4856 = vmatprep.subr.bf16.mxu0 %v4611
        %4857 = vmatpush1.bf16.msra.mxu0 %v4610
        %4858 = vmatprep.subr.bf16.mxu0 %v4615
        %4859 = vmatpush1.bf16.msra.mxu0 %v4614
        %4860 = vmatprep.subr.bf16.mxu0 %v4619
        %4861 = vmatpush1.bf16.msra.mxu0 %v4618
        %4862 = vmatprep.subr.bf16.mxu0 %v4623
        %4863 = vmatpush1.bf16.msra.mxu0 %v4622
        %4864 = vmatprep.subr.bf16.mxu0 %v4627
        %4865 = vmatpush1.bf16.msra.mxu0 %v4626
        %4866 = vmatprep.subr.bf16.mxu0 %v4631
        %4867 = vmatpush1.bf16.msra.mxu0 %v4630
        %4868 = vmatprep.subr.bf16.mxu0 %v4635
        %4869 = vmatpush1.bf16.msra.mxu0 %v4634
        %4870 = vmatprep.subr.bf16.mxu0 %v4639
        %4871 = vmatpush1.bf16.msra.mxu0 %v4638
        %4872 = vmatprep.subr.bf16.mxu0 %v4643
        %4873 = vmatpush1.bf16.msra.mxu0 %v4642
        %4874 = vmatprep.subr.bf16.mxu0 %v4647
        %4875 = vmatpush1.bf16.msra.mxu0 %v4646
        %4876 = vmatprep.subr.bf16.mxu0 %v4651
        %4877 = vmatpush1.bf16.msra.mxu0 %v4650
        %4878 = vmatprep.mubr.bf16.mxu0 %v4052
        %4879 = vmatmul.mubr.bf16.gmra.mrb[0].mxu0 %v4051
        %v4880 = vpop.f32.mrb[0].mxu0
        %v4881 = vadd.f32 %v4189, %v4880
        %v4882 = vpop.f32.mrb[0].mxu0
        %v4883 = vadd.f32 %v4193, %v4882
        %v4884 = vpop.f32.mrb[0].mxu0
        %v4885 = vpop.f32.mrb[0].mxu0
        %4886 = vdwg.mxu0
        %4887 = vmatprep.subr.bf16.mxu0 %v4655
        %4888 = vmatpush1.bf16.msra.mxu0 %v4654
        %4889 = vmatprep.subr.bf16.mxu0 %v4659
        %4890 = vmatpush1.bf16.msra.mxu0 %v4658
        %4891 = vmatprep.subr.bf16.mxu0 %v4663
        %4892 = vmatpush1.bf16.msra.mxu0 %v4662
        %4893 = vmatprep.subr.bf16.mxu0 %v4667
        %4894 = vmatpush1.bf16.msra.mxu0 %v4666
        %4895 = vmatprep.subr.bf16.mxu0 %v4671
        %4896 = vmatpush1.bf16.msra.mxu0 %v4670
        %4897 = vmatprep.subr.bf16.mxu0 %v4675
        %4898 = vmatpush1.bf16.msra.mxu0 %v4674
        %4899 = vmatprep.subr.bf16.mxu0 %v4679
        %4900 = vmatpush1.bf16.msra.mxu0 %v4678
        %4901 = vmatprep.subr.bf16.mxu0 %v4683
        %4902 = vmatpush1.bf16.msra.mxu0 %v4682
        %4903 = vmatprep.subr.bf16.mxu0 %v4687
        %4904 = vmatpush1.bf16.msra.mxu0 %v4686
        %4905 = vmatprep.subr.bf16.mxu0 %v4691
        %4906 = vmatpush1.bf16.msra.mxu0 %v4690
        %4907 = vmatprep.subr.bf16.mxu0 %v4695
        %4908 = vmatpush1.bf16.msra.mxu0 %v4694
        %4909 = vmatprep.subr.bf16.mxu0 %v4699
        %4910 = vmatpush1.bf16.msra.mxu0 %v4698
        %4911 = vmatprep.subr.bf16.mxu0 %v4703
        %4912 = vmatpush1.bf16.msra.mxu0 %v4702
        %4913 = vmatprep.subr.bf16.mxu0 %v4707
        %4914 = vmatpush1.bf16.msra.mxu0 %v4706
        %4915 = vmatprep.subr.bf16.mxu0 %v4711
        %4916 = vmatpush1.bf16.msra.mxu0 %v4710
        %4917 = vmatprep.subr.bf16.mxu0 %v4715
        %4918 = vmatpush1.bf16.msra.mxu0 %v4714
        %4919 = vmatprep.mubr.bf16.mxu0 %v4054
        %4920 = vmatmul.mubr.bf16.gmra.mrb[0].mxu0 %v4053
        %v4921 = vpop.f32.mrb[0].mxu0
        %v4922 = vadd.f32 %v4881, %v4921
        %v4923 = vpop.f32.mrb[0].mxu0
        %v4924 = vadd.f32 %v4883, %v4923
        %v4925 = vpop.f32.mrb[0].mxu0
        %v4926 = vpop.f32.mrb[0].mxu0
        %4927 = vdwg.mxu0
        %4928 = vmatprep.subr.bf16.mxu0 %v4593
        %4929 = vmatpush1.bf16.msra.mxu0 %v4592
        %4930 = vmatprep.subr.bf16.mxu0 %v4597
        %4931 = vmatpush1.bf16.msra.mxu0 %v4596
        %4932 = vmatprep.subr.bf16.mxu0 %v4601
        %4933 = vmatpush1.bf16.msra.mxu0 %v4600
        %4934 = vmatprep.subr.bf16.mxu0 %v4605
        %4935 = vmatpush1.bf16.msra.mxu0 %v4604
        %4936 = vmatprep.subr.bf16.mxu0 %v4609
        %4937 = vmatpush1.bf16.msra.mxu0 %v4608
        %4938 = vmatprep.subr.bf16.mxu0 %v4613
        %4939 = vmatpush1.bf16.msra.mxu0 %v4612
        %4940 = vmatprep.subr.bf16.mxu0 %v4617
        %4941 = vmatpush1.bf16.msra.mxu0 %v4616
        %4942 = vmatprep.subr.bf16.mxu0 %v4621
        %4943 = vmatpush1.bf16.msra.mxu0 %v4620
        %4944 = vmatprep.subr.bf16.mxu0 %v4625
        %4945 = vmatpush1.bf16.msra.mxu0 %v4624
        %4946 = vmatprep.subr.bf16.mxu0 %v4629
        %4947 = vmatpush1.bf16.msra.mxu0 %v4628
        %4948 = vmatprep.subr.bf16.mxu0 %v4633
        %4949 = vmatpush1.bf16.msra.mxu0 %v4632
        %4950 = vmatprep.subr.bf16.mxu0 %v4637
        %4951 = vmatpush1.bf16.msra.mxu0 %v4636
        %4952 = vmatprep.subr.bf16.mxu0 %v4641
        %4953 = vmatpush1.bf16.msra.mxu0 %v4640
        %4954 = vmatprep.subr.bf16.mxu0 %v4645
        %4955 = vmatpush1.bf16.msra.mxu0 %v4644
        %4956 = vmatprep.subr.bf16.mxu0 %v4649
        %4957 = vmatpush1.bf16.msra.mxu0 %v4648
        %4958 = vmatprep.subr.bf16.mxu0 %v4653
        %4959 = vmatpush1.bf16.msra.mxu0 %v4652
        %4960 = vmatprep.mubr.bf16.mxu0 %v4052
        %4961 = vmatmul.mubr.bf16.gmra.mrb[0].mxu0 %v4051
        %v4962 = vpop.f32.mrb[0].mxu0
        %v4963 = vadd.f32 %v4197, %v4962
        %v4964 = vpop.f32.mrb[0].mxu0
        %v4965 = vadd.f32 %v4201, %v4964
        %v4966 = vpop.f32.mrb[0].mxu0
        %v4967 = vpop.f32.mrb[0].mxu0
        %4968 = vdwg.mxu0
        %4969 = vmatprep.subr.bf16.mxu0 %v4657
        %4970 = vmatpush1.bf16.msra.mxu0 %v4656
        %4971 = vmatprep.subr.bf16.mxu0 %v4661
        %4972 = vmatpush1.bf16.msra.mxu0 %v4660
        %4973 = vmatprep.subr.bf16.mxu0 %v4665
        %4974 = vmatpush1.bf16.msra.mxu0 %v4664
        %4975 = vmatprep.subr.bf16.mxu0 %v4669
        %4976 = vmatpush1.bf16.msra.mxu0 %v4668
        %4977 = vmatprep.subr.bf16.mxu0 %v4673
        %4978 = vmatpush1.bf16.msra.mxu0 %v4672
        %4979 = vmatprep.subr.bf16.mxu0 %v4677
        %4980 = vmatpush1.bf16.msra.mxu0 %v4676
        %4981 = vmatprep.subr.bf16.mxu0 %v4681
        %4982 = vmatpush1.bf16.msra.mxu0 %v4680
        %4983 = vmatprep.subr.bf16.mxu0 %v4685
        %4984 = vmatpush1.bf16.msra.mxu0 %v4684
        %4985 = vmatprep.subr.bf16.mxu0 %v4689
        %4986 = vmatpush1.bf16.msra.mxu0 %v4688
        %4987 = vmatprep.subr.bf16.mxu0 %v4693
        %4988 = vmatpush1.bf16.msra.mxu0 %v4692
        %4989 = vmatprep.subr.bf16.mxu0 %v4697
        %4990 = vmatpush1.bf16.msra.mxu0 %v4696
        %4991 = vmatprep.subr.bf16.mxu0 %v4701
        %4992 = vmatpush1.bf16.msra.mxu0 %v4700
        %4993 = vmatprep.subr.bf16.mxu0 %v4705
        %4994 = vmatpush1.bf16.msra.mxu0 %v4704
        %4995 = vmatprep.subr.bf16.mxu0 %v4709
        %4996 = vmatpush1.bf16.msra.mxu0 %v4708
        %4997 = vmatprep.subr.bf16.mxu0 %v4713
        %4998 = vmatpush1.bf16.msra.mxu0 %v4712
        %4999 = vmatprep.subr.bf16.mxu0 %v4717
        %5000 = vmatpush1.bf16.msra.mxu0 %v4716
        %5001 = vmatprep.mubr.bf16.mxu0 %v4054
        %5002 = vmatmul.mubr.bf16.gmra.mrb[0].mxu0 %v4053
        %v5003 = vpop.f32.mrb[0].mxu0
        %v5004 = vadd.f32 %v4963, %v5003
        %v5005 = vpop.f32.mrb[0].mxu0
        %v5006 = vadd.f32 %v4965, %v5005
        %v5007 = vpop.f32.mrb[0].mxu0
        %v5008 = vpop.f32.mrb[0].mxu0
        %5009 = vdwg.mxu0
        %v5010 = vmax.f32 %v4922, 0.0
        %v5011 = vmax.f32 %v4924, 0.0
        %v5012 = vmax.f32 %v5004, 0.0
        %v5013 = vmax.f32 %v5006, 0.0
        %v5014 = vpack.c.bf16 %v5010, %v5010
        %v5015 = vpack.c.bf16 %v5011, %v5011
        %v5016 = vpack.c.bf16 %v5012, %v5012
        %v5017 = vpack.c.bf16 %v5013, %v5013
        %v5018 = vld [vmem:[%s195 + $0x400] sm:$0xff]
        %v5019 = vld [vmem:[%s195 + $0x408] sm:$0xff]
        %v5020 = vld [vmem:[%s195 + $0x410] sm:$0xff]
        %v5021 = vld [vmem:[%s195 + $0x418] sm:$0xff]
        %v5022 = vld [vmem:[%s195 + $0x420] sm:$0xff]
        %v5023 = vld [vmem:[%s195 + $0x428] sm:$0xff]
        %v5024 = vld [vmem:[%s195 + $0x430] sm:$0xff]
        %v5025 = vld [vmem:[%s195 + $0x438] sm:$0xff]
        %v5026 = vld [vmem:[%s195 + $0x440] sm:$0xff]
        %v5027 = vld [vmem:[%s195 + $0x448] sm:$0xff]
        %v5028 = vld [vmem:[%s195 + $0x450] sm:$0xff]
        %v5029 = vld [vmem:[%s195 + $0x458] sm:$0xff]
        %v5030 = vld [vmem:[%s195 + $0x460] sm:$0xff]
        %v5031 = vld [vmem:[%s195 + $0x468] sm:$0xff]
        %v5032 = vld [vmem:[%s195 + $0x470] sm:$0xff]
        %v5033 = vld [vmem:[%s195 + $0x478] sm:$0xff]
        %v5034 = vld [vmem:[%s195 + $0x480] sm:$0xff]
        %v5035 = vld [vmem:[%s195 + $0x488] sm:$0xff]
        %v5036 = vld [vmem:[%s195 + $0x490] sm:$0xff]
        %v5037 = vld [vmem:[%s195 + $0x498] sm:$0xff]
        %v5038 = vld [vmem:[%s195 + $0x4a0] sm:$0xff]
        %v5039 = vld [vmem:[%s195 + $0x4a8] sm:$0xff]
        %v5040 = vld [vmem:[%s195 + $0x4b0] sm:$0xff]
        %v5041 = vld [vmem:[%s195 + $0x4b8] sm:$0xff]
        %v5042 = vld [vmem:[%s195 + $0x4c0] sm:$0xff]
        %v5043 = vld [vmem:[%s195 + $0x4c8] sm:$0xff]
        %v5044 = vld [vmem:[%s195 + $0x4d0] sm:$0xff]
        %v5045 = vld [vmem:[%s195 + $0x4d8] sm:$0xff]
        %v5046 = vld [vmem:[%s195 + $0x4e0] sm:$0xff]
        %v5047 = vld [vmem:[%s195 + $0x4e8] sm:$0xff]
        %v5048 = vld [vmem:[%s195 + $0x4f0] sm:$0xff]
        %v5049 = vld [vmem:[%s195 + $0x4f8] sm:$0xff]
        %v5050 = vld [vmem:[%s195 + $0x500] sm:$0xff]
        %v5051 = vld [vmem:[%s195 + $0x508] sm:$0xff]
        %v5052 = vld [vmem:[%s195 + $0x510] sm:$0xff]
        %v5053 = vld [vmem:[%s195 + $0x518] sm:$0xff]
        %v5054 = vld [vmem:[%s195 + $0x520] sm:$0xff]
        %v5055 = vld [vmem:[%s195 + $0x528] sm:$0xff]
        %v5056 = vld [vmem:[%s195 + $0x530] sm:$0xff]
        %v5057 = vld [vmem:[%s195 + $0x538] sm:$0xff]
        %v5058 = vld [vmem:[%s195 + $0x540] sm:$0xff]
        %v5059 = vld [vmem:[%s195 + $0x548] sm:$0xff]
        %v5060 = vld [vmem:[%s195 + $0x550] sm:$0xff]
        %v5061 = vld [vmem:[%s195 + $0x558] sm:$0xff]
        %v5062 = vld [vmem:[%s195 + $0x560] sm:$0xff]
        %v5063 = vld [vmem:[%s195 + $0x568] sm:$0xff]
        %v5064 = vld [vmem:[%s195 + $0x570] sm:$0xff]
        %v5065 = vld [vmem:[%s195 + $0x578] sm:$0xff]
        %v5066 = vld [vmem:[%s195 + $0x580] sm:$0xff]
        %v5067 = vld [vmem:[%s195 + $0x588] sm:$0xff]
        %v5068 = vld [vmem:[%s195 + $0x590] sm:$0xff]
        %v5069 = vld [vmem:[%s195 + $0x598] sm:$0xff]
        %v5070 = vld [vmem:[%s195 + $0x5a0] sm:$0xff]
        %v5071 = vld [vmem:[%s195 + $0x5a8] sm:$0xff]
        %v5072 = vld [vmem:[%s195 + $0x5b0] sm:$0xff]
        %v5073 = vld [vmem:[%s195 + $0x5b8] sm:$0xff]
        %v5074 = vld [vmem:[%s195 + $0x5c0] sm:$0xff]
        %v5075 = vld [vmem:[%s195 + $0x5c8] sm:$0xff]
        %v5076 = vld [vmem:[%s195 + $0x5d0] sm:$0xff]
        %v5077 = vld [vmem:[%s195 + $0x5d8] sm:$0xff]
        %v5078 = vld [vmem:[%s195 + $0x5e0] sm:$0xff]
        %v5079 = vld [vmem:[%s195 + $0x5e8] sm:$0xff]
        %v5080 = vld [vmem:[%s195 + $0x5f0] sm:$0xff]
        %v5081 = vld [vmem:[%s195 + $0x5f8] sm:$0xff]
        %v5082 = vld [vmem:[%s195 + $0x600] sm:$0xff]
        %v5083 = vld [vmem:[%s195 + $0x608] sm:$0xff]
        %v5084 = vld [vmem:[%s195 + $0x610] sm:$0xff]
        %v5085 = vld [vmem:[%s195 + $0x618] sm:$0xff]
        %v5086 = vld [vmem:[%s195 + $0x620] sm:$0xff]
        %v5087 = vld [vmem:[%s195 + $0x628] sm:$0xff]
        %v5088 = vld [vmem:[%s195 + $0x630] sm:$0xff]
        %v5089 = vld [vmem:[%s195 + $0x638] sm:$0xff]
        %v5090 = vld [vmem:[%s195 + $0x640] sm:$0xff]
        %v5091 = vld [vmem:[%s195 + $0x648] sm:$0xff]
        %v5092 = vld [vmem:[%s195 + $0x650] sm:$0xff]
        %v5093 = vld [vmem:[%s195 + $0x658] sm:$0xff]
        %v5094 = vld [vmem:[%s195 + $0x660] sm:$0xff]
        %v5095 = vld [vmem:[%s195 + $0x668] sm:$0xff]
        %v5096 = vld [vmem:[%s195 + $0x670] sm:$0xff]
        %v5097 = vld [vmem:[%s195 + $0x678] sm:$0xff]
        %v5098 = vld [vmem:[%s195 + $0x680] sm:$0xff]
        %v5099 = vld [vmem:[%s195 + $0x688] sm:$0xff]
        %v5100 = vld [vmem:[%s195 + $0x690] sm:$0xff]
        %v5101 = vld [vmem:[%s195 + $0x698] sm:$0xff]
        %v5102 = vld [vmem:[%s195 + $0x6a0] sm:$0xff]
        %v5103 = vld [vmem:[%s195 + $0x6a8] sm:$0xff]
        %v5104 = vld [vmem:[%s195 + $0x6b0] sm:$0xff]
        %v5105 = vld [vmem:[%s195 + $0x6b8] sm:$0xff]
        %v5106 = vld [vmem:[%s195 + $0x6c0] sm:$0xff]
        %v5107 = vld [vmem:[%s195 + $0x6c8] sm:$0xff]
        %v5108 = vld [vmem:[%s195 + $0x6d0] sm:$0xff]
        %v5109 = vld [vmem:[%s195 + $0x6d8] sm:$0xff]
        %v5110 = vld [vmem:[%s195 + $0x6e0] sm:$0xff]
        %v5111 = vld [vmem:[%s195 + $0x6e8] sm:$0xff]
        %v5112 = vld [vmem:[%s195 + $0x6f0] sm:$0xff]
        %v5113 = vld [vmem:[%s195 + $0x6f8] sm:$0xff]
        %v5114 = vld [vmem:[%s195 + $0x700] sm:$0xff]
        %v5115 = vld [vmem:[%s195 + $0x708] sm:$0xff]
        %v5116 = vld [vmem:[%s195 + $0x710] sm:$0xff]
        %v5117 = vld [vmem:[%s195 + $0x718] sm:$0xff]
        %v5118 = vld [vmem:[%s195 + $0x720] sm:$0xff]
        %v5119 = vld [vmem:[%s195 + $0x728] sm:$0xff]
        %v5120 = vld [vmem:[%s195 + $0x730] sm:$0xff]
        %v5121 = vld [vmem:[%s195 + $0x738] sm:$0xff]
        %v5122 = vld [vmem:[%s195 + $0x740] sm:$0xff]
        %v5123 = vld [vmem:[%s195 + $0x748] sm:$0xff]
        %v5124 = vld [vmem:[%s195 + $0x750] sm:$0xff]
        %v5125 = vld [vmem:[%s195 + $0x758] sm:$0xff]
        %v5126 = vld [vmem:[%s195 + $0x760] sm:$0xff]
        %v5127 = vld [vmem:[%s195 + $0x768] sm:$0xff]
        %v5128 = vld [vmem:[%s195 + $0x770] sm:$0xff]
        %v5129 = vld [vmem:[%s195 + $0x778] sm:$0xff]
        %v5130 = vld [vmem:[%s195 + $0x780] sm:$0xff]
        %v5131 = vld [vmem:[%s195 + $0x788] sm:$0xff]
        %v5132 = vld [vmem:[%s195 + $0x790] sm:$0xff]
        %v5133 = vld [vmem:[%s195 + $0x798] sm:$0xff]
        %v5134 = vld [vmem:[%s195 + $0x7a0] sm:$0xff]
        %v5135 = vld [vmem:[%s195 + $0x7a8] sm:$0xff]
        %v5136 = vld [vmem:[%s195 + $0x7b0] sm:$0xff]
        %v5137 = vld [vmem:[%s195 + $0x7b8] sm:$0xff]
        %v5138 = vld [vmem:[%s195 + $0x7c0] sm:$0xff]
        %v5139 = vld [vmem:[%s195 + $0x7c8] sm:$0xff]
        %v5140 = vld [vmem:[%s195 + $0x7d0] sm:$0xff]
        %v5141 = vld [vmem:[%s195 + $0x7d8] sm:$0xff]
        %v5142 = vld [vmem:[%s195 + $0x7e0] sm:$0xff]
        %v5143 = vld [vmem:[%s195 + $0x7e8] sm:$0xff]
        %v5144 = vld [vmem:[%s195 + $0x7f0] sm:$0xff]
        %v5145 = vld [vmem:[%s195 + $0x7f8] sm:$0xff]
        %s5146 = scalar_lea.vmem %s3, 8
        %v5147 = vld [vmem:[%s5146] sm:$0xf]
        %v5149 = vlaneseq
        %v5150 = vshrl.u32 %v5149, 7
        %v5151 = vsub.s32 0, %v5150
        %v5152 = vrot.slane %v5147, %v5151
        %v5153 = vlaneseq
        %v5154 = vshrl.u32 %v5153, 7
        %v5155 = vsub.s32 1, %v5154
        %v5156 = vrot.slane %v5147, %v5155
        %v5157 = vlaneseq
        %v5158 = vshrl.u32 %v5157, 7
        %v5159 = vsub.s32 2, %v5158
        %v5160 = vrot.slane %v5147, %v5159
        %v5161 = vlaneseq
        %v5162 = vshrl.u32 %v5161, 7
        %v5163 = vsub.s32 3, %v5162
        %v5164 = vrot.slane %v5147, %v5163
        %v5297 = vunpack.c.l.b16 %v5018
        %v5298 = vunpack.c.h.b16 %v5018
        %v5299 = vunpack.c.l.b16 %v5019
        %v5300 = vunpack.c.h.b16 %v5019
        %v5301 = vunpack.c.l.b16 %v5020
        %v5302 = vunpack.c.h.b16 %v5020
        %v5303 = vunpack.c.l.b16 %v5021
        %v5304 = vunpack.c.h.b16 %v5021
        %v5305 = vunpack.c.l.b16 %v5022
        %v5306 = vunpack.c.h.b16 %v5022
        %v5307 = vunpack.c.l.b16 %v5023
        %v5308 = vunpack.c.h.b16 %v5023
        %v5309 = vunpack.c.l.b16 %v5024
        %v5310 = vunpack.c.h.b16 %v5024
        %v5311 = vunpack.c.l.b16 %v5025
        %v5312 = vunpack.c.h.b16 %v5025
        %v5313 = vunpack.c.l.b16 %v5026
        %v5314 = vunpack.c.h.b16 %v5026
        %v5315 = vunpack.c.l.b16 %v5027
        %v5316 = vunpack.c.h.b16 %v5027
        %v5317 = vunpack.c.l.b16 %v5028
        %v5318 = vunpack.c.h.b16 %v5028
        %v5319 = vunpack.c.l.b16 %v5029
        %v5320 = vunpack.c.h.b16 %v5029
        %v5321 = vunpack.c.l.b16 %v5030
        %v5322 = vunpack.c.h.b16 %v5030
        %v5323 = vunpack.c.l.b16 %v5031
        %v5324 = vunpack.c.h.b16 %v5031
        %v5325 = vunpack.c.l.b16 %v5032
        %v5326 = vunpack.c.h.b16 %v5032
        %v5327 = vunpack.c.l.b16 %v5033
        %v5328 = vunpack.c.h.b16 %v5033
        %v5329 = vunpack.c.l.b16 %v5034
        %v5330 = vunpack.c.h.b16 %v5034
        %v5331 = vunpack.c.l.b16 %v5035
        %v5332 = vunpack.c.h.b16 %v5035
        %v5333 = vunpack.c.l.b16 %v5036
        %v5334 = vunpack.c.h.b16 %v5036
        %v5335 = vunpack.c.l.b16 %v5037
        %v5336 = vunpack.c.h.b16 %v5037
        %v5337 = vunpack.c.l.b16 %v5038
        %v5338 = vunpack.c.h.b16 %v5038
        %v5339 = vunpack.c.l.b16 %v5039
        %v5340 = vunpack.c.h.b16 %v5039
        %v5341 = vunpack.c.l.b16 %v5040
        %v5342 = vunpack.c.h.b16 %v5040
        %v5343 = vunpack.c.l.b16 %v5041
        %v5344 = vunpack.c.h.b16 %v5041
        %v5345 = vunpack.c.l.b16 %v5042
        %v5346 = vunpack.c.h.b16 %v5042
        %v5347 = vunpack.c.l.b16 %v5043
        %v5348 = vunpack.c.h.b16 %v5043
        %v5349 = vunpack.c.l.b16 %v5044
        %v5350 = vunpack.c.h.b16 %v5044
        %v5351 = vunpack.c.l.b16 %v5045
        %v5352 = vunpack.c.h.b16 %v5045
        %v5353 = vunpack.c.l.b16 %v5046
        %v5354 = vunpack.c.h.b16 %v5046
        %v5355 = vunpack.c.l.b16 %v5047
        %v5356 = vunpack.c.h.b16 %v5047
        %v5357 = vunpack.c.l.b16 %v5048
        %v5358 = vunpack.c.h.b16 %v5048
        %v5359 = vunpack.c.l.b16 %v5049
        %v5360 = vunpack.c.h.b16 %v5049
        %v5361 = vunpack.c.l.b16 %v5050
        %v5362 = vunpack.c.h.b16 %v5050
        %v5363 = vunpack.c.l.b16 %v5051
        %v5364 = vunpack.c.h.b16 %v5051
        %v5365 = vunpack.c.l.b16 %v5052
        %v5366 = vunpack.c.h.b16 %v5052
        %v5367 = vunpack.c.l.b16 %v5053
        %v5368 = vunpack.c.h.b16 %v5053
        %v5369 = vunpack.c.l.b16 %v5054
        %v5370 = vunpack.c.h.b16 %v5054
        %v5371 = vunpack.c.l.b16 %v5055
        %v5372 = vunpack.c.h.b16 %v5055
        %v5373 = vunpack.c.l.b16 %v5056
        %v5374 = vunpack.c.h.b16 %v5056
        %v5375 = vunpack.c.l.b16 %v5057
        %v5376 = vunpack.c.h.b16 %v5057
        %v5377 = vunpack.c.l.b16 %v5058
        %v5378 = vunpack.c.h.b16 %v5058
        %v5379 = vunpack.c.l.b16 %v5059
        %v5380 = vunpack.c.h.b16 %v5059
        %v5381 = vunpack.c.l.b16 %v5060
        %v5382 = vunpack.c.h.b16 %v5060
        %v5383 = vunpack.c.l.b16 %v5061
        %v5384 = vunpack.c.h.b16 %v5061
        %v5385 = vunpack.c.l.b16 %v5062
        %v5386 = vunpack.c.h.b16 %v5062
        %v5387 = vunpack.c.l.b16 %v5063
        %v5388 = vunpack.c.h.b16 %v5063
        %v5389 = vunpack.c.l.b16 %v5064
        %v5390 = vunpack.c.h.b16 %v5064
        %v5391 = vunpack.c.l.b16 %v5065
        %v5392 = vunpack.c.h.b16 %v5065
        %v5393 = vunpack.c.l.b16 %v5066
        %v5394 = vunpack.c.h.b16 %v5066
        %v5395 = vunpack.c.l.b16 %v5067
        %v5396 = vunpack.c.h.b16 %v5067
        %v5397 = vunpack.c.l.b16 %v5068
        %v5398 = vunpack.c.h.b16 %v5068
        %v5399 = vunpack.c.l.b16 %v5069
        %v5400 = vunpack.c.h.b16 %v5069
        %v5401 = vunpack.c.l.b16 %v5070
        %v5402 = vunpack.c.h.b16 %v5070
        %v5403 = vunpack.c.l.b16 %v5071
        %v5404 = vunpack.c.h.b16 %v5071
        %v5405 = vunpack.c.l.b16 %v5072
        %v5406 = vunpack.c.h.b16 %v5072
        %v5407 = vunpack.c.l.b16 %v5073
        %v5408 = vunpack.c.h.b16 %v5073
        %v5409 = vunpack.c.l.b16 %v5074
        %v5410 = vunpack.c.h.b16 %v5074
        %v5411 = vunpack.c.l.b16 %v5075
        %v5412 = vunpack.c.h.b16 %v5075
        %v5413 = vunpack.c.l.b16 %v5076
        %v5414 = vunpack.c.h.b16 %v5076
        %v5415 = vunpack.c.l.b16 %v5077
        %v5416 = vunpack.c.h.b16 %v5077
        %v5417 = vunpack.c.l.b16 %v5078
        %v5418 = vunpack.c.h.b16 %v5078
        %v5419 = vunpack.c.l.b16 %v5079
        %v5420 = vunpack.c.h.b16 %v5079
        %v5421 = vunpack.c.l.b16 %v5080
        %v5422 = vunpack.c.h.b16 %v5080
        %v5423 = vunpack.c.l.b16 %v5081
        %v5424 = vunpack.c.h.b16 %v5081
        %v5425 = vunpack.c.l.b16 %v5082
        %v5426 = vunpack.c.h.b16 %v5082
        %v5427 = vunpack.c.l.b16 %v5083
        %v5428 = vunpack.c.h.b16 %v5083
        %v5429 = vunpack.c.l.b16 %v5084
        %v5430 = vunpack.c.h.b16 %v5084
        %v5431 = vunpack.c.l.b16 %v5085
        %v5432 = vunpack.c.h.b16 %v5085
        %v5433 = vunpack.c.l.b16 %v5086
        %v5434 = vunpack.c.h.b16 %v5086
        %v5435 = vunpack.c.l.b16 %v5087
        %v5436 = vunpack.c.h.b16 %v5087
        %v5437 = vunpack.c.l.b16 %v5088
        %v5438 = vunpack.c.h.b16 %v5088
        %v5439 = vunpack.c.l.b16 %v5089
        %v5440 = vunpack.c.h.b16 %v5089
        %v5441 = vunpack.c.l.b16 %v5090
        %v5442 = vunpack.c.h.b16 %v5090
        %v5443 = vunpack.c.l.b16 %v5091
        %v5444 = vunpack.c.h.b16 %v5091
        %v5445 = vunpack.c.l.b16 %v5092
        %v5446 = vunpack.c.h.b16 %v5092
        %v5447 = vunpack.c.l.b16 %v5093
        %v5448 = vunpack.c.h.b16 %v5093
        %v5449 = vunpack.c.l.b16 %v5094
        %v5450 = vunpack.c.h.b16 %v5094
        %v5451 = vunpack.c.l.b16 %v5095
        %v5452 = vunpack.c.h.b16 %v5095
        %v5453 = vunpack.c.l.b16 %v5096
        %v5454 = vunpack.c.h.b16 %v5096
        %v5455 = vunpack.c.l.b16 %v5097
        %v5456 = vunpack.c.h.b16 %v5097
        %v5457 = vunpack.c.l.b16 %v5098
        %v5458 = vunpack.c.h.b16 %v5098
        %v5459 = vunpack.c.l.b16 %v5099
        %v5460 = vunpack.c.h.b16 %v5099
        %v5461 = vunpack.c.l.b16 %v5100
        %v5462 = vunpack.c.h.b16 %v5100
        %v5463 = vunpack.c.l.b16 %v5101
        %v5464 = vunpack.c.h.b16 %v5101
        %v5465 = vunpack.c.l.b16 %v5102
        %v5466 = vunpack.c.h.b16 %v5102
        %v5467 = vunpack.c.l.b16 %v5103
        %v5468 = vunpack.c.h.b16 %v5103
        %v5469 = vunpack.c.l.b16 %v5104
        %v5470 = vunpack.c.h.b16 %v5104
        %v5471 = vunpack.c.l.b16 %v5105
        %v5472 = vunpack.c.h.b16 %v5105
        %v5473 = vunpack.c.l.b16 %v5106
        %v5474 = vunpack.c.h.b16 %v5106
        %v5475 = vunpack.c.l.b16 %v5107
        %v5476 = vunpack.c.h.b16 %v5107
        %v5477 = vunpack.c.l.b16 %v5108
        %v5478 = vunpack.c.h.b16 %v5108
        %v5479 = vunpack.c.l.b16 %v5109
        %v5480 = vunpack.c.h.b16 %v5109
        %v5481 = vunpack.c.l.b16 %v5110
        %v5482 = vunpack.c.h.b16 %v5110
        %v5483 = vunpack.c.l.b16 %v5111
        %v5484 = vunpack.c.h.b16 %v5111
        %v5485 = vunpack.c.l.b16 %v5112
        %v5486 = vunpack.c.h.b16 %v5112
        %v5487 = vunpack.c.l.b16 %v5113
        %v5488 = vunpack.c.h.b16 %v5113
        %v5489 = vunpack.c.l.b16 %v5114
        %v5490 = vunpack.c.h.b16 %v5114
        %v5491 = vunpack.c.l.b16 %v5115
        %v5492 = vunpack.c.h.b16 %v5115
        %v5493 = vunpack.c.l.b16 %v5116
        %v5494 = vunpack.c.h.b16 %v5116
        %v5495 = vunpack.c.l.b16 %v5117
        %v5496 = vunpack.c.h.b16 %v5117
        %v5497 = vunpack.c.l.b16 %v5118
        %v5498 = vunpack.c.h.b16 %v5118
        %v5499 = vunpack.c.l.b16 %v5119
        %v5500 = vunpack.c.h.b16 %v5119
        %v5501 = vunpack.c.l.b16 %v5120
        %v5502 = vunpack.c.h.b16 %v5120
        %v5503 = vunpack.c.l.b16 %v5121
        %v5504 = vunpack.c.h.b16 %v5121
        %v5505 = vunpack.c.l.b16 %v5122
        %v5506 = vunpack.c.h.b16 %v5122
        %v5507 = vunpack.c.l.b16 %v5123
        %v5508 = vunpack.c.h.b16 %v5123
        %v5509 = vunpack.c.l.b16 %v5124
        %v5510 = vunpack.c.h.b16 %v5124
        %v5511 = vunpack.c.l.b16 %v5125
        %v5512 = vunpack.c.h.b16 %v5125
        %v5513 = vunpack.c.l.b16 %v5126
        %v5514 = vunpack.c.h.b16 %v5126
        %v5515 = vunpack.c.l.b16 %v5127
        %v5516 = vunpack.c.h.b16 %v5127
        %v5517 = vunpack.c.l.b16 %v5128
        %v5518 = vunpack.c.h.b16 %v5128
        %v5519 = vunpack.c.l.b16 %v5129
        %v5520 = vunpack.c.h.b16 %v5129
        %v5521 = vunpack.c.l.b16 %v5130
        %v5522 = vunpack.c.h.b16 %v5130
        %v5523 = vunpack.c.l.b16 %v5131
        %v5524 = vunpack.c.h.b16 %v5131
        %v5525 = vunpack.c.l.b16 %v5132
        %v5526 = vunpack.c.h.b16 %v5132
        %v5527 = vunpack.c.l.b16 %v5133
        %v5528 = vunpack.c.h.b16 %v5133
        %v5529 = vunpack.c.l.b16 %v5134
        %v5530 = vunpack.c.h.b16 %v5134
        %v5531 = vunpack.c.l.b16 %v5135
        %v5532 = vunpack.c.h.b16 %v5135
        %v5533 = vunpack.c.l.b16 %v5136
        %v5534 = vunpack.c.h.b16 %v5136
        %v5535 = vunpack.c.l.b16 %v5137
        %v5536 = vunpack.c.h.b16 %v5137
        %v5537 = vunpack.c.l.b16 %v5138
        %v5538 = vunpack.c.h.b16 %v5138
        %v5539 = vunpack.c.l.b16 %v5139
        %v5540 = vunpack.c.h.b16 %v5139
        %v5541 = vunpack.c.l.b16 %v5140
        %v5542 = vunpack.c.h.b16 %v5140
        %v5543 = vunpack.c.l.b16 %v5141
        %v5544 = vunpack.c.h.b16 %v5141
        %v5545 = vunpack.c.l.b16 %v5142
        %v5546 = vunpack.c.h.b16 %v5142
        %v5547 = vunpack.c.l.b16 %v5143
        %v5548 = vunpack.c.h.b16 %v5143
        %v5549 = vunpack.c.l.b16 %v5144
        %v5550 = vunpack.c.h.b16 %v5144
        %v5551 = vunpack.c.l.b16 %v5145
        %v5552 = vunpack.c.h.b16 %v5145
        %v5553 = vpack.c.b16 %v5301, %v5297
        %v5554 = vpack.c.b16 %v5302, %v5298
        %v5555 = vpack.c.b16 %v5303, %v5299
        %v5556 = vpack.c.b16 %v5304, %v5300
        %v5557 = vpack.c.b16 %v5309, %v5305
        %v5558 = vpack.c.b16 %v5310, %v5306
        %v5559 = vpack.c.b16 %v5311, %v5307
        %v5560 = vpack.c.b16 %v5312, %v5308
        %v5561 = vpack.c.b16 %v5317, %v5313
        %v5562 = vpack.c.b16 %v5318, %v5314
        %v5563 = vpack.c.b16 %v5319, %v5315
        %v5564 = vpack.c.b16 %v5320, %v5316
        %v5565 = vpack.c.b16 %v5325, %v5321
        %v5566 = vpack.c.b16 %v5326, %v5322
        %v5567 = vpack.c.b16 %v5327, %v5323
        %v5568 = vpack.c.b16 %v5328, %v5324
        %v5569 = vpack.c.b16 %v5333, %v5329
        %v5570 = vpack.c.b16 %v5334, %v5330
        %v5571 = vpack.c.b16 %v5335, %v5331
        %v5572 = vpack.c.b16 %v5336, %v5332
        %v5573 = vpack.c.b16 %v5341, %v5337
        %v5574 = vpack.c.b16 %v5342, %v5338
        %v5575 = vpack.c.b16 %v5343, %v5339
        %v5576 = vpack.c.b16 %v5344, %v5340
        %v5577 = vpack.c.b16 %v5349, %v5345
        %v5578 = vpack.c.b16 %v5350, %v5346
        %v5579 = vpack.c.b16 %v5351, %v5347
        %v5580 = vpack.c.b16 %v5352, %v5348
        %v5581 = vpack.c.b16 %v5357, %v5353
        %v5582 = vpack.c.b16 %v5358, %v5354
        %v5583 = vpack.c.b16 %v5359, %v5355
        %v5584 = vpack.c.b16 %v5360, %v5356
        %v5585 = vpack.c.b16 %v5365, %v5361
        %v5586 = vpack.c.b16 %v5366, %v5362
        %v5587 = vpack.c.b16 %v5367, %v5363
        %v5588 = vpack.c.b16 %v5368, %v5364
        %v5589 = vpack.c.b16 %v5373, %v5369
        %v5590 = vpack.c.b16 %v5374, %v5370
        %v5591 = vpack.c.b16 %v5375, %v5371
        %v5592 = vpack.c.b16 %v5376, %v5372
        %v5593 = vpack.c.b16 %v5381, %v5377
        %v5594 = vpack.c.b16 %v5382, %v5378
        %v5595 = vpack.c.b16 %v5383, %v5379
        %v5596 = vpack.c.b16 %v5384, %v5380
        %v5597 = vpack.c.b16 %v5389, %v5385
        %v5598 = vpack.c.b16 %v5390, %v5386
        %v5599 = vpack.c.b16 %v5391, %v5387
        %v5600 = vpack.c.b16 %v5392, %v5388
        %v5601 = vpack.c.b16 %v5397, %v5393
        %v5602 = vpack.c.b16 %v5398, %v5394
        %v5603 = vpack.c.b16 %v5399, %v5395
        %v5604 = vpack.c.b16 %v5400, %v5396
        %v5605 = vpack.c.b16 %v5405, %v5401
        %v5606 = vpack.c.b16 %v5406, %v5402
        %v5607 = vpack.c.b16 %v5407, %v5403
        %v5608 = vpack.c.b16 %v5408, %v5404
        %v5609 = vpack.c.b16 %v5413, %v5409
        %v5610 = vpack.c.b16 %v5414, %v5410
        %v5611 = vpack.c.b16 %v5415, %v5411
        %v5612 = vpack.c.b16 %v5416, %v5412
        %v5613 = vpack.c.b16 %v5421, %v5417
        %v5614 = vpack.c.b16 %v5422, %v5418
        %v5615 = vpack.c.b16 %v5423, %v5419
        %v5616 = vpack.c.b16 %v5424, %v5420
        %v5617 = vpack.c.b16 %v5429, %v5425
        %v5618 = vpack.c.b16 %v5430, %v5426
        %v5619 = vpack.c.b16 %v5431, %v5427
        %v5620 = vpack.c.b16 %v5432, %v5428
        %v5621 = vpack.c.b16 %v5437, %v5433
        %v5622 = vpack.c.b16 %v5438, %v5434
        %v5623 = vpack.c.b16 %v5439, %v5435
        %v5624 = vpack.c.b16 %v5440, %v5436
        %v5625 = vpack.c.b16 %v5445, %v5441
        %v5626 = vpack.c.b16 %v5446, %v5442
        %v5627 = vpack.c.b16 %v5447, %v5443
        %v5628 = vpack.c.b16 %v5448, %v5444
        %v5629 = vpack.c.b16 %v5453, %v5449
        %v5630 = vpack.c.b16 %v5454, %v5450
        %v5631 = vpack.c.b16 %v5455, %v5451
        %v5632 = vpack.c.b16 %v5456, %v5452
        %v5633 = vpack.c.b16 %v5461, %v5457
        %v5634 = vpack.c.b16 %v5462, %v5458
        %v5635 = vpack.c.b16 %v5463, %v5459
        %v5636 = vpack.c.b16 %v5464, %v5460
        %v5637 = vpack.c.b16 %v5469, %v5465
        %v5638 = vpack.c.b16 %v5470, %v5466
        %v5639 = vpack.c.b16 %v5471, %v5467
        %v5640 = vpack.c.b16 %v5472, %v5468
        %v5641 = vpack.c.b16 %v5477, %v5473
        %v5642 = vpack.c.b16 %v5478, %v5474
        %v5643 = vpack.c.b16 %v5479, %v5475
        %v5644 = vpack.c.b16 %v5480, %v5476
        %v5645 = vpack.c.b16 %v5485, %v5481
        %v5646 = vpack.c.b16 %v5486, %v5482
        %v5647 = vpack.c.b16 %v5487, %v5483
        %v5648 = vpack.c.b16 %v5488, %v5484
        %v5649 = vpack.c.b16 %v5493, %v5489
        %v5650 = vpack.c.b16 %v5494, %v5490
        %v5651 = vpack.c.b16 %v5495, %v5491
        %v5652 = vpack.c.b16 %v5496, %v5492
        %v5653 = vpack.c.b16 %v5501, %v5497
        %v5654 = vpack.c.b16 %v5502, %v5498
        %v5655 = vpack.c.b16 %v5503, %v5499
        %v5656 = vpack.c.b16 %v5504, %v5500
        %v5657 = vpack.c.b16 %v5509, %v5505
        %v5658 = vpack.c.b16 %v5510, %v5506
        %v5659 = vpack.c.b16 %v5511, %v5507
        %v5660 = vpack.c.b16 %v5512, %v5508
        %v5661 = vpack.c.b16 %v5517, %v5513
        %v5662 = vpack.c.b16 %v5518, %v5514
        %v5663 = vpack.c.b16 %v5519, %v5515
        %v5664 = vpack.c.b16 %v5520, %v5516
        %v5665 = vpack.c.b16 %v5525, %v5521
        %v5666 = vpack.c.b16 %v5526, %v5522
        %v5667 = vpack.c.b16 %v5527, %v5523
        %v5668 = vpack.c.b16 %v5528, %v5524
        %v5669 = vpack.c.b16 %v5533, %v5529
        %v5670 = vpack.c.b16 %v5534, %v5530
        %v5671 = vpack.c.b16 %v5535, %v5531
        %v5672 = vpack.c.b16 %v5536, %v5532
        %v5673 = vpack.c.b16 %v5541, %v5537
        %v5674 = vpack.c.b16 %v5542, %v5538
        %v5675 = vpack.c.b16 %v5543, %v5539
        %v5676 = vpack.c.b16 %v5544, %v5540
        %v5677 = vpack.c.b16 %v5549, %v5545
        %v5678 = vpack.c.b16 %v5550, %v5546
        %v5679 = vpack.c.b16 %v5551, %v5547
        %v5680 = vpack.c.b16 %v5552, %v5548
        %5809 = vmatprep.subr.bf16.mxu0 %v5554
        %5810 = vmatpush1.bf16.msra.mxu0 %v5553
        %5811 = vmatprep.subr.bf16.mxu0 %v5558
        %5812 = vmatpush1.bf16.msra.mxu0 %v5557
        %5813 = vmatprep.subr.bf16.mxu0 %v5562
        %5814 = vmatpush1.bf16.msra.mxu0 %v5561
        %5815 = vmatprep.subr.bf16.mxu0 %v5566
        %5816 = vmatpush1.bf16.msra.mxu0 %v5565
        %5817 = vmatprep.subr.bf16.mxu0 %v5570
        %5818 = vmatpush1.bf16.msra.mxu0 %v5569
        %5819 = vmatprep.subr.bf16.mxu0 %v5574
        %5820 = vmatpush1.bf16.msra.mxu0 %v5573
        %5821 = vmatprep.subr.bf16.mxu0 %v5578
        %5822 = vmatpush1.bf16.msra.mxu0 %v5577
        %5823 = vmatprep.subr.bf16.mxu0 %v5582
        %5824 = vmatpush1.bf16.msra.mxu0 %v5581
        %5825 = vmatprep.subr.bf16.mxu0 %v5586
        %5826 = vmatpush1.bf16.msra.mxu0 %v5585
        %5827 = vmatprep.subr.bf16.mxu0 %v5590
        %5828 = vmatpush1.bf16.msra.mxu0 %v5589
        %5829 = vmatprep.subr.bf16.mxu0 %v5594
        %5830 = vmatpush1.bf16.msra.mxu0 %v5593
        %5831 = vmatprep.subr.bf16.mxu0 %v5598
        %5832 = vmatpush1.bf16.msra.mxu0 %v5597
        %5833 = vmatprep.subr.bf16.mxu0 %v5602
        %5834 = vmatpush1.bf16.msra.mxu0 %v5601
        %5835 = vmatprep.subr.bf16.mxu0 %v5606
        %5836 = vmatpush1.bf16.msra.mxu0 %v5605
        %5837 = vmatprep.subr.bf16.mxu0 %v5610
        %5838 = vmatpush1.bf16.msra.mxu0 %v5609
        %5839 = vmatprep.subr.bf16.mxu0 %v5614
        %5840 = vmatpush1.bf16.msra.mxu0 %v5613
        %5841 = vmatprep.mubr.bf16.mxu0 %v5015
        %5842 = vmatmul.mubr.bf16.gmra.mrb[0].mxu0 %v5014
        %v5843 = vpop.f32.mrb[0].mxu0
        %v5844 = vadd.f32 %v5152, %v5843
        %v5845 = vpop.f32.mrb[0].mxu0
        %v5846 = vadd.f32 %v5156, %v5845
        %v5847 = vpop.f32.mrb[0].mxu0
        %v5848 = vpop.f32.mrb[0].mxu0
        %5849 = vdwg.mxu0
        %5850 = vmatprep.subr.bf16.mxu0 %v5618
        %5851 = vmatpush1.bf16.msra.mxu0 %v5617
        %5852 = vmatprep.subr.bf16.mxu0 %v5622
        %5853 = vmatpush1.bf16.msra.mxu0 %v5621
        %5854 = vmatprep.subr.bf16.mxu0 %v5626
        %5855 = vmatpush1.bf16.msra.mxu0 %v5625
        %5856 = vmatprep.subr.bf16.mxu0 %v5630
        %5857 = vmatpush1.bf16.msra.mxu0 %v5629
        %5858 = vmatprep.subr.bf16.mxu0 %v5634
        %5859 = vmatpush1.bf16.msra.mxu0 %v5633
        %5860 = vmatprep.subr.bf16.mxu0 %v5638
        %5861 = vmatpush1.bf16.msra.mxu0 %v5637
        %5862 = vmatprep.subr.bf16.mxu0 %v5642
        %5863 = vmatpush1.bf16.msra.mxu0 %v5641
        %5864 = vmatprep.subr.bf16.mxu0 %v5646
        %5865 = vmatpush1.bf16.msra.mxu0 %v5645
        %5866 = vmatprep.subr.bf16.mxu0 %v5650
        %5867 = vmatpush1.bf16.msra.mxu0 %v5649
        %5868 = vmatprep.subr.bf16.mxu0 %v5654
        %5869 = vmatpush1.bf16.msra.mxu0 %v5653
        %5870 = vmatprep.subr.bf16.mxu0 %v5658
        %5871 = vmatpush1.bf16.msra.mxu0 %v5657
        %5872 = vmatprep.subr.bf16.mxu0 %v5662
        %5873 = vmatpush1.bf16.msra.mxu0 %v5661
        %5874 = vmatprep.subr.bf16.mxu0 %v5666
        %5875 = vmatpush1.bf16.msra.mxu0 %v5665
        %5876 = vmatprep.subr.bf16.mxu0 %v5670
        %5877 = vmatpush1.bf16.msra.mxu0 %v5669
        %5878 = vmatprep.subr.bf16.mxu0 %v5674
        %5879 = vmatpush1.bf16.msra.mxu0 %v5673
        %5880 = vmatprep.subr.bf16.mxu0 %v5678
        %5881 = vmatpush1.bf16.msra.mxu0 %v5677
        %5882 = vmatprep.mubr.bf16.mxu0 %v5017
        %5883 = vmatmul.mubr.bf16.gmra.mrb[0].mxu0 %v5016
        %v5884 = vpop.f32.mrb[0].mxu0
        %v5885 = vadd.f32 %v5844, %v5884
        %v5886 = vpop.f32.mrb[0].mxu0
        %v5887 = vadd.f32 %v5846, %v5886
        %v5888 = vpop.f32.mrb[0].mxu0
        %v5889 = vpop.f32.mrb[0].mxu0
        %5890 = vdwg.mxu0
        %5891 = vmatprep.subr.bf16.mxu0 %v5556
        %5892 = vmatpush1.bf16.msra.mxu0 %v5555
        %5893 = vmatprep.subr.bf16.mxu0 %v5560
        %5894 = vmatpush1.bf16.msra.mxu0 %v5559
        %5895 = vmatprep.subr.bf16.mxu0 %v5564
        %5896 = vmatpush1.bf16.msra.mxu0 %v5563
        %5897 = vmatprep.subr.bf16.mxu0 %v5568
        %5898 = vmatpush1.bf16.msra.mxu0 %v5567
        %5899 = vmatprep.subr.bf16.mxu0 %v5572
        %5900 = vmatpush1.bf16.msra.mxu0 %v5571
        %5901 = vmatprep.subr.bf16.mxu0 %v5576
        %5902 = vmatpush1.bf16.msra.mxu0 %v5575
        %5903 = vmatprep.subr.bf16.mxu0 %v5580
        %5904 = vmatpush1.bf16.msra.mxu0 %v5579
        %5905 = vmatprep.subr.bf16.mxu0 %v5584
        %5906 = vmatpush1.bf16.msra.mxu0 %v5583
        %5907 = vmatprep.subr.bf16.mxu0 %v5588
        %5908 = vmatpush1.bf16.msra.mxu0 %v5587
        %5909 = vmatprep.subr.bf16.mxu0 %v5592
        %5910 = vmatpush1.bf16.msra.mxu0 %v5591
        %5911 = vmatprep.subr.bf16.mxu0 %v5596
        %5912 = vmatpush1.bf16.msra.mxu0 %v5595
        %5913 = vmatprep.subr.bf16.mxu0 %v5600
        %5914 = vmatpush1.bf16.msra.mxu0 %v5599
        %5915 = vmatprep.subr.bf16.mxu0 %v5604
        %5916 = vmatpush1.bf16.msra.mxu0 %v5603
        %5917 = vmatprep.subr.bf16.mxu0 %v5608
        %5918 = vmatpush1.bf16.msra.mxu0 %v5607
        %5919 = vmatprep.subr.bf16.mxu0 %v5612
        %5920 = vmatpush1.bf16.msra.mxu0 %v5611
        %5921 = vmatprep.subr.bf16.mxu0 %v5616
        %5922 = vmatpush1.bf16.msra.mxu0 %v5615
        %5923 = vmatprep.mubr.bf16.mxu0 %v5015
        %5924 = vmatmul.mubr.bf16.gmra.mrb[0].mxu0 %v5014
        %v5925 = vpop.f32.mrb[0].mxu0
        %v5926 = vadd.f32 %v5160, %v5925
        %v5927 = vpop.f32.mrb[0].mxu0
        %v5928 = vadd.f32 %v5164, %v5927
        %v5929 = vpop.f32.mrb[0].mxu0
        %v5930 = vpop.f32.mrb[0].mxu0
        %5931 = vdwg.mxu0
        %5932 = vmatprep.subr.bf16.mxu0 %v5620
        %5933 = vmatpush1.bf16.msra.mxu0 %v5619
        %5934 = vmatprep.subr.bf16.mxu0 %v5624
        %5935 = vmatpush1.bf16.msra.mxu0 %v5623
        %5936 = vmatprep.subr.bf16.mxu0 %v5628
        %5937 = vmatpush1.bf16.msra.mxu0 %v5627
        %5938 = vmatprep.subr.bf16.mxu0 %v5632
        %5939 = vmatpush1.bf16.msra.mxu0 %v5631
        %5940 = vmatprep.subr.bf16.mxu0 %v5636
        %5941 = vmatpush1.bf16.msra.mxu0 %v5635
        %5942 = vmatprep.subr.bf16.mxu0 %v5640
        %5943 = vmatpush1.bf16.msra.mxu0 %v5639
        %5944 = vmatprep.subr.bf16.mxu0 %v5644
        %5945 = vmatpush1.bf16.msra.mxu0 %v5643
        %5946 = vmatprep.subr.bf16.mxu0 %v5648
        %5947 = vmatpush1.bf16.msra.mxu0 %v5647
        %5948 = vmatprep.subr.bf16.mxu0 %v5652
        %5949 = vmatpush1.bf16.msra.mxu0 %v5651
        %5950 = vmatprep.subr.bf16.mxu0 %v5656
        %5951 = vmatpush1.bf16.msra.mxu0 %v5655
        %5952 = vmatprep.subr.bf16.mxu0 %v5660
        %5953 = vmatpush1.bf16.msra.mxu0 %v5659
        %5954 = vmatprep.subr.bf16.mxu0 %v5664
        %5955 = vmatpush1.bf16.msra.mxu0 %v5663
        %5956 = vmatprep.subr.bf16.mxu0 %v5668
        %5957 = vmatpush1.bf16.msra.mxu0 %v5667
        %5958 = vmatprep.subr.bf16.mxu0 %v5672
        %5959 = vmatpush1.bf16.msra.mxu0 %v5671
        %5960 = vmatprep.subr.bf16.mxu0 %v5676
        %5961 = vmatpush1.bf16.msra.mxu0 %v5675
        %5962 = vmatprep.subr.bf16.mxu0 %v5680
        %5963 = vmatpush1.bf16.msra.mxu0 %v5679
        %5964 = vmatprep.mubr.bf16.mxu0 %v5017
        %5965 = vmatmul.mubr.bf16.gmra.mrb[0].mxu0 %v5016
        %v5966 = vpop.f32.mrb[0].mxu0
        %v5967 = vadd.f32 %v5926, %v5966
        %v5968 = vpop.f32.mrb[0].mxu0
        %v5969 = vadd.f32 %v5928, %v5968
        %v5970 = vpop.f32.mrb[0].mxu0
        %v5971 = vpop.f32.mrb[0].mxu0
        %5972 = vdwg.mxu0
        %v5973 = vmax.f32 %v5885, 0.0
        %v5974 = vmax.f32 %v5887, 0.0
        %v5975 = vmax.f32 %v5967, 0.0
        %v5976 = vmax.f32 %v5969, 0.0
        %v5977 = vpack.c.bf16 %v5973, %v5973
        %v5978 = vpack.c.bf16 %v5974, %v5974
        %v5979 = vpack.c.bf16 %v5975, %v5975
        %v5980 = vpack.c.bf16 %v5976, %v5976
        %v5981 = vld [vmem:[%s195 + $0x800] sm:$0xff]
        %v5982 = vld [vmem:[%s195 + $0x808] sm:$0xff]
        %v5983 = vld [vmem:[%s195 + $0x810] sm:$0xff]
        %v5984 = vld [vmem:[%s195 + $0x818] sm:$0xff]
        %v5985 = vld [vmem:[%s195 + $0x820] sm:$0xff]
        %v5986 = vld [vmem:[%s195 + $0x828] sm:$0xff]
        %v5987 = vld [vmem:[%s195 + $0x830] sm:$0xff]
        %v5988 = vld [vmem:[%s195 + $0x838] sm:$0xff]
        %v5989 = vld [vmem:[%s195 + $0x840] sm:$0xff]
        %v5990 = vld [vmem:[%s195 + $0x848] sm:$0xff]
        %v5991 = vld [vmem:[%s195 + $0x850] sm:$0xff]
        %v5992 = vld [vmem:[%s195 + $0x858] sm:$0xff]
        %v5993 = vld [vmem:[%s195 + $0x860] sm:$0xff]
        %v5994 = vld [vmem:[%s195 + $0x868] sm:$0xff]
        %v5995 = vld [vmem:[%s195 + $0x870] sm:$0xff]
        %v5996 = vld [vmem:[%s195 + $0x878] sm:$0xff]
        %v5997 = vld [vmem:[%s195 + $0x880] sm:$0xff]
        %v5998 = vld [vmem:[%s195 + $0x888] sm:$0xff]
        %v5999 = vld [vmem:[%s195 + $0x890] sm:$0xff]
        %v6000 = vld [vmem:[%s195 + $0x898] sm:$0xff]
        %v6001 = vld [vmem:[%s195 + $0x8a0] sm:$0xff]
        %v6002 = vld [vmem:[%s195 + $0x8a8] sm:$0xff]
        %v6003 = vld [vmem:[%s195 + $0x8b0] sm:$0xff]
        %v6004 = vld [vmem:[%s195 + $0x8b8] sm:$0xff]
        %v6005 = vld [vmem:[%s195 + $0x8c0] sm:$0xff]
        %v6006 = vld [vmem:[%s195 + $0x8c8] sm:$0xff]
        %v6007 = vld [vmem:[%s195 + $0x8d0] sm:$0xff]
        %v6008 = vld [vmem:[%s195 + $0x8d8] sm:$0xff]
        %v6009 = vld [vmem:[%s195 + $0x8e0] sm:$0xff]
        %v6010 = vld [vmem:[%s195 + $0x8e8] sm:$0xff]
        %v6011 = vld [vmem:[%s195 + $0x8f0] sm:$0xff]
        %v6012 = vld [vmem:[%s195 + $0x8f8] sm:$0xff]
        %v6013 = vld [vmem:[%s195 + $0x900] sm:$0xff]
        %v6014 = vld [vmem:[%s195 + $0x908] sm:$0xff]
        %v6015 = vld [vmem:[%s195 + $0x910] sm:$0xff]
        %v6016 = vld [vmem:[%s195 + $0x918] sm:$0xff]
        %v6017 = vld [vmem:[%s195 + $0x920] sm:$0xff]
        %v6018 = vld [vmem:[%s195 + $0x928] sm:$0xff]
        %v6019 = vld [vmem:[%s195 + $0x930] sm:$0xff]
        %v6020 = vld [vmem:[%s195 + $0x938] sm:$0xff]
        %v6021 = vld [vmem:[%s195 + $0x940] sm:$0xff]
        %v6022 = vld [vmem:[%s195 + $0x948] sm:$0xff]
        %v6023 = vld [vmem:[%s195 + $0x950] sm:$0xff]
        %v6024 = vld [vmem:[%s195 + $0x958] sm:$0xff]
        %v6025 = vld [vmem:[%s195 + $0x960] sm:$0xff]
        %v6026 = vld [vmem:[%s195 + $0x968] sm:$0xff]
        %v6027 = vld [vmem:[%s195 + $0x970] sm:$0xff]
        %v6028 = vld [vmem:[%s195 + $0x978] sm:$0xff]
        %v6029 = vld [vmem:[%s195 + $0x980] sm:$0xff]
        %v6030 = vld [vmem:[%s195 + $0x988] sm:$0xff]
        %v6031 = vld [vmem:[%s195 + $0x990] sm:$0xff]
        %v6032 = vld [vmem:[%s195 + $0x998] sm:$0xff]
        %v6033 = vld [vmem:[%s195 + $0x9a0] sm:$0xff]
        %v6034 = vld [vmem:[%s195 + $0x9a8] sm:$0xff]
        %v6035 = vld [vmem:[%s195 + $0x9b0] sm:$0xff]
        %v6036 = vld [vmem:[%s195 + $0x9b8] sm:$0xff]
        %v6037 = vld [vmem:[%s195 + $0x9c0] sm:$0xff]
        %v6038 = vld [vmem:[%s195 + $0x9c8] sm:$0xff]
        %v6039 = vld [vmem:[%s195 + $0x9d0] sm:$0xff]
        %v6040 = vld [vmem:[%s195 + $0x9d8] sm:$0xff]
        %v6041 = vld [vmem:[%s195 + $0x9e0] sm:$0xff]
        %v6042 = vld [vmem:[%s195 + $0x9e8] sm:$0xff]
        %v6043 = vld [vmem:[%s195 + $0x9f0] sm:$0xff]
        %v6044 = vld [vmem:[%s195 + $0x9f8] sm:$0xff]
        %v6045 = vld [vmem:[%s195 + $0xa00] sm:$0xff]
        %v6046 = vld [vmem:[%s195 + $0xa08] sm:$0xff]
        %v6047 = vld [vmem:[%s195 + $0xa10] sm:$0xff]
        %v6048 = vld [vmem:[%s195 + $0xa18] sm:$0xff]
        %v6049 = vld [vmem:[%s195 + $0xa20] sm:$0xff]
        %v6050 = vld [vmem:[%s195 + $0xa28] sm:$0xff]
        %v6051 = vld [vmem:[%s195 + $0xa30] sm:$0xff]
        %v6052 = vld [vmem:[%s195 + $0xa38] sm:$0xff]
        %v6053 = vld [vmem:[%s195 + $0xa40] sm:$0xff]
        %v6054 = vld [vmem:[%s195 + $0xa48] sm:$0xff]
        %v6055 = vld [vmem:[%s195 + $0xa50] sm:$0xff]
        %v6056 = vld [vmem:[%s195 + $0xa58] sm:$0xff]
        %v6057 = vld [vmem:[%s195 + $0xa60] sm:$0xff]
        %v6058 = vld [vmem:[%s195 + $0xa68] sm:$0xff]
        %v6059 = vld [vmem:[%s195 + $0xa70] sm:$0xff]
        %v6060 = vld [vmem:[%s195 + $0xa78] sm:$0xff]
        %v6061 = vld [vmem:[%s195 + $0xa80] sm:$0xff]
        %v6062 = vld [vmem:[%s195 + $0xa88] sm:$0xff]
        %v6063 = vld [vmem:[%s195 + $0xa90] sm:$0xff]
        %v6064 = vld [vmem:[%s195 + $0xa98] sm:$0xff]
        %v6065 = vld [vmem:[%s195 + $0xaa0] sm:$0xff]
        %v6066 = vld [vmem:[%s195 + $0xaa8] sm:$0xff]
        %v6067 = vld [vmem:[%s195 + $0xab0] sm:$0xff]
        %v6068 = vld [vmem:[%s195 + $0xab8] sm:$0xff]
        %v6069 = vld [vmem:[%s195 + $0xac0] sm:$0xff]
        %v6070 = vld [vmem:[%s195 + $0xac8] sm:$0xff]
        %v6071 = vld [vmem:[%s195 + $0xad0] sm:$0xff]
        %v6072 = vld [vmem:[%s195 + $0xad8] sm:$0xff]
        %v6073 = vld [vmem:[%s195 + $0xae0] sm:$0xff]
        %v6074 = vld [vmem:[%s195 + $0xae8] sm:$0xff]
        %v6075 = vld [vmem:[%s195 + $0xaf0] sm:$0xff]
        %v6076 = vld [vmem:[%s195 + $0xaf8] sm:$0xff]
        %v6077 = vld [vmem:[%s195 + $0xb00] sm:$0xff]
        %v6078 = vld [vmem:[%s195 + $0xb08] sm:$0xff]
        %v6079 = vld [vmem:[%s195 + $0xb10] sm:$0xff]
        %v6080 = vld [vmem:[%s195 + $0xb18] sm:$0xff]
        %v6081 = vld [vmem:[%s195 + $0xb20] sm:$0xff]
        %v6082 = vld [vmem:[%s195 + $0xb28] sm:$0xff]
        %v6083 = vld [vmem:[%s195 + $0xb30] sm:$0xff]
        %v6084 = vld [vmem:[%s195 + $0xb38] sm:$0xff]
        %v6085 = vld [vmem:[%s195 + $0xb40] sm:$0xff]
        %v6086 = vld [vmem:[%s195 + $0xb48] sm:$0xff]
        %v6087 = vld [vmem:[%s195 + $0xb50] sm:$0xff]
        %v6088 = vld [vmem:[%s195 + $0xb58] sm:$0xff]
        %v6089 = vld [vmem:[%s195 + $0xb60] sm:$0xff]
        %v6090 = vld [vmem:[%s195 + $0xb68] sm:$0xff]
        %v6091 = vld [vmem:[%s195 + $0xb70] sm:$0xff]
        %v6092 = vld [vmem:[%s195 + $0xb78] sm:$0xff]
        %v6093 = vld [vmem:[%s195 + $0xb80] sm:$0xff]
        %v6094 = vld [vmem:[%s195 + $0xb88] sm:$0xff]
        %v6095 = vld [vmem:[%s195 + $0xb90] sm:$0xff]
        %v6096 = vld [vmem:[%s195 + $0xb98] sm:$0xff]
        %v6097 = vld [vmem:[%s195 + $0xba0] sm:$0xff]
        %v6098 = vld [vmem:[%s195 + $0xba8] sm:$0xff]
        %v6099 = vld [vmem:[%s195 + $0xbb0] sm:$0xff]
        %v6100 = vld [vmem:[%s195 + $0xbb8] sm:$0xff]
        %v6101 = vld [vmem:[%s195 + $0xbc0] sm:$0xff]
        %v6102 = vld [vmem:[%s195 + $0xbc8] sm:$0xff]
        %v6103 = vld [vmem:[%s195 + $0xbd0] sm:$0xff]
        %v6104 = vld [vmem:[%s195 + $0xbd8] sm:$0xff]
        %v6105 = vld [vmem:[%s195 + $0xbe0] sm:$0xff]
        %v6106 = vld [vmem:[%s195 + $0xbe8] sm:$0xff]
        %v6107 = vld [vmem:[%s195 + $0xbf0] sm:$0xff]
        %v6108 = vld [vmem:[%s195 + $0xbf8] sm:$0xff]
        %s6109 = scalar_lea.vmem %s3, 12
        %v6110 = vld [vmem:[%s6109] sm:$0xf]
        %v6112 = vlaneseq
        %v6113 = vshrl.u32 %v6112, 7
        %v6114 = vsub.s32 0, %v6113
        %v6115 = vrot.slane %v6110, %v6114
        %v6116 = vlaneseq
        %v6117 = vshrl.u32 %v6116, 7
        %v6118 = vsub.s32 1, %v6117
        %v6119 = vrot.slane %v6110, %v6118
        %v6120 = vlaneseq
        %v6121 = vshrl.u32 %v6120, 7
        %v6122 = vsub.s32 2, %v6121
        %v6123 = vrot.slane %v6110, %v6122
        %v6124 = vlaneseq
        %v6125 = vshrl.u32 %v6124, 7
        %v6126 = vsub.s32 3, %v6125
        %v6127 = vrot.slane %v6110, %v6126
        %v6260 = vunpack.c.l.b16 %v5981
        %v6261 = vunpack.c.h.b16 %v5981
        %v6262 = vunpack.c.l.b16 %v5982
        %v6263 = vunpack.c.h.b16 %v5982
        %v6264 = vunpack.c.l.b16 %v5983
        %v6265 = vunpack.c.h.b16 %v5983
        %v6266 = vunpack.c.l.b16 %v5984
        %v6267 = vunpack.c.h.b16 %v5984
        %v6268 = vunpack.c.l.b16 %v5985
        %v6269 = vunpack.c.h.b16 %v5985
        %v6270 = vunpack.c.l.b16 %v5986
        %v6271 = vunpack.c.h.b16 %v5986
        %v6272 = vunpack.c.l.b16 %v5987
        %v6273 = vunpack.c.h.b16 %v5987
        %v6274 = vunpack.c.l.b16 %v5988
        %v6275 = vunpack.c.h.b16 %v5988
        %v6276 = vunpack.c.l.b16 %v5989
        %v6277 = vunpack.c.h.b16 %v5989
        %v6278 = vunpack.c.l.b16 %v5990
        %v6279 = vunpack.c.h.b16 %v5990
        %v6280 = vunpack.c.l.b16 %v5991
        %v6281 = vunpack.c.h.b16 %v5991
        %v6282 = vunpack.c.l.b16 %v5992
        %v6283 = vunpack.c.h.b16 %v5992
        %v6284 = vunpack.c.l.b16 %v5993
        %v6285 = vunpack.c.h.b16 %v5993
        %v6286 = vunpack.c.l.b16 %v5994
        %v6287 = vunpack.c.h.b16 %v5994
        %v6288 = vunpack.c.l.b16 %v5995
        %v6289 = vunpack.c.h.b16 %v5995
        %v6290 = vunpack.c.l.b16 %v5996
        %v6291 = vunpack.c.h.b16 %v5996
        %v6292 = vunpack.c.l.b16 %v5997
        %v6293 = vunpack.c.h.b16 %v5997
        %v6294 = vunpack.c.l.b16 %v5998
        %v6295 = vunpack.c.h.b16 %v5998
        %v6296 = vunpack.c.l.b16 %v5999
        %v6297 = vunpack.c.h.b16 %v5999
        %v6298 = vunpack.c.l.b16 %v6000
        %v6299 = vunpack.c.h.b16 %v6000
        %v6300 = vunpack.c.l.b16 %v6001
        %v6301 = vunpack.c.h.b16 %v6001
        %v6302 = vunpack.c.l.b16 %v6002
        %v6303 = vunpack.c.h.b16 %v6002
        %v6304 = vunpack.c.l.b16 %v6003
        %v6305 = vunpack.c.h.b16 %v6003
        %v6306 = vunpack.c.l.b16 %v6004
        %v6307 = vunpack.c.h.b16 %v6004
        %v6308 = vunpack.c.l.b16 %v6005
        %v6309 = vunpack.c.h.b16 %v6005
        %v6310 = vunpack.c.l.b16 %v6006
        %v6311 = vunpack.c.h.b16 %v6006
        %v6312 = vunpack.c.l.b16 %v6007
        %v6313 = vunpack.c.h.b16 %v6007
        %v6314 = vunpack.c.l.b16 %v6008
        %v6315 = vunpack.c.h.b16 %v6008
        %v6316 = vunpack.c.l.b16 %v6009
        %v6317 = vunpack.c.h.b16 %v6009
        %v6318 = vunpack.c.l.b16 %v6010
        %v6319 = vunpack.c.h.b16 %v6010
        %v6320 = vunpack.c.l.b16 %v6011
        %v6321 = vunpack.c.h.b16 %v6011
        %v6322 = vunpack.c.l.b16 %v6012
        %v6323 = vunpack.c.h.b16 %v6012
        %v6324 = vunpack.c.l.b16 %v6013
        %v6325 = vunpack.c.h.b16 %v6013
        %v6326 = vunpack.c.l.b16 %v6014
        %v6327 = vunpack.c.h.b16 %v6014
        %v6328 = vunpack.c.l.b16 %v6015
        %v6329 = vunpack.c.h.b16 %v6015
        %v6330 = vunpack.c.l.b16 %v6016
        %v6331 = vunpack.c.h.b16 %v6016
        %v6332 = vunpack.c.l.b16 %v6017
        %v6333 = vunpack.c.h.b16 %v6017
        %v6334 = vunpack.c.l.b16 %v6018
        %v6335 = vunpack.c.h.b16 %v6018
        %v6336 = vunpack.c.l.b16 %v6019
        %v6337 = vunpack.c.h.b16 %v6019
        %v6338 = vunpack.c.l.b16 %v6020
        %v6339 = vunpack.c.h.b16 %v6020
        %v6340 = vunpack.c.l.b16 %v6021
        %v6341 = vunpack.c.h.b16 %v6021
        %v6342 = vunpack.c.l.b16 %v6022
        %v6343 = vunpack.c.h.b16 %v6022
        %v6344 = vunpack.c.l.b16 %v6023
        %v6345 = vunpack.c.h.b16 %v6023
        %v6346 = vunpack.c.l.b16 %v6024
        %v6347 = vunpack.c.h.b16 %v6024
        %v6348 = vunpack.c.l.b16 %v6025
        %v6349 = vunpack.c.h.b16 %v6025
        %v6350 = vunpack.c.l.b16 %v6026
        %v6351 = vunpack.c.h.b16 %v6026
        %v6352 = vunpack.c.l.b16 %v6027
        %v6353 = vunpack.c.h.b16 %v6027
        %v6354 = vunpack.c.l.b16 %v6028
        %v6355 = vunpack.c.h.b16 %v6028
        %v6356 = vunpack.c.l.b16 %v6029
        %v6357 = vunpack.c.h.b16 %v6029
        %v6358 = vunpack.c.l.b16 %v6030
        %v6359 = vunpack.c.h.b16 %v6030
        %v6360 = vunpack.c.l.b16 %v6031
        %v6361 = vunpack.c.h.b16 %v6031
        %v6362 = vunpack.c.l.b16 %v6032
        %v6363 = vunpack.c.h.b16 %v6032
        %v6364 = vunpack.c.l.b16 %v6033
        %v6365 = vunpack.c.h.b16 %v6033
        %v6366 = vunpack.c.l.b16 %v6034
        %v6367 = vunpack.c.h.b16 %v6034
        %v6368 = vunpack.c.l.b16 %v6035
        %v6369 = vunpack.c.h.b16 %v6035
        %v6370 = vunpack.c.l.b16 %v6036
        %v6371 = vunpack.c.h.b16 %v6036
        %v6372 = vunpack.c.l.b16 %v6037
        %v6373 = vunpack.c.h.b16 %v6037
        %v6374 = vunpack.c.l.b16 %v6038
        %v6375 = vunpack.c.h.b16 %v6038
        %v6376 = vunpack.c.l.b16 %v6039
        %v6377 = vunpack.c.h.b16 %v6039
        %v6378 = vunpack.c.l.b16 %v6040
        %v6379 = vunpack.c.h.b16 %v6040
        %v6380 = vunpack.c.l.b16 %v6041
        %v6381 = vunpack.c.h.b16 %v6041
        %v6382 = vunpack.c.l.b16 %v6042
        %v6383 = vunpack.c.h.b16 %v6042
        %v6384 = vunpack.c.l.b16 %v6043
        %v6385 = vunpack.c.h.b16 %v6043
        %v6386 = vunpack.c.l.b16 %v6044
        %v6387 = vunpack.c.h.b16 %v6044
        %v6388 = vunpack.c.l.b16 %v6045
        %v6389 = vunpack.c.h.b16 %v6045
        %v6390 = vunpack.c.l.b16 %v6046
        %v6391 = vunpack.c.h.b16 %v6046
        %v6392 = vunpack.c.l.b16 %v6047
        %v6393 = vunpack.c.h.b16 %v6047
        %v6394 = vunpack.c.l.b16 %v6048
        %v6395 = vunpack.c.h.b16 %v6048
        %v6396 = vunpack.c.l.b16 %v6049
        %v6397 = vunpack.c.h.b16 %v6049
        %v6398 = vunpack.c.l.b16 %v6050
        %v6399 = vunpack.c.h.b16 %v6050
        %v6400 = vunpack.c.l.b16 %v6051
        %v6401 = vunpack.c.h.b16 %v6051
        %v6402 = vunpack.c.l.b16 %v6052
        %v6403 = vunpack.c.h.b16 %v6052
        %v6404 = vunpack.c.l.b16 %v6053
        %v6405 = vunpack.c.h.b16 %v6053
        %v6406 = vunpack.c.l.b16 %v6054
        %v6407 = vunpack.c.h.b16 %v6054
        %v6408 = vunpack.c.l.b16 %v6055
        %v6409 = vunpack.c.h.b16 %v6055
        %v6410 = vunpack.c.l.b16 %v6056
        %v6411 = vunpack.c.h.b16 %v6056
        %v6412 = vunpack.c.l.b16 %v6057
        %v6413 = vunpack.c.h.b16 %v6057
        %v6414 = vunpack.c.l.b16 %v6058
        %v6415 = vunpack.c.h.b16 %v6058
        %v6416 = vunpack.c.l.b16 %v6059
        %v6417 = vunpack.c.h.b16 %v6059
        %v6418 = vunpack.c.l.b16 %v6060
        %v6419 = vunpack.c.h.b16 %v6060
        %v6420 = vunpack.c.l.b16 %v6061
        %v6421 = vunpack.c.h.b16 %v6061
        %v6422 = vunpack.c.l.b16 %v6062
        %v6423 = vunpack.c.h.b16 %v6062
        %v6424 = vunpack.c.l.b16 %v6063
        %v6425 = vunpack.c.h.b16 %v6063
        %v6426 = vunpack.c.l.b16 %v6064
        %v6427 = vunpack.c.h.b16 %v6064
        %v6428 = vunpack.c.l.b16 %v6065
        %v6429 = vunpack.c.h.b16 %v6065
        %v6430 = vunpack.c.l.b16 %v6066
        %v6431 = vunpack.c.h.b16 %v6066
        %v6432 = vunpack.c.l.b16 %v6067
        %v6433 = vunpack.c.h.b16 %v6067
        %v6434 = vunpack.c.l.b16 %v6068
        %v6435 = vunpack.c.h.b16 %v6068
        %v6436 = vunpack.c.l.b16 %v6069
        %v6437 = vunpack.c.h.b16 %v6069
        %v6438 = vunpack.c.l.b16 %v6070
        %v6439 = vunpack.c.h.b16 %v6070
        %v6440 = vunpack.c.l.b16 %v6071
        %v6441 = vunpack.c.h.b16 %v6071
        %v6442 = vunpack.c.l.b16 %v6072
        %v6443 = vunpack.c.h.b16 %v6072
        %v6444 = vunpack.c.l.b16 %v6073
        %v6445 = vunpack.c.h.b16 %v6073
        %v6446 = vunpack.c.l.b16 %v6074
        %v6447 = vunpack.c.h.b16 %v6074
        %v6448 = vunpack.c.l.b16 %v6075
        %v6449 = vunpack.c.h.b16 %v6075
        %v6450 = vunpack.c.l.b16 %v6076
        %v6451 = vunpack.c.h.b16 %v6076
        %v6452 = vunpack.c.l.b16 %v6077
        %v6453 = vunpack.c.h.b16 %v6077
        %v6454 = vunpack.c.l.b16 %v6078
        %v6455 = vunpack.c.h.b16 %v6078
        %v6456 = vunpack.c.l.b16 %v6079
        %v6457 = vunpack.c.h.b16 %v6079
        %v6458 = vunpack.c.l.b16 %v6080
        %v6459 = vunpack.c.h.b16 %v6080
        %v6460 = vunpack.c.l.b16 %v6081
        %v6461 = vunpack.c.h.b16 %v6081
        %v6462 = vunpack.c.l.b16 %v6082
        %v6463 = vunpack.c.h.b16 %v6082
        %v6464 = vunpack.c.l.b16 %v6083
        %v6465 = vunpack.c.h.b16 %v6083
        %v6466 = vunpack.c.l.b16 %v6084
        %v6467 = vunpack.c.h.b16 %v6084
        %v6468 = vunpack.c.l.b16 %v6085
        %v6469 = vunpack.c.h.b16 %v6085
        %v6470 = vunpack.c.l.b16 %v6086
        %v6471 = vunpack.c.h.b16 %v6086
        %v6472 = vunpack.c.l.b16 %v6087
        %v6473 = vunpack.c.h.b16 %v6087
        %v6474 = vunpack.c.l.b16 %v6088
        %v6475 = vunpack.c.h.b16 %v6088
        %v6476 = vunpack.c.l.b16 %v6089
        %v6477 = vunpack.c.h.b16 %v6089
        %v6478 = vunpack.c.l.b16 %v6090
        %v6479 = vunpack.c.h.b16 %v6090
        %v6480 = vunpack.c.l.b16 %v6091
        %v6481 = vunpack.c.h.b16 %v6091
        %v6482 = vunpack.c.l.b16 %v6092
        %v6483 = vunpack.c.h.b16 %v6092
        %v6484 = vunpack.c.l.b16 %v6093
        %v6485 = vunpack.c.h.b16 %v6093
        %v6486 = vunpack.c.l.b16 %v6094
        %v6487 = vunpack.c.h.b16 %v6094
        %v6488 = vunpack.c.l.b16 %v6095
        %v6489 = vunpack.c.h.b16 %v6095
        %v6490 = vunpack.c.l.b16 %v6096
        %v6491 = vunpack.c.h.b16 %v6096
        %v6492 = vunpack.c.l.b16 %v6097
        %v6493 = vunpack.c.h.b16 %v6097
        %v6494 = vunpack.c.l.b16 %v6098
        %v6495 = vunpack.c.h.b16 %v6098
        %v6496 = vunpack.c.l.b16 %v6099
        %v6497 = vunpack.c.h.b16 %v6099
        %v6498 = vunpack.c.l.b16 %v6100
        %v6499 = vunpack.c.h.b16 %v6100
        %v6500 = vunpack.c.l.b16 %v6101
        %v6501 = vunpack.c.h.b16 %v6101
        %v6502 = vunpack.c.l.b16 %v6102
        %v6503 = vunpack.c.h.b16 %v6102
        %v6504 = vunpack.c.l.b16 %v6103
        %v6505 = vunpack.c.h.b16 %v6103
        %v6506 = vunpack.c.l.b16 %v6104
        %v6507 = vunpack.c.h.b16 %v6104
        %v6508 = vunpack.c.l.b16 %v6105
        %v6509 = vunpack.c.h.b16 %v6105
        %v6510 = vunpack.c.l.b16 %v6106
        %v6511 = vunpack.c.h.b16 %v6106
        %v6512 = vunpack.c.l.b16 %v6107
        %v6513 = vunpack.c.h.b16 %v6107
        %v6514 = vunpack.c.l.b16 %v6108
        %v6515 = vunpack.c.h.b16 %v6108
        %v6516 = vpack.c.b16 %v6264, %v6260
        %v6517 = vpack.c.b16 %v6265, %v6261
        %v6518 = vpack.c.b16 %v6266, %v6262
        %v6519 = vpack.c.b16 %v6267, %v6263
        %v6520 = vpack.c.b16 %v6272, %v6268
        %v6521 = vpack.c.b16 %v6273, %v6269
        %v6522 = vpack.c.b16 %v6274, %v6270
        %v6523 = vpack.c.b16 %v6275, %v6271
        %v6524 = vpack.c.b16 %v6280, %v6276
        %v6525 = vpack.c.b16 %v6281, %v6277
        %v6526 = vpack.c.b16 %v6282, %v6278
        %v6527 = vpack.c.b16 %v6283, %v6279
        %v6528 = vpack.c.b16 %v6288, %v6284
        %v6529 = vpack.c.b16 %v6289, %v6285
        %v6530 = vpack.c.b16 %v6290, %v6286
        %v6531 = vpack.c.b16 %v6291, %v6287
        %v6532 = vpack.c.b16 %v6296, %v6292
        %v6533 = vpack.c.b16 %v6297, %v6293
        %v6534 = vpack.c.b16 %v6298, %v6294
        %v6535 = vpack.c.b16 %v6299, %v6295
        %v6536 = vpack.c.b16 %v6304, %v6300
        %v6537 = vpack.c.b16 %v6305, %v6301
        %v6538 = vpack.c.b16 %v6306, %v6302
        %v6539 = vpack.c.b16 %v6307, %v6303
        %v6540 = vpack.c.b16 %v6312, %v6308
        %v6541 = vpack.c.b16 %v6313, %v6309
        %v6542 = vpack.c.b16 %v6314, %v6310
        %v6543 = vpack.c.b16 %v6315, %v6311
        %v6544 = vpack.c.b16 %v6320, %v6316
        %v6545 = vpack.c.b16 %v6321, %v6317
        %v6546 = vpack.c.b16 %v6322, %v6318
        %v6547 = vpack.c.b16 %v6323, %v6319
        %v6548 = vpack.c.b16 %v6328, %v6324
        %v6549 = vpack.c.b16 %v6329, %v6325
        %v6550 = vpack.c.b16 %v6330, %v6326
        %v6551 = vpack.c.b16 %v6331, %v6327
        %v6552 = vpack.c.b16 %v6336, %v6332
        %v6553 = vpack.c.b16 %v6337, %v6333
        %v6554 = vpack.c.b16 %v6338, %v6334
        %v6555 = vpack.c.b16 %v6339, %v6335
        %v6556 = vpack.c.b16 %v6344, %v6340
        %v6557 = vpack.c.b16 %v6345, %v6341
        %v6558 = vpack.c.b16 %v6346, %v6342
        %v6559 = vpack.c.b16 %v6347, %v6343
        %v6560 = vpack.c.b16 %v6352, %v6348
        %v6561 = vpack.c.b16 %v6353, %v6349
        %v6562 = vpack.c.b16 %v6354, %v6350
        %v6563 = vpack.c.b16 %v6355, %v6351
        %v6564 = vpack.c.b16 %v6360, %v6356
        %v6565 = vpack.c.b16 %v6361, %v6357
        %v6566 = vpack.c.b16 %v6362, %v6358
        %v6567 = vpack.c.b16 %v6363, %v6359
        %v6568 = vpack.c.b16 %v6368, %v6364
        %v6569 = vpack.c.b16 %v6369, %v6365
        %v6570 = vpack.c.b16 %v6370, %v6366
        %v6571 = vpack.c.b16 %v6371, %v6367
        %v6572 = vpack.c.b16 %v6376, %v6372
        %v6573 = vpack.c.b16 %v6377, %v6373
        %v6574 = vpack.c.b16 %v6378, %v6374
        %v6575 = vpack.c.b16 %v6379, %v6375
        %v6576 = vpack.c.b16 %v6384, %v6380
        %v6577 = vpack.c.b16 %v6385, %v6381
        %v6578 = vpack.c.b16 %v6386, %v6382
        %v6579 = vpack.c.b16 %v6387, %v6383
        %v6580 = vpack.c.b16 %v6392, %v6388
        %v6581 = vpack.c.b16 %v6393, %v6389
        %v6582 = vpack.c.b16 %v6394, %v6390
        %v6583 = vpack.c.b16 %v6395, %v6391
        %v6584 = vpack.c.b16 %v6400, %v6396
        %v6585 = vpack.c.b16 %v6401, %v6397
        %v6586 = vpack.c.b16 %v6402, %v6398
        %v6587 = vpack.c.b16 %v6403, %v6399
        %v6588 = vpack.c.b16 %v6408, %v6404
        %v6589 = vpack.c.b16 %v6409, %v6405
        %v6590 = vpack.c.b16 %v6410, %v6406
        %v6591 = vpack.c.b16 %v6411, %v6407
        %v6592 = vpack.c.b16 %v6416, %v6412
        %v6593 = vpack.c.b16 %v6417, %v6413
        %v6594 = vpack.c.b16 %v6418, %v6414
        %v6595 = vpack.c.b16 %v6419, %v6415
        %v6596 = vpack.c.b16 %v6424, %v6420
        %v6597 = vpack.c.b16 %v6425, %v6421
        %v6598 = vpack.c.b16 %v6426, %v6422
        %v6599 = vpack.c.b16 %v6427, %v6423
        %v6600 = vpack.c.b16 %v6432, %v6428
        %v6601 = vpack.c.b16 %v6433, %v6429
        %v6602 = vpack.c.b16 %v6434, %v6430
        %v6603 = vpack.c.b16 %v6435, %v6431
        %v6604 = vpack.c.b16 %v6440, %v6436
        %v6605 = vpack.c.b16 %v6441, %v6437
        %v6606 = vpack.c.b16 %v6442, %v6438
        %v6607 = vpack.c.b16 %v6443, %v6439
        %v6608 = vpack.c.b16 %v6448, %v6444
        %v6609 = vpack.c.b16 %v6449, %v6445
        %v6610 = vpack.c.b16 %v6450, %v6446
        %v6611 = vpack.c.b16 %v6451, %v6447
        %v6612 = vpack.c.b16 %v6456, %v6452
        %v6613 = vpack.c.b16 %v6457, %v6453
        %v6614 = vpack.c.b16 %v6458, %v6454
        %v6615 = vpack.c.b16 %v6459, %v6455
        %v6616 = vpack.c.b16 %v6464, %v6460
        %v6617 = vpack.c.b16 %v6465, %v6461
        %v6618 = vpack.c.b16 %v6466, %v6462
        %v6619 = vpack.c.b16 %v6467, %v6463
        %v6620 = vpack.c.b16 %v6472, %v6468
        %v6621 = vpack.c.b16 %v6473, %v6469
        %v6622 = vpack.c.b16 %v6474, %v6470
        %v6623 = vpack.c.b16 %v6475, %v6471
        %v6624 = vpack.c.b16 %v6480, %v6476
        %v6625 = vpack.c.b16 %v6481, %v6477
        %v6626 = vpack.c.b16 %v6482, %v6478
        %v6627 = vpack.c.b16 %v6483, %v6479
        %v6628 = vpack.c.b16 %v6488, %v6484
        %v6629 = vpack.c.b16 %v6489, %v6485
        %v6630 = vpack.c.b16 %v6490, %v6486
        %v6631 = vpack.c.b16 %v6491, %v6487
        %v6632 = vpack.c.b16 %v6496, %v6492
        %v6633 = vpack.c.b16 %v6497, %v6493
        %v6634 = vpack.c.b16 %v6498, %v6494
        %v6635 = vpack.c.b16 %v6499, %v6495
        %v6636 = vpack.c.b16 %v6504, %v6500
        %v6637 = vpack.c.b16 %v6505, %v6501
        %v6638 = vpack.c.b16 %v6506, %v6502
        %v6639 = vpack.c.b16 %v6507, %v6503
        %v6640 = vpack.c.b16 %v6512, %v6508
        %v6641 = vpack.c.b16 %v6513, %v6509
        %v6642 = vpack.c.b16 %v6514, %v6510
        %v6643 = vpack.c.b16 %v6515, %v6511
        %6772 = vmatprep.subr.bf16.mxu0 %v6517
        %6773 = vmatpush1.bf16.msra.mxu0 %v6516
        %6774 = vmatprep.subr.bf16.mxu0 %v6521
        %6775 = vmatpush1.bf16.msra.mxu0 %v6520
        %6776 = vmatprep.subr.bf16.mxu0 %v6525
        %6777 = vmatpush1.bf16.msra.mxu0 %v6524
        %6778 = vmatprep.subr.bf16.mxu0 %v6529
        %6779 = vmatpush1.bf16.msra.mxu0 %v6528
        %6780 = vmatprep.subr.bf16.mxu0 %v6533
        %6781 = vmatpush1.bf16.msra.mxu0 %v6532
        %6782 = vmatprep.subr.bf16.mxu0 %v6537
        %6783 = vmatpush1.bf16.msra.mxu0 %v6536
        %6784 = vmatprep.subr.bf16.mxu0 %v6541
        %6785 = vmatpush1.bf16.msra.mxu0 %v6540
        %6786 = vmatprep.subr.bf16.mxu0 %v6545
        %6787 = vmatpush1.bf16.msra.mxu0 %v6544
        %6788 = vmatprep.subr.bf16.mxu0 %v6549
        %6789 = vmatpush1.bf16.msra.mxu0 %v6548
        %6790 = vmatprep.subr.bf16.mxu0 %v6553
        %6791 = vmatpush1.bf16.msra.mxu0 %v6552
        %6792 = vmatprep.subr.bf16.mxu0 %v6557
        %6793 = vmatpush1.bf16.msra.mxu0 %v6556
        %6794 = vmatprep.subr.bf16.mxu0 %v6561
        %6795 = vmatpush1.bf16.msra.mxu0 %v6560
        %6796 = vmatprep.subr.bf16.mxu0 %v6565
        %6797 = vmatpush1.bf16.msra.mxu0 %v6564
        %6798 = vmatprep.subr.bf16.mxu0 %v6569
        %6799 = vmatpush1.bf16.msra.mxu0 %v6568
        %6800 = vmatprep.subr.bf16.mxu0 %v6573
        %6801 = vmatpush1.bf16.msra.mxu0 %v6572
        %6802 = vmatprep.subr.bf16.mxu0 %v6577
        %6803 = vmatpush1.bf16.msra.mxu0 %v6576
        %6804 = vmatprep.mubr.bf16.mxu0 %v5978
        %6805 = vmatmul.mubr.bf16.gmra.mrb[0].mxu0 %v5977
        %v6806 = vpop.f32.mrb[0].mxu0
        %v6807 = vadd.f32 %v6115, %v6806
        %v6808 = vpop.f32.mrb[0].mxu0
        %v6809 = vadd.f32 %v6119, %v6808
        %v6810 = vpop.f32.mrb[0].mxu0
        %v6811 = vpop.f32.mrb[0].mxu0
        %6812 = vdwg.mxu0
        %6813 = vmatprep.subr.bf16.mxu0 %v6581
        %6814 = vmatpush1.bf16.msra.mxu0 %v6580
        %6815 = vmatprep.subr.bf16.mxu0 %v6585
        %6816 = vmatpush1.bf16.msra.mxu0 %v6584
        %6817 = vmatprep.subr.bf16.mxu0 %v6589
        %6818 = vmatpush1.bf16.msra.mxu0 %v6588
        %6819 = vmatprep.subr.bf16.mxu0 %v6593
        %6820 = vmatpush1.bf16.msra.mxu0 %v6592
        %6821 = vmatprep.subr.bf16.mxu0 %v6597
        %6822 = vmatpush1.bf16.msra.mxu0 %v6596
        %6823 = vmatprep.subr.bf16.mxu0 %v6601
        %6824 = vmatpush1.bf16.msra.mxu0 %v6600
        %6825 = vmatprep.subr.bf16.mxu0 %v6605
        %6826 = vmatpush1.bf16.msra.mxu0 %v6604
        %6827 = vmatprep.subr.bf16.mxu0 %v6609
        %6828 = vmatpush1.bf16.msra.mxu0 %v6608
        %6829 = vmatprep.subr.bf16.mxu0 %v6613
        %6830 = vmatpush1.bf16.msra.mxu0 %v6612
        %6831 = vmatprep.subr.bf16.mxu0 %v6617
        %6832 = vmatpush1.bf16.msra.mxu0 %v6616
        %6833 = vmatprep.subr.bf16.mxu0 %v6621
        %6834 = vmatpush1.bf16.msra.mxu0 %v6620
        %6835 = vmatprep.subr.bf16.mxu0 %v6625
        %6836 = vmatpush1.bf16.msra.mxu0 %v6624
        %6837 = vmatprep.subr.bf16.mxu0 %v6629
        %6838 = vmatpush1.bf16.msra.mxu0 %v6628
        %6839 = vmatprep.subr.bf16.mxu0 %v6633
        %6840 = vmatpush1.bf16.msra.mxu0 %v6632
        %6841 = vmatprep.subr.bf16.mxu0 %v6637
        %6842 = vmatpush1.bf16.msra.mxu0 %v6636
        %6843 = vmatprep.subr.bf16.mxu0 %v6641
        %6844 = vmatpush1.bf16.msra.mxu0 %v6640
        %6845 = vmatprep.mubr.bf16.mxu0 %v5980
        %6846 = vmatmul.mubr.bf16.gmra.mrb[0].mxu0 %v5979
        %v6847 = vpop.f32.mrb[0].mxu0
        %v6848 = vadd.f32 %v6807, %v6847
        %v6849 = vpop.f32.mrb[0].mxu0
        %v6850 = vadd.f32 %v6809, %v6849
        %v6851 = vpop.f32.mrb[0].mxu0
        %v6852 = vpop.f32.mrb[0].mxu0
        %6853 = vdwg.mxu0
        %6854 = vmatprep.subr.bf16.mxu0 %v6519
        %6855 = vmatpush1.bf16.msra.mxu0 %v6518
        %6856 = vmatprep.subr.bf16.mxu0 %v6523
        %6857 = vmatpush1.bf16.msra.mxu0 %v6522
        %6858 = vmatprep.subr.bf16.mxu0 %v6527
        %6859 = vmatpush1.bf16.msra.mxu0 %v6526
        %6860 = vmatprep.subr.bf16.mxu0 %v6531
        %6861 = vmatpush1.bf16.msra.mxu0 %v6530
        %6862 = vmatprep.subr.bf16.mxu0 %v6535
        %6863 = vmatpush1.bf16.msra.mxu0 %v6534
        %6864 = vmatprep.subr.bf16.mxu0 %v6539
        %6865 = vmatpush1.bf16.msra.mxu0 %v6538
        %6866 = vmatprep.subr.bf16.mxu0 %v6543
        %6867 = vmatpush1.bf16.msra.mxu0 %v6542
        %6868 = vmatprep.subr.bf16.mxu0 %v6547
        %6869 = vmatpush1.bf16.msra.mxu0 %v6546
        %6870 = vmatprep.subr.bf16.mxu0 %v6551
        %6871 = vmatpush1.bf16.msra.mxu0 %v6550
        %6872 = vmatprep.subr.bf16.mxu0 %v6555
        %6873 = vmatpush1.bf16.msra.mxu0 %v6554
        %6874 = vmatprep.subr.bf16.mxu0 %v6559
        %6875 = vmatpush1.bf16.msra.mxu0 %v6558
        %6876 = vmatprep.subr.bf16.mxu0 %v6563
        %6877 = vmatpush1.bf16.msra.mxu0 %v6562
        %6878 = vmatprep.subr.bf16.mxu0 %v6567
        %6879 = vmatpush1.bf16.msra.mxu0 %v6566
        %6880 = vmatprep.subr.bf16.mxu0 %v6571
        %6881 = vmatpush1.bf16.msra.mxu0 %v6570
        %6882 = vmatprep.subr.bf16.mxu0 %v6575
        %6883 = vmatpush1.bf16.msra.mxu0 %v6574
        %6884 = vmatprep.subr.bf16.mxu0 %v6579
        %6885 = vmatpush1.bf16.msra.mxu0 %v6578
        %6886 = vmatprep.mubr.bf16.mxu0 %v5978
        %6887 = vmatmul.mubr.bf16.gmra.mrb[0].mxu0 %v5977
        %v6888 = vpop.f32.mrb[0].mxu0
        %v6889 = vadd.f32 %v6123, %v6888
        %v6890 = vpop.f32.mrb[0].mxu0
        %v6891 = vadd.f32 %v6127, %v6890
        %v6892 = vpop.f32.mrb[0].mxu0
        %v6893 = vpop.f32.mrb[0].mxu0
        %6894 = vdwg.mxu0
        %6895 = vmatprep.subr.bf16.mxu0 %v6583
        %6896 = vmatpush1.bf16.msra.mxu0 %v6582
        %6897 = vmatprep.subr.bf16.mxu0 %v6587
        %6898 = vmatpush1.bf16.msra.mxu0 %v6586
        %6899 = vmatprep.subr.bf16.mxu0 %v6591
        %6900 = vmatpush1.bf16.msra.mxu0 %v6590
        %6901 = vmatprep.subr.bf16.mxu0 %v6595
        %6902 = vmatpush1.bf16.msra.mxu0 %v6594
        %6903 = vmatprep.subr.bf16.mxu0 %v6599
        %6904 = vmatpush1.bf16.msra.mxu0 %v6598
        %6905 = vmatprep.subr.bf16.mxu0 %v6603
        %6906 = vmatpush1.bf16.msra.mxu0 %v6602
        %6907 = vmatprep.subr.bf16.mxu0 %v6607
        %6908 = vmatpush1.bf16.msra.mxu0 %v6606
        %6909 = vmatprep.subr.bf16.mxu0 %v6611
        %6910 = vmatpush1.bf16.msra.mxu0 %v6610
        %6911 = vmatprep.subr.bf16.mxu0 %v6615
        %6912 = vmatpush1.bf16.msra.mxu0 %v6614
        %6913 = vmatprep.subr.bf16.mxu0 %v6619
        %6914 = vmatpush1.bf16.msra.mxu0 %v6618
        %6915 = vmatprep.subr.bf16.mxu0 %v6623
        %6916 = vmatpush1.bf16.msra.mxu0 %v6622
        %6917 = vmatprep.subr.bf16.mxu0 %v6627
        %6918 = vmatpush1.bf16.msra.mxu0 %v6626
        %6919 = vmatprep.subr.bf16.mxu0 %v6631
        %6920 = vmatpush1.bf16.msra.mxu0 %v6630
        %6921 = vmatprep.subr.bf16.mxu0 %v6635
        %6922 = vmatpush1.bf16.msra.mxu0 %v6634
        %6923 = vmatprep.subr.bf16.mxu0 %v6639
        %6924 = vmatpush1.bf16.msra.mxu0 %v6638
        %6925 = vmatprep.subr.bf16.mxu0 %v6643
        %6926 = vmatpush1.bf16.msra.mxu0 %v6642
        %6927 = vmatprep.mubr.bf16.mxu0 %v5980
        %6928 = vmatmul.mubr.bf16.gmra.mrb[0].mxu0 %v5979
        %v6929 = vpop.f32.mrb[0].mxu0
        %v6930 = vadd.f32 %v6889, %v6929
        %v6931 = vpop.f32.mrb[0].mxu0
        %v6932 = vadd.f32 %v6891, %v6931
        %v6933 = vpop.f32.mrb[0].mxu0
        %v6934 = vpop.f32.mrb[0].mxu0
        %6935 = vdwg.mxu0
        %v6936 = vmax.f32 %v6848, 0.0
        %v6937 = vmax.f32 %v6850, 0.0
        %v6938 = vmax.f32 %v6930, 0.0
        %v6939 = vmax.f32 %v6932, 0.0
        %v6940 = vpack.c.bf16 %v6936, %v6936
        %v6941 = vpack.c.bf16 %v6937, %v6937
        %v6942 = vpack.c.bf16 %v6938, %v6938
        %v6943 = vpack.c.bf16 %v6939, %v6939
        %v6944 = vld [vmem:[%s195 + $0xc00] sm:$0xff]
        %v6945 = vld [vmem:[%s195 + $0xc08] sm:$0xff]
        %v6946 = vld [vmem:[%s195 + $0xc10] sm:$0xff]
        %v6947 = vld [vmem:[%s195 + $0xc18] sm:$0xff]
        %v6948 = vld [vmem:[%s195 + $0xc20] sm:$0xff]
        %v6949 = vld [vmem:[%s195 + $0xc28] sm:$0xff]
        %v6950 = vld [vmem:[%s195 + $0xc30] sm:$0xff]
        %v6951 = vld [vmem:[%s195 + $0xc38] sm:$0xff]
        %v6952 = vld [vmem:[%s195 + $0xc40] sm:$0xff]
        %v6953 = vld [vmem:[%s195 + $0xc48] sm:$0xff]
        %v6954 = vld [vmem:[%s195 + $0xc50] sm:$0xff]
        %v6955 = vld [vmem:[%s195 + $0xc58] sm:$0xff]
        %v6956 = vld [vmem:[%s195 + $0xc60] sm:$0xff]
        %v6957 = vld [vmem:[%s195 + $0xc68] sm:$0xff]
        %v6958 = vld [vmem:[%s195 + $0xc70] sm:$0xff]
        %v6959 = vld [vmem:[%s195 + $0xc78] sm:$0xff]
        %v6960 = vld [vmem:[%s195 + $0xc80] sm:$0xff]
        %v6961 = vld [vmem:[%s195 + $0xc88] sm:$0xff]
        %v6962 = vld [vmem:[%s195 + $0xc90] sm:$0xff]
        %v6963 = vld [vmem:[%s195 + $0xc98] sm:$0xff]
        %v6964 = vld [vmem:[%s195 + $0xca0] sm:$0xff]
        %v6965 = vld [vmem:[%s195 + $0xca8] sm:$0xff]
        %v6966 = vld [vmem:[%s195 + $0xcb0] sm:$0xff]
        %v6967 = vld [vmem:[%s195 + $0xcb8] sm:$0xff]
        %v6968 = vld [vmem:[%s195 + $0xcc0] sm:$0xff]
        %v6969 = vld [vmem:[%s195 + $0xcc8] sm:$0xff]
        %v6970 = vld [vmem:[%s195 + $0xcd0] sm:$0xff]
        %v6971 = vld [vmem:[%s195 + $0xcd8] sm:$0xff]
        %v6972 = vld [vmem:[%s195 + $0xce0] sm:$0xff]
        %v6973 = vld [vmem:[%s195 + $0xce8] sm:$0xff]
        %v6974 = vld [vmem:[%s195 + $0xcf0] sm:$0xff]
        %v6975 = vld [vmem:[%s195 + $0xcf8] sm:$0xff]
        %v6976 = vld [vmem:[%s195 + $0xd00] sm:$0xff]
        %v6977 = vld [vmem:[%s195 + $0xd08] sm:$0xff]
        %v6978 = vld [vmem:[%s195 + $0xd10] sm:$0xff]
        %v6979 = vld [vmem:[%s195 + $0xd18] sm:$0xff]
        %v6980 = vld [vmem:[%s195 + $0xd20] sm:$0xff]
        %v6981 = vld [vmem:[%s195 + $0xd28] sm:$0xff]
        %v6982 = vld [vmem:[%s195 + $0xd30] sm:$0xff]
        %v6983 = vld [vmem:[%s195 + $0xd38] sm:$0xff]
        %v6984 = vld [vmem:[%s195 + $0xd40] sm:$0xff]
        %v6985 = vld [vmem:[%s195 + $0xd48] sm:$0xff]
        %v6986 = vld [vmem:[%s195 + $0xd50] sm:$0xff]
        %v6987 = vld [vmem:[%s195 + $0xd58] sm:$0xff]
        %v6988 = vld [vmem:[%s195 + $0xd60] sm:$0xff]
        %v6989 = vld [vmem:[%s195 + $0xd68] sm:$0xff]
        %v6990 = vld [vmem:[%s195 + $0xd70] sm:$0xff]
        %v6991 = vld [vmem:[%s195 + $0xd78] sm:$0xff]
        %v6992 = vld [vmem:[%s195 + $0xd80] sm:$0xff]
        %v6993 = vld [vmem:[%s195 + $0xd88] sm:$0xff]
        %v6994 = vld [vmem:[%s195 + $0xd90] sm:$0xff]
        %v6995 = vld [vmem:[%s195 + $0xd98] sm:$0xff]
        %v6996 = vld [vmem:[%s195 + $0xda0] sm:$0xff]
        %v6997 = vld [vmem:[%s195 + $0xda8] sm:$0xff]
        %v6998 = vld [vmem:[%s195 + $0xdb0] sm:$0xff]
        %v6999 = vld [vmem:[%s195 + $0xdb8] sm:$0xff]
        %v7000 = vld [vmem:[%s195 + $0xdc0] sm:$0xff]
        %v7001 = vld [vmem:[%s195 + $0xdc8] sm:$0xff]
        %v7002 = vld [vmem:[%s195 + $0xdd0] sm:$0xff]
        %v7003 = vld [vmem:[%s195 + $0xdd8] sm:$0xff]
        %v7004 = vld [vmem:[%s195 + $0xde0] sm:$0xff]
        %v7005 = vld [vmem:[%s195 + $0xde8] sm:$0xff]
        %v7006 = vld [vmem:[%s195 + $0xdf0] sm:$0xff]
        %v7007 = vld [vmem:[%s195 + $0xdf8] sm:$0xff]
        %v7008 = vld [vmem:[%s195 + $0xe00] sm:$0xff]
        %v7009 = vld [vmem:[%s195 + $0xe08] sm:$0xff]
        %v7010 = vld [vmem:[%s195 + $0xe10] sm:$0xff]
        %v7011 = vld [vmem:[%s195 + $0xe18] sm:$0xff]
        %v7012 = vld [vmem:[%s195 + $0xe20] sm:$0xff]
        %v7013 = vld [vmem:[%s195 + $0xe28] sm:$0xff]
        %v7014 = vld [vmem:[%s195 + $0xe30] sm:$0xff]
        %v7015 = vld [vmem:[%s195 + $0xe38] sm:$0xff]
        %v7016 = vld [vmem:[%s195 + $0xe40] sm:$0xff]
        %v7017 = vld [vmem:[%s195 + $0xe48] sm:$0xff]
        %v7018 = vld [vmem:[%s195 + $0xe50] sm:$0xff]
        %v7019 = vld [vmem:[%s195 + $0xe58] sm:$0xff]
        %v7020 = vld [vmem:[%s195 + $0xe60] sm:$0xff]
        %v7021 = vld [vmem:[%s195 + $0xe68] sm:$0xff]
        %v7022 = vld [vmem:[%s195 + $0xe70] sm:$0xff]
        %v7023 = vld [vmem:[%s195 + $0xe78] sm:$0xff]
        %v7024 = vld [vmem:[%s195 + $0xe80] sm:$0xff]
        %v7025 = vld [vmem:[%s195 + $0xe88] sm:$0xff]
        %v7026 = vld [vmem:[%s195 + $0xe90] sm:$0xff]
        %v7027 = vld [vmem:[%s195 + $0xe98] sm:$0xff]
        %v7028 = vld [vmem:[%s195 + $0xea0] sm:$0xff]
        %v7029 = vld [vmem:[%s195 + $0xea8] sm:$0xff]
        %v7030 = vld [vmem:[%s195 + $0xeb0] sm:$0xff]
        %v7031 = vld [vmem:[%s195 + $0xeb8] sm:$0xff]
        %v7032 = vld [vmem:[%s195 + $0xec0] sm:$0xff]
        %v7033 = vld [vmem:[%s195 + $0xec8] sm:$0xff]
        %v7034 = vld [vmem:[%s195 + $0xed0] sm:$0xff]
        %v7035 = vld [vmem:[%s195 + $0xed8] sm:$0xff]
        %v7036 = vld [vmem:[%s195 + $0xee0] sm:$0xff]
        %v7037 = vld [vmem:[%s195 + $0xee8] sm:$0xff]
        %v7038 = vld [vmem:[%s195 + $0xef0] sm:$0xff]
        %v7039 = vld [vmem:[%s195 + $0xef8] sm:$0xff]
        %v7040 = vld [vmem:[%s195 + $0xf00] sm:$0xff]
        %v7041 = vld [vmem:[%s195 + $0xf08] sm:$0xff]
        %v7042 = vld [vmem:[%s195 + $0xf10] sm:$0xff]
        %v7043 = vld [vmem:[%s195 + $0xf18] sm:$0xff]
        %v7044 = vld [vmem:[%s195 + $0xf20] sm:$0xff]
        %v7045 = vld [vmem:[%s195 + $0xf28] sm:$0xff]
        %v7046 = vld [vmem:[%s195 + $0xf30] sm:$0xff]
        %v7047 = vld [vmem:[%s195 + $0xf38] sm:$0xff]
        %v7048 = vld [vmem:[%s195 + $0xf40] sm:$0xff]
        %v7049 = vld [vmem:[%s195 + $0xf48] sm:$0xff]
        %v7050 = vld [vmem:[%s195 + $0xf50] sm:$0xff]
        %v7051 = vld [vmem:[%s195 + $0xf58] sm:$0xff]
        %v7052 = vld [vmem:[%s195 + $0xf60] sm:$0xff]
        %v7053 = vld [vmem:[%s195 + $0xf68] sm:$0xff]
        %v7054 = vld [vmem:[%s195 + $0xf70] sm:$0xff]
        %v7055 = vld [vmem:[%s195 + $0xf78] sm:$0xff]
        %v7056 = vld [vmem:[%s195 + $0xf80] sm:$0xff]
        %v7057 = vld [vmem:[%s195 + $0xf88] sm:$0xff]
        %v7058 = vld [vmem:[%s195 + $0xf90] sm:$0xff]
        %v7059 = vld [vmem:[%s195 + $0xf98] sm:$0xff]
        %v7060 = vld [vmem:[%s195 + $0xfa0] sm:$0xff]
        %v7061 = vld [vmem:[%s195 + $0xfa8] sm:$0xff]
        %v7062 = vld [vmem:[%s195 + $0xfb0] sm:$0xff]
        %v7063 = vld [vmem:[%s195 + $0xfb8] sm:$0xff]
        %v7064 = vld [vmem:[%s195 + $0xfc0] sm:$0xff]
        %v7065 = vld [vmem:[%s195 + $0xfc8] sm:$0xff]
        %v7066 = vld [vmem:[%s195 + $0xfd0] sm:$0xff]
        %v7067 = vld [vmem:[%s195 + $0xfd8] sm:$0xff]
        %v7068 = vld [vmem:[%s195 + $0xfe0] sm:$0xff]
        %v7069 = vld [vmem:[%s195 + $0xfe8] sm:$0xff]
        %v7070 = vld [vmem:[%s195 + $0xff0] sm:$0xff]
        %v7071 = vld [vmem:[%s195 + $0xff8] sm:$0xff]
        %s7072 = scalar_lea.vmem %s3, 16
        %v7073 = vld [vmem:[%s7072] sm:$0xf]
        %v7075 = vlaneseq
        %v7076 = vshrl.u32 %v7075, 7
        %v7077 = vsub.s32 0, %v7076
        %v7078 = vrot.slane %v7073, %v7077
        %v7079 = vlaneseq
        %v7080 = vshrl.u32 %v7079, 7
        %v7081 = vsub.s32 1, %v7080
        %v7082 = vrot.slane %v7073, %v7081
        %v7083 = vlaneseq
        %v7084 = vshrl.u32 %v7083, 7
        %v7085 = vsub.s32 2, %v7084
        %v7086 = vrot.slane %v7073, %v7085
        %v7087 = vlaneseq
        %v7088 = vshrl.u32 %v7087, 7
        %v7089 = vsub.s32 3, %v7088
        %v7090 = vrot.slane %v7073, %v7089
        %v7223 = vunpack.c.l.b16 %v6944
        %v7224 = vunpack.c.h.b16 %v6944
        %v7225 = vunpack.c.l.b16 %v6945
        %v7226 = vunpack.c.h.b16 %v6945
        %v7227 = vunpack.c.l.b16 %v6946
        %v7228 = vunpack.c.h.b16 %v6946
        %v7229 = vunpack.c.l.b16 %v6947
        %v7230 = vunpack.c.h.b16 %v6947
        %v7231 = vunpack.c.l.b16 %v6948
        %v7232 = vunpack.c.h.b16 %v6948
        %v7233 = vunpack.c.l.b16 %v6949
        %v7234 = vunpack.c.h.b16 %v6949
        %v7235 = vunpack.c.l.b16 %v6950
        %v7236 = vunpack.c.h.b16 %v6950
        %v7237 = vunpack.c.l.b16 %v6951
        %v7238 = vunpack.c.h.b16 %v6951
        %v7239 = vunpack.c.l.b16 %v6952
        %v7240 = vunpack.c.h.b16 %v6952
        %v7241 = vunpack.c.l.b16 %v6953
        %v7242 = vunpack.c.h.b16 %v6953
        %v7243 = vunpack.c.l.b16 %v6954
        %v7244 = vunpack.c.h.b16 %v6954
        %v7245 = vunpack.c.l.b16 %v6955
        %v7246 = vunpack.c.h.b16 %v6955
        %v7247 = vunpack.c.l.b16 %v6956
        %v7248 = vunpack.c.h.b16 %v6956
        %v7249 = vunpack.c.l.b16 %v6957
        %v7250 = vunpack.c.h.b16 %v6957
        %v7251 = vunpack.c.l.b16 %v6958
        %v7252 = vunpack.c.h.b16 %v6958
        %v7253 = vunpack.c.l.b16 %v6959
        %v7254 = vunpack.c.h.b16 %v6959
        %v7255 = vunpack.c.l.b16 %v6960
        %v7256 = vunpack.c.h.b16 %v6960
        %v7257 = vunpack.c.l.b16 %v6961
        %v7258 = vunpack.c.h.b16 %v6961
        %v7259 = vunpack.c.l.b16 %v6962
        %v7260 = vunpack.c.h.b16 %v6962
        %v7261 = vunpack.c.l.b16 %v6963
        %v7262 = vunpack.c.h.b16 %v6963
        %v7263 = vunpack.c.l.b16 %v6964
        %v7264 = vunpack.c.h.b16 %v6964
        %v7265 = vunpack.c.l.b16 %v6965
        %v7266 = vunpack.c.h.b16 %v6965
        %v7267 = vunpack.c.l.b16 %v6966
        %v7268 = vunpack.c.h.b16 %v6966
        %v7269 = vunpack.c.l.b16 %v6967
        %v7270 = vunpack.c.h.b16 %v6967
        %v7271 = vunpack.c.l.b16 %v6968
        %v7272 = vunpack.c.h.b16 %v6968
        %v7273 = vunpack.c.l.b16 %v6969
        %v7274 = vunpack.c.h.b16 %v6969
        %v7275 = vunpack.c.l.b16 %v6970
        %v7276 = vunpack.c.h.b16 %v6970
        %v7277 = vunpack.c.l.b16 %v6971
        %v7278 = vunpack.c.h.b16 %v6971
        %v7279 = vunpack.c.l.b16 %v6972
        %v7280 = vunpack.c.h.b16 %v6972
        %v7281 = vunpack.c.l.b16 %v6973
        %v7282 = vunpack.c.h.b16 %v6973
        %v7283 = vunpack.c.l.b16 %v6974
        %v7284 = vunpack.c.h.b16 %v6974
        %v7285 = vunpack.c.l.b16 %v6975
        %v7286 = vunpack.c.h.b16 %v6975
        %v7287 = vunpack.c.l.b16 %v6976
        %v7288 = vunpack.c.h.b16 %v6976
        %v7289 = vunpack.c.l.b16 %v6977
        %v7290 = vunpack.c.h.b16 %v6977
        %v7291 = vunpack.c.l.b16 %v6978
        %v7292 = vunpack.c.h.b16 %v6978
        %v7293 = vunpack.c.l.b16 %v6979
        %v7294 = vunpack.c.h.b16 %v6979
        %v7295 = vunpack.c.l.b16 %v6980
        %v7296 = vunpack.c.h.b16 %v6980
        %v7297 = vunpack.c.l.b16 %v6981
        %v7298 = vunpack.c.h.b16 %v6981
        %v7299 = vunpack.c.l.b16 %v6982
        %v7300 = vunpack.c.h.b16 %v6982
        %v7301 = vunpack.c.l.b16 %v6983
        %v7302 = vunpack.c.h.b16 %v6983
        %v7303 = vunpack.c.l.b16 %v6984
        %v7304 = vunpack.c.h.b16 %v6984
        %v7305 = vunpack.c.l.b16 %v6985
        %v7306 = vunpack.c.h.b16 %v6985
        %v7307 = vunpack.c.l.b16 %v6986
        %v7308 = vunpack.c.h.b16 %v6986
        %v7309 = vunpack.c.l.b16 %v6987
        %v7310 = vunpack.c.h.b16 %v6987
        %v7311 = vunpack.c.l.b16 %v6988
        %v7312 = vunpack.c.h.b16 %v6988
        %v7313 = vunpack.c.l.b16 %v6989
        %v7314 = vunpack.c.h.b16 %v6989
        %v7315 = vunpack.c.l.b16 %v6990
        %v7316 = vunpack.c.h.b16 %v6990
        %v7317 = vunpack.c.l.b16 %v6991
        %v7318 = vunpack.c.h.b16 %v6991
        %v7319 = vunpack.c.l.b16 %v6992
        %v7320 = vunpack.c.h.b16 %v6992
        %v7321 = vunpack.c.l.b16 %v6993
        %v7322 = vunpack.c.h.b16 %v6993
        %v7323 = vunpack.c.l.b16 %v6994
        %v7324 = vunpack.c.h.b16 %v6994
        %v7325 = vunpack.c.l.b16 %v6995
        %v7326 = vunpack.c.h.b16 %v6995
        %v7327 = vunpack.c.l.b16 %v6996
        %v7328 = vunpack.c.h.b16 %v6996
        %v7329 = vunpack.c.l.b16 %v6997
        %v7330 = vunpack.c.h.b16 %v6997
        %v7331 = vunpack.c.l.b16 %v6998
        %v7332 = vunpack.c.h.b16 %v6998
        %v7333 = vunpack.c.l.b16 %v6999
        %v7334 = vunpack.c.h.b16 %v6999
        %v7335 = vunpack.c.l.b16 %v7000
        %v7336 = vunpack.c.h.b16 %v7000
        %v7337 = vunpack.c.l.b16 %v7001
        %v7338 = vunpack.c.h.b16 %v7001
        %v7339 = vunpack.c.l.b16 %v7002
        %v7340 = vunpack.c.h.b16 %v7002
        %v7341 = vunpack.c.l.b16 %v7003
        %v7342 = vunpack.c.h.b16 %v7003
        %v7343 = vunpack.c.l.b16 %v7004
        %v7344 = vunpack.c.h.b16 %v7004
        %v7345 = vunpack.c.l.b16 %v7005
        %v7346 = vunpack.c.h.b16 %v7005
        %v7347 = vunpack.c.l.b16 %v7006
        %v7348 = vunpack.c.h.b16 %v7006
        %v7349 = vunpack.c.l.b16 %v7007
        %v7350 = vunpack.c.h.b16 %v7007
        %v7351 = vunpack.c.l.b16 %v7008
        %v7352 = vunpack.c.h.b16 %v7008
        %v7353 = vunpack.c.l.b16 %v7009
        %v7354 = vunpack.c.h.b16 %v7009
        %v7355 = vunpack.c.l.b16 %v7010
        %v7356 = vunpack.c.h.b16 %v7010
        %v7357 = vunpack.c.l.b16 %v7011
        %v7358 = vunpack.c.h.b16 %v7011
        %v7359 = vunpack.c.l.b16 %v7012
        %v7360 = vunpack.c.h.b16 %v7012
        %v7361 = vunpack.c.l.b16 %v7013
        %v7362 = vunpack.c.h.b16 %v7013
        %v7363 = vunpack.c.l.b16 %v7014
        %v7364 = vunpack.c.h.b16 %v7014
        %v7365 = vunpack.c.l.b16 %v7015
        %v7366 = vunpack.c.h.b16 %v7015
        %v7367 = vunpack.c.l.b16 %v7016
        %v7368 = vunpack.c.h.b16 %v7016
        %v7369 = vunpack.c.l.b16 %v7017
        %v7370 = vunpack.c.h.b16 %v7017
        %v7371 = vunpack.c.l.b16 %v7018
        %v7372 = vunpack.c.h.b16 %v7018
        %v7373 = vunpack.c.l.b16 %v7019
        %v7374 = vunpack.c.h.b16 %v7019
        %v7375 = vunpack.c.l.b16 %v7020
        %v7376 = vunpack.c.h.b16 %v7020
        %v7377 = vunpack.c.l.b16 %v7021
        %v7378 = vunpack.c.h.b16 %v7021
        %v7379 = vunpack.c.l.b16 %v7022
        %v7380 = vunpack.c.h.b16 %v7022
        %v7381 = vunpack.c.l.b16 %v7023
        %v7382 = vunpack.c.h.b16 %v7023
        %v7383 = vunpack.c.l.b16 %v7024
        %v7384 = vunpack.c.h.b16 %v7024
        %v7385 = vunpack.c.l.b16 %v7025
        %v7386 = vunpack.c.h.b16 %v7025
        %v7387 = vunpack.c.l.b16 %v7026
        %v7388 = vunpack.c.h.b16 %v7026
        %v7389 = vunpack.c.l.b16 %v7027
        %v7390 = vunpack.c.h.b16 %v7027
        %v7391 = vunpack.c.l.b16 %v7028
        %v7392 = vunpack.c.h.b16 %v7028
        %v7393 = vunpack.c.l.b16 %v7029
        %v7394 = vunpack.c.h.b16 %v7029
        %v7395 = vunpack.c.l.b16 %v7030
        %v7396 = vunpack.c.h.b16 %v7030
        %v7397 = vunpack.c.l.b16 %v7031
        %v7398 = vunpack.c.h.b16 %v7031
        %v7399 = vunpack.c.l.b16 %v7032
        %v7400 = vunpack.c.h.b16 %v7032
        %v7401 = vunpack.c.l.b16 %v7033
        %v7402 = vunpack.c.h.b16 %v7033
        %v7403 = vunpack.c.l.b16 %v7034
        %v7404 = vunpack.c.h.b16 %v7034
        %v7405 = vunpack.c.l.b16 %v7035
        %v7406 = vunpack.c.h.b16 %v7035
        %v7407 = vunpack.c.l.b16 %v7036
        %v7408 = vunpack.c.h.b16 %v7036
        %v7409 = vunpack.c.l.b16 %v7037
        %v7410 = vunpack.c.h.b16 %v7037
        %v7411 = vunpack.c.l.b16 %v7038
        %v7412 = vunpack.c.h.b16 %v7038
        %v7413 = vunpack.c.l.b16 %v7039
        %v7414 = vunpack.c.h.b16 %v7039
        %v7415 = vunpack.c.l.b16 %v7040
        %v7416 = vunpack.c.h.b16 %v7040
        %v7417 = vunpack.c.l.b16 %v7041
        %v7418 = vunpack.c.h.b16 %v7041
        %v7419 = vunpack.c.l.b16 %v7042
        %v7420 = vunpack.c.h.b16 %v7042
        %v7421 = vunpack.c.l.b16 %v7043
        %v7422 = vunpack.c.h.b16 %v7043
        %v7423 = vunpack.c.l.b16 %v7044
        %v7424 = vunpack.c.h.b16 %v7044
        %v7425 = vunpack.c.l.b16 %v7045
        %v7426 = vunpack.c.h.b16 %v7045
        %v7427 = vunpack.c.l.b16 %v7046
        %v7428 = vunpack.c.h.b16 %v7046
        %v7429 = vunpack.c.l.b16 %v7047
        %v7430 = vunpack.c.h.b16 %v7047
        %v7431 = vunpack.c.l.b16 %v7048
        %v7432 = vunpack.c.h.b16 %v7048
        %v7433 = vunpack.c.l.b16 %v7049
        %v7434 = vunpack.c.h.b16 %v7049
        %v7435 = vunpack.c.l.b16 %v7050
        %v7436 = vunpack.c.h.b16 %v7050
        %v7437 = vunpack.c.l.b16 %v7051
        %v7438 = vunpack.c.h.b16 %v7051
        %v7439 = vunpack.c.l.b16 %v7052
        %v7440 = vunpack.c.h.b16 %v7052
        %v7441 = vunpack.c.l.b16 %v7053
        %v7442 = vunpack.c.h.b16 %v7053
        %v7443 = vunpack.c.l.b16 %v7054
        %v7444 = vunpack.c.h.b16 %v7054
        %v7445 = vunpack.c.l.b16 %v7055
        %v7446 = vunpack.c.h.b16 %v7055
        %v7447 = vunpack.c.l.b16 %v7056
        %v7448 = vunpack.c.h.b16 %v7056
        %v7449 = vunpack.c.l.b16 %v7057
        %v7450 = vunpack.c.h.b16 %v7057
        %v7451 = vunpack.c.l.b16 %v7058
        %v7452 = vunpack.c.h.b16 %v7058
        %v7453 = vunpack.c.l.b16 %v7059
        %v7454 = vunpack.c.h.b16 %v7059
        %v7455 = vunpack.c.l.b16 %v7060
        %v7456 = vunpack.c.h.b16 %v7060
        %v7457 = vunpack.c.l.b16 %v7061
        %v7458 = vunpack.c.h.b16 %v7061
        %v7459 = vunpack.c.l.b16 %v7062
        %v7460 = vunpack.c.h.b16 %v7062
        %v7461 = vunpack.c.l.b16 %v7063
        %v7462 = vunpack.c.h.b16 %v7063
        %v7463 = vunpack.c.l.b16 %v7064
        %v7464 = vunpack.c.h.b16 %v7064
        %v7465 = vunpack.c.l.b16 %v7065
        %v7466 = vunpack.c.h.b16 %v7065
        %v7467 = vunpack.c.l.b16 %v7066
        %v7468 = vunpack.c.h.b16 %v7066
        %v7469 = vunpack.c.l.b16 %v7067
        %v7470 = vunpack.c.h.b16 %v7067
        %v7471 = vunpack.c.l.b16 %v7068
        %v7472 = vunpack.c.h.b16 %v7068
        %v7473 = vunpack.c.l.b16 %v7069
        %v7474 = vunpack.c.h.b16 %v7069
        %v7475 = vunpack.c.l.b16 %v7070
        %v7476 = vunpack.c.h.b16 %v7070
        %v7477 = vunpack.c.l.b16 %v7071
        %v7478 = vunpack.c.h.b16 %v7071
        %v7479 = vpack.c.b16 %v7227, %v7223
        %v7480 = vpack.c.b16 %v7228, %v7224
        %v7481 = vpack.c.b16 %v7229, %v7225
        %v7482 = vpack.c.b16 %v7230, %v7226
        %v7483 = vpack.c.b16 %v7235, %v7231
        %v7484 = vpack.c.b16 %v7236, %v7232
        %v7485 = vpack.c.b16 %v7237, %v7233
        %v7486 = vpack.c.b16 %v7238, %v7234
        %v7487 = vpack.c.b16 %v7243, %v7239
        %v7488 = vpack.c.b16 %v7244, %v7240
        %v7489 = vpack.c.b16 %v7245, %v7241
        %v7490 = vpack.c.b16 %v7246, %v7242
        %v7491 = vpack.c.b16 %v7251, %v7247
        %v7492 = vpack.c.b16 %v7252, %v7248
        %v7493 = vpack.c.b16 %v7253, %v7249
        %v7494 = vpack.c.b16 %v7254, %v7250
        %v7495 = vpack.c.b16 %v7259, %v7255
        %v7496 = vpack.c.b16 %v7260, %v7256
        %v7497 = vpack.c.b16 %v7261, %v7257
        %v7498 = vpack.c.b16 %v7262, %v7258
        %v7499 = vpack.c.b16 %v7267, %v7263
        %v7500 = vpack.c.b16 %v7268, %v7264
        %v7501 = vpack.c.b16 %v7269, %v7265
        %v7502 = vpack.c.b16 %v7270, %v7266
        %v7503 = vpack.c.b16 %v7275, %v7271
        %v7504 = vpack.c.b16 %v7276, %v7272
        %v7505 = vpack.c.b16 %v7277, %v7273
        %v7506 = vpack.c.b16 %v7278, %v7274
        %v7507 = vpack.c.b16 %v7283, %v7279
        %v7508 = vpack.c.b16 %v7284, %v7280
        %v7509 = vpack.c.b16 %v7285, %v7281
        %v7510 = vpack.c.b16 %v7286, %v7282
        %v7511 = vpack.c.b16 %v7291, %v7287
        %v7512 = vpack.c.b16 %v7292, %v7288
        %v7513 = vpack.c.b16 %v7293, %v7289
        %v7514 = vpack.c.b16 %v7294, %v7290
        %v7515 = vpack.c.b16 %v7299, %v7295
        %v7516 = vpack.c.b16 %v7300, %v7296
        %v7517 = vpack.c.b16 %v7301, %v7297
        %v7518 = vpack.c.b16 %v7302, %v7298
        %v7519 = vpack.c.b16 %v7307, %v7303
        %v7520 = vpack.c.b16 %v7308, %v7304
        %v7521 = vpack.c.b16 %v7309, %v7305
        %v7522 = vpack.c.b16 %v7310, %v7306
        %v7523 = vpack.c.b16 %v7315, %v7311
        %v7524 = vpack.c.b16 %v7316, %v7312
        %v7525 = vpack.c.b16 %v7317, %v7313
        %v7526 = vpack.c.b16 %v7318, %v7314
        %v7527 = vpack.c.b16 %v7323, %v7319
        %v7528 = vpack.c.b16 %v7324, %v7320
        %v7529 = vpack.c.b16 %v7325, %v7321
        %v7530 = vpack.c.b16 %v7326, %v7322
        %v7531 = vpack.c.b16 %v7331, %v7327
        %v7532 = vpack.c.b16 %v7332, %v7328
        %v7533 = vpack.c.b16 %v7333, %v7329
        %v7534 = vpack.c.b16 %v7334, %v7330
        %v7535 = vpack.c.b16 %v7339, %v7335
        %v7536 = vpack.c.b16 %v7340, %v7336
        %v7537 = vpack.c.b16 %v7341, %v7337
        %v7538 = vpack.c.b16 %v7342, %v7338
        %v7539 = vpack.c.b16 %v7347, %v7343
        %v7540 = vpack.c.b16 %v7348, %v7344
        %v7541 = vpack.c.b16 %v7349, %v7345
        %v7542 = vpack.c.b16 %v7350, %v7346
        %v7543 = vpack.c.b16 %v7355, %v7351
        %v7544 = vpack.c.b16 %v7356, %v7352
        %v7545 = vpack.c.b16 %v7357, %v7353
        %v7546 = vpack.c.b16 %v7358, %v7354
        %v7547 = vpack.c.b16 %v7363, %v7359
        %v7548 = vpack.c.b16 %v7364, %v7360
        %v7549 = vpack.c.b16 %v7365, %v7361
        %v7550 = vpack.c.b16 %v7366, %v7362
        %v7551 = vpack.c.b16 %v7371, %v7367
        %v7552 = vpack.c.b16 %v7372, %v7368
        %v7553 = vpack.c.b16 %v7373, %v7369
        %v7554 = vpack.c.b16 %v7374, %v7370
        %v7555 = vpack.c.b16 %v7379, %v7375
        %v7556 = vpack.c.b16 %v7380, %v7376
        %v7557 = vpack.c.b16 %v7381, %v7377
        %v7558 = vpack.c.b16 %v7382, %v7378
        %v7559 = vpack.c.b16 %v7387, %v7383
        %v7560 = vpack.c.b16 %v7388, %v7384
        %v7561 = vpack.c.b16 %v7389, %v7385
        %v7562 = vpack.c.b16 %v7390, %v7386
        %v7563 = vpack.c.b16 %v7395, %v7391
        %v7564 = vpack.c.b16 %v7396, %v7392
        %v7565 = vpack.c.b16 %v7397, %v7393
        %v7566 = vpack.c.b16 %v7398, %v7394
        %v7567 = vpack.c.b16 %v7403, %v7399
        %v7568 = vpack.c.b16 %v7404, %v7400
        %v7569 = vpack.c.b16 %v7405, %v7401
        %v7570 = vpack.c.b16 %v7406, %v7402
        %v7571 = vpack.c.b16 %v7411, %v7407
        %v7572 = vpack.c.b16 %v7412, %v7408
        %v7573 = vpack.c.b16 %v7413, %v7409
        %v7574 = vpack.c.b16 %v7414, %v7410
        %v7575 = vpack.c.b16 %v7419, %v7415
        %v7576 = vpack.c.b16 %v7420, %v7416
        %v7577 = vpack.c.b16 %v7421, %v7417
        %v7578 = vpack.c.b16 %v7422, %v7418
        %v7579 = vpack.c.b16 %v7427, %v7423
        %v7580 = vpack.c.b16 %v7428, %v7424
        %v7581 = vpack.c.b16 %v7429, %v7425
        %v7582 = vpack.c.b16 %v7430, %v7426
        %v7583 = vpack.c.b16 %v7435, %v7431
        %v7584 = vpack.c.b16 %v7436, %v7432
        %v7585 = vpack.c.b16 %v7437, %v7433
        %v7586 = vpack.c.b16 %v7438, %v7434
        %v7587 = vpack.c.b16 %v7443, %v7439
        %v7588 = vpack.c.b16 %v7444, %v7440
        %v7589 = vpack.c.b16 %v7445, %v7441
        %v7590 = vpack.c.b16 %v7446, %v7442
        %v7591 = vpack.c.b16 %v7451, %v7447
        %v7592 = vpack.c.b16 %v7452, %v7448
        %v7593 = vpack.c.b16 %v7453, %v7449
        %v7594 = vpack.c.b16 %v7454, %v7450
        %v7595 = vpack.c.b16 %v7459, %v7455
        %v7596 = vpack.c.b16 %v7460, %v7456
        %v7597 = vpack.c.b16 %v7461, %v7457
        %v7598 = vpack.c.b16 %v7462, %v7458
        %v7599 = vpack.c.b16 %v7467, %v7463
        %v7600 = vpack.c.b16 %v7468, %v7464
        %v7601 = vpack.c.b16 %v7469, %v7465
        %v7602 = vpack.c.b16 %v7470, %v7466
        %v7603 = vpack.c.b16 %v7475, %v7471
        %v7604 = vpack.c.b16 %v7476, %v7472
        %v7605 = vpack.c.b16 %v7477, %v7473
        %v7606 = vpack.c.b16 %v7478, %v7474
        %7735 = vmatprep.subr.bf16.mxu0 %v7480
        %7736 = vmatpush1.bf16.msra.mxu0 %v7479
        %7737 = vmatprep.subr.bf16.mxu0 %v7484
        %7738 = vmatpush1.bf16.msra.mxu0 %v7483
        %7739 = vmatprep.subr.bf16.mxu0 %v7488
        %7740 = vmatpush1.bf16.msra.mxu0 %v7487
        %7741 = vmatprep.subr.bf16.mxu0 %v7492
        %7742 = vmatpush1.bf16.msra.mxu0 %v7491
        %7743 = vmatprep.subr.bf16.mxu0 %v7496
        %7744 = vmatpush1.bf16.msra.mxu0 %v7495
        %7745 = vmatprep.subr.bf16.mxu0 %v7500
        %7746 = vmatpush1.bf16.msra.mxu0 %v7499
        %7747 = vmatprep.subr.bf16.mxu0 %v7504
        %7748 = vmatpush1.bf16.msra.mxu0 %v7503
        %7749 = vmatprep.subr.bf16.mxu0 %v7508
        %7750 = vmatpush1.bf16.msra.mxu0 %v7507
        %7751 = vmatprep.subr.bf16.mxu0 %v7512
        %7752 = vmatpush1.bf16.msra.mxu0 %v7511
        %7753 = vmatprep.subr.bf16.mxu0 %v7516
        %7754 = vmatpush1.bf16.msra.mxu0 %v7515
        %7755 = vmatprep.subr.bf16.mxu0 %v7520
        %7756 = vmatpush1.bf16.msra.mxu0 %v7519
        %7757 = vmatprep.subr.bf16.mxu0 %v7524
        %7758 = vmatpush1.bf16.msra.mxu0 %v7523
        %7759 = vmatprep.subr.bf16.mxu0 %v7528
        %7760 = vmatpush1.bf16.msra.mxu0 %v7527
        %7761 = vmatprep.subr.bf16.mxu0 %v7532
        %7762 = vmatpush1.bf16.msra.mxu0 %v7531
        %7763 = vmatprep.subr.bf16.mxu0 %v7536
        %7764 = vmatpush1.bf16.msra.mxu0 %v7535
        %7765 = vmatprep.subr.bf16.mxu0 %v7540
        %7766 = vmatpush1.bf16.msra.mxu0 %v7539
        %7767 = vmatprep.mubr.bf16.mxu0 %v6941
        %7768 = vmatmul.mubr.bf16.gmra.mrb[0].mxu0 %v6940
        %v7769 = vpop.f32.mrb[0].mxu0
        %v7770 = vadd.f32 %v7078, %v7769
        %v7771 = vpop.f32.mrb[0].mxu0
        %v7772 = vadd.f32 %v7082, %v7771
        %v7773 = vpop.f32.mrb[0].mxu0
        %v7774 = vpop.f32.mrb[0].mxu0
        %7775 = vdwg.mxu0
        %7776 = vmatprep.subr.bf16.mxu0 %v7544
        %7777 = vmatpush1.bf16.msra.mxu0 %v7543
        %7778 = vmatprep.subr.bf16.mxu0 %v7548
        %7779 = vmatpush1.bf16.msra.mxu0 %v7547
        %7780 = vmatprep.subr.bf16.mxu0 %v7552
        %7781 = vmatpush1.bf16.msra.mxu0 %v7551
        %7782 = vmatprep.subr.bf16.mxu0 %v7556
        %7783 = vmatpush1.bf16.msra.mxu0 %v7555
        %7784 = vmatprep.subr.bf16.mxu0 %v7560
        %7785 = vmatpush1.bf16.msra.mxu0 %v7559
        %7786 = vmatprep.subr.bf16.mxu0 %v7564
        %7787 = vmatpush1.bf16.msra.mxu0 %v7563
        %7788 = vmatprep.subr.bf16.mxu0 %v7568
        %7789 = vmatpush1.bf16.msra.mxu0 %v7567
        %7790 = vmatprep.subr.bf16.mxu0 %v7572
        %7791 = vmatpush1.bf16.msra.mxu0 %v7571
        %7792 = vmatprep.subr.bf16.mxu0 %v7576
        %7793 = vmatpush1.bf16.msra.mxu0 %v7575
        %7794 = vmatprep.subr.bf16.mxu0 %v7580
        %7795 = vmatpush1.bf16.msra.mxu0 %v7579
        %7796 = vmatprep.subr.bf16.mxu0 %v7584
        %7797 = vmatpush1.bf16.msra.mxu0 %v7583
        %7798 = vmatprep.subr.bf16.mxu0 %v7588
        %7799 = vmatpush1.bf16.msra.mxu0 %v7587
        %7800 = vmatprep.subr.bf16.mxu0 %v7592
        %7801 = vmatpush1.bf16.msra.mxu0 %v7591
        %7802 = vmatprep.subr.bf16.mxu0 %v7596
        %7803 = vmatpush1.bf16.msra.mxu0 %v7595
        %7804 = vmatprep.subr.bf16.mxu0 %v7600
        %7805 = vmatpush1.bf16.msra.mxu0 %v7599
        %7806 = vmatprep.subr.bf16.mxu0 %v7604
        %7807 = vmatpush1.bf16.msra.mxu0 %v7603
        %7808 = vmatprep.mubr.bf16.mxu0 %v6943
        %7809 = vmatmul.mubr.bf16.gmra.mrb[0].mxu0 %v6942
        %v7810 = vpop.f32.mrb[0].mxu0
        %v7811 = vadd.f32 %v7770, %v7810
        %v7812 = vpop.f32.mrb[0].mxu0
        %v7813 = vadd.f32 %v7772, %v7812
        %v7814 = vpop.f32.mrb[0].mxu0
        %v7815 = vpop.f32.mrb[0].mxu0
        %7816 = vdwg.mxu0
        %7817 = vmatprep.subr.bf16.mxu0 %v7482
        %7818 = vmatpush1.bf16.msra.mxu0 %v7481
        %7819 = vmatprep.subr.bf16.mxu0 %v7486
        %7820 = vmatpush1.bf16.msra.mxu0 %v7485
        %7821 = vmatprep.subr.bf16.mxu0 %v7490
        %7822 = vmatpush1.bf16.msra.mxu0 %v7489
        %7823 = vmatprep.subr.bf16.mxu0 %v7494
        %7824 = vmatpush1.bf16.msra.mxu0 %v7493
        %7825 = vmatprep.subr.bf16.mxu0 %v7498
        %7826 = vmatpush1.bf16.msra.mxu0 %v7497
        %7827 = vmatprep.subr.bf16.mxu0 %v7502
        %7828 = vmatpush1.bf16.msra.mxu0 %v7501
        %7829 = vmatprep.subr.bf16.mxu0 %v7506
        %7830 = vmatpush1.bf16.msra.mxu0 %v7505
        %7831 = vmatprep.subr.bf16.mxu0 %v7510
        %7832 = vmatpush1.bf16.msra.mxu0 %v7509
        %7833 = vmatprep.subr.bf16.mxu0 %v7514
        %7834 = vmatpush1.bf16.msra.mxu0 %v7513
        %7835 = vmatprep.subr.bf16.mxu0 %v7518
        %7836 = vmatpush1.bf16.msra.mxu0 %v7517
        %7837 = vmatprep.subr.bf16.mxu0 %v7522
        %7838 = vmatpush1.bf16.msra.mxu0 %v7521
        %7839 = vmatprep.subr.bf16.mxu0 %v7526
        %7840 = vmatpush1.bf16.msra.mxu0 %v7525
        %7841 = vmatprep.subr.bf16.mxu0 %v7530
        %7842 = vmatpush1.bf16.msra.mxu0 %v7529
        %7843 = vmatprep.subr.bf16.mxu0 %v7534
        %7844 = vmatpush1.bf16.msra.mxu0 %v7533
        %7845 = vmatprep.subr.bf16.mxu0 %v7538
        %7846 = vmatpush1.bf16.msra.mxu0 %v7537
        %7847 = vmatprep.subr.bf16.mxu0 %v7542
        %7848 = vmatpush1.bf16.msra.mxu0 %v7541
        %7849 = vmatprep.mubr.bf16.mxu0 %v6941
        %7850 = vmatmul.mubr.bf16.gmra.mrb[0].mxu0 %v6940
        %v7851 = vpop.f32.mrb[0].mxu0
        %v7852 = vadd.f32 %v7086, %v7851
        %v7853 = vpop.f32.mrb[0].mxu0
        %v7854 = vadd.f32 %v7090, %v7853
        %v7855 = vpop.f32.mrb[0].mxu0
        %v7856 = vpop.f32.mrb[0].mxu0
        %7857 = vdwg.mxu0
        %7858 = vmatprep.subr.bf16.mxu0 %v7546
        %7859 = vmatpush1.bf16.msra.mxu0 %v7545
        %7860 = vmatprep.subr.bf16.mxu0 %v7550
        %7861 = vmatpush1.bf16.msra.mxu0 %v7549
        %7862 = vmatprep.subr.bf16.mxu0 %v7554
        %7863 = vmatpush1.bf16.msra.mxu0 %v7553
        %7864 = vmatprep.subr.bf16.mxu0 %v7558
        %7865 = vmatpush1.bf16.msra.mxu0 %v7557
        %7866 = vmatprep.subr.bf16.mxu0 %v7562
        %7867 = vmatpush1.bf16.msra.mxu0 %v7561
        %7868 = vmatprep.subr.bf16.mxu0 %v7566
        %7869 = vmatpush1.bf16.msra.mxu0 %v7565
        %7870 = vmatprep.subr.bf16.mxu0 %v7570
        %7871 = vmatpush1.bf16.msra.mxu0 %v7569
        %7872 = vmatprep.subr.bf16.mxu0 %v7574
        %7873 = vmatpush1.bf16.msra.mxu0 %v7573
        %7874 = vmatprep.subr.bf16.mxu0 %v7578
        %7875 = vmatpush1.bf16.msra.mxu0 %v7577
        %7876 = vmatprep.subr.bf16.mxu0 %v7582
        %7877 = vmatpush1.bf16.msra.mxu0 %v7581
        %7878 = vmatprep.subr.bf16.mxu0 %v7586
        %7879 = vmatpush1.bf16.msra.mxu0 %v7585
        %7880 = vmatprep.subr.bf16.mxu0 %v7590
        %7881 = vmatpush1.bf16.msra.mxu0 %v7589
        %7882 = vmatprep.subr.bf16.mxu0 %v7594
        %7883 = vmatpush1.bf16.msra.mxu0 %v7593
        %7884 = vmatprep.subr.bf16.mxu0 %v7598
        %7885 = vmatpush1.bf16.msra.mxu0 %v7597
        %7886 = vmatprep.subr.bf16.mxu0 %v7602
        %7887 = vmatpush1.bf16.msra.mxu0 %v7601
        %7888 = vmatprep.subr.bf16.mxu0 %v7606
        %7889 = vmatpush1.bf16.msra.mxu0 %v7605
        %7890 = vmatprep.mubr.bf16.mxu0 %v6943
        %7891 = vmatmul.mubr.bf16.gmra.mrb[0].mxu0 %v6942
        %v7892 = vpop.f32.mrb[0].mxu0
        %v7893 = vadd.f32 %v7852, %v7892
        %v7894 = vpop.f32.mrb[0].mxu0
        %v7895 = vadd.f32 %v7854, %v7894
        %v7896 = vpop.f32.mrb[0].mxu0
        %v7897 = vpop.f32.mrb[0].mxu0
        %7898 = vdwg.mxu0
        %7899 = vst [vmem:[%s4] sm:$0xff] %v7811
        %7900 = vst [vmem:[%s4 + $0x8] sm:$0xff] %v7813
        %7901 = vst [vmem:[%s4 + $0x10] sm:$0xff] %v7893
        %7902 = vst [vmem:[%s4 + $0x18] sm:$0xff] %v7895
      $region44: #{spectrum_encoder_forward.5} parent=31 // pred_fallthru
        _
      // Predicated region
      $region45: #{spectrum_encoder_forward.5} parent=31 // pred_check
        %p7903 = pneg %p109
      $region46: #{spectrum_encoder_forward.5} parent=31 // pred_check_branch
        %7905 = sbr.rel (%p7903) target = $region48
      $region47: #{spectrum_encoder_forward.5} parent=31 // pred_region
        _
      $region48: #{spectrum_encoder_forward.5} parent=31 // pred_fallthru
        _
      // Predicated region
      $region49: #{spectrum_encoder_forward.5} parent=31 // pred_check
        %p7906 = pneg %p109
      $region50: #{spectrum_encoder_forward.5} parent=31 // pred_check_branch
        %7908 = sbr.rel (%p7906) target = $region52
      $region51: #{spectrum_encoder_forward.5} parent=31 // pred_region
        _
      $region52: #{spectrum_encoder_forward.5} parent=31 // pred_fallthru
        _
    $region32: #{spectrum_encoder_forward.5} parent=5 // pred_fallthru
      _
    %p7909 = scmp.le.s32.totalorder 2, %s16
    // Predicated region
    $region53: #{spectrum_encoder_forward.5} parent=5 // pred_check
      %p7910 = pneg %p7909
    $region54: #{spectrum_encoder_forward.5} parent=5 // pred_check_branch
      %7912 = sbr.rel (%p7910) target = $region56
    $region55: #{spectrum_encoder_forward.5} parent=5 // pred_region
      %s7913 = ssub.s32 %s16, 2
    $region56: #{spectrum_encoder_forward.5} parent=5 // pred_fallthru
      _
  $region6: #{spectrum_encoder_forward.5} parent=0 // loop_footer
    %s20 = sadd.s32 1, %s16
  $region7: #{spectrum_encoder_forward.5} parent=0 // loop_footer_branch
    %15 = sbr.rel target = $region3
  $region8: #{spectrum_encoder_forward.5} parent=0 // loop_exit
    _

</llo_original>
